<compile_context>
chip_gen: v7x
topology: tpu7x:2x2x1
jax: 0.10.0
libtpu: 0.0.40
codegen_flags: <defaults>
</compile_context>

<pallas_src>
import jax
import jax.numpy as jnp
from jax import lax
from jax.experimental import pallas as pl
from jax.experimental.pallas import tpu as pltpu

EPS = 1e-5


def conv_block_kernel(xp_ref, w1_ref, b1_ref, g1_ref, bt1_ref,
                      w2_ref, b2_ref, g2_ref, bt2_ref,
                      out_ref, mid_ref, p1_ref, p2_ref):
    # xp_ref : (N, H+2, W+2, Cin)   zero-padded input, NHWC, bf16
    # w*_ref : (Cout, 9*Cin|9*Cout) K-concatenated per-conv weights, bf16
    # b/g/bt : (Cout, 1)            bias / gamma / beta, f32
    # out_ref: (Cout, N*H*W)        channel-major, lane-dense, f32
    # mid_ref: (N, H+2, W+2, Cout)  bf16 VMEM scratch (zero-haloed intermediate)
    # p1/p2  : (N*H*W, 9*Cin|9*Cout) bf16 im2col slabs (VMEM scratch)
    N, HP, WP, Cin = xp_ref.shape
    H, W = HP - 2, WP - 2
    Cout = w1_ref.shape[0]
    M = N * H * W
    inv_m = 1.0 / M

    def build_im2col(src_ref, c, patch_ref):
        # One (M, 9*c) bf16 slab per conv: 9 static sub-tile stores, consumed
        # by a single K=9*c MXU matmul (replaces 9 per-tap dots + relayouts).
        for kh in range(3):
            for kw in range(3):
                t = kh * 3 + kw
                patch_ref[:, t * c:(t + 1) * c] = (
                    src_ref[:, kh:kh + H, kw:kw + W, :].reshape(M, c))

    def conv_bn_relu(patch_ref, w_ref, b, g, beta):
        # (Cout, 9c) @ (M, 9c)^T -> (Cout, M): single bf16 MXU matmul with f32
        # accumulation, result already channel-major / lane-dense.
        y = lax.dot_general(
            w_ref[...], patch_ref[...],
            dimension_numbers=(((1,), (1,)), ((), ())),
            preferred_element_type=jnp.float32)
        y = y + b
        # Two-pass (centered) batch statistics in f32, per review concern.
        mean = jnp.sum(y, axis=1, keepdims=True) * inv_m
        cent = y - mean
        var = jnp.sum(cent * cent, axis=1, keepdims=True) * inv_m
        scale = g * lax.rsqrt(var + EPS)
        shift = beta - mean * scale
        return jnp.maximum(y * scale + shift, 0.0)

    # ---------------- conv1 (3x3, pad pre-applied) + BN1 + ReLU --------------
    build_im2col(xp_ref, Cin, p1_ref)
    y1 = conv_bn_relu(p1_ref, w1_ref, b1_ref[...], g1_ref[...], bt1_ref[...])

    # ---------------- hand off through a zero-haloed bf16 VMEM scratch -------
    # Zero only the 1-wide halo (not the whole buffer), then write the interior
    # (already cast to bf16 so conv2's MXU operands need no further casts).
    mid_ref[:, 0:1, :, :] = jnp.zeros((N, 1, WP, Cout), jnp.bfloat16)
    mid_ref[:, HP - 1:HP, :, :] = jnp.zeros((N, 1, WP, Cout), jnp.bfloat16)
    mid_ref[:, 1:H + 1, 0:1, :] = jnp.zeros((N, H, 1, Cout), jnp.bfloat16)
    mid_ref[:, 1:H + 1, WP - 1:WP, :] = jnp.zeros((N, H, 1, Cout), jnp.bfloat16)
    mid_ref[:, 1:H + 1, 1:W + 1, :] = (
        jnp.transpose(y1).astype(jnp.bfloat16).reshape(N, H, W, Cout))

    # ---------------- conv2 (3x3, pad 1) + BN2 + ReLU ------------------------
    build_im2col(mid_ref, Cout, p2_ref)
    y2 = conv_bn_relu(p2_ref, w2_ref, b2_ref[...], g2_ref[...], bt2_ref[...])

    out_ref[...] = y2   # (Cout, M): lane-dense store


def conv_block_forward(x_nchw, params):
    """Pallas forward. x_nchw: (N, C_in, H, W) float32 -> (N, C_out, H, W)."""
    N, Cin, H, W = x_nchw.shape
    Cout = params['w1'].shape[0]
    M = N * H * W

    # NCHW -> NHWC, zero pad H/W by 1, cast to bf16 ONCE (fused by XLA).
    x = jnp.transpose(x_nchw, (0, 2, 3, 1))
    xp = jnp.pad(x, ((0, 0), (1, 1), (1, 1), (0, 0))).astype(jnp.bfloat16)

    # PyTorch conv weight (O, I, kh, kw) -> K-concatenated (O, 9*I), bf16.
    # Column order (kh, kw, ci) matches the im2col slab built in the kernel.
    w1 = jnp.transpose(params['w1'], (0, 2, 3, 1)).reshape(Cout, 9 * Cin)
    w2 = jnp.transpose(params['w2'], (0, 2, 3, 1)).reshape(Cout, 9 * Cout)
    w1 = w1.astype(jnp.bfloat16)
    w2 = w2.astype(jnp.bfloat16)
    b1 = params['b1'].reshape(Cout, 1).astype(jnp.float32)
    g1 = params['g1'].reshape(Cout, 1).astype(jnp.float32)
    bt1 = params['beta1'].reshape(Cout, 1).astype(jnp.float32)
    b2 = params['b2'].reshape(Cout, 1).astype(jnp.float32)
    g2 = params['g2'].reshape(Cout, 1).astype(jnp.float32)
    bt2 = params['beta2'].reshape(Cout, 1).astype(jnp.float32)

    vmem = pl.BlockSpec(memory_space=pltpu.MemorySpace.VMEM)
    out = pl.pallas_call(
        conv_block_kernel,
        out_shape=jax.ShapeDtypeStruct((Cout, M), jnp.float32),
        in_specs=[vmem] * 9,
        out_specs=vmem,
        scratch_shapes=[
            pltpu.VMEM((N, H + 2, W + 2, Cout), jnp.bfloat16),  # mid (haloed)
            pltpu.VMEM((M, 9 * Cin), jnp.bfloat16),             # im2col conv1
            pltpu.VMEM((M, 9 * Cout), jnp.bfloat16),            # im2col conv2
        ],
        compiler_params=pltpu.CompilerParams(
            # Explicit scoped-VMEM budget (footprint here is <1 MiB; 32 MiB is
            # within the default of every generation, incl. v7x's 64 MiB phys).
            vmem_limit_bytes=32 * 1024 * 1024),
    )(xp, w1, b1, g1, bt1, w2, b2, g2, bt2)

    # Channel-major (Cout, N*H*W) -> NCHW (layout plumbing; see TODO above).
    out = out.reshape(Cout, N, H, W)
    return jnp.transpose(out, (1, 0, 2, 3))


def conv_block_reference(x_nchw, params):
    """Pure-JAX reference matching PyTorch training-mode forward (f32)."""
    def conv_bn_relu(h, w, b, g, beta):
        y = lax.conv_general_dilated(
            h, w, window_strides=(1, 1), padding=((1, 1), (1, 1)),
            dimension_numbers=('NCHW', 'OIHW', 'NCHW'),
            precision=lax.Precision.HIGHEST)
        y = y + b[None, :, None, None]
        mean = jnp.mean(y, axis=(0, 2, 3), keepdims=True)
        var = jnp.mean((y - mean) ** 2, axis=(0, 2, 3), keepdims=True)
        y = (g[None, :, None, None] * (y - mean) / jnp.sqrt(var + EPS)
             + beta[None, :, None, None])
        return jnp.maximum(y, 0.0)

    h = conv_bn_relu(x_nchw, params['w1'], params['b1'], params['g1'],
                     params['beta1'])
    return conv_bn_relu(h, params['w2'], params['b2'], params['g2'],
                        params['beta2'])


def make_params(key, ch_in, ch_out):
    ks = jax.random.split(key, 8)
    s1 = 1.0 / jnp.sqrt(ch_in * 9.0)
    s2 = 1.0 / jnp.sqrt(ch_out * 9.0)
    return {
        'w1': jax.random.normal(ks[0], (ch_out, ch_in, 3, 3), jnp.float32) * s1,
        'b1': jax.random.normal(ks[1], (ch_out,), jnp.float32) * 0.1,
        'g1': 1.0 + 0.1 * jax.random.normal(ks[2], (ch_out,), jnp.float32),
        'beta1': 0.1 * jax.random.normal(ks[3], (ch_out,), jnp.float32),
        'w2': jax.random.normal(ks[4], (ch_out, ch_out, 3, 3), jnp.float32) * s2,
        'b2': jax.random.normal(ks[5], (ch_out,), jnp.float32) * 0.1,
        'g2': 1.0 + 0.1 * jax.random.normal(ks[6], (ch_out,), jnp.float32),
        'beta2': 0.1 * jax.random.normal(ks[7], (ch_out,), jnp.float32),
    }


if __name__ == "__main__":
    key = jax.random.PRNGKey(0)
    k_x, k_p = jax.random.split(key)

    N, ch_in, ch_out, H, W = 2, 4, 8, 16, 16
    x = jax.random.normal(k_x, (N, ch_in, H, W), jnp.float32)
    params = make_params(k_p, ch_in, ch_out)

    out = jax.block_until_ready(conv_block_forward(x, params))
    ref = jax.block_until_ready(conv_block_reference(x, params))

    assert out.shape == (N, ch_out, H, W)
    # Kernel uses bf16 MXU operands with f32 accumulation (per perf review);
    # reference is full-f32/HIGHEST, so allow ~2e-2 deviation (measured
    # deviation is ~1e-2 worst-case at these magnitudes).
    max_err = float(jnp.max(jnp.abs(out - ref)))
    assert jnp.allclose(out, ref, rtol=2e-2, atol=2e-2), max_err

    print("KERNEL_OK")
</pallas_src>

<mosaic_0001>
module attributes {stable_mosaic.version = 11 : i64} {
  func.func @conv_block_kernel(%arg0: memref<2x18x18x4xbf16, #tpu.memory_space<vmem>>, %arg1: memref<8x36xbf16, #tpu.memory_space<vmem>>, %arg2: memref<8x1xf32, #tpu.memory_space<vmem>>, %arg3: memref<8x1xf32, #tpu.memory_space<vmem>>, %arg4: memref<8x1xf32, #tpu.memory_space<vmem>>, %arg5: memref<8x72xbf16, #tpu.memory_space<vmem>>, %arg6: memref<8x1xf32, #tpu.memory_space<vmem>>, %arg7: memref<8x1xf32, #tpu.memory_space<vmem>>, %arg8: memref<8x1xf32, #tpu.memory_space<vmem>>, %arg9: memref<8x512xf32, #tpu.memory_space<vmem>>, %arg10: memref<2x18x18x8xbf16, #tpu.memory_space<vmem>>, %arg11: memref<512x36xbf16, #tpu.memory_space<vmem>>, %arg12: memref<512x72xbf16, #tpu.memory_space<vmem>>) attributes {dimension_semantics = [], scalar_prefetch = 0 : i64, scratch_operands = 3 : i64, tpu.core_type = #tpu.core_type<tc>} {
    %c0 = arith.constant 0 : index
    %c0_0 = arith.constant 0 : index
    %c0_1 = arith.constant 0 : index
    %c0_2 = arith.constant 0 : index
    %0 = vector.load %arg0[%c0, %c0_0, %c0_1, %c0_2] : memref<2x18x18x4xbf16, #tpu.memory_space<vmem>>, vector<2x16x16x4xbf16>
    %1 = vector.shape_cast %0 : vector<2x16x16x4xbf16> to vector<512x4xbf16>
    %c0_3 = arith.constant 0 : index
    %c0_4 = arith.constant 0 : index
    %2 = vector.load %arg11[%c0_3, %c0_4] : memref<512x36xbf16, #tpu.memory_space<vmem>>, vector<512x4xbf16>
    tpu.vector_store %arg11[%c0_3, %c0_4], %1 {strides = array<i32>} : memref<512x36xbf16, #tpu.memory_space<vmem>>, vector<512x4xbf16>,
    %c0_5 = arith.constant 0 : index
    %c0_6 = arith.constant 0 : index
    %c1 = arith.constant 1 : index
    %c0_7 = arith.constant 0 : index
    %3 = vector.load %arg0[%c0_5, %c0_6, %c1, %c0_7] : memref<2x18x18x4xbf16, #tpu.memory_space<vmem>>, vector<2x16x16x4xbf16>
    %4 = vector.shape_cast %3 : vector<2x16x16x4xbf16> to vector<512x4xbf16>
    %c0_8 = arith.constant 0 : index
    %c4 = arith.constant 4 : index
    %5 = vector.load %arg11[%c0_8, %c4] : memref<512x36xbf16, #tpu.memory_space<vmem>>, vector<512x4xbf16>
    tpu.vector_store %arg11[%c0_8, %c4], %4 {strides = array<i32>} : memref<512x36xbf16, #tpu.memory_space<vmem>>, vector<512x4xbf16>,
    %c0_9 = arith.constant 0 : index
    %c0_10 = arith.constant 0 : index
    %c2 = arith.constant 2 : index
    %c0_11 = arith.constant 0 : index
    %6 = vector.load %arg0[%c0_9, %c0_10, %c2, %c0_11] : memref<2x18x18x4xbf16, #tpu.memory_space<vmem>>, vector<2x16x16x4xbf16>
    %7 = vector.shape_cast %6 : vector<2x16x16x4xbf16> to vector<512x4xbf16>
    %c0_12 = arith.constant 0 : index
    %c8 = arith.constant 8 : index
    %8 = vector.load %arg11[%c0_12, %c8] : memref<512x36xbf16, #tpu.memory_space<vmem>>, vector<512x4xbf16>
    tpu.vector_store %arg11[%c0_12, %c8], %7 {strides = array<i32>} : memref<512x36xbf16, #tpu.memory_space<vmem>>, vector<512x4xbf16>,
    %c0_13 = arith.constant 0 : index
    %c1_14 = arith.constant 1 : index
    %c0_15 = arith.constant 0 : index
    %c0_16 = arith.constant 0 : index
    %9 = vector.load %arg0[%c0_13, %c1_14, %c0_15, %c0_16] : memref<2x18x18x4xbf16, #tpu.memory_space<vmem>>, vector<2x16x16x4xbf16>
    %10 = vector.shape_cast %9 : vector<2x16x16x4xbf16> to vector<512x4xbf16>
    %c0_17 = arith.constant 0 : index
    %c12 = arith.constant 12 : index
    %11 = vector.load %arg11[%c0_17, %c12] : memref<512x36xbf16, #tpu.memory_space<vmem>>, vector<512x4xbf16>
    tpu.vector_store %arg11[%c0_17, %c12], %10 {strides = array<i32>} : memref<512x36xbf16, #tpu.memory_space<vmem>>, vector<512x4xbf16>,
    %c0_18 = arith.constant 0 : index
    %c1_19 = arith.constant 1 : index
    %c1_20 = arith.constant 1 : index
    %c0_21 = arith.constant 0 : index
    %12 = vector.load %arg0[%c0_18, %c1_19, %c1_20, %c0_21] : memref<2x18x18x4xbf16, #tpu.memory_space<vmem>>, vector<2x16x16x4xbf16>
    %13 = vector.shape_cast %12 : vector<2x16x16x4xbf16> to vector<512x4xbf16>
    %c0_22 = arith.constant 0 : index
    %c16 = arith.constant 16 : index
    %14 = vector.load %arg11[%c0_22, %c16] : memref<512x36xbf16, #tpu.memory_space<vmem>>, vector<512x4xbf16>
    tpu.vector_store %arg11[%c0_22, %c16], %13 {strides = array<i32>} : memref<512x36xbf16, #tpu.memory_space<vmem>>, vector<512x4xbf16>,
    %c0_23 = arith.constant 0 : index
    %c1_24 = arith.constant 1 : index
    %c2_25 = arith.constant 2 : index
    %c0_26 = arith.constant 0 : index
    %15 = vector.load %arg0[%c0_23, %c1_24, %c2_25, %c0_26] : memref<2x18x18x4xbf16, #tpu.memory_space<vmem>>, vector<2x16x16x4xbf16>
    %16 = vector.shape_cast %15 : vector<2x16x16x4xbf16> to vector<512x4xbf16>
    %c0_27 = arith.constant 0 : index
    %c20 = arith.constant 20 : index
    %17 = vector.load %arg11[%c0_27, %c20] : memref<512x36xbf16, #tpu.memory_space<vmem>>, vector<512x4xbf16>
    tpu.vector_store %arg11[%c0_27, %c20], %16 {strides = array<i32>} : memref<512x36xbf16, #tpu.memory_space<vmem>>, vector<512x4xbf16>,
    %c0_28 = arith.constant 0 : index
    %c2_29 = arith.constant 2 : index
    %c0_30 = arith.constant 0 : index
    %c0_31 = arith.constant 0 : index
    %18 = vector.load %arg0[%c0_28, %c2_29, %c0_30, %c0_31] : memref<2x18x18x4xbf16, #tpu.memory_space<vmem>>, vector<2x16x16x4xbf16>
    %19 = vector.shape_cast %18 : vector<2x16x16x4xbf16> to vector<512x4xbf16>
    %c0_32 = arith.constant 0 : index
    %c24 = arith.constant 24 : index
    %20 = vector.load %arg11[%c0_32, %c24] : memref<512x36xbf16, #tpu.memory_space<vmem>>, vector<512x4xbf16>
    tpu.vector_store %arg11[%c0_32, %c24], %19 {strides = array<i32>} : memref<512x36xbf16, #tpu.memory_space<vmem>>, vector<512x4xbf16>,
    %c0_33 = arith.constant 0 : index
    %c2_34 = arith.constant 2 : index
    %c1_35 = arith.constant 1 : index
    %c0_36 = arith.constant 0 : index
    %21 = vector.load %arg0[%c0_33, %c2_34, %c1_35, %c0_36] : memref<2x18x18x4xbf16, #tpu.memory_space<vmem>>, vector<2x16x16x4xbf16>
    %22 = vector.shape_cast %21 : vector<2x16x16x4xbf16> to vector<512x4xbf16>
    %c0_37 = arith.constant 0 : index
    %c28 = arith.constant 28 : index
    %23 = vector.load %arg11[%c0_37, %c28] : memref<512x36xbf16, #tpu.memory_space<vmem>>, vector<512x4xbf16>
    tpu.vector_store %arg11[%c0_37, %c28], %22 {strides = array<i32>} : memref<512x36xbf16, #tpu.memory_space<vmem>>, vector<512x4xbf16>,
    %c0_38 = arith.constant 0 : index
    %c2_39 = arith.constant 2 : index
    %c2_40 = arith.constant 2 : index
    %c0_41 = arith.constant 0 : index
    %24 = vector.load %arg0[%c0_38, %c2_39, %c2_40, %c0_41] : memref<2x18x18x4xbf16, #tpu.memory_space<vmem>>, vector<2x16x16x4xbf16>
    %25 = vector.shape_cast %24 : vector<2x16x16x4xbf16> to vector<512x4xbf16>
    %c0_42 = arith.constant 0 : index
    %c32 = arith.constant 32 : index
    %26 = vector.load %arg11[%c0_42, %c32] : memref<512x36xbf16, #tpu.memory_space<vmem>>, vector<512x4xbf16>
    tpu.vector_store %arg11[%c0_42, %c32], %25 {strides = array<i32>} : memref<512x36xbf16, #tpu.memory_space<vmem>>, vector<512x4xbf16>,
    %c0_43 = arith.constant 0 : index
    %c0_44 = arith.constant 0 : index
    %27 = vector.load %arg2[%c0_43, %c0_44] : memref<8x1xf32, #tpu.memory_space<vmem>>, vector<8x1xf32>
    %c0_45 = arith.constant 0 : index
    %c0_46 = arith.constant 0 : index
    %28 = vector.load %arg3[%c0_45, %c0_46] : memref<8x1xf32, #tpu.memory_space<vmem>>, vector<8x1xf32>
    %c0_47 = arith.constant 0 : index
    %c0_48 = arith.constant 0 : index
    %29 = vector.load %arg4[%c0_47, %c0_48] : memref<8x1xf32, #tpu.memory_space<vmem>>, vector<8x1xf32>
    %c0_49 = arith.constant 0 : index
    %c0_50 = arith.constant 0 : index
    %30 = vector.load %arg1[%c0_49, %c0_50] : memref<8x36xbf16, #tpu.memory_space<vmem>>, vector<8x36xbf16>
    %c0_51 = arith.constant 0 : index
    %c0_52 = arith.constant 0 : index
    %31 = vector.load %arg11[%c0_51, %c0_52] : memref<512x36xbf16, #tpu.memory_space<vmem>>, vector<512x36xbf16>
    %cst = arith.constant dense<0.000000e+00> : vector<8x512xf32>
    %32 = tpu.matmul %30, %31, %cst {dimension_numbers = #tpu.dot_dimension_numbers<[1], [1], [0], [0], [0, 0, 1, 0], [], []>} : vector<8x36xbf16>, vector<512x36xbf16>, vector<8x512xf32> -> vector<8x512xf32>
    %33 = vector.broadcast %27 : vector<8x1xf32> to vector<8x512xf32>
    %34 = arith.addf %32, %33 : vector<8x512xf32>
    %cst_53 = arith.constant dense<0.000000e+00> : vector<8xf32>
    %35 = vector.multi_reduction <add>, %34, %cst_53 [1] : vector<8x512xf32> to vector<8xf32>
    %36 = vector.shape_cast %35 : vector<8xf32> to vector<8x1xf32>
    %cst_54 = arith.constant 0.001953125 : f32
    %37 = vector.broadcast %cst_54 : f32 to vector<8x1xf32>
    %38 = arith.mulf %36, %37 : vector<8x1xf32>
    %39 = vector.broadcast %38 : vector<8x1xf32> to vector<8x512xf32>
    %40 = arith.subf %34, %39 : vector<8x512xf32>
    %41 = arith.mulf %40, %40 : vector<8x512xf32>
    %cst_55 = arith.constant dense<0.000000e+00> : vector<8xf32>
    %42 = vector.multi_reduction <add>, %41, %cst_55 [1] : vector<8x512xf32> to vector<8xf32>
    %43 = vector.shape_cast %42 : vector<8xf32> to vector<8x1xf32>
    %cst_56 = arith.constant 0.001953125 : f32
    %44 = vector.broadcast %cst_56 : f32 to vector<8x1xf32>
    %45 = arith.mulf %43, %44 : vector<8x1xf32>
    %cst_57 = arith.constant 9.99999974E-6 : f32
    %46 = vector.broadcast %cst_57 : f32 to vector<8x1xf32>
    %47 = arith.addf %45, %46 : vector<8x1xf32>
    %48 = math.rsqrt %47 : vector<8x1xf32>
    %49 = arith.mulf %28, %48 : vector<8x1xf32>
    %50 = arith.mulf %38, %49 : vector<8x1xf32>
    %51 = arith.subf %29, %50 : vector<8x1xf32>
    %52 = vector.broadcast %49 : vector<8x1xf32> to vector<8x512xf32>
    %53 = arith.mulf %34, %52 : vector<8x512xf32>
    %54 = vector.broadcast %51 : vector<8x1xf32> to vector<8x512xf32>
    %55 = arith.addf %53, %54 : vector<8x512xf32>
    %cst_58 = arith.constant 0.000000e+00 : f32
    %56 = vector.broadcast %cst_58 : f32 to vector<8x512xf32>
    %57 = arith.maximumf %55, %56 : vector<8x512xf32>
    %cst_59 = arith.constant 0.000000e+00 : bf16
    %58 = vector.broadcast %cst_59 : bf16 to vector<2x1x18x8xbf16>
    %c0_60 = arith.constant 0 : index
    %c0_61 = arith.constant 0 : index
    %c0_62 = arith.constant 0 : index
    %c0_63 = arith.constant 0 : index
    %59 = vector.load %arg10[%c0_60, %c0_61, %c0_62, %c0_63] : memref<2x18x18x8xbf16, #tpu.memory_space<vmem>>, vector<2x1x18x8xbf16>
    tpu.vector_store %arg10[%c0_60, %c0_61, %c0_62, %c0_63], %58 {strides = array<i32>} : memref<2x18x18x8xbf16, #tpu.memory_space<vmem>>, vector<2x1x18x8xbf16>,
    %cst_64 = arith.constant 0.000000e+00 : bf16
    %60 = vector.broadcast %cst_64 : bf16 to vector<2x1x18x8xbf16>
    %c0_65 = arith.constant 0 : index
    %c17 = arith.constant 17 : index
    %c0_66 = arith.constant 0 : index
    %c0_67 = arith.constant 0 : index
    %61 = vector.load %arg10[%c0_65, %c17, %c0_66, %c0_67] : memref<2x18x18x8xbf16, #tpu.memory_space<vmem>>, vector<2x1x18x8xbf16>
    tpu.vector_store %arg10[%c0_65, %c17, %c0_66, %c0_67], %60 {strides = array<i32>} : memref<2x18x18x8xbf16, #tpu.memory_space<vmem>>, vector<2x1x18x8xbf16>,
    %cst_68 = arith.constant 0.000000e+00 : bf16
    %62 = vector.broadcast %cst_68 : bf16 to vector<2x16x1x8xbf16>
    %c0_69 = arith.constant 0 : index
    %c1_70 = arith.constant 1 : index
    %c0_71 = arith.constant 0 : index
    %c0_72 = arith.constant 0 : index
    %63 = vector.load %arg10[%c0_69, %c1_70, %c0_71, %c0_72] : memref<2x18x18x8xbf16, #tpu.memory_space<vmem>>, vector<2x16x1x8xbf16>
    tpu.vector_store %arg10[%c0_69, %c1_70, %c0_71, %c0_72], %62 {strides = array<i32>} : memref<2x18x18x8xbf16, #tpu.memory_space<vmem>>, vector<2x16x1x8xbf16>,
    %cst_73 = arith.constant 0.000000e+00 : bf16
    %64 = vector.broadcast %cst_73 : bf16 to vector<2x16x1x8xbf16>
    %c0_74 = arith.constant 0 : index
    %c1_75 = arith.constant 1 : index
    %c17_76 = arith.constant 17 : index
    %c0_77 = arith.constant 0 : index
    %65 = vector.load %arg10[%c0_74, %c1_75, %c17_76, %c0_77] : memref<2x18x18x8xbf16, #tpu.memory_space<vmem>>, vector<2x16x1x8xbf16>
    tpu.vector_store %arg10[%c0_74, %c1_75, %c17_76, %c0_77], %64 {strides = array<i32>} : memref<2x18x18x8xbf16, #tpu.memory_space<vmem>>, vector<2x16x1x8xbf16>,
    %66 = tpu.transpose %57, [1, 0] : vector<8x512xf32> -> vector<512x8xf32>
    %67 = arith.truncf %66 : vector<512x8xf32> to vector<512x8xbf16>
    %68 = vector.shape_cast %67 : vector<512x8xbf16> to vector<2x16x16x8xbf16>
    %c0_78 = arith.constant 0 : index
    %c1_79 = arith.constant 1 : index
    %c1_80 = arith.constant 1 : index
    %c0_81 = arith.constant 0 : index
    %69 = vector.load %arg10[%c0_78, %c1_79, %c1_80, %c0_81] : memref<2x18x18x8xbf16, #tpu.memory_space<vmem>>, vector<2x16x16x8xbf16>
    tpu.vector_store %arg10[%c0_78, %c1_79, %c1_80, %c0_81], %68 {strides = array<i32>} : memref<2x18x18x8xbf16, #tpu.memory_space<vmem>>, vector<2x16x16x8xbf16>,
    %c0_82 = arith.constant 0 : index
    %c0_83 = arith.constant 0 : index
    %c0_84 = arith.constant 0 : index
    %c0_85 = arith.constant 0 : index
    %70 = vector.load %arg10[%c0_82, %c0_83, %c0_84, %c0_85] : memref<2x18x18x8xbf16, #tpu.memory_space<vmem>>, vector<2x16x16x8xbf16>
    %71 = vector.shape_cast %70 : vector<2x16x16x8xbf16> to vector<512x8xbf16>
    %c0_86 = arith.constant 0 : index
    %c0_87 = arith.constant 0 : index
    %72 = vector.load %arg12[%c0_86, %c0_87] : memref<512x72xbf16, #tpu.memory_space<vmem>>, vector<512x8xbf16>
    tpu.vector_store %arg12[%c0_86, %c0_87], %71 {strides = array<i32>} : memref<512x72xbf16, #tpu.memory_space<vmem>>, vector<512x8xbf16>,
    %c0_88 = arith.constant 0 : index
    %c0_89 = arith.constant 0 : index
    %c1_90 = arith.constant 1 : index
    %c0_91 = arith.constant 0 : index
    %73 = vector.load %arg10[%c0_88, %c0_89, %c1_90, %c0_91] : memref<2x18x18x8xbf16, #tpu.memory_space<vmem>>, vector<2x16x16x8xbf16>
    %74 = vector.shape_cast %73 : vector<2x16x16x8xbf16> to vector<512x8xbf16>
    %c0_92 = arith.constant 0 : index
    %c8_93 = arith.constant 8 : index
    %75 = vector.load %arg12[%c0_92, %c8_93] : memref<512x72xbf16, #tpu.memory_space<vmem>>, vector<512x8xbf16>
    tpu.vector_store %arg12[%c0_92, %c8_93], %74 {strides = array<i32>} : memref<512x72xbf16, #tpu.memory_space<vmem>>, vector<512x8xbf16>,
    %c0_94 = arith.constant 0 : index
    %c0_95 = arith.constant 0 : index
    %c2_96 = arith.constant 2 : index
    %c0_97 = arith.constant 0 : index
    %76 = vector.load %arg10[%c0_94, %c0_95, %c2_96, %c0_97] : memref<2x18x18x8xbf16, #tpu.memory_space<vmem>>, vector<2x16x16x8xbf16>
    %77 = vector.shape_cast %76 : vector<2x16x16x8xbf16> to vector<512x8xbf16>
    %c0_98 = arith.constant 0 : index
    %c16_99 = arith.constant 16 : index
    %78 = vector.load %arg12[%c0_98, %c16_99] : memref<512x72xbf16, #tpu.memory_space<vmem>>, vector<512x8xbf16>
    tpu.vector_store %arg12[%c0_98, %c16_99], %77 {strides = array<i32>} : memref<512x72xbf16, #tpu.memory_space<vmem>>, vector<512x8xbf16>,
    %c0_100 = arith.constant 0 : index
    %c1_101 = arith.constant 1 : index
    %c0_102 = arith.constant 0 : index
    %c0_103 = arith.constant 0 : index
    %79 = vector.load %arg10[%c0_100, %c1_101, %c0_102, %c0_103] : memref<2x18x18x8xbf16, #tpu.memory_space<vmem>>, vector<2x16x16x8xbf16>
    %80 = vector.shape_cast %79 : vector<2x16x16x8xbf16> to vector<512x8xbf16>
    %c0_104 = arith.constant 0 : index
    %c24_105 = arith.constant 24 : index
    %81 = vector.load %arg12[%c0_104, %c24_105] : memref<512x72xbf16, #tpu.memory_space<vmem>>, vector<512x8xbf16>
    tpu.vector_store %arg12[%c0_104, %c24_105], %80 {strides = array<i32>} : memref<512x72xbf16, #tpu.memory_space<vmem>>, vector<512x8xbf16>,
    %c0_106 = arith.constant 0 : index
    %c1_107 = arith.constant 1 : index
    %c1_108 = arith.constant 1 : index
    %c0_109 = arith.constant 0 : index
    %82 = vector.load %arg10[%c0_106, %c1_107, %c1_108, %c0_109] : memref<2x18x18x8xbf16, #tpu.memory_space<vmem>>, vector<2x16x16x8xbf16>
    %83 = vector.shape_cast %82 : vector<2x16x16x8xbf16> to vector<512x8xbf16>
    %c0_110 = arith.constant 0 : index
    %c32_111 = arith.constant 32 : index
    %84 = vector.load %arg12[%c0_110, %c32_111] : memref<512x72xbf16, #tpu.memory_space<vmem>>, vector<512x8xbf16>
    tpu.vector_store %arg12[%c0_110, %c32_111], %83 {strides = array<i32>} : memref<512x72xbf16, #tpu.memory_space<vmem>>, vector<512x8xbf16>,
    %c0_112 = arith.constant 0 : index
    %c1_113 = arith.constant 1 : index
    %c2_114 = arith.constant 2 : index
    %c0_115 = arith.constant 0 : index
    %85 = vector.load %arg10[%c0_112, %c1_113, %c2_114, %c0_115] : memref<2x18x18x8xbf16, #tpu.memory_space<vmem>>, vector<2x16x16x8xbf16>
    %86 = vector.shape_cast %85 : vector<2x16x16x8xbf16> to vector<512x8xbf16>
    %c0_116 = arith.constant 0 : index
    %c40 = arith.constant 40 : index
    %87 = vector.load %arg12[%c0_116, %c40] : memref<512x72xbf16, #tpu.memory_space<vmem>>, vector<512x8xbf16>
    tpu.vector_store %arg12[%c0_116, %c40], %86 {strides = array<i32>} : memref<512x72xbf16, #tpu.memory_space<vmem>>, vector<512x8xbf16>,
    %c0_117 = arith.constant 0 : index
    %c2_118 = arith.constant 2 : index
    %c0_119 = arith.constant 0 : index
    %c0_120 = arith.constant 0 : index
    %88 = vector.load %arg10[%c0_117, %c2_118, %c0_119, %c0_120] : memref<2x18x18x8xbf16, #tpu.memory_space<vmem>>, vector<2x16x16x8xbf16>
    %89 = vector.shape_cast %88 : vector<2x16x16x8xbf16> to vector<512x8xbf16>
    %c0_121 = arith.constant 0 : index
    %c48 = arith.constant 48 : index
    %90 = vector.load %arg12[%c0_121, %c48] : memref<512x72xbf16, #tpu.memory_space<vmem>>, vector<512x8xbf16>
    tpu.vector_store %arg12[%c0_121, %c48], %89 {strides = array<i32>} : memref<512x72xbf16, #tpu.memory_space<vmem>>, vector<512x8xbf16>,
    %c0_122 = arith.constant 0 : index
    %c2_123 = arith.constant 2 : index
    %c1_124 = arith.constant 1 : index
    %c0_125 = arith.constant 0 : index
    %91 = vector.load %arg10[%c0_122, %c2_123, %c1_124, %c0_125] : memref<2x18x18x8xbf16, #tpu.memory_space<vmem>>, vector<2x16x16x8xbf16>
    %92 = vector.shape_cast %91 : vector<2x16x16x8xbf16> to vector<512x8xbf16>
    %c0_126 = arith.constant 0 : index
    %c56 = arith.constant 56 : index
    %93 = vector.load %arg12[%c0_126, %c56] : memref<512x72xbf16, #tpu.memory_space<vmem>>, vector<512x8xbf16>
    tpu.vector_store %arg12[%c0_126, %c56], %92 {strides = array<i32>} : memref<512x72xbf16, #tpu.memory_space<vmem>>, vector<512x8xbf16>,
    %c0_127 = arith.constant 0 : index
    %c2_128 = arith.constant 2 : index
    %c2_129 = arith.constant 2 : index
    %c0_130 = arith.constant 0 : index
    %94 = vector.load %arg10[%c0_127, %c2_128, %c2_129, %c0_130] : memref<2x18x18x8xbf16, #tpu.memory_space<vmem>>, vector<2x16x16x8xbf16>
    %95 = vector.shape_cast %94 : vector<2x16x16x8xbf16> to vector<512x8xbf16>
    %c0_131 = arith.constant 0 : index
    %c64 = arith.constant 64 : index
    %96 = vector.load %arg12[%c0_131, %c64] : memref<512x72xbf16, #tpu.memory_space<vmem>>, vector<512x8xbf16>
    tpu.vector_store %arg12[%c0_131, %c64], %95 {strides = array<i32>} : memref<512x72xbf16, #tpu.memory_space<vmem>>, vector<512x8xbf16>,
    %c0_132 = arith.constant 0 : index
    %c0_133 = arith.constant 0 : index
    %97 = vector.load %arg6[%c0_132, %c0_133] : memref<8x1xf32, #tpu.memory_space<vmem>>, vector<8x1xf32>
    %c0_134 = arith.constant 0 : index
    %c0_135 = arith.constant 0 : index
    %98 = vector.load %arg7[%c0_134, %c0_135] : memref<8x1xf32, #tpu.memory_space<vmem>>, vector<8x1xf32>
    %c0_136 = arith.constant 0 : index
    %c0_137 = arith.constant 0 : index
    %99 = vector.load %arg8[%c0_136, %c0_137] : memref<8x1xf32, #tpu.memory_space<vmem>>, vector<8x1xf32>
    %c0_138 = arith.constant 0 : index
    %c0_139 = arith.constant 0 : index
    %100 = vector.load %arg5[%c0_138, %c0_139] : memref<8x72xbf16, #tpu.memory_space<vmem>>, vector<8x72xbf16>
    %c0_140 = arith.constant 0 : index
    %c0_141 = arith.constant 0 : index
    %101 = vector.load %arg12[%c0_140, %c0_141] : memref<512x72xbf16, #tpu.memory_space<vmem>>, vector<512x72xbf16>
    %cst_142 = arith.constant dense<0.000000e+00> : vector<8x512xf32>
    %102 = tpu.matmul %100, %101, %cst_142 {dimension_numbers = #tpu.dot_dimension_numbers<[1], [1], [0], [0], [0, 0, 1, 0], [], []>} : vector<8x72xbf16>, vector<512x72xbf16>, vector<8x512xf32> -> vector<8x512xf32>
    %103 = vector.broadcast %97 : vector<8x1xf32> to vector<8x512xf32>
    %104 = arith.addf %102, %103 : vector<8x512xf32>
    %cst_143 = arith.constant dense<0.000000e+00> : vector<8xf32>
    %105 = vector.multi_reduction <add>, %104, %cst_143 [1] : vector<8x512xf32> to vector<8xf32>
    %106 = vector.shape_cast %105 : vector<8xf32> to vector<8x1xf32>
    %cst_144 = arith.constant 0.001953125 : f32
    %107 = vector.broadcast %cst_144 : f32 to vector<8x1xf32>
    %108 = arith.mulf %106, %107 : vector<8x1xf32>
    %109 = vector.broadcast %108 : vector<8x1xf32> to vector<8x512xf32>
    %110 = arith.subf %104, %109 : vector<8x512xf32>
    %111 = arith.mulf %110, %110 : vector<8x512xf32>
    %cst_145 = arith.constant dense<0.000000e+00> : vector<8xf32>
    %112 = vector.multi_reduction <add>, %111, %cst_145 [1] : vector<8x512xf32> to vector<8xf32>
    %113 = vector.shape_cast %112 : vector<8xf32> to vector<8x1xf32>
    %cst_146 = arith.constant 0.001953125 : f32
    %114 = vector.broadcast %cst_146 : f32 to vector<8x1xf32>
    %115 = arith.mulf %113, %114 : vector<8x1xf32>
    %cst_147 = arith.constant 9.99999974E-6 : f32
    %116 = vector.broadcast %cst_147 : f32 to vector<8x1xf32>
    %117 = arith.addf %115, %116 : vector<8x1xf32>
    %118 = math.rsqrt %117 : vector<8x1xf32>
    %119 = arith.mulf %98, %118 : vector<8x1xf32>
    %120 = arith.mulf %108, %119 : vector<8x1xf32>
    %121 = arith.subf %99, %120 : vector<8x1xf32>
    %122 = vector.broadcast %119 : vector<8x1xf32> to vector<8x512xf32>
    %123 = arith.mulf %104, %122 : vector<8x512xf32>
    %124 = vector.broadcast %121 : vector<8x1xf32> to vector<8x512xf32>
    %125 = arith.addf %123, %124 : vector<8x512xf32>
    %cst_148 = arith.constant 0.000000e+00 : f32
    %126 = vector.broadcast %cst_148 : f32 to vector<8x512xf32>
    %127 = arith.maximumf %125, %126 : vector<8x512xf32>
    %c0_149 = arith.constant 0 : index
    %c0_150 = arith.constant 0 : index
    %128 = vector.load %arg9[%c0_149, %c0_150] : memref<8x512xf32, #tpu.memory_space<vmem>>, vector<8x512xf32>
    tpu.vector_store %arg9[%c0_149, %c0_150], %127 {strides = array<i32>} : memref<8x512xf32, #tpu.memory_space<vmem>>, vector<8x512xf32>,
    return
  }
}

</mosaic_0001>

<llo_original>
// kernel: tpu_custom_call.1
$region0: #{tpu_custom_call.1}
  #allocation0 [shape = 'u32[]', space=smem, size = 0x4, offset = 0x4, fixed_abs, tag = 'smem constant byte address 0x4 - core index']
  #allocation1 [shape = 'u32[144,128]{1,0:T(1,128)}', space=vmem, size = 0x12000, scoped, tag = 'internal scratch']
  #allocation2 [shape = 'bf16[2,18,18,8]{3,2,1,0:T(8,128)(2,1)}', space=vmem, size = 0x36000, scoped, tag = 'scratch operand']
  #allocation3 [shape = 'bf16[512,36]{1,0:T(16,128)(2,1)}', space=vmem, size = 0x20000, scoped, tag = 'scratch operand']
  #allocation4 [shape = 'bf16[512,72]{1,0:T(16,128)(2,1)}', space=vmem, size = 0x20000, scoped, tag = 'scratch operand']
  %s0 = inlined_call_operand.vmem [shape: bf16[2,18,18,4], index: 0, kind: input, shape index: {}]
  %s1 = inlined_call_operand.vmem [shape: bf16[8,36], index: 1, kind: input, shape index: {}]
  %s2 = inlined_call_operand.vmem [shape: f32[8,1], index: 2, kind: input, shape index: {}]
  %s3 = inlined_call_operand.vmem [shape: f32[8,1], index: 3, kind: input, shape index: {}]
  %s4 = inlined_call_operand.vmem [shape: f32[8,1], index: 4, kind: input, shape index: {}]
  %s5 = inlined_call_operand.vmem [shape: bf16[8,72], index: 5, kind: input, shape index: {}]
  %s6 = inlined_call_operand.vmem [shape: f32[8,1], index: 6, kind: input, shape index: {}]
  %s7 = inlined_call_operand.vmem [shape: f32[8,1], index: 7, kind: input, shape index: {}]
  %s8 = inlined_call_operand.vmem [shape: f32[8,1], index: 8, kind: input, shape index: {}]
  %s9 = inlined_call_operand.hbm [shape: f32[8,512], index: 9, kind: output, shape index: {}]
  %s10 = sld [smem:[#allocation0]]
  $region46: #{tpu_custom_call.1} parent=0
    _
  %s12 = ssub.s32 1, %s10
  %s13 = scalar_select 0, %s12, %s10
  $region1: #{tpu_custom_call.1} parent=0
    #allocation5 [shape = 'u8[16384]{0}', space=vmem, size = 0x4000, scoped, tag = 'output window, operand 0, single buffered']
    #allocation6 [shape = 's32[1]{0}', space=sflag, size = 0x4, scoped, tag = 'scoped memory for tpu_custom_call.1']
    %14 = vsyncpa [#allocation6], 0
    // Predicated region
    $region2: #{tpu_custom_call.1} parent=1 // pred_check
      _
    $region3: #{tpu_custom_call.1} parent=1 // pred_check_branch
      %16 = sbr.rel (0) target = $region5
    $region4: #{tpu_custom_call.1} parent=1 // pred_region
      _
    $region5: #{tpu_custom_call.1} parent=1 // pred_fallthru
      _
    // Predicated region
    $region6: #{tpu_custom_call.1} parent=1 // pred_check
      _
    $region7: #{tpu_custom_call.1} parent=1 // pred_check_branch
      %18 = sbr.rel (0) target = $region9
    $region8: #{tpu_custom_call.1} parent=1 // pred_region
      _
    $region9: #{tpu_custom_call.1} parent=1 // pred_fallthru
      _
    // Predicated region
    $region10: #{tpu_custom_call.1} parent=1 // pred_check
      _
    $region11: #{tpu_custom_call.1} parent=1 // pred_check_branch
      %20 = sbr.rel (0) target = $region13
    $region12: #{tpu_custom_call.1} parent=1 // pred_region
      _
    $region13: #{tpu_custom_call.1} parent=1 // pred_fallthru
      _
    // Predicated region
    $region14: #{tpu_custom_call.1} parent=1 // pred_check
      _
    $region15: #{tpu_custom_call.1} parent=1 // pred_check_branch
      %22 = sbr.rel (0) target = $region17
    $region16: #{tpu_custom_call.1} parent=1 // pred_region
      _
    $region17: #{tpu_custom_call.1} parent=1 // pred_fallthru
      _
    // Predicated region
    $region18: #{tpu_custom_call.1} parent=1 // pred_check
      _
    $region19: #{tpu_custom_call.1} parent=1 // pred_check_branch
      %24 = sbr.rel (0) target = $region21
    $region20: #{tpu_custom_call.1} parent=1 // pred_region
      _
    $region21: #{tpu_custom_call.1} parent=1 // pred_fallthru
      _
    // Predicated region
    $region22: #{tpu_custom_call.1} parent=1 // pred_check
      _
    $region23: #{tpu_custom_call.1} parent=1 // pred_check_branch
      %26 = sbr.rel (0) target = $region25
    $region24: #{tpu_custom_call.1} parent=1 // pred_region
      _
    $region25: #{tpu_custom_call.1} parent=1 // pred_fallthru
      _
    // Predicated region
    $region26: #{tpu_custom_call.1} parent=1 // pred_check
      _
    $region27: #{tpu_custom_call.1} parent=1 // pred_check_branch
      %28 = sbr.rel (0) target = $region29
    $region28: #{tpu_custom_call.1} parent=1 // pred_region
      _
    $region29: #{tpu_custom_call.1} parent=1 // pred_fallthru
      _
    // Predicated region
    $region30: #{tpu_custom_call.1} parent=1 // pred_check
      _
    $region31: #{tpu_custom_call.1} parent=1 // pred_check_branch
      %30 = sbr.rel (0) target = $region33
    $region32: #{tpu_custom_call.1} parent=1 // pred_region
      _
    $region33: #{tpu_custom_call.1} parent=1 // pred_fallthru
      _
    // Predicated region
    $region34: #{tpu_custom_call.1} parent=1 // pred_check
      _
    $region35: #{tpu_custom_call.1} parent=1 // pred_check_branch
      %32 = sbr.rel (0) target = $region37
    $region36: #{tpu_custom_call.1} parent=1 // pred_region
      _
    $region37: #{tpu_custom_call.1} parent=1 // pred_fallthru
      _
    %v34 = vld [vmem:[%s0] sm:$0xf]
    %v35 = vld [vmem:[%s0 + $0x4] sm:$0xf]
    %v36 = vld [vmem:[%s0 + $0xc] sm:$0xf]
    %v37 = vld [vmem:[%s0 + $0x10] sm:$0xf]
    %v38 = vld [vmem:[%s0 + $0x18] sm:$0xf]
    %v39 = vld [vmem:[%s0 + $0x1c] sm:$0xf]
    %v40 = vld [vmem:[%s0 + $0x24] sm:$0xf]
    %v41 = vld [vmem:[%s0 + $0x28] sm:$0xf]
    %v42 = vld [vmem:[%s0 + $0x30] sm:$0xf]
    %v43 = vld [vmem:[%s0 + $0x34] sm:$0xf]
    %v44 = vld [vmem:[%s0 + $0x3c] sm:$0xf]
    %v45 = vld [vmem:[%s0 + $0x40] sm:$0xf]
    %v46 = vld [vmem:[%s0 + $0x48] sm:$0xf]
    %v47 = vld [vmem:[%s0 + $0x4c] sm:$0xf]
    %v48 = vld [vmem:[%s0 + $0x54] sm:$0xf]
    %v49 = vld [vmem:[%s0 + $0x58] sm:$0xf]
    %v50 = vld [vmem:[%s0 + $0x60] sm:$0xf]
    %v51 = vld [vmem:[%s0 + $0x64] sm:$0xf]
    %v52 = vld [vmem:[%s0 + $0x6c] sm:$0xf]
    %v53 = vld [vmem:[%s0 + $0x70] sm:$0xf]
    %v54 = vld [vmem:[%s0 + $0x78] sm:$0xf]
    %v55 = vld [vmem:[%s0 + $0x7c] sm:$0xf]
    %v56 = vld [vmem:[%s0 + $0x84] sm:$0xf]
    %v57 = vld [vmem:[%s0 + $0x88] sm:$0xf]
    %v58 = vld [vmem:[%s0 + $0x90] sm:$0xf]
    %v59 = vld [vmem:[%s0 + $0x94] sm:$0xf]
    %v60 = vld [vmem:[%s0 + $0x9c] sm:$0xf]
    %v61 = vld [vmem:[%s0 + $0xa0] sm:$0xf]
    %v62 = vld [vmem:[%s0 + $0xa8] sm:$0xf]
    %v63 = vld [vmem:[%s0 + $0xac] sm:$0xf]
    %v64 = vld [vmem:[%s0 + $0xb4] sm:$0xf]
    %v65 = vld [vmem:[%s0 + $0xb8] sm:$0xf]
    %v66 = vld [vmem:[%s0 + $0xd8] sm:$0xf]
    %v67 = vld [vmem:[%s0 + $0xdc] sm:$0xf]
    %v68 = vld [vmem:[%s0 + $0xe4] sm:$0xf]
    %v69 = vld [vmem:[%s0 + $0xe8] sm:$0xf]
    %v70 = vld [vmem:[%s0 + $0xf0] sm:$0xf]
    %v71 = vld [vmem:[%s0 + $0xf4] sm:$0xf]
    %v72 = vld [vmem:[%s0 + $0xfc] sm:$0xf]
    %v73 = vld [vmem:[%s0 + $0x100] sm:$0xf]
    %v74 = vld [vmem:[%s0 + $0x108] sm:$0xf]
    %v75 = vld [vmem:[%s0 + $0x10c] sm:$0xf]
    %v76 = vld [vmem:[%s0 + $0x114] sm:$0xf]
    %v77 = vld [vmem:[%s0 + $0x118] sm:$0xf]
    %v78 = vld [vmem:[%s0 + $0x120] sm:$0xf]
    %v79 = vld [vmem:[%s0 + $0x124] sm:$0xf]
    %v80 = vld [vmem:[%s0 + $0x12c] sm:$0xf]
    %v81 = vld [vmem:[%s0 + $0x130] sm:$0xf]
    %v82 = vld [vmem:[%s0 + $0x138] sm:$0xf]
    %v83 = vld [vmem:[%s0 + $0x13c] sm:$0xf]
    %v84 = vld [vmem:[%s0 + $0x144] sm:$0xf]
    %v85 = vld [vmem:[%s0 + $0x148] sm:$0xf]
    %v86 = vld [vmem:[%s0 + $0x150] sm:$0xf]
    %v87 = vld [vmem:[%s0 + $0x154] sm:$0xf]
    %v88 = vld [vmem:[%s0 + $0x15c] sm:$0xf]
    %v89 = vld [vmem:[%s0 + $0x160] sm:$0xf]
    %v90 = vld [vmem:[%s0 + $0x168] sm:$0xf]
    %v91 = vld [vmem:[%s0 + $0x16c] sm:$0xf]
    %v92 = vld [vmem:[%s0 + $0x174] sm:$0xf]
    %v93 = vld [vmem:[%s0 + $0x178] sm:$0xf]
    %v94 = vld [vmem:[%s0 + $0x180] sm:$0xf]
    %v95 = vld [vmem:[%s0 + $0x184] sm:$0xf]
    %v96 = vld [vmem:[%s0 + $0x18c] sm:$0xf]
    %v97 = vld [vmem:[%s0 + $0x190] sm:$0xf]
    %v162 = vunpack.c.l.b16 %v34
    %v163 = vunpack.c.l.b16 %v35
    %v164 = vunpack.c.l.b16 %v36
    %v165 = vunpack.c.l.b16 %v37
    %v166 = vunpack.c.l.b16 %v38
    %v167 = vunpack.c.l.b16 %v39
    %v168 = vunpack.c.l.b16 %v40
    %v169 = vunpack.c.l.b16 %v41
    %v170 = vunpack.c.l.b16 %v42
    %v171 = vunpack.c.l.b16 %v43
    %v172 = vunpack.c.l.b16 %v44
    %v173 = vunpack.c.l.b16 %v45
    %v174 = vunpack.c.l.b16 %v46
    %v175 = vunpack.c.l.b16 %v47
    %v176 = vunpack.c.l.b16 %v48
    %v177 = vunpack.c.l.b16 %v49
    %v178 = vunpack.c.l.b16 %v50
    %v179 = vunpack.c.l.b16 %v51
    %v180 = vunpack.c.l.b16 %v52
    %v181 = vunpack.c.l.b16 %v53
    %v182 = vunpack.c.l.b16 %v54
    %v183 = vunpack.c.l.b16 %v55
    %v184 = vunpack.c.l.b16 %v56
    %v185 = vunpack.c.l.b16 %v57
    %v186 = vunpack.c.l.b16 %v58
    %v187 = vunpack.c.l.b16 %v59
    %v188 = vunpack.c.l.b16 %v60
    %v189 = vunpack.c.l.b16 %v61
    %v190 = vunpack.c.l.b16 %v62
    %v191 = vunpack.c.l.b16 %v63
    %v192 = vunpack.c.l.b16 %v64
    %v193 = vunpack.c.l.b16 %v65
    %v194 = vunpack.c.l.b16 %v66
    %v195 = vunpack.c.l.b16 %v67
    %v196 = vunpack.c.l.b16 %v68
    %v197 = vunpack.c.l.b16 %v69
    %v198 = vunpack.c.l.b16 %v70
    %v199 = vunpack.c.l.b16 %v71
    %v200 = vunpack.c.l.b16 %v72
    %v201 = vunpack.c.l.b16 %v73
    %v202 = vunpack.c.l.b16 %v74
    %v203 = vunpack.c.l.b16 %v75
    %v204 = vunpack.c.l.b16 %v76
    %v205 = vunpack.c.l.b16 %v77
    %v206 = vunpack.c.l.b16 %v78
    %v207 = vunpack.c.l.b16 %v79
    %v208 = vunpack.c.l.b16 %v80
    %v209 = vunpack.c.l.b16 %v81
    %v210 = vunpack.c.l.b16 %v82
    %v211 = vunpack.c.l.b16 %v83
    %v212 = vunpack.c.l.b16 %v84
    %v213 = vunpack.c.l.b16 %v85
    %v214 = vunpack.c.l.b16 %v86
    %v215 = vunpack.c.l.b16 %v87
    %v216 = vunpack.c.l.b16 %v88
    %v217 = vunpack.c.l.b16 %v89
    %v218 = vunpack.c.l.b16 %v90
    %v219 = vunpack.c.l.b16 %v91
    %v220 = vunpack.c.l.b16 %v92
    %v221 = vunpack.c.l.b16 %v93
    %v222 = vunpack.c.l.b16 %v94
    %v223 = vunpack.c.l.b16 %v95
    %v224 = vunpack.c.l.b16 %v96
    %v225 = vunpack.c.l.b16 %v97
    %v226 = vpack.c.b16 %v163, %v162
    %v227 = vpack.c.b16 %v165, %v164
    %v228 = vpack.c.b16 %v167, %v166
    %v229 = vpack.c.b16 %v169, %v168
    %v230 = vpack.c.b16 %v171, %v170
    %v231 = vpack.c.b16 %v173, %v172
    %v232 = vpack.c.b16 %v175, %v174
    %v233 = vpack.c.b16 %v177, %v176
    %v234 = vpack.c.b16 %v179, %v178
    %v235 = vpack.c.b16 %v181, %v180
    %v236 = vpack.c.b16 %v183, %v182
    %v237 = vpack.c.b16 %v185, %v184
    %v238 = vpack.c.b16 %v187, %v186
    %v239 = vpack.c.b16 %v189, %v188
    %v240 = vpack.c.b16 %v191, %v190
    %v241 = vpack.c.b16 %v193, %v192
    %v242 = vpack.c.b16 %v195, %v194
    %v243 = vpack.c.b16 %v197, %v196
    %v244 = vpack.c.b16 %v199, %v198
    %v245 = vpack.c.b16 %v201, %v200
    %v246 = vpack.c.b16 %v203, %v202
    %v247 = vpack.c.b16 %v205, %v204
    %v248 = vpack.c.b16 %v207, %v206
    %v249 = vpack.c.b16 %v209, %v208
    %v250 = vpack.c.b16 %v211, %v210
    %v251 = vpack.c.b16 %v213, %v212
    %v252 = vpack.c.b16 %v215, %v214
    %v253 = vpack.c.b16 %v217, %v216
    %v254 = vpack.c.b16 %v219, %v218
    %v255 = vpack.c.b16 %v221, %v220
    %v256 = vpack.c.b16 %v223, %v222
    %v257 = vpack.c.b16 %v225, %v224
    %vm290 = vcmask 31744
    %291 = vst.msk [vmem:[#allocation3] sm:$0xff] %vm290, %v226
    %292 = vst.msk [vmem:[#allocation3 + $0x8] sm:$0xff] %vm290, %v227
    %293 = vst.msk [vmem:[#allocation3 + $0x10] sm:$0xff] %vm290, %v228
    %294 = vst.msk [vmem:[#allocation3 + $0x18] sm:$0xff] %vm290, %v229
    %295 = vst.msk [vmem:[#allocation3 + $0x20] sm:$0xff] %vm290, %v230
    %296 = vst.msk [vmem:[#allocation3 + $0x28] sm:$0xff] %vm290, %v231
    %297 = vst.msk [vmem:[#allocation3 + $0x30] sm:$0xff] %vm290, %v232
    %298 = vst.msk [vmem:[#allocation3 + $0x38] sm:$0xff] %vm290, %v233
    %299 = vst.msk [vmem:[#allocation3 + $0x40] sm:$0xff] %vm290, %v234
    %300 = vst.msk [vmem:[#allocation3 + $0x48] sm:$0xff] %vm290, %v235
    %301 = vst.msk [vmem:[#allocation3 + $0x50] sm:$0xff] %vm290, %v236
    %302 = vst.msk [vmem:[#allocation3 + $0x58] sm:$0xff] %vm290, %v237
    %303 = vst.msk [vmem:[#allocation3 + $0x60] sm:$0xff] %vm290, %v238
    %304 = vst.msk [vmem:[#allocation3 + $0x68] sm:$0xff] %vm290, %v239
    %305 = vst.msk [vmem:[#allocation3 + $0x70] sm:$0xff] %vm290, %v240
    %306 = vst.msk [vmem:[#allocation3 + $0x78] sm:$0xff] %vm290, %v241
    %307 = vst.msk [vmem:[#allocation3 + $0x80] sm:$0xff] %vm290, %v242
    %308 = vst.msk [vmem:[#allocation3 + $0x88] sm:$0xff] %vm290, %v243
    %309 = vst.msk [vmem:[#allocation3 + $0x90] sm:$0xff] %vm290, %v244
    %310 = vst.msk [vmem:[#allocation3 + $0x98] sm:$0xff] %vm290, %v245
    %311 = vst.msk [vmem:[#allocation3 + $0xa0] sm:$0xff] %vm290, %v246
    %312 = vst.msk [vmem:[#allocation3 + $0xa8] sm:$0xff] %vm290, %v247
    %313 = vst.msk [vmem:[#allocation3 + $0xb0] sm:$0xff] %vm290, %v248
    %314 = vst.msk [vmem:[#allocation3 + $0xb8] sm:$0xff] %vm290, %v249
    %315 = vst.msk [vmem:[#allocation3 + $0xc0] sm:$0xff] %vm290, %v250
    %316 = vst.msk [vmem:[#allocation3 + $0xc8] sm:$0xff] %vm290, %v251
    %317 = vst.msk [vmem:[#allocation3 + $0xd0] sm:$0xff] %vm290, %v252
    %318 = vst.msk [vmem:[#allocation3 + $0xd8] sm:$0xff] %vm290, %v253
    %319 = vst.msk [vmem:[#allocation3 + $0xe0] sm:$0xff] %vm290, %v254
    %320 = vst.msk [vmem:[#allocation3 + $0xe8] sm:$0xff] %vm290, %v255
    %321 = vst.msk [vmem:[#allocation3 + $0xf0] sm:$0xff] %vm290, %v256
    %322 = vst.msk [vmem:[#allocation3 + $0xf8] sm:$0xff] %vm290, %v257
    %v323 = vld [vmem:[%s0] sm:$0xf]
    %v324 = vld [vmem:[%s0 + $0x4] sm:$0xf]
    %v325 = vld [vmem:[%s0 + $0x8] sm:$0x1]
    %v326 = vld [vmem:[%s0 + $0xc] sm:$0xf]
    %v327 = vld [vmem:[%s0 + $0x10] sm:$0xf]
    %v328 = vld [vmem:[%s0 + $0x14] sm:$0x1]
    %v329 = vld [vmem:[%s0 + $0x18] sm:$0xf]
    %v330 = vld [vmem:[%s0 + $0x1c] sm:$0xf]
    %v331 = vld [vmem:[%s0 + $0x20] sm:$0x1]
    %v332 = vld [vmem:[%s0 + $0x24] sm:$0xf]
    %v333 = vld [vmem:[%s0 + $0x28] sm:$0xf]
    %v334 = vld [vmem:[%s0 + $0x2c] sm:$0x1]
    %v335 = vld [vmem:[%s0 + $0x30] sm:$0xf]
    %v336 = vld [vmem:[%s0 + $0x34] sm:$0xf]
    %v337 = vld [vmem:[%s0 + $0x38] sm:$0x1]
    %v338 = vld [vmem:[%s0 + $0x3c] sm:$0xf]
    %v339 = vld [vmem:[%s0 + $0x40] sm:$0xf]
    %v340 = vld [vmem:[%s0 + $0x44] sm:$0x1]
    %v341 = vld [vmem:[%s0 + $0x48] sm:$0xf]
    %v342 = vld [vmem:[%s0 + $0x4c] sm:$0xf]
    %v343 = vld [vmem:[%s0 + $0x50] sm:$0x1]
    %v344 = vld [vmem:[%s0 + $0x54] sm:$0xf]
    %v345 = vld [vmem:[%s0 + $0x58] sm:$0xf]
    %v346 = vld [vmem:[%s0 + $0x5c] sm:$0x1]
    %v347 = vld [vmem:[%s0 + $0x60] sm:$0xf]
    %v348 = vld [vmem:[%s0 + $0x64] sm:$0xf]
    %v349 = vld [vmem:[%s0 + $0x68] sm:$0x1]
    %v350 = vld [vmem:[%s0 + $0x6c] sm:$0xf]
    %v351 = vld [vmem:[%s0 + $0x70] sm:$0xf]
    %v352 = vld [vmem:[%s0 + $0x74] sm:$0x1]
    %v353 = vld [vmem:[%s0 + $0x78] sm:$0xf]
    %v354 = vld [vmem:[%s0 + $0x7c] sm:$0xf]
    %v355 = vld [vmem:[%s0 + $0x80] sm:$0x1]
    %v356 = vld [vmem:[%s0 + $0x84] sm:$0xf]
    %v357 = vld [vmem:[%s0 + $0x88] sm:$0xf]
    %v358 = vld [vmem:[%s0 + $0x8c] sm:$0x1]
    %v359 = vld [vmem:[%s0 + $0x90] sm:$0xf]
    %v360 = vld [vmem:[%s0 + $0x94] sm:$0xf]
    %v361 = vld [vmem:[%s0 + $0x98] sm:$0x1]
    %v362 = vld [vmem:[%s0 + $0x9c] sm:$0xf]
    %v363 = vld [vmem:[%s0 + $0xa0] sm:$0xf]
    %v364 = vld [vmem:[%s0 + $0xa4] sm:$0x1]
    %v365 = vld [vmem:[%s0 + $0xa8] sm:$0xf]
    %v366 = vld [vmem:[%s0 + $0xac] sm:$0xf]
    %v367 = vld [vmem:[%s0 + $0xb0] sm:$0x1]
    %v368 = vld [vmem:[%s0 + $0xb4] sm:$0xf]
    %v369 = vld [vmem:[%s0 + $0xb8] sm:$0xf]
    %v370 = vld [vmem:[%s0 + $0xbc] sm:$0x1]
    %v371 = vld [vmem:[%s0 + $0xd8] sm:$0xf]
    %v372 = vld [vmem:[%s0 + $0xdc] sm:$0xf]
    %v373 = vld [vmem:[%s0 + $0xe0] sm:$0x1]
    %v374 = vld [vmem:[%s0 + $0xe4] sm:$0xf]
    %v375 = vld [vmem:[%s0 + $0xe8] sm:$0xf]
    %v376 = vld [vmem:[%s0 + $0xec] sm:$0x1]
    %v377 = vld [vmem:[%s0 + $0xf0] sm:$0xf]
    %v378 = vld [vmem:[%s0 + $0xf4] sm:$0xf]
    %v379 = vld [vmem:[%s0 + $0xf8] sm:$0x1]
    %v380 = vld [vmem:[%s0 + $0xfc] sm:$0xf]
    %v381 = vld [vmem:[%s0 + $0x100] sm:$0xf]
    %v382 = vld [vmem:[%s0 + $0x104] sm:$0x1]
    %v383 = vld [vmem:[%s0 + $0x108] sm:$0xf]
    %v384 = vld [vmem:[%s0 + $0x10c] sm:$0xf]
    %v385 = vld [vmem:[%s0 + $0x110] sm:$0x1]
    %v386 = vld [vmem:[%s0 + $0x114] sm:$0xf]
    %v387 = vld [vmem:[%s0 + $0x118] sm:$0xf]
    %v388 = vld [vmem:[%s0 + $0x11c] sm:$0x1]
    %v389 = vld [vmem:[%s0 + $0x120] sm:$0xf]
    %v390 = vld [vmem:[%s0 + $0x124] sm:$0xf]
    %v391 = vld [vmem:[%s0 + $0x128] sm:$0x1]
    %v392 = vld [vmem:[%s0 + $0x12c] sm:$0xf]
    %v393 = vld [vmem:[%s0 + $0x130] sm:$0xf]
    %v394 = vld [vmem:[%s0 + $0x134] sm:$0x1]
    %v395 = vld [vmem:[%s0 + $0x138] sm:$0xf]
    %v396 = vld [vmem:[%s0 + $0x13c] sm:$0xf]
    %v397 = vld [vmem:[%s0 + $0x140] sm:$0x1]
    %v398 = vld [vmem:[%s0 + $0x144] sm:$0xf]
    %v399 = vld [vmem:[%s0 + $0x148] sm:$0xf]
    %v400 = vld [vmem:[%s0 + $0x14c] sm:$0x1]
    %v401 = vld [vmem:[%s0 + $0x150] sm:$0xf]
    %v402 = vld [vmem:[%s0 + $0x154] sm:$0xf]
    %v403 = vld [vmem:[%s0 + $0x158] sm:$0x1]
    %v404 = vld [vmem:[%s0 + $0x15c] sm:$0xf]
    %v405 = vld [vmem:[%s0 + $0x160] sm:$0xf]
    %v406 = vld [vmem:[%s0 + $0x164] sm:$0x1]
    %v407 = vld [vmem:[%s0 + $0x168] sm:$0xf]
    %v408 = vld [vmem:[%s0 + $0x16c] sm:$0xf]
    %v409 = vld [vmem:[%s0 + $0x170] sm:$0x1]
    %v410 = vld [vmem:[%s0 + $0x174] sm:$0xf]
    %v411 = vld [vmem:[%s0 + $0x178] sm:$0xf]
    %v412 = vld [vmem:[%s0 + $0x17c] sm:$0x1]
    %v413 = vld [vmem:[%s0 + $0x180] sm:$0xf]
    %v414 = vld [vmem:[%s0 + $0x184] sm:$0xf]
    %v415 = vld [vmem:[%s0 + $0x188] sm:$0x1]
    %v416 = vld [vmem:[%s0 + $0x18c] sm:$0xf]
    %v417 = vld [vmem:[%s0 + $0x190] sm:$0xf]
    %v418 = vld [vmem:[%s0 + $0x194] sm:$0x1]
    %vm419 = vsmask.f32 3328
    %vm420 = vsmask.f32 7440
    %vm421 = vmor %vm419, %vm420
    %v423 = vshrl.u32 %v323, 16
    %v425 = vrot.slane %v423, 4
    %v426 = vshll.u32 %v323, 16
    %v428 = vrot.slane %v426, 5
    %v429 = vor.u32 %v425, %v428
    %v430 = vrot.slane %v429, 4
    %v432 = vshll.u32 %v324, 16
    %v434 = vrot.slane %v432, 5
    %v435 = vsel %vm421, %v430, %v434
    %v436 = vshrl.u32 %v324, 16
    %v438 = vrot.slane %v436, 4
    %v439 = vor.u32 %v438, %v434
    %v440 = vrot.slane %v439, 4
    %v442 = vshll.u32 %v325, 16
    %v444 = vrot.slane %v442, 5
    %v445 = vsel %vm421, %v440, %v444
    %v447 = vshrl.u32 %v326, 16
    %v449 = vrot.slane %v447, 4
    %v450 = vshll.u32 %v326, 16
    %v452 = vrot.slane %v450, 5
    %v453 = vor.u32 %v449, %v452
    %v454 = vrot.slane %v453, 4
    %v456 = vshll.u32 %v327, 16
    %v458 = vrot.slane %v456, 5
    %v459 = vsel %vm421, %v454, %v458
    %v460 = vshrl.u32 %v327, 16
    %v462 = vrot.slane %v460, 4
    %v463 = vor.u32 %v462, %v458
    %v464 = vrot.slane %v463, 4
    %v466 = vshll.u32 %v328, 16
    %v468 = vrot.slane %v466, 5
    %v469 = vsel %vm421, %v464, %v468
    %v471 = vshrl.u32 %v329, 16
    %v473 = vrot.slane %v471, 4
    %v474 = vshll.u32 %v329, 16
    %v476 = vrot.slane %v474, 5
    %v477 = vor.u32 %v473, %v476
    %v478 = vrot.slane %v477, 4
    %v480 = vshll.u32 %v330, 16
    %v482 = vrot.slane %v480, 5
    %v483 = vsel %vm421, %v478, %v482
    %v484 = vshrl.u32 %v330, 16
    %v486 = vrot.slane %v484, 4
    %v487 = vor.u32 %v486, %v482
    %v488 = vrot.slane %v487, 4
    %v490 = vshll.u32 %v331, 16
    %v492 = vrot.slane %v490, 5
    %v493 = vsel %vm421, %v488, %v492
    %v495 = vshrl.u32 %v332, 16
    %v497 = vrot.slane %v495, 4
    %v498 = vshll.u32 %v332, 16
    %v500 = vrot.slane %v498, 5
    %v501 = vor.u32 %v497, %v500
    %v502 = vrot.slane %v501, 4
    %v504 = vshll.u32 %v333, 16
    %v506 = vrot.slane %v504, 5
    %v507 = vsel %vm421, %v502, %v506
    %v508 = vshrl.u32 %v333, 16
    %v510 = vrot.slane %v508, 4
    %v511 = vor.u32 %v510, %v506
    %v512 = vrot.slane %v511, 4
    %v514 = vshll.u32 %v334, 16
    %v516 = vrot.slane %v514, 5
    %v517 = vsel %vm421, %v512, %v516
    %v519 = vshrl.u32 %v335, 16
    %v521 = vrot.slane %v519, 4
    %v522 = vshll.u32 %v335, 16
    %v524 = vrot.slane %v522, 5
    %v525 = vor.u32 %v521, %v524
    %v526 = vrot.slane %v525, 4
    %v528 = vshll.u32 %v336, 16
    %v530 = vrot.slane %v528, 5
    %v531 = vsel %vm421, %v526, %v530
    %v532 = vshrl.u32 %v336, 16
    %v534 = vrot.slane %v532, 4
    %v535 = vor.u32 %v534, %v530
    %v536 = vrot.slane %v535, 4
    %v538 = vshll.u32 %v337, 16
    %v540 = vrot.slane %v538, 5
    %v541 = vsel %vm421, %v536, %v540
    %v543 = vshrl.u32 %v338, 16
    %v545 = vrot.slane %v543, 4
    %v546 = vshll.u32 %v338, 16
    %v548 = vrot.slane %v546, 5
    %v549 = vor.u32 %v545, %v548
    %v550 = vrot.slane %v549, 4
    %v552 = vshll.u32 %v339, 16
    %v554 = vrot.slane %v552, 5
    %v555 = vsel %vm421, %v550, %v554
    %v556 = vshrl.u32 %v339, 16
    %v558 = vrot.slane %v556, 4
    %v559 = vor.u32 %v558, %v554
    %v560 = vrot.slane %v559, 4
    %v562 = vshll.u32 %v340, 16
    %v564 = vrot.slane %v562, 5
    %v565 = vsel %vm421, %v560, %v564
    %v567 = vshrl.u32 %v341, 16
    %v569 = vrot.slane %v567, 4
    %v570 = vshll.u32 %v341, 16
    %v572 = vrot.slane %v570, 5
    %v573 = vor.u32 %v569, %v572
    %v574 = vrot.slane %v573, 4
    %v576 = vshll.u32 %v342, 16
    %v578 = vrot.slane %v576, 5
    %v579 = vsel %vm421, %v574, %v578
    %v580 = vshrl.u32 %v342, 16
    %v582 = vrot.slane %v580, 4
    %v583 = vor.u32 %v582, %v578
    %v584 = vrot.slane %v583, 4
    %v586 = vshll.u32 %v343, 16
    %v588 = vrot.slane %v586, 5
    %v589 = vsel %vm421, %v584, %v588
    %v591 = vshrl.u32 %v344, 16
    %v593 = vrot.slane %v591, 4
    %v594 = vshll.u32 %v344, 16
    %v596 = vrot.slane %v594, 5
    %v597 = vor.u32 %v593, %v596
    %v598 = vrot.slane %v597, 4
    %v600 = vshll.u32 %v345, 16
    %v602 = vrot.slane %v600, 5
    %v603 = vsel %vm421, %v598, %v602
    %v604 = vshrl.u32 %v345, 16
    %v606 = vrot.slane %v604, 4
    %v607 = vor.u32 %v606, %v602
    %v608 = vrot.slane %v607, 4
    %v610 = vshll.u32 %v346, 16
    %v612 = vrot.slane %v610, 5
    %v613 = vsel %vm421, %v608, %v612
    %v615 = vshrl.u32 %v347, 16
    %v617 = vrot.slane %v615, 4
    %v618 = vshll.u32 %v347, 16
    %v620 = vrot.slane %v618, 5
    %v621 = vor.u32 %v617, %v620
    %v622 = vrot.slane %v621, 4
    %v624 = vshll.u32 %v348, 16
    %v626 = vrot.slane %v624, 5
    %v627 = vsel %vm421, %v622, %v626
    %v628 = vshrl.u32 %v348, 16
    %v630 = vrot.slane %v628, 4
    %v631 = vor.u32 %v630, %v626
    %v632 = vrot.slane %v631, 4
    %v634 = vshll.u32 %v349, 16
    %v636 = vrot.slane %v634, 5
    %v637 = vsel %vm421, %v632, %v636
    %v639 = vshrl.u32 %v350, 16
    %v641 = vrot.slane %v639, 4
    %v642 = vshll.u32 %v350, 16
    %v644 = vrot.slane %v642, 5
    %v645 = vor.u32 %v641, %v644
    %v646 = vrot.slane %v645, 4
    %v648 = vshll.u32 %v351, 16
    %v650 = vrot.slane %v648, 5
    %v651 = vsel %vm421, %v646, %v650
    %v652 = vshrl.u32 %v351, 16
    %v654 = vrot.slane %v652, 4
    %v655 = vor.u32 %v654, %v650
    %v656 = vrot.slane %v655, 4
    %v658 = vshll.u32 %v352, 16
    %v660 = vrot.slane %v658, 5
    %v661 = vsel %vm421, %v656, %v660
    %v663 = vshrl.u32 %v353, 16
    %v665 = vrot.slane %v663, 4
    %v666 = vshll.u32 %v353, 16
    %v668 = vrot.slane %v666, 5
    %v669 = vor.u32 %v665, %v668
    %v670 = vrot.slane %v669, 4
    %v672 = vshll.u32 %v354, 16
    %v674 = vrot.slane %v672, 5
    %v675 = vsel %vm421, %v670, %v674
    %v676 = vshrl.u32 %v354, 16
    %v678 = vrot.slane %v676, 4
    %v679 = vor.u32 %v678, %v674
    %v680 = vrot.slane %v679, 4
    %v682 = vshll.u32 %v355, 16
    %v684 = vrot.slane %v682, 5
    %v685 = vsel %vm421, %v680, %v684
    %v687 = vshrl.u32 %v356, 16
    %v689 = vrot.slane %v687, 4
    %v690 = vshll.u32 %v356, 16
    %v692 = vrot.slane %v690, 5
    %v693 = vor.u32 %v689, %v692
    %v694 = vrot.slane %v693, 4
    %v696 = vshll.u32 %v357, 16
    %v698 = vrot.slane %v696, 5
    %v699 = vsel %vm421, %v694, %v698
    %v700 = vshrl.u32 %v357, 16
    %v702 = vrot.slane %v700, 4
    %v703 = vor.u32 %v702, %v698
    %v704 = vrot.slane %v703, 4
    %v706 = vshll.u32 %v358, 16
    %v708 = vrot.slane %v706, 5
    %v709 = vsel %vm421, %v704, %v708
    %v711 = vshrl.u32 %v359, 16
    %v713 = vrot.slane %v711, 4
    %v714 = vshll.u32 %v359, 16
    %v716 = vrot.slane %v714, 5
    %v717 = vor.u32 %v713, %v716
    %v718 = vrot.slane %v717, 4
    %v720 = vshll.u32 %v360, 16
    %v722 = vrot.slane %v720, 5
    %v723 = vsel %vm421, %v718, %v722
    %v724 = vshrl.u32 %v360, 16
    %v726 = vrot.slane %v724, 4
    %v727 = vor.u32 %v726, %v722
    %v728 = vrot.slane %v727, 4
    %v730 = vshll.u32 %v361, 16
    %v732 = vrot.slane %v730, 5
    %v733 = vsel %vm421, %v728, %v732
    %v735 = vshrl.u32 %v362, 16
    %v737 = vrot.slane %v735, 4
    %v738 = vshll.u32 %v362, 16
    %v740 = vrot.slane %v738, 5
    %v741 = vor.u32 %v737, %v740
    %v742 = vrot.slane %v741, 4
    %v744 = vshll.u32 %v363, 16
    %v746 = vrot.slane %v744, 5
    %v747 = vsel %vm421, %v742, %v746
    %v748 = vshrl.u32 %v363, 16
    %v750 = vrot.slane %v748, 4
    %v751 = vor.u32 %v750, %v746
    %v752 = vrot.slane %v751, 4
    %v754 = vshll.u32 %v364, 16
    %v756 = vrot.slane %v754, 5
    %v757 = vsel %vm421, %v752, %v756
    %v759 = vshrl.u32 %v365, 16
    %v761 = vrot.slane %v759, 4
    %v762 = vshll.u32 %v365, 16
    %v764 = vrot.slane %v762, 5
    %v765 = vor.u32 %v761, %v764
    %v766 = vrot.slane %v765, 4
    %v768 = vshll.u32 %v366, 16
    %v770 = vrot.slane %v768, 5
    %v771 = vsel %vm421, %v766, %v770
    %v772 = vshrl.u32 %v366, 16
    %v774 = vrot.slane %v772, 4
    %v775 = vor.u32 %v774, %v770
    %v776 = vrot.slane %v775, 4
    %v778 = vshll.u32 %v367, 16
    %v780 = vrot.slane %v778, 5
    %v781 = vsel %vm421, %v776, %v780
    %v783 = vshrl.u32 %v368, 16
    %v785 = vrot.slane %v783, 4
    %v786 = vshll.u32 %v368, 16
    %v788 = vrot.slane %v786, 5
    %v789 = vor.u32 %v785, %v788
    %v790 = vrot.slane %v789, 4
    %v792 = vshll.u32 %v369, 16
    %v794 = vrot.slane %v792, 5
    %v795 = vsel %vm421, %v790, %v794
    %v796 = vshrl.u32 %v369, 16
    %v798 = vrot.slane %v796, 4
    %v799 = vor.u32 %v798, %v794
    %v800 = vrot.slane %v799, 4
    %v802 = vshll.u32 %v370, 16
    %v804 = vrot.slane %v802, 5
    %v805 = vsel %vm421, %v800, %v804
    %v807 = vshrl.u32 %v371, 16
    %v809 = vrot.slane %v807, 4
    %v810 = vshll.u32 %v371, 16
    %v812 = vrot.slane %v810, 5
    %v813 = vor.u32 %v809, %v812
    %v814 = vrot.slane %v813, 4
    %v816 = vshll.u32 %v372, 16
    %v818 = vrot.slane %v816, 5
    %v819 = vsel %vm421, %v814, %v818
    %v820 = vshrl.u32 %v372, 16
    %v822 = vrot.slane %v820, 4
    %v823 = vor.u32 %v822, %v818
    %v824 = vrot.slane %v823, 4
    %v826 = vshll.u32 %v373, 16
    %v828 = vrot.slane %v826, 5
    %v829 = vsel %vm421, %v824, %v828
    %v831 = vshrl.u32 %v374, 16
    %v833 = vrot.slane %v831, 4
    %v834 = vshll.u32 %v374, 16
    %v836 = vrot.slane %v834, 5
    %v837 = vor.u32 %v833, %v836
    %v838 = vrot.slane %v837, 4
    %v840 = vshll.u32 %v375, 16
    %v842 = vrot.slane %v840, 5
    %v843 = vsel %vm421, %v838, %v842
    %v844 = vshrl.u32 %v375, 16
    %v846 = vrot.slane %v844, 4
    %v847 = vor.u32 %v846, %v842
    %v848 = vrot.slane %v847, 4
    %v850 = vshll.u32 %v376, 16
    %v852 = vrot.slane %v850, 5
    %v853 = vsel %vm421, %v848, %v852
    %v855 = vshrl.u32 %v377, 16
    %v857 = vrot.slane %v855, 4
    %v858 = vshll.u32 %v377, 16
    %v860 = vrot.slane %v858, 5
    %v861 = vor.u32 %v857, %v860
    %v862 = vrot.slane %v861, 4
    %v864 = vshll.u32 %v378, 16
    %v866 = vrot.slane %v864, 5
    %v867 = vsel %vm421, %v862, %v866
    %v868 = vshrl.u32 %v378, 16
    %v870 = vrot.slane %v868, 4
    %v871 = vor.u32 %v870, %v866
    %v872 = vrot.slane %v871, 4
    %v874 = vshll.u32 %v379, 16
    %v876 = vrot.slane %v874, 5
    %v877 = vsel %vm421, %v872, %v876
    %v879 = vshrl.u32 %v380, 16
    %v881 = vrot.slane %v879, 4
    %v882 = vshll.u32 %v380, 16
    %v884 = vrot.slane %v882, 5
    %v885 = vor.u32 %v881, %v884
    %v886 = vrot.slane %v885, 4
    %v888 = vshll.u32 %v381, 16
    %v890 = vrot.slane %v888, 5
    %v891 = vsel %vm421, %v886, %v890
    %v892 = vshrl.u32 %v381, 16
    %v894 = vrot.slane %v892, 4
    %v895 = vor.u32 %v894, %v890
    %v896 = vrot.slane %v895, 4
    %v898 = vshll.u32 %v382, 16
    %v900 = vrot.slane %v898, 5
    %v901 = vsel %vm421, %v896, %v900
    %v903 = vshrl.u32 %v383, 16
    %v905 = vrot.slane %v903, 4
    %v906 = vshll.u32 %v383, 16
    %v908 = vrot.slane %v906, 5
    %v909 = vor.u32 %v905, %v908
    %v910 = vrot.slane %v909, 4
    %v912 = vshll.u32 %v384, 16
    %v914 = vrot.slane %v912, 5
    %v915 = vsel %vm421, %v910, %v914
    %v916 = vshrl.u32 %v384, 16
    %v918 = vrot.slane %v916, 4
    %v919 = vor.u32 %v918, %v914
    %v920 = vrot.slane %v919, 4
    %v922 = vshll.u32 %v385, 16
    %v924 = vrot.slane %v922, 5
    %v925 = vsel %vm421, %v920, %v924
    %v927 = vshrl.u32 %v386, 16
    %v929 = vrot.slane %v927, 4
    %v930 = vshll.u32 %v386, 16
    %v932 = vrot.slane %v930, 5
    %v933 = vor.u32 %v929, %v932
    %v934 = vrot.slane %v933, 4
    %v936 = vshll.u32 %v387, 16
    %v938 = vrot.slane %v936, 5
    %v939 = vsel %vm421, %v934, %v938
    %v940 = vshrl.u32 %v387, 16
    %v942 = vrot.slane %v940, 4
    %v943 = vor.u32 %v942, %v938
    %v944 = vrot.slane %v943, 4
    %v946 = vshll.u32 %v388, 16
    %v948 = vrot.slane %v946, 5
    %v949 = vsel %vm421, %v944, %v948
    %v951 = vshrl.u32 %v389, 16
    %v953 = vrot.slane %v951, 4
    %v954 = vshll.u32 %v389, 16
    %v956 = vrot.slane %v954, 5
    %v957 = vor.u32 %v953, %v956
    %v958 = vrot.slane %v957, 4
    %v960 = vshll.u32 %v390, 16
    %v962 = vrot.slane %v960, 5
    %v963 = vsel %vm421, %v958, %v962
    %v964 = vshrl.u32 %v390, 16
    %v966 = vrot.slane %v964, 4
    %v967 = vor.u32 %v966, %v962
    %v968 = vrot.slane %v967, 4
    %v970 = vshll.u32 %v391, 16
    %v972 = vrot.slane %v970, 5
    %v973 = vsel %vm421, %v968, %v972
    %v975 = vshrl.u32 %v392, 16
    %v977 = vrot.slane %v975, 4
    %v978 = vshll.u32 %v392, 16
    %v980 = vrot.slane %v978, 5
    %v981 = vor.u32 %v977, %v980
    %v982 = vrot.slane %v981, 4
    %v984 = vshll.u32 %v393, 16
    %v986 = vrot.slane %v984, 5
    %v987 = vsel %vm421, %v982, %v986
    %v988 = vshrl.u32 %v393, 16
    %v990 = vrot.slane %v988, 4
    %v991 = vor.u32 %v990, %v986
    %v992 = vrot.slane %v991, 4
    %v994 = vshll.u32 %v394, 16
    %v996 = vrot.slane %v994, 5
    %v997 = vsel %vm421, %v992, %v996
    %v999 = vshrl.u32 %v395, 16
    %v1001 = vrot.slane %v999, 4
    %v1002 = vshll.u32 %v395, 16
    %v1004 = vrot.slane %v1002, 5
    %v1005 = vor.u32 %v1001, %v1004
    %v1006 = vrot.slane %v1005, 4
    %v1008 = vshll.u32 %v396, 16
    %v1010 = vrot.slane %v1008, 5
    %v1011 = vsel %vm421, %v1006, %v1010
    %v1012 = vshrl.u32 %v396, 16
    %v1014 = vrot.slane %v1012, 4
    %v1015 = vor.u32 %v1014, %v1010
    %v1016 = vrot.slane %v1015, 4
    %v1018 = vshll.u32 %v397, 16
    %v1020 = vrot.slane %v1018, 5
    %v1021 = vsel %vm421, %v1016, %v1020
    %v1023 = vshrl.u32 %v398, 16
    %v1025 = vrot.slane %v1023, 4
    %v1026 = vshll.u32 %v398, 16
    %v1028 = vrot.slane %v1026, 5
    %v1029 = vor.u32 %v1025, %v1028
    %v1030 = vrot.slane %v1029, 4
    %v1032 = vshll.u32 %v399, 16
    %v1034 = vrot.slane %v1032, 5
    %v1035 = vsel %vm421, %v1030, %v1034
    %v1036 = vshrl.u32 %v399, 16
    %v1038 = vrot.slane %v1036, 4
    %v1039 = vor.u32 %v1038, %v1034
    %v1040 = vrot.slane %v1039, 4
    %v1042 = vshll.u32 %v400, 16
    %v1044 = vrot.slane %v1042, 5
    %v1045 = vsel %vm421, %v1040, %v1044
    %v1047 = vshrl.u32 %v401, 16
    %v1049 = vrot.slane %v1047, 4
    %v1050 = vshll.u32 %v401, 16
    %v1052 = vrot.slane %v1050, 5
    %v1053 = vor.u32 %v1049, %v1052
    %v1054 = vrot.slane %v1053, 4
    %v1056 = vshll.u32 %v402, 16
    %v1058 = vrot.slane %v1056, 5
    %v1059 = vsel %vm421, %v1054, %v1058
    %v1060 = vshrl.u32 %v402, 16
    %v1062 = vrot.slane %v1060, 4
    %v1063 = vor.u32 %v1062, %v1058
    %v1064 = vrot.slane %v1063, 4
    %v1066 = vshll.u32 %v403, 16
    %v1068 = vrot.slane %v1066, 5
    %v1069 = vsel %vm421, %v1064, %v1068
    %v1071 = vshrl.u32 %v404, 16
    %v1073 = vrot.slane %v1071, 4
    %v1074 = vshll.u32 %v404, 16
    %v1076 = vrot.slane %v1074, 5
    %v1077 = vor.u32 %v1073, %v1076
    %v1078 = vrot.slane %v1077, 4
    %v1080 = vshll.u32 %v405, 16
    %v1082 = vrot.slane %v1080, 5
    %v1083 = vsel %vm421, %v1078, %v1082
    %v1084 = vshrl.u32 %v405, 16
    %v1086 = vrot.slane %v1084, 4
    %v1087 = vor.u32 %v1086, %v1082
    %v1088 = vrot.slane %v1087, 4
    %v1090 = vshll.u32 %v406, 16
    %v1092 = vrot.slane %v1090, 5
    %v1093 = vsel %vm421, %v1088, %v1092
    %v1095 = vshrl.u32 %v407, 16
    %v1097 = vrot.slane %v1095, 4
    %v1098 = vshll.u32 %v407, 16
    %v1100 = vrot.slane %v1098, 5
    %v1101 = vor.u32 %v1097, %v1100
    %v1102 = vrot.slane %v1101, 4
    %v1104 = vshll.u32 %v408, 16
    %v1106 = vrot.slane %v1104, 5
    %v1107 = vsel %vm421, %v1102, %v1106
    %v1108 = vshrl.u32 %v408, 16
    %v1110 = vrot.slane %v1108, 4
    %v1111 = vor.u32 %v1110, %v1106
    %v1112 = vrot.slane %v1111, 4
    %v1114 = vshll.u32 %v409, 16
    %v1116 = vrot.slane %v1114, 5
    %v1117 = vsel %vm421, %v1112, %v1116
    %v1119 = vshrl.u32 %v410, 16
    %v1121 = vrot.slane %v1119, 4
    %v1122 = vshll.u32 %v410, 16
    %v1124 = vrot.slane %v1122, 5
    %v1125 = vor.u32 %v1121, %v1124
    %v1126 = vrot.slane %v1125, 4
    %v1128 = vshll.u32 %v411, 16
    %v1130 = vrot.slane %v1128, 5
    %v1131 = vsel %vm421, %v1126, %v1130
    %v1132 = vshrl.u32 %v411, 16
    %v1134 = vrot.slane %v1132, 4
    %v1135 = vor.u32 %v1134, %v1130
    %v1136 = vrot.slane %v1135, 4
    %v1138 = vshll.u32 %v412, 16
    %v1140 = vrot.slane %v1138, 5
    %v1141 = vsel %vm421, %v1136, %v1140
    %v1143 = vshrl.u32 %v413, 16
    %v1145 = vrot.slane %v1143, 4
    %v1146 = vshll.u32 %v413, 16
    %v1148 = vrot.slane %v1146, 5
    %v1149 = vor.u32 %v1145, %v1148
    %v1150 = vrot.slane %v1149, 4
    %v1152 = vshll.u32 %v414, 16
    %v1154 = vrot.slane %v1152, 5
    %v1155 = vsel %vm421, %v1150, %v1154
    %v1156 = vshrl.u32 %v414, 16
    %v1158 = vrot.slane %v1156, 4
    %v1159 = vor.u32 %v1158, %v1154
    %v1160 = vrot.slane %v1159, 4
    %v1162 = vshll.u32 %v415, 16
    %v1164 = vrot.slane %v1162, 5
    %v1165 = vsel %vm421, %v1160, %v1164
    %v1167 = vshrl.u32 %v416, 16
    %v1169 = vrot.slane %v1167, 4
    %v1170 = vshll.u32 %v416, 16
    %v1172 = vrot.slane %v1170, 5
    %v1173 = vor.u32 %v1169, %v1172
    %v1174 = vrot.slane %v1173, 4
    %v1176 = vshll.u32 %v417, 16
    %v1178 = vrot.slane %v1176, 5
    %v1179 = vsel %vm421, %v1174, %v1178
    %v1180 = vshrl.u32 %v417, 16
    %v1182 = vrot.slane %v1180, 4
    %v1183 = vor.u32 %v1182, %v1178
    %v1184 = vrot.slane %v1183, 4
    %v1186 = vshll.u32 %v418, 16
    %v1188 = vrot.slane %v1186, 5
    %v1189 = vsel %vm421, %v1184, %v1188
    %v1190 = vunpack.c.l.b16 %v435
    %v1191 = vunpack.c.l.b16 %v445
    %v1192 = vunpack.c.l.b16 %v459
    %v1193 = vunpack.c.l.b16 %v469
    %v1194 = vunpack.c.l.b16 %v483
    %v1195 = vunpack.c.l.b16 %v493
    %v1196 = vunpack.c.l.b16 %v507
    %v1197 = vunpack.c.l.b16 %v517
    %v1198 = vunpack.c.l.b16 %v531
    %v1199 = vunpack.c.l.b16 %v541
    %v1200 = vunpack.c.l.b16 %v555
    %v1201 = vunpack.c.l.b16 %v565
    %v1202 = vunpack.c.l.b16 %v579
    %v1203 = vunpack.c.l.b16 %v589
    %v1204 = vunpack.c.l.b16 %v603
    %v1205 = vunpack.c.l.b16 %v613
    %v1206 = vunpack.c.l.b16 %v627
    %v1207 = vunpack.c.l.b16 %v637
    %v1208 = vunpack.c.l.b16 %v651
    %v1209 = vunpack.c.l.b16 %v661
    %v1210 = vunpack.c.l.b16 %v675
    %v1211 = vunpack.c.l.b16 %v685
    %v1212 = vunpack.c.l.b16 %v699
    %v1213 = vunpack.c.l.b16 %v709
    %v1214 = vunpack.c.l.b16 %v723
    %v1215 = vunpack.c.l.b16 %v733
    %v1216 = vunpack.c.l.b16 %v747
    %v1217 = vunpack.c.l.b16 %v757
    %v1218 = vunpack.c.l.b16 %v771
    %v1219 = vunpack.c.l.b16 %v781
    %v1220 = vunpack.c.l.b16 %v795
    %v1221 = vunpack.c.l.b16 %v805
    %v1222 = vunpack.c.l.b16 %v819
    %v1223 = vunpack.c.l.b16 %v829
    %v1224 = vunpack.c.l.b16 %v843
    %v1225 = vunpack.c.l.b16 %v853
    %v1226 = vunpack.c.l.b16 %v867
    %v1227 = vunpack.c.l.b16 %v877
    %v1228 = vunpack.c.l.b16 %v891
    %v1229 = vunpack.c.l.b16 %v901
    %v1230 = vunpack.c.l.b16 %v915
    %v1231 = vunpack.c.l.b16 %v925
    %v1232 = vunpack.c.l.b16 %v939
    %v1233 = vunpack.c.l.b16 %v949
    %v1234 = vunpack.c.l.b16 %v963
    %v1235 = vunpack.c.l.b16 %v973
    %v1236 = vunpack.c.l.b16 %v987
    %v1237 = vunpack.c.l.b16 %v997
    %v1238 = vunpack.c.l.b16 %v1011
    %v1239 = vunpack.c.l.b16 %v1021
    %v1240 = vunpack.c.l.b16 %v1035
    %v1241 = vunpack.c.l.b16 %v1045
    %v1242 = vunpack.c.l.b16 %v1059
    %v1243 = vunpack.c.l.b16 %v1069
    %v1244 = vunpack.c.l.b16 %v1083
    %v1245 = vunpack.c.l.b16 %v1093
    %v1246 = vunpack.c.l.b16 %v1107
    %v1247 = vunpack.c.l.b16 %v1117
    %v1248 = vunpack.c.l.b16 %v1131
    %v1249 = vunpack.c.l.b16 %v1141
    %v1250 = vunpack.c.l.b16 %v1155
    %v1251 = vunpack.c.l.b16 %v1165
    %v1252 = vunpack.c.l.b16 %v1179
    %v1253 = vunpack.c.l.b16 %v1189
    %v1254 = vpack.c.b16 %v1191, %v1190
    %v1255 = vpack.c.b16 %v1193, %v1192
    %v1256 = vpack.c.b16 %v1195, %v1194
    %v1257 = vpack.c.b16 %v1197, %v1196
    %v1258 = vpack.c.b16 %v1199, %v1198
    %v1259 = vpack.c.b16 %v1201, %v1200
    %v1260 = vpack.c.b16 %v1203, %v1202
    %v1261 = vpack.c.b16 %v1205, %v1204
    %v1262 = vpack.c.b16 %v1207, %v1206
    %v1263 = vpack.c.b16 %v1209, %v1208
    %v1264 = vpack.c.b16 %v1211, %v1210
    %v1265 = vpack.c.b16 %v1213, %v1212
    %v1266 = vpack.c.b16 %v1215, %v1214
    %v1267 = vpack.c.b16 %v1217, %v1216
    %v1268 = vpack.c.b16 %v1219, %v1218
    %v1269 = vpack.c.b16 %v1221, %v1220
    %v1270 = vpack.c.b16 %v1223, %v1222
    %v1271 = vpack.c.b16 %v1225, %v1224
    %v1272 = vpack.c.b16 %v1227, %v1226
    %v1273 = vpack.c.b16 %v1229, %v1228
    %v1274 = vpack.c.b16 %v1231, %v1230
    %v1275 = vpack.c.b16 %v1233, %v1232
    %v1276 = vpack.c.b16 %v1235, %v1234
    %v1277 = vpack.c.b16 %v1237, %v1236
    %v1278 = vpack.c.b16 %v1239, %v1238
    %v1279 = vpack.c.b16 %v1241, %v1240
    %v1280 = vpack.c.b16 %v1243, %v1242
    %v1281 = vpack.c.b16 %v1245, %v1244
    %v1282 = vpack.c.b16 %v1247, %v1246
    %v1283 = vpack.c.b16 %v1249, %v1248
    %v1284 = vpack.c.b16 %v1251, %v1250
    %v1285 = vpack.c.b16 %v1253, %v1252
    %1286 = vrot.lane.b32.xlu0 %v1254, 4
    %v1287 = vpop.permute.xlu0 %1286
    %1288 = vrot.lane.b32.xlu0 %v1255, 4
    %v1289 = vpop.permute.xlu0 %1288
    %1290 = vrot.lane.b32.xlu0 %v1256, 4
    %v1291 = vpop.permute.xlu0 %1290
    %1292 = vrot.lane.b32.xlu0 %v1257, 4
    %v1293 = vpop.permute.xlu0 %1292
    %1294 = vrot.lane.b32.xlu0 %v1258, 4
    %v1295 = vpop.permute.xlu0 %1294
    %1296 = vrot.lane.b32.xlu0 %v1259, 4
    %v1297 = vpop.permute.xlu0 %1296
    %1298 = vrot.lane.b32.xlu0 %v1260, 4
    %v1299 = vpop.permute.xlu0 %1298
    %1300 = vrot.lane.b32.xlu0 %v1261, 4
    %v1301 = vpop.permute.xlu0 %1300
    %1302 = vrot.lane.b32.xlu0 %v1262, 4
    %v1303 = vpop.permute.xlu0 %1302
    %1304 = vrot.lane.b32.xlu0 %v1263, 4
    %v1305 = vpop.permute.xlu0 %1304
    %1306 = vrot.lane.b32.xlu0 %v1264, 4
    %v1307 = vpop.permute.xlu0 %1306
    %1308 = vrot.lane.b32.xlu0 %v1265, 4
    %v1309 = vpop.permute.xlu0 %1308
    %1310 = vrot.lane.b32.xlu0 %v1266, 4
    %v1311 = vpop.permute.xlu0 %1310
    %1312 = vrot.lane.b32.xlu0 %v1267, 4
    %v1313 = vpop.permute.xlu0 %1312
    %1314 = vrot.lane.b32.xlu0 %v1268, 4
    %v1315 = vpop.permute.xlu0 %1314
    %1316 = vrot.lane.b32.xlu0 %v1269, 4
    %v1317 = vpop.permute.xlu0 %1316
    %1318 = vrot.lane.b32.xlu0 %v1270, 4
    %v1319 = vpop.permute.xlu0 %1318
    %1320 = vrot.lane.b32.xlu0 %v1271, 4
    %v1321 = vpop.permute.xlu0 %1320
    %1322 = vrot.lane.b32.xlu0 %v1272, 4
    %v1323 = vpop.permute.xlu0 %1322
    %1324 = vrot.lane.b32.xlu0 %v1273, 4
    %v1325 = vpop.permute.xlu0 %1324
    %1326 = vrot.lane.b32.xlu0 %v1274, 4
    %v1327 = vpop.permute.xlu0 %1326
    %1328 = vrot.lane.b32.xlu0 %v1275, 4
    %v1329 = vpop.permute.xlu0 %1328
    %1330 = vrot.lane.b32.xlu0 %v1276, 4
    %v1331 = vpop.permute.xlu0 %1330
    %1332 = vrot.lane.b32.xlu0 %v1277, 4
    %v1333 = vpop.permute.xlu0 %1332
    %1334 = vrot.lane.b32.xlu0 %v1278, 4
    %v1335 = vpop.permute.xlu0 %1334
    %1336 = vrot.lane.b32.xlu0 %v1279, 4
    %v1337 = vpop.permute.xlu0 %1336
    %1338 = vrot.lane.b32.xlu0 %v1280, 4
    %v1339 = vpop.permute.xlu0 %1338
    %1340 = vrot.lane.b32.xlu0 %v1281, 4
    %v1341 = vpop.permute.xlu0 %1340
    %1342 = vrot.lane.b32.xlu0 %v1282, 4
    %v1343 = vpop.permute.xlu0 %1342
    %1344 = vrot.lane.b32.xlu0 %v1283, 4
    %v1345 = vpop.permute.xlu0 %1344
    %1346 = vrot.lane.b32.xlu0 %v1284, 4
    %v1347 = vpop.permute.xlu0 %1346
    %1348 = vrot.lane.b32.xlu0 %v1285, 4
    %v1349 = vpop.permute.xlu0 %1348
    %vm1382 = vcmask 64544
    %1383 = vst.msk [vmem:[#allocation3] sm:$0xff] %vm1382, %v1287
    %1384 = vst.msk [vmem:[#allocation3 + $0x8] sm:$0xff] %vm1382, %v1289
    %1385 = vst.msk [vmem:[#allocation3 + $0x10] sm:$0xff] %vm1382, %v1291
    %1386 = vst.msk [vmem:[#allocation3 + $0x18] sm:$0xff] %vm1382, %v1293
    %1387 = vst.msk [vmem:[#allocation3 + $0x20] sm:$0xff] %vm1382, %v1295
    %1388 = vst.msk [vmem:[#allocation3 + $0x28] sm:$0xff] %vm1382, %v1297
    %1389 = vst.msk [vmem:[#allocation3 + $0x30] sm:$0xff] %vm1382, %v1299
    %1390 = vst.msk [vmem:[#allocation3 + $0x38] sm:$0xff] %vm1382, %v1301
    %1391 = vst.msk [vmem:[#allocation3 + $0x40] sm:$0xff] %vm1382, %v1303
    %1392 = vst.msk [vmem:[#allocation3 + $0x48] sm:$0xff] %vm1382, %v1305
    %1393 = vst.msk [vmem:[#allocation3 + $0x50] sm:$0xff] %vm1382, %v1307
    %1394 = vst.msk [vmem:[#allocation3 + $0x58] sm:$0xff] %vm1382, %v1309
    %1395 = vst.msk [vmem:[#allocation3 + $0x60] sm:$0xff] %vm1382, %v1311
    %1396 = vst.msk [vmem:[#allocation3 + $0x68] sm:$0xff] %vm1382, %v1313
    %1397 = vst.msk [vmem:[#allocation3 + $0x70] sm:$0xff] %vm1382, %v1315
    %1398 = vst.msk [vmem:[#allocation3 + $0x78] sm:$0xff] %vm1382, %v1317
    %1399 = vst.msk [vmem:[#allocation3 + $0x80] sm:$0xff] %vm1382, %v1319
    %1400 = vst.msk [vmem:[#allocation3 + $0x88] sm:$0xff] %vm1382, %v1321
    %1401 = vst.msk [vmem:[#allocation3 + $0x90] sm:$0xff] %vm1382, %v1323
    %1402 = vst.msk [vmem:[#allocation3 + $0x98] sm:$0xff] %vm1382, %v1325
    %1403 = vst.msk [vmem:[#allocation3 + $0xa0] sm:$0xff] %vm1382, %v1327
    %1404 = vst.msk [vmem:[#allocation3 + $0xa8] sm:$0xff] %vm1382, %v1329
    %1405 = vst.msk [vmem:[#allocation3 + $0xb0] sm:$0xff] %vm1382, %v1331
    %1406 = vst.msk [vmem:[#allocation3 + $0xb8] sm:$0xff] %vm1382, %v1333
    %1407 = vst.msk [vmem:[#allocation3 + $0xc0] sm:$0xff] %vm1382, %v1335
    %1408 = vst.msk [vmem:[#allocation3 + $0xc8] sm:$0xff] %vm1382, %v1337
    %1409 = vst.msk [vmem:[#allocation3 + $0xd0] sm:$0xff] %vm1382, %v1339
    %1410 = vst.msk [vmem:[#allocation3 + $0xd8] sm:$0xff] %vm1382, %v1341
    %1411 = vst.msk [vmem:[#allocation3 + $0xe0] sm:$0xff] %vm1382, %v1343
    %1412 = vst.msk [vmem:[#allocation3 + $0xe8] sm:$0xff] %vm1382, %v1345
    %1413 = vst.msk [vmem:[#allocation3 + $0xf0] sm:$0xff] %vm1382, %v1347
    %1414 = vst.msk [vmem:[#allocation3 + $0xf8] sm:$0xff] %vm1382, %v1349
    %v1415 = vld [vmem:[%s0] sm:$0xe]
    %v1416 = vld [vmem:[%s0 + $0x4] sm:$0xf]
    %v1417 = vld [vmem:[%s0 + $0x8] sm:$0x1]
    %v1418 = vld [vmem:[%s0 + $0xc] sm:$0xe]
    %v1419 = vld [vmem:[%s0 + $0x10] sm:$0xf]
    %v1420 = vld [vmem:[%s0 + $0x14] sm:$0x1]
    %v1421 = vld [vmem:[%s0 + $0x18] sm:$0xe]
    %v1422 = vld [vmem:[%s0 + $0x1c] sm:$0xf]
    %v1423 = vld [vmem:[%s0 + $0x20] sm:$0x1]
    %v1424 = vld [vmem:[%s0 + $0x24] sm:$0xe]
    %v1425 = vld [vmem:[%s0 + $0x28] sm:$0xf]
    %v1426 = vld [vmem:[%s0 + $0x2c] sm:$0x1]
    %v1427 = vld [vmem:[%s0 + $0x30] sm:$0xe]
    %v1428 = vld [vmem:[%s0 + $0x34] sm:$0xf]
    %v1429 = vld [vmem:[%s0 + $0x38] sm:$0x1]
    %v1430 = vld [vmem:[%s0 + $0x3c] sm:$0xe]
    %v1431 = vld [vmem:[%s0 + $0x40] sm:$0xf]
    %v1432 = vld [vmem:[%s0 + $0x44] sm:$0x1]
    %v1433 = vld [vmem:[%s0 + $0x48] sm:$0xe]
    %v1434 = vld [vmem:[%s0 + $0x4c] sm:$0xf]
    %v1435 = vld [vmem:[%s0 + $0x50] sm:$0x1]
    %v1436 = vld [vmem:[%s0 + $0x54] sm:$0xe]
    %v1437 = vld [vmem:[%s0 + $0x58] sm:$0xf]
    %v1438 = vld [vmem:[%s0 + $0x5c] sm:$0x1]
    %v1439 = vld [vmem:[%s0 + $0x60] sm:$0xe]
    %v1440 = vld [vmem:[%s0 + $0x64] sm:$0xf]
    %v1441 = vld [vmem:[%s0 + $0x68] sm:$0x1]
    %v1442 = vld [vmem:[%s0 + $0x6c] sm:$0xe]
    %v1443 = vld [vmem:[%s0 + $0x70] sm:$0xf]
    %v1444 = vld [vmem:[%s0 + $0x74] sm:$0x1]
    %v1445 = vld [vmem:[%s0 + $0x78] sm:$0xe]
    %v1446 = vld [vmem:[%s0 + $0x7c] sm:$0xf]
    %v1447 = vld [vmem:[%s0 + $0x80] sm:$0x1]
    %v1448 = vld [vmem:[%s0 + $0x84] sm:$0xe]
    %v1449 = vld [vmem:[%s0 + $0x88] sm:$0xf]
    %v1450 = vld [vmem:[%s0 + $0x8c] sm:$0x1]
    %v1451 = vld [vmem:[%s0 + $0x90] sm:$0xe]
    %v1452 = vld [vmem:[%s0 + $0x94] sm:$0xf]
    %v1453 = vld [vmem:[%s0 + $0x98] sm:$0x1]
    %v1454 = vld [vmem:[%s0 + $0x9c] sm:$0xe]
    %v1455 = vld [vmem:[%s0 + $0xa0] sm:$0xf]
    %v1456 = vld [vmem:[%s0 + $0xa4] sm:$0x1]
    %v1457 = vld [vmem:[%s0 + $0xa8] sm:$0xe]
    %v1458 = vld [vmem:[%s0 + $0xac] sm:$0xf]
    %v1459 = vld [vmem:[%s0 + $0xb0] sm:$0x1]
    %v1460 = vld [vmem:[%s0 + $0xb4] sm:$0xe]
    %v1461 = vld [vmem:[%s0 + $0xb8] sm:$0xf]
    %v1462 = vld [vmem:[%s0 + $0xbc] sm:$0x1]
    %v1463 = vld [vmem:[%s0 + $0xd8] sm:$0xe]
    %v1464 = vld [vmem:[%s0 + $0xdc] sm:$0xf]
    %v1465 = vld [vmem:[%s0 + $0xe0] sm:$0x1]
    %v1466 = vld [vmem:[%s0 + $0xe4] sm:$0xe]
    %v1467 = vld [vmem:[%s0 + $0xe8] sm:$0xf]
    %v1468 = vld [vmem:[%s0 + $0xec] sm:$0x1]
    %v1469 = vld [vmem:[%s0 + $0xf0] sm:$0xe]
    %v1470 = vld [vmem:[%s0 + $0xf4] sm:$0xf]
    %v1471 = vld [vmem:[%s0 + $0xf8] sm:$0x1]
    %v1472 = vld [vmem:[%s0 + $0xfc] sm:$0xe]
    %v1473 = vld [vmem:[%s0 + $0x100] sm:$0xf]
    %v1474 = vld [vmem:[%s0 + $0x104] sm:$0x1]
    %v1475 = vld [vmem:[%s0 + $0x108] sm:$0xe]
    %v1476 = vld [vmem:[%s0 + $0x10c] sm:$0xf]
    %v1477 = vld [vmem:[%s0 + $0x110] sm:$0x1]
    %v1478 = vld [vmem:[%s0 + $0x114] sm:$0xe]
    %v1479 = vld [vmem:[%s0 + $0x118] sm:$0xf]
    %v1480 = vld [vmem:[%s0 + $0x11c] sm:$0x1]
    %v1481 = vld [vmem:[%s0 + $0x120] sm:$0xe]
    %v1482 = vld [vmem:[%s0 + $0x124] sm:$0xf]
    %v1483 = vld [vmem:[%s0 + $0x128] sm:$0x1]
    %v1484 = vld [vmem:[%s0 + $0x12c] sm:$0xe]
    %v1485 = vld [vmem:[%s0 + $0x130] sm:$0xf]
    %v1486 = vld [vmem:[%s0 + $0x134] sm:$0x1]
    %v1487 = vld [vmem:[%s0 + $0x138] sm:$0xe]
    %v1488 = vld [vmem:[%s0 + $0x13c] sm:$0xf]
    %v1489 = vld [vmem:[%s0 + $0x140] sm:$0x1]
    %v1490 = vld [vmem:[%s0 + $0x144] sm:$0xe]
    %v1491 = vld [vmem:[%s0 + $0x148] sm:$0xf]
    %v1492 = vld [vmem:[%s0 + $0x14c] sm:$0x1]
    %v1493 = vld [vmem:[%s0 + $0x150] sm:$0xe]
    %v1494 = vld [vmem:[%s0 + $0x154] sm:$0xf]
    %v1495 = vld [vmem:[%s0 + $0x158] sm:$0x1]
    %v1496 = vld [vmem:[%s0 + $0x15c] sm:$0xe]
    %v1497 = vld [vmem:[%s0 + $0x160] sm:$0xf]
    %v1498 = vld [vmem:[%s0 + $0x164] sm:$0x1]
    %v1499 = vld [vmem:[%s0 + $0x168] sm:$0xe]
    %v1500 = vld [vmem:[%s0 + $0x16c] sm:$0xf]
    %v1501 = vld [vmem:[%s0 + $0x170] sm:$0x1]
    %v1502 = vld [vmem:[%s0 + $0x174] sm:$0xe]
    %v1503 = vld [vmem:[%s0 + $0x178] sm:$0xf]
    %v1504 = vld [vmem:[%s0 + $0x17c] sm:$0x1]
    %v1505 = vld [vmem:[%s0 + $0x180] sm:$0xe]
    %v1506 = vld [vmem:[%s0 + $0x184] sm:$0xf]
    %v1507 = vld [vmem:[%s0 + $0x188] sm:$0x1]
    %v1508 = vld [vmem:[%s0 + $0x18c] sm:$0xe]
    %v1509 = vld [vmem:[%s0 + $0x190] sm:$0xf]
    %v1510 = vld [vmem:[%s0 + $0x194] sm:$0x1]
    %vm1607 = vcmask 1042432
    %vm1608 = vcmask 1046532
    %vm1609 = vmor %vm1607, %vm1608
    %v1610 = vrot.slane %v1415, 5
    %v1611 = vrot.slane %v1610, 4
    %v1612 = vrot.slane %v1416, 5
    %v1613 = vsel %vm1609, %v1611, %v1612
    %v1614 = vrot.slane %v1612, 4
    %v1615 = vrot.slane %v1417, 5
    %v1616 = vsel %vm1609, %v1614, %v1615
    %v1617 = vrot.slane %v1418, 5
    %v1618 = vrot.slane %v1617, 4
    %v1619 = vrot.slane %v1419, 5
    %v1620 = vsel %vm1609, %v1618, %v1619
    %v1621 = vrot.slane %v1619, 4
    %v1622 = vrot.slane %v1420, 5
    %v1623 = vsel %vm1609, %v1621, %v1622
    %v1624 = vrot.slane %v1421, 5
    %v1625 = vrot.slane %v1624, 4
    %v1626 = vrot.slane %v1422, 5
    %v1627 = vsel %vm1609, %v1625, %v1626
    %v1628 = vrot.slane %v1626, 4
    %v1629 = vrot.slane %v1423, 5
    %v1630 = vsel %vm1609, %v1628, %v1629
    %v1631 = vrot.slane %v1424, 5
    %v1632 = vrot.slane %v1631, 4
    %v1633 = vrot.slane %v1425, 5
    %v1634 = vsel %vm1609, %v1632, %v1633
    %v1635 = vrot.slane %v1633, 4
    %v1636 = vrot.slane %v1426, 5
    %v1637 = vsel %vm1609, %v1635, %v1636
    %v1638 = vrot.slane %v1427, 5
    %v1639 = vrot.slane %v1638, 4
    %v1640 = vrot.slane %v1428, 5
    %v1641 = vsel %vm1609, %v1639, %v1640
    %v1642 = vrot.slane %v1640, 4
    %v1643 = vrot.slane %v1429, 5
    %v1644 = vsel %vm1609, %v1642, %v1643
    %v1645 = vrot.slane %v1430, 5
    %v1646 = vrot.slane %v1645, 4
    %v1647 = vrot.slane %v1431, 5
    %v1648 = vsel %vm1609, %v1646, %v1647
    %v1649 = vrot.slane %v1647, 4
    %v1650 = vrot.slane %v1432, 5
    %v1651 = vsel %vm1609, %v1649, %v1650
    %v1652 = vrot.slane %v1433, 5
    %v1653 = vrot.slane %v1652, 4
    %v1654 = vrot.slane %v1434, 5
    %v1655 = vsel %vm1609, %v1653, %v1654
    %v1656 = vrot.slane %v1654, 4
    %v1657 = vrot.slane %v1435, 5
    %v1658 = vsel %vm1609, %v1656, %v1657
    %v1659 = vrot.slane %v1436, 5
    %v1660 = vrot.slane %v1659, 4
    %v1661 = vrot.slane %v1437, 5
    %v1662 = vsel %vm1609, %v1660, %v1661
    %v1663 = vrot.slane %v1661, 4
    %v1664 = vrot.slane %v1438, 5
    %v1665 = vsel %vm1609, %v1663, %v1664
    %v1666 = vrot.slane %v1439, 5
    %v1667 = vrot.slane %v1666, 4
    %v1668 = vrot.slane %v1440, 5
    %v1669 = vsel %vm1609, %v1667, %v1668
    %v1670 = vrot.slane %v1668, 4
    %v1671 = vrot.slane %v1441, 5
    %v1672 = vsel %vm1609, %v1670, %v1671
    %v1673 = vrot.slane %v1442, 5
    %v1674 = vrot.slane %v1673, 4
    %v1675 = vrot.slane %v1443, 5
    %v1676 = vsel %vm1609, %v1674, %v1675
    %v1677 = vrot.slane %v1675, 4
    %v1678 = vrot.slane %v1444, 5
    %v1679 = vsel %vm1609, %v1677, %v1678
    %v1680 = vrot.slane %v1445, 5
    %v1681 = vrot.slane %v1680, 4
    %v1682 = vrot.slane %v1446, 5
    %v1683 = vsel %vm1609, %v1681, %v1682
    %v1684 = vrot.slane %v1682, 4
    %v1685 = vrot.slane %v1447, 5
    %v1686 = vsel %vm1609, %v1684, %v1685
    %v1687 = vrot.slane %v1448, 5
    %v1688 = vrot.slane %v1687, 4
    %v1689 = vrot.slane %v1449, 5
    %v1690 = vsel %vm1609, %v1688, %v1689
    %v1691 = vrot.slane %v1689, 4
    %v1692 = vrot.slane %v1450, 5
    %v1693 = vsel %vm1609, %v1691, %v1692
    %v1694 = vrot.slane %v1451, 5
    %v1695 = vrot.slane %v1694, 4
    %v1696 = vrot.slane %v1452, 5
    %v1697 = vsel %vm1609, %v1695, %v1696
    %v1698 = vrot.slane %v1696, 4
    %v1699 = vrot.slane %v1453, 5
    %v1700 = vsel %vm1609, %v1698, %v1699
    %v1701 = vrot.slane %v1454, 5
    %v1702 = vrot.slane %v1701, 4
    %v1703 = vrot.slane %v1455, 5
    %v1704 = vsel %vm1609, %v1702, %v1703
    %v1705 = vrot.slane %v1703, 4
    %v1706 = vrot.slane %v1456, 5
    %v1707 = vsel %vm1609, %v1705, %v1706
    %v1708 = vrot.slane %v1457, 5
    %v1709 = vrot.slane %v1708, 4
    %v1710 = vrot.slane %v1458, 5
    %v1711 = vsel %vm1609, %v1709, %v1710
    %v1712 = vrot.slane %v1710, 4
    %v1713 = vrot.slane %v1459, 5
    %v1714 = vsel %vm1609, %v1712, %v1713
    %v1715 = vrot.slane %v1460, 5
    %v1716 = vrot.slane %v1715, 4
    %v1717 = vrot.slane %v1461, 5
    %v1718 = vsel %vm1609, %v1716, %v1717
    %v1719 = vrot.slane %v1717, 4
    %v1720 = vrot.slane %v1462, 5
    %v1721 = vsel %vm1609, %v1719, %v1720
    %v1722 = vrot.slane %v1463, 5
    %v1723 = vrot.slane %v1722, 4
    %v1724 = vrot.slane %v1464, 5
    %v1725 = vsel %vm1609, %v1723, %v1724
    %v1726 = vrot.slane %v1724, 4
    %v1727 = vrot.slane %v1465, 5
    %v1728 = vsel %vm1609, %v1726, %v1727
    %v1729 = vrot.slane %v1466, 5
    %v1730 = vrot.slane %v1729, 4
    %v1731 = vrot.slane %v1467, 5
    %v1732 = vsel %vm1609, %v1730, %v1731
    %v1733 = vrot.slane %v1731, 4
    %v1734 = vrot.slane %v1468, 5
    %v1735 = vsel %vm1609, %v1733, %v1734
    %v1736 = vrot.slane %v1469, 5
    %v1737 = vrot.slane %v1736, 4
    %v1738 = vrot.slane %v1470, 5
    %v1739 = vsel %vm1609, %v1737, %v1738
    %v1740 = vrot.slane %v1738, 4
    %v1741 = vrot.slane %v1471, 5
    %v1742 = vsel %vm1609, %v1740, %v1741
    %v1743 = vrot.slane %v1472, 5
    %v1744 = vrot.slane %v1743, 4
    %v1745 = vrot.slane %v1473, 5
    %v1746 = vsel %vm1609, %v1744, %v1745
    %v1747 = vrot.slane %v1745, 4
    %v1748 = vrot.slane %v1474, 5
    %v1749 = vsel %vm1609, %v1747, %v1748
    %v1750 = vrot.slane %v1475, 5
    %v1751 = vrot.slane %v1750, 4
    %v1752 = vrot.slane %v1476, 5
    %v1753 = vsel %vm1609, %v1751, %v1752
    %v1754 = vrot.slane %v1752, 4
    %v1755 = vrot.slane %v1477, 5
    %v1756 = vsel %vm1609, %v1754, %v1755
    %v1757 = vrot.slane %v1478, 5
    %v1758 = vrot.slane %v1757, 4
    %v1759 = vrot.slane %v1479, 5
    %v1760 = vsel %vm1609, %v1758, %v1759
    %v1761 = vrot.slane %v1759, 4
    %v1762 = vrot.slane %v1480, 5
    %v1763 = vsel %vm1609, %v1761, %v1762
    %v1764 = vrot.slane %v1481, 5
    %v1765 = vrot.slane %v1764, 4
    %v1766 = vrot.slane %v1482, 5
    %v1767 = vsel %vm1609, %v1765, %v1766
    %v1768 = vrot.slane %v1766, 4
    %v1769 = vrot.slane %v1483, 5
    %v1770 = vsel %vm1609, %v1768, %v1769
    %v1771 = vrot.slane %v1484, 5
    %v1772 = vrot.slane %v1771, 4
    %v1773 = vrot.slane %v1485, 5
    %v1774 = vsel %vm1609, %v1772, %v1773
    %v1775 = vrot.slane %v1773, 4
    %v1776 = vrot.slane %v1486, 5
    %v1777 = vsel %vm1609, %v1775, %v1776
    %v1778 = vrot.slane %v1487, 5
    %v1779 = vrot.slane %v1778, 4
    %v1780 = vrot.slane %v1488, 5
    %v1781 = vsel %vm1609, %v1779, %v1780
    %v1782 = vrot.slane %v1780, 4
    %v1783 = vrot.slane %v1489, 5
    %v1784 = vsel %vm1609, %v1782, %v1783
    %v1785 = vrot.slane %v1490, 5
    %v1786 = vrot.slane %v1785, 4
    %v1787 = vrot.slane %v1491, 5
    %v1788 = vsel %vm1609, %v1786, %v1787
    %v1789 = vrot.slane %v1787, 4
    %v1790 = vrot.slane %v1492, 5
    %v1791 = vsel %vm1609, %v1789, %v1790
    %v1792 = vrot.slane %v1493, 5
    %v1793 = vrot.slane %v1792, 4
    %v1794 = vrot.slane %v1494, 5
    %v1795 = vsel %vm1609, %v1793, %v1794
    %v1796 = vrot.slane %v1794, 4
    %v1797 = vrot.slane %v1495, 5
    %v1798 = vsel %vm1609, %v1796, %v1797
    %v1799 = vrot.slane %v1496, 5
    %v1800 = vrot.slane %v1799, 4
    %v1801 = vrot.slane %v1497, 5
    %v1802 = vsel %vm1609, %v1800, %v1801
    %v1803 = vrot.slane %v1801, 4
    %v1804 = vrot.slane %v1498, 5
    %v1805 = vsel %vm1609, %v1803, %v1804
    %v1806 = vrot.slane %v1499, 5
    %v1807 = vrot.slane %v1806, 4
    %v1808 = vrot.slane %v1500, 5
    %v1809 = vsel %vm1609, %v1807, %v1808
    %v1810 = vrot.slane %v1808, 4
    %v1811 = vrot.slane %v1501, 5
    %v1812 = vsel %vm1609, %v1810, %v1811
    %v1813 = vrot.slane %v1502, 5
    %v1814 = vrot.slane %v1813, 4
    %v1815 = vrot.slane %v1503, 5
    %v1816 = vsel %vm1609, %v1814, %v1815
    %v1817 = vrot.slane %v1815, 4
    %v1818 = vrot.slane %v1504, 5
    %v1819 = vsel %vm1609, %v1817, %v1818
    %v1820 = vrot.slane %v1505, 5
    %v1821 = vrot.slane %v1820, 4
    %v1822 = vrot.slane %v1506, 5
    %v1823 = vsel %vm1609, %v1821, %v1822
    %v1824 = vrot.slane %v1822, 4
    %v1825 = vrot.slane %v1507, 5
    %v1826 = vsel %vm1609, %v1824, %v1825
    %v1827 = vrot.slane %v1508, 5
    %v1828 = vrot.slane %v1827, 4
    %v1829 = vrot.slane %v1509, 5
    %v1830 = vsel %vm1609, %v1828, %v1829
    %v1831 = vrot.slane %v1829, 4
    %v1832 = vrot.slane %v1510, 5
    %v1833 = vsel %vm1609, %v1831, %v1832
    %v1834 = vunpack.c.l.b16 %v1613
    %v1835 = vunpack.c.l.b16 %v1616
    %v1836 = vunpack.c.l.b16 %v1620
    %v1837 = vunpack.c.l.b16 %v1623
    %v1838 = vunpack.c.l.b16 %v1627
    %v1839 = vunpack.c.l.b16 %v1630
    %v1840 = vunpack.c.l.b16 %v1634
    %v1841 = vunpack.c.l.b16 %v1637
    %v1842 = vunpack.c.l.b16 %v1641
    %v1843 = vunpack.c.l.b16 %v1644
    %v1844 = vunpack.c.l.b16 %v1648
    %v1845 = vunpack.c.l.b16 %v1651
    %v1846 = vunpack.c.l.b16 %v1655
    %v1847 = vunpack.c.l.b16 %v1658
    %v1848 = vunpack.c.l.b16 %v1662
    %v1849 = vunpack.c.l.b16 %v1665
    %v1850 = vunpack.c.l.b16 %v1669
    %v1851 = vunpack.c.l.b16 %v1672
    %v1852 = vunpack.c.l.b16 %v1676
    %v1853 = vunpack.c.l.b16 %v1679
    %v1854 = vunpack.c.l.b16 %v1683
    %v1855 = vunpack.c.l.b16 %v1686
    %v1856 = vunpack.c.l.b16 %v1690
    %v1857 = vunpack.c.l.b16 %v1693
    %v1858 = vunpack.c.l.b16 %v1697
    %v1859 = vunpack.c.l.b16 %v1700
    %v1860 = vunpack.c.l.b16 %v1704
    %v1861 = vunpack.c.l.b16 %v1707
    %v1862 = vunpack.c.l.b16 %v1711
    %v1863 = vunpack.c.l.b16 %v1714
    %v1864 = vunpack.c.l.b16 %v1718
    %v1865 = vunpack.c.l.b16 %v1721
    %v1866 = vunpack.c.l.b16 %v1725
    %v1867 = vunpack.c.l.b16 %v1728
    %v1868 = vunpack.c.l.b16 %v1732
    %v1869 = vunpack.c.l.b16 %v1735
    %v1870 = vunpack.c.l.b16 %v1739
    %v1871 = vunpack.c.l.b16 %v1742
    %v1872 = vunpack.c.l.b16 %v1746
    %v1873 = vunpack.c.l.b16 %v1749
    %v1874 = vunpack.c.l.b16 %v1753
    %v1875 = vunpack.c.l.b16 %v1756
    %v1876 = vunpack.c.l.b16 %v1760
    %v1877 = vunpack.c.l.b16 %v1763
    %v1878 = vunpack.c.l.b16 %v1767
    %v1879 = vunpack.c.l.b16 %v1770
    %v1880 = vunpack.c.l.b16 %v1774
    %v1881 = vunpack.c.l.b16 %v1777
    %v1882 = vunpack.c.l.b16 %v1781
    %v1883 = vunpack.c.l.b16 %v1784
    %v1884 = vunpack.c.l.b16 %v1788
    %v1885 = vunpack.c.l.b16 %v1791
    %v1886 = vunpack.c.l.b16 %v1795
    %v1887 = vunpack.c.l.b16 %v1798
    %v1888 = vunpack.c.l.b16 %v1802
    %v1889 = vunpack.c.l.b16 %v1805
    %v1890 = vunpack.c.l.b16 %v1809
    %v1891 = vunpack.c.l.b16 %v1812
    %v1892 = vunpack.c.l.b16 %v1816
    %v1893 = vunpack.c.l.b16 %v1819
    %v1894 = vunpack.c.l.b16 %v1823
    %v1895 = vunpack.c.l.b16 %v1826
    %v1896 = vunpack.c.l.b16 %v1830
    %v1897 = vunpack.c.l.b16 %v1833
    %v1898 = vpack.c.b16 %v1835, %v1834
    %v1899 = vpack.c.b16 %v1837, %v1836
    %v1900 = vpack.c.b16 %v1839, %v1838
    %v1901 = vpack.c.b16 %v1841, %v1840
    %v1902 = vpack.c.b16 %v1843, %v1842
    %v1903 = vpack.c.b16 %v1845, %v1844
    %v1904 = vpack.c.b16 %v1847, %v1846
    %v1905 = vpack.c.b16 %v1849, %v1848
    %v1906 = vpack.c.b16 %v1851, %v1850
    %v1907 = vpack.c.b16 %v1853, %v1852
    %v1908 = vpack.c.b16 %v1855, %v1854
    %v1909 = vpack.c.b16 %v1857, %v1856
    %v1910 = vpack.c.b16 %v1859, %v1858
    %v1911 = vpack.c.b16 %v1861, %v1860
    %v1912 = vpack.c.b16 %v1863, %v1862
    %v1913 = vpack.c.b16 %v1865, %v1864
    %v1914 = vpack.c.b16 %v1867, %v1866
    %v1915 = vpack.c.b16 %v1869, %v1868
    %v1916 = vpack.c.b16 %v1871, %v1870
    %v1917 = vpack.c.b16 %v1873, %v1872
    %v1918 = vpack.c.b16 %v1875, %v1874
    %v1919 = vpack.c.b16 %v1877, %v1876
    %v1920 = vpack.c.b16 %v1879, %v1878
    %v1921 = vpack.c.b16 %v1881, %v1880
    %v1922 = vpack.c.b16 %v1883, %v1882
    %v1923 = vpack.c.b16 %v1885, %v1884
    %v1924 = vpack.c.b16 %v1887, %v1886
    %v1925 = vpack.c.b16 %v1889, %v1888
    %v1926 = vpack.c.b16 %v1891, %v1890
    %v1927 = vpack.c.b16 %v1893, %v1892
    %v1928 = vpack.c.b16 %v1895, %v1894
    %v1929 = vpack.c.b16 %v1897, %v1896
    %1930 = vrot.lane.b32.xlu0 %v1898, 8
    %v1931 = vpop.permute.xlu0 %1930
    %1932 = vrot.lane.b32.xlu0 %v1899, 8
    %v1933 = vpop.permute.xlu0 %1932
    %1934 = vrot.lane.b32.xlu0 %v1900, 8
    %v1935 = vpop.permute.xlu0 %1934
    %1936 = vrot.lane.b32.xlu0 %v1901, 8
    %v1937 = vpop.permute.xlu0 %1936
    %1938 = vrot.lane.b32.xlu0 %v1902, 8
    %v1939 = vpop.permute.xlu0 %1938
    %1940 = vrot.lane.b32.xlu0 %v1903, 8
    %v1941 = vpop.permute.xlu0 %1940
    %1942 = vrot.lane.b32.xlu0 %v1904, 8
    %v1943 = vpop.permute.xlu0 %1942
    %1944 = vrot.lane.b32.xlu0 %v1905, 8
    %v1945 = vpop.permute.xlu0 %1944
    %1946 = vrot.lane.b32.xlu0 %v1906, 8
    %v1947 = vpop.permute.xlu0 %1946
    %1948 = vrot.lane.b32.xlu0 %v1907, 8
    %v1949 = vpop.permute.xlu0 %1948
    %1950 = vrot.lane.b32.xlu0 %v1908, 8
    %v1951 = vpop.permute.xlu0 %1950
    %1952 = vrot.lane.b32.xlu0 %v1909, 8
    %v1953 = vpop.permute.xlu0 %1952
    %1954 = vrot.lane.b32.xlu0 %v1910, 8
    %v1955 = vpop.permute.xlu0 %1954
    %1956 = vrot.lane.b32.xlu0 %v1911, 8
    %v1957 = vpop.permute.xlu0 %1956
    %1958 = vrot.lane.b32.xlu0 %v1912, 8
    %v1959 = vpop.permute.xlu0 %1958
    %1960 = vrot.lane.b32.xlu0 %v1913, 8
    %v1961 = vpop.permute.xlu0 %1960
    %1962 = vrot.lane.b32.xlu0 %v1914, 8
    %v1963 = vpop.permute.xlu0 %1962
    %1964 = vrot.lane.b32.xlu0 %v1915, 8
    %v1965 = vpop.permute.xlu0 %1964
    %1966 = vrot.lane.b32.xlu0 %v1916, 8
    %v1967 = vpop.permute.xlu0 %1966
    %1968 = vrot.lane.b32.xlu0 %v1917, 8
    %v1969 = vpop.permute.xlu0 %1968
    %1970 = vrot.lane.b32.xlu0 %v1918, 8
    %v1971 = vpop.permute.xlu0 %1970
    %1972 = vrot.lane.b32.xlu0 %v1919, 8
    %v1973 = vpop.permute.xlu0 %1972
    %1974 = vrot.lane.b32.xlu0 %v1920, 8
    %v1975 = vpop.permute.xlu0 %1974
    %1976 = vrot.lane.b32.xlu0 %v1921, 8
    %v1977 = vpop.permute.xlu0 %1976
    %1978 = vrot.lane.b32.xlu0 %v1922, 8
    %v1979 = vpop.permute.xlu0 %1978
    %1980 = vrot.lane.b32.xlu0 %v1923, 8
    %v1981 = vpop.permute.xlu0 %1980
    %1982 = vrot.lane.b32.xlu0 %v1924, 8
    %v1983 = vpop.permute.xlu0 %1982
    %1984 = vrot.lane.b32.xlu0 %v1925, 8
    %v1985 = vpop.permute.xlu0 %1984
    %1986 = vrot.lane.b32.xlu0 %v1926, 8
    %v1987 = vpop.permute.xlu0 %1986
    %1988 = vrot.lane.b32.xlu0 %v1927, 8
    %v1989 = vpop.permute.xlu0 %1988
    %1990 = vrot.lane.b32.xlu0 %v1928, 8
    %v1991 = vpop.permute.xlu0 %1990
    %1992 = vrot.lane.b32.xlu0 %v1929, 8
    %v1993 = vpop.permute.xlu0 %1992
    %vm2026 = vcmask 97344
    %2027 = vst.msk [vmem:[#allocation3] sm:$0xff] %vm2026, %v1931
    %2028 = vst.msk [vmem:[#allocation3 + $0x8] sm:$0xff] %vm2026, %v1933
    %2029 = vst.msk [vmem:[#allocation3 + $0x10] sm:$0xff] %vm2026, %v1935
    %2030 = vst.msk [vmem:[#allocation3 + $0x18] sm:$0xff] %vm2026, %v1937
    %2031 = vst.msk [vmem:[#allocation3 + $0x20] sm:$0xff] %vm2026, %v1939
    %2032 = vst.msk [vmem:[#allocation3 + $0x28] sm:$0xff] %vm2026, %v1941
    %2033 = vst.msk [vmem:[#allocation3 + $0x30] sm:$0xff] %vm2026, %v1943
    %2034 = vst.msk [vmem:[#allocation3 + $0x38] sm:$0xff] %vm2026, %v1945
    %2035 = vst.msk [vmem:[#allocation3 + $0x40] sm:$0xff] %vm2026, %v1947
    %2036 = vst.msk [vmem:[#allocation3 + $0x48] sm:$0xff] %vm2026, %v1949
    %2037 = vst.msk [vmem:[#allocation3 + $0x50] sm:$0xff] %vm2026, %v1951
    %2038 = vst.msk [vmem:[#allocation3 + $0x58] sm:$0xff] %vm2026, %v1953
    %2039 = vst.msk [vmem:[#allocation3 + $0x60] sm:$0xff] %vm2026, %v1955
    %2040 = vst.msk [vmem:[#allocation3 + $0x68] sm:$0xff] %vm2026, %v1957
    %2041 = vst.msk [vmem:[#allocation3 + $0x70] sm:$0xff] %vm2026, %v1959
    %2042 = vst.msk [vmem:[#allocation3 + $0x78] sm:$0xff] %vm2026, %v1961
    %2043 = vst.msk [vmem:[#allocation3 + $0x80] sm:$0xff] %vm2026, %v1963
    %2044 = vst.msk [vmem:[#allocation3 + $0x88] sm:$0xff] %vm2026, %v1965
    %2045 = vst.msk [vmem:[#allocation3 + $0x90] sm:$0xff] %vm2026, %v1967
    %2046 = vst.msk [vmem:[#allocation3 + $0x98] sm:$0xff] %vm2026, %v1969
    %2047 = vst.msk [vmem:[#allocation3 + $0xa0] sm:$0xff] %vm2026, %v1971
    %2048 = vst.msk [vmem:[#allocation3 + $0xa8] sm:$0xff] %vm2026, %v1973
    %2049 = vst.msk [vmem:[#allocation3 + $0xb0] sm:$0xff] %vm2026, %v1975
    %2050 = vst.msk [vmem:[#allocation3 + $0xb8] sm:$0xff] %vm2026, %v1977
    %2051 = vst.msk [vmem:[#allocation3 + $0xc0] sm:$0xff] %vm2026, %v1979
    %2052 = vst.msk [vmem:[#allocation3 + $0xc8] sm:$0xff] %vm2026, %v1981
    %2053 = vst.msk [vmem:[#allocation3 + $0xd0] sm:$0xff] %vm2026, %v1983
    %2054 = vst.msk [vmem:[#allocation3 + $0xd8] sm:$0xff] %vm2026, %v1985
    %2055 = vst.msk [vmem:[#allocation3 + $0xe0] sm:$0xff] %vm2026, %v1987
    %2056 = vst.msk [vmem:[#allocation3 + $0xe8] sm:$0xff] %vm2026, %v1989
    %2057 = vst.msk [vmem:[#allocation3 + $0xf0] sm:$0xff] %vm2026, %v1991
    %2058 = vst.msk [vmem:[#allocation3 + $0xf8] sm:$0xff] %vm2026, %v1993
    %s2059 = scalar_lea.vmem %s0, 12
    %v2060 = vld [vmem:[%s2059] sm:$0xf]
    %v2061 = vld [vmem:[%s2059 + $0x4] sm:$0xf]
    %v2062 = vld [vmem:[%s2059 + $0xc] sm:$0xf]
    %v2063 = vld [vmem:[%s2059 + $0x10] sm:$0xf]
    %v2064 = vld [vmem:[%s2059 + $0x18] sm:$0xf]
    %v2065 = vld [vmem:[%s2059 + $0x1c] sm:$0xf]
    %v2066 = vld [vmem:[%s2059 + $0x24] sm:$0xf]
    %v2067 = vld [vmem:[%s2059 + $0x28] sm:$0xf]
    %v2068 = vld [vmem:[%s2059 + $0x30] sm:$0xf]
    %v2069 = vld [vmem:[%s2059 + $0x34] sm:$0xf]
    %v2070 = vld [vmem:[%s2059 + $0x3c] sm:$0xf]
    %v2071 = vld [vmem:[%s2059 + $0x40] sm:$0xf]
    %v2072 = vld [vmem:[%s2059 + $0x48] sm:$0xf]
    %v2073 = vld [vmem:[%s2059 + $0x4c] sm:$0xf]
    %v2074 = vld [vmem:[%s2059 + $0x54] sm:$0xf]
    %v2075 = vld [vmem:[%s2059 + $0x58] sm:$0xf]
    %v2076 = vld [vmem:[%s2059 + $0x60] sm:$0xf]
    %v2077 = vld [vmem:[%s2059 + $0x64] sm:$0xf]
    %v2078 = vld [vmem:[%s2059 + $0x6c] sm:$0xf]
    %v2079 = vld [vmem:[%s2059 + $0x70] sm:$0xf]
    %v2080 = vld [vmem:[%s2059 + $0x78] sm:$0xf]
    %v2081 = vld [vmem:[%s2059 + $0x7c] sm:$0xf]
    %v2082 = vld [vmem:[%s2059 + $0x84] sm:$0xf]
    %v2083 = vld [vmem:[%s2059 + $0x88] sm:$0xf]
    %v2084 = vld [vmem:[%s2059 + $0x90] sm:$0xf]
    %v2085 = vld [vmem:[%s2059 + $0x94] sm:$0xf]
    %v2086 = vld [vmem:[%s2059 + $0x9c] sm:$0xf]
    %v2087 = vld [vmem:[%s2059 + $0xa0] sm:$0xf]
    %v2088 = vld [vmem:[%s2059 + $0xa8] sm:$0xf]
    %v2089 = vld [vmem:[%s2059 + $0xac] sm:$0xf]
    %v2090 = vld [vmem:[%s2059 + $0xb4] sm:$0xf]
    %v2091 = vld [vmem:[%s2059 + $0xb8] sm:$0xf]
    %v2092 = vld [vmem:[%s2059 + $0xd8] sm:$0xf]
    %v2093 = vld [vmem:[%s2059 + $0xdc] sm:$0xf]
    %v2094 = vld [vmem:[%s2059 + $0xe4] sm:$0xf]
    %v2095 = vld [vmem:[%s2059 + $0xe8] sm:$0xf]
    %v2096 = vld [vmem:[%s2059 + $0xf0] sm:$0xf]
    %v2097 = vld [vmem:[%s2059 + $0xf4] sm:$0xf]
    %v2098 = vld [vmem:[%s2059 + $0xfc] sm:$0xf]
    %v2099 = vld [vmem:[%s2059 + $0x100] sm:$0xf]
    %v2100 = vld [vmem:[%s2059 + $0x108] sm:$0xf]
    %v2101 = vld [vmem:[%s2059 + $0x10c] sm:$0xf]
    %v2102 = vld [vmem:[%s2059 + $0x114] sm:$0xf]
    %v2103 = vld [vmem:[%s2059 + $0x118] sm:$0xf]
    %v2104 = vld [vmem:[%s2059 + $0x120] sm:$0xf]
    %v2105 = vld [vmem:[%s2059 + $0x124] sm:$0xf]
    %v2106 = vld [vmem:[%s2059 + $0x12c] sm:$0xf]
    %v2107 = vld [vmem:[%s2059 + $0x130] sm:$0xf]
    %v2108 = vld [vmem:[%s2059 + $0x138] sm:$0xf]
    %v2109 = vld [vmem:[%s2059 + $0x13c] sm:$0xf]
    %v2110 = vld [vmem:[%s2059 + $0x144] sm:$0xf]
    %v2111 = vld [vmem:[%s2059 + $0x148] sm:$0xf]
    %v2112 = vld [vmem:[%s2059 + $0x150] sm:$0xf]
    %v2113 = vld [vmem:[%s2059 + $0x154] sm:$0xf]
    %v2114 = vld [vmem:[%s2059 + $0x15c] sm:$0xf]
    %v2115 = vld [vmem:[%s2059 + $0x160] sm:$0xf]
    %v2116 = vld [vmem:[%s2059 + $0x168] sm:$0xf]
    %v2117 = vld [vmem:[%s2059 + $0x16c] sm:$0xf]
    %v2118 = vld [vmem:[%s2059 + $0x174] sm:$0xf]
    %v2119 = vld [vmem:[%s2059 + $0x178] sm:$0xf]
    %v2120 = vld [vmem:[%s2059 + $0x180] sm:$0xf]
    %v2121 = vld [vmem:[%s2059 + $0x184] sm:$0xf]
    %v2122 = vld [vmem:[%s2059 + $0x18c] sm:$0xf]
    %v2123 = vld [vmem:[%s2059 + $0x190] sm:$0xf]
    %v2188 = vunpack.c.l.b16 %v2060
    %v2189 = vunpack.c.l.b16 %v2061
    %v2190 = vunpack.c.l.b16 %v2062
    %v2191 = vunpack.c.l.b16 %v2063
    %v2192 = vunpack.c.l.b16 %v2064
    %v2193 = vunpack.c.l.b16 %v2065
    %v2194 = vunpack.c.l.b16 %v2066
    %v2195 = vunpack.c.l.b16 %v2067
    %v2196 = vunpack.c.l.b16 %v2068
    %v2197 = vunpack.c.l.b16 %v2069
    %v2198 = vunpack.c.l.b16 %v2070
    %v2199 = vunpack.c.l.b16 %v2071
    %v2200 = vunpack.c.l.b16 %v2072
    %v2201 = vunpack.c.l.b16 %v2073
    %v2202 = vunpack.c.l.b16 %v2074
    %v2203 = vunpack.c.l.b16 %v2075
    %v2204 = vunpack.c.l.b16 %v2076
    %v2205 = vunpack.c.l.b16 %v2077
    %v2206 = vunpack.c.l.b16 %v2078
    %v2207 = vunpack.c.l.b16 %v2079
    %v2208 = vunpack.c.l.b16 %v2080
    %v2209 = vunpack.c.l.b16 %v2081
    %v2210 = vunpack.c.l.b16 %v2082
    %v2211 = vunpack.c.l.b16 %v2083
    %v2212 = vunpack.c.l.b16 %v2084
    %v2213 = vunpack.c.l.b16 %v2085
    %v2214 = vunpack.c.l.b16 %v2086
    %v2215 = vunpack.c.l.b16 %v2087
    %v2216 = vunpack.c.l.b16 %v2088
    %v2217 = vunpack.c.l.b16 %v2089
    %v2218 = vunpack.c.l.b16 %v2090
    %v2219 = vunpack.c.l.b16 %v2091
    %v2220 = vunpack.c.l.b16 %v2092
    %v2221 = vunpack.c.l.b16 %v2093
    %v2222 = vunpack.c.l.b16 %v2094
    %v2223 = vunpack.c.l.b16 %v2095
    %v2224 = vunpack.c.l.b16 %v2096
    %v2225 = vunpack.c.l.b16 %v2097
    %v2226 = vunpack.c.l.b16 %v2098
    %v2227 = vunpack.c.l.b16 %v2099
    %v2228 = vunpack.c.l.b16 %v2100
    %v2229 = vunpack.c.l.b16 %v2101
    %v2230 = vunpack.c.l.b16 %v2102
    %v2231 = vunpack.c.l.b16 %v2103
    %v2232 = vunpack.c.l.b16 %v2104
    %v2233 = vunpack.c.l.b16 %v2105
    %v2234 = vunpack.c.l.b16 %v2106
    %v2235 = vunpack.c.l.b16 %v2107
    %v2236 = vunpack.c.l.b16 %v2108
    %v2237 = vunpack.c.l.b16 %v2109
    %v2238 = vunpack.c.l.b16 %v2110
    %v2239 = vunpack.c.l.b16 %v2111
    %v2240 = vunpack.c.l.b16 %v2112
    %v2241 = vunpack.c.l.b16 %v2113
    %v2242 = vunpack.c.l.b16 %v2114
    %v2243 = vunpack.c.l.b16 %v2115
    %v2244 = vunpack.c.l.b16 %v2116
    %v2245 = vunpack.c.l.b16 %v2117
    %v2246 = vunpack.c.l.b16 %v2118
    %v2247 = vunpack.c.l.b16 %v2119
    %v2248 = vunpack.c.l.b16 %v2120
    %v2249 = vunpack.c.l.b16 %v2121
    %v2250 = vunpack.c.l.b16 %v2122
    %v2251 = vunpack.c.l.b16 %v2123
    %v2252 = vpack.c.b16 %v2189, %v2188
    %v2253 = vpack.c.b16 %v2191, %v2190
    %v2254 = vpack.c.b16 %v2193, %v2192
    %v2255 = vpack.c.b16 %v2195, %v2194
    %v2256 = vpack.c.b16 %v2197, %v2196
    %v2257 = vpack.c.b16 %v2199, %v2198
    %v2258 = vpack.c.b16 %v2201, %v2200
    %v2259 = vpack.c.b16 %v2203, %v2202
    %v2260 = vpack.c.b16 %v2205, %v2204
    %v2261 = vpack.c.b16 %v2207, %v2206
    %v2262 = vpack.c.b16 %v2209, %v2208
    %v2263 = vpack.c.b16 %v2211, %v2210
    %v2264 = vpack.c.b16 %v2213, %v2212
    %v2265 = vpack.c.b16 %v2215, %v2214
    %v2266 = vpack.c.b16 %v2217, %v2216
    %v2267 = vpack.c.b16 %v2219, %v2218
    %v2268 = vpack.c.b16 %v2221, %v2220
    %v2269 = vpack.c.b16 %v2223, %v2222
    %v2270 = vpack.c.b16 %v2225, %v2224
    %v2271 = vpack.c.b16 %v2227, %v2226
    %v2272 = vpack.c.b16 %v2229, %v2228
    %v2273 = vpack.c.b16 %v2231, %v2230
    %v2274 = vpack.c.b16 %v2233, %v2232
    %v2275 = vpack.c.b16 %v2235, %v2234
    %v2276 = vpack.c.b16 %v2237, %v2236
    %v2277 = vpack.c.b16 %v2239, %v2238
    %v2278 = vpack.c.b16 %v2241, %v2240
    %v2279 = vpack.c.b16 %v2243, %v2242
    %v2280 = vpack.c.b16 %v2245, %v2244
    %v2281 = vpack.c.b16 %v2247, %v2246
    %v2282 = vpack.c.b16 %v2249, %v2248
    %v2283 = vpack.c.b16 %v2251, %v2250
    %2284 = vrot.lane.b32.xlu0 %v2252, 12
    %v2285 = vpop.permute.xlu0 %2284
    %2286 = vrot.lane.b32.xlu0 %v2253, 12
    %v2287 = vpop.permute.xlu0 %2286
    %2288 = vrot.lane.b32.xlu0 %v2254, 12
    %v2289 = vpop.permute.xlu0 %2288
    %2290 = vrot.lane.b32.xlu0 %v2255, 12
    %v2291 = vpop.permute.xlu0 %2290
    %2292 = vrot.lane.b32.xlu0 %v2256, 12
    %v2293 = vpop.permute.xlu0 %2292
    %2294 = vrot.lane.b32.xlu0 %v2257, 12
    %v2295 = vpop.permute.xlu0 %2294
    %2296 = vrot.lane.b32.xlu0 %v2258, 12
    %v2297 = vpop.permute.xlu0 %2296
    %2298 = vrot.lane.b32.xlu0 %v2259, 12
    %v2299 = vpop.permute.xlu0 %2298
    %2300 = vrot.lane.b32.xlu0 %v2260, 12
    %v2301 = vpop.permute.xlu0 %2300
    %2302 = vrot.lane.b32.xlu0 %v2261, 12
    %v2303 = vpop.permute.xlu0 %2302
    %2304 = vrot.lane.b32.xlu0 %v2262, 12
    %v2305 = vpop.permute.xlu0 %2304
    %2306 = vrot.lane.b32.xlu0 %v2263, 12
    %v2307 = vpop.permute.xlu0 %2306
    %2308 = vrot.lane.b32.xlu0 %v2264, 12
    %v2309 = vpop.permute.xlu0 %2308
    %2310 = vrot.lane.b32.xlu0 %v2265, 12
    %v2311 = vpop.permute.xlu0 %2310
    %2312 = vrot.lane.b32.xlu0 %v2266, 12
    %v2313 = vpop.permute.xlu0 %2312
    %2314 = vrot.lane.b32.xlu0 %v2267, 12
    %v2315 = vpop.permute.xlu0 %2314
    %2316 = vrot.lane.b32.xlu0 %v2268, 12
    %v2317 = vpop.permute.xlu0 %2316
    %2318 = vrot.lane.b32.xlu0 %v2269, 12
    %v2319 = vpop.permute.xlu0 %2318
    %2320 = vrot.lane.b32.xlu0 %v2270, 12
    %v2321 = vpop.permute.xlu0 %2320
    %2322 = vrot.lane.b32.xlu0 %v2271, 12
    %v2323 = vpop.permute.xlu0 %2322
    %2324 = vrot.lane.b32.xlu0 %v2272, 12
    %v2325 = vpop.permute.xlu0 %2324
    %2326 = vrot.lane.b32.xlu0 %v2273, 12
    %v2327 = vpop.permute.xlu0 %2326
    %2328 = vrot.lane.b32.xlu0 %v2274, 12
    %v2329 = vpop.permute.xlu0 %2328
    %2330 = vrot.lane.b32.xlu0 %v2275, 12
    %v2331 = vpop.permute.xlu0 %2330
    %2332 = vrot.lane.b32.xlu0 %v2276, 12
    %v2333 = vpop.permute.xlu0 %2332
    %2334 = vrot.lane.b32.xlu0 %v2277, 12
    %v2335 = vpop.permute.xlu0 %2334
    %2336 = vrot.lane.b32.xlu0 %v2278, 12
    %v2337 = vpop.permute.xlu0 %2336
    %2338 = vrot.lane.b32.xlu0 %v2279, 12
    %v2339 = vpop.permute.xlu0 %2338
    %2340 = vrot.lane.b32.xlu0 %v2280, 12
    %v2341 = vpop.permute.xlu0 %2340
    %2342 = vrot.lane.b32.xlu0 %v2281, 12
    %v2343 = vpop.permute.xlu0 %2342
    %2344 = vrot.lane.b32.xlu0 %v2282, 12
    %v2345 = vpop.permute.xlu0 %2344
    %2346 = vrot.lane.b32.xlu0 %v2283, 12
    %v2347 = vpop.permute.xlu0 %2346
    %vm2380 = vcmask 130144
    %2381 = vst.msk [vmem:[#allocation3] sm:$0xff] %vm2380, %v2285
    %2382 = vst.msk [vmem:[#allocation3 + $0x8] sm:$0xff] %vm2380, %v2287
    %2383 = vst.msk [vmem:[#allocation3 + $0x10] sm:$0xff] %vm2380, %v2289
    %2384 = vst.msk [vmem:[#allocation3 + $0x18] sm:$0xff] %vm2380, %v2291
    %2385 = vst.msk [vmem:[#allocation3 + $0x20] sm:$0xff] %vm2380, %v2293
    %2386 = vst.msk [vmem:[#allocation3 + $0x28] sm:$0xff] %vm2380, %v2295
    %2387 = vst.msk [vmem:[#allocation3 + $0x30] sm:$0xff] %vm2380, %v2297
    %2388 = vst.msk [vmem:[#allocation3 + $0x38] sm:$0xff] %vm2380, %v2299
    %2389 = vst.msk [vmem:[#allocation3 + $0x40] sm:$0xff] %vm2380, %v2301
    %2390 = vst.msk [vmem:[#allocation3 + $0x48] sm:$0xff] %vm2380, %v2303
    %2391 = vst.msk [vmem:[#allocation3 + $0x50] sm:$0xff] %vm2380, %v2305
    %2392 = vst.msk [vmem:[#allocation3 + $0x58] sm:$0xff] %vm2380, %v2307
    %2393 = vst.msk [vmem:[#allocation3 + $0x60] sm:$0xff] %vm2380, %v2309
    %2394 = vst.msk [vmem:[#allocation3 + $0x68] sm:$0xff] %vm2380, %v2311
    %2395 = vst.msk [vmem:[#allocation3 + $0x70] sm:$0xff] %vm2380, %v2313
    %2396 = vst.msk [vmem:[#allocation3 + $0x78] sm:$0xff] %vm2380, %v2315
    %2397 = vst.msk [vmem:[#allocation3 + $0x80] sm:$0xff] %vm2380, %v2317
    %2398 = vst.msk [vmem:[#allocation3 + $0x88] sm:$0xff] %vm2380, %v2319
    %2399 = vst.msk [vmem:[#allocation3 + $0x90] sm:$0xff] %vm2380, %v2321
    %2400 = vst.msk [vmem:[#allocation3 + $0x98] sm:$0xff] %vm2380, %v2323
    %2401 = vst.msk [vmem:[#allocation3 + $0xa0] sm:$0xff] %vm2380, %v2325
    %2402 = vst.msk [vmem:[#allocation3 + $0xa8] sm:$0xff] %vm2380, %v2327
    %2403 = vst.msk [vmem:[#allocation3 + $0xb0] sm:$0xff] %vm2380, %v2329
    %2404 = vst.msk [vmem:[#allocation3 + $0xb8] sm:$0xff] %vm2380, %v2331
    %2405 = vst.msk [vmem:[#allocation3 + $0xc0] sm:$0xff] %vm2380, %v2333
    %2406 = vst.msk [vmem:[#allocation3 + $0xc8] sm:$0xff] %vm2380, %v2335
    %2407 = vst.msk [vmem:[#allocation3 + $0xd0] sm:$0xff] %vm2380, %v2337
    %2408 = vst.msk [vmem:[#allocation3 + $0xd8] sm:$0xff] %vm2380, %v2339
    %2409 = vst.msk [vmem:[#allocation3 + $0xe0] sm:$0xff] %vm2380, %v2341
    %2410 = vst.msk [vmem:[#allocation3 + $0xe8] sm:$0xff] %vm2380, %v2343
    %2411 = vst.msk [vmem:[#allocation3 + $0xf0] sm:$0xff] %vm2380, %v2345
    %2412 = vst.msk [vmem:[#allocation3 + $0xf8] sm:$0xff] %vm2380, %v2347
    %v2413 = vld [vmem:[%s2059] sm:$0xf]
    %v2414 = vld [vmem:[%s2059 + $0x4] sm:$0xf]
    %v2415 = vld [vmem:[%s2059 + $0x8] sm:$0x1]
    %v2416 = vld [vmem:[%s2059 + $0xc] sm:$0xf]
    %v2417 = vld [vmem:[%s2059 + $0x10] sm:$0xf]
    %v2418 = vld [vmem:[%s2059 + $0x14] sm:$0x1]
    %v2419 = vld [vmem:[%s2059 + $0x18] sm:$0xf]
    %v2420 = vld [vmem:[%s2059 + $0x1c] sm:$0xf]
    %v2421 = vld [vmem:[%s2059 + $0x20] sm:$0x1]
    %v2422 = vld [vmem:[%s2059 + $0x24] sm:$0xf]
    %v2423 = vld [vmem:[%s2059 + $0x28] sm:$0xf]
    %v2424 = vld [vmem:[%s2059 + $0x2c] sm:$0x1]
    %v2425 = vld [vmem:[%s2059 + $0x30] sm:$0xf]
    %v2426 = vld [vmem:[%s2059 + $0x34] sm:$0xf]
    %v2427 = vld [vmem:[%s2059 + $0x38] sm:$0x1]
    %v2428 = vld [vmem:[%s2059 + $0x3c] sm:$0xf]
    %v2429 = vld [vmem:[%s2059 + $0x40] sm:$0xf]
    %v2430 = vld [vmem:[%s2059 + $0x44] sm:$0x1]
    %v2431 = vld [vmem:[%s2059 + $0x48] sm:$0xf]
    %v2432 = vld [vmem:[%s2059 + $0x4c] sm:$0xf]
    %v2433 = vld [vmem:[%s2059 + $0x50] sm:$0x1]
    %v2434 = vld [vmem:[%s2059 + $0x54] sm:$0xf]
    %v2435 = vld [vmem:[%s2059 + $0x58] sm:$0xf]
    %v2436 = vld [vmem:[%s2059 + $0x5c] sm:$0x1]
    %v2437 = vld [vmem:[%s2059 + $0x60] sm:$0xf]
    %v2438 = vld [vmem:[%s2059 + $0x64] sm:$0xf]
    %v2439 = vld [vmem:[%s2059 + $0x68] sm:$0x1]
    %v2440 = vld [vmem:[%s2059 + $0x6c] sm:$0xf]
    %v2441 = vld [vmem:[%s2059 + $0x70] sm:$0xf]
    %v2442 = vld [vmem:[%s2059 + $0x74] sm:$0x1]
    %v2443 = vld [vmem:[%s2059 + $0x78] sm:$0xf]
    %v2444 = vld [vmem:[%s2059 + $0x7c] sm:$0xf]
    %v2445 = vld [vmem:[%s2059 + $0x80] sm:$0x1]
    %v2446 = vld [vmem:[%s2059 + $0x84] sm:$0xf]
    %v2447 = vld [vmem:[%s2059 + $0x88] sm:$0xf]
    %v2448 = vld [vmem:[%s2059 + $0x8c] sm:$0x1]
    %v2449 = vld [vmem:[%s2059 + $0x90] sm:$0xf]
    %v2450 = vld [vmem:[%s2059 + $0x94] sm:$0xf]
    %v2451 = vld [vmem:[%s2059 + $0x98] sm:$0x1]
    %v2452 = vld [vmem:[%s2059 + $0x9c] sm:$0xf]
    %v2453 = vld [vmem:[%s2059 + $0xa0] sm:$0xf]
    %v2454 = vld [vmem:[%s2059 + $0xa4] sm:$0x1]
    %v2455 = vld [vmem:[%s2059 + $0xa8] sm:$0xf]
    %v2456 = vld [vmem:[%s2059 + $0xac] sm:$0xf]
    %v2457 = vld [vmem:[%s2059 + $0xb0] sm:$0x1]
    %v2458 = vld [vmem:[%s2059 + $0xb4] sm:$0xf]
    %v2459 = vld [vmem:[%s2059 + $0xb8] sm:$0xf]
    %v2460 = vld [vmem:[%s2059 + $0xbc] sm:$0x1]
    %v2461 = vld [vmem:[%s2059 + $0xd8] sm:$0xf]
    %v2462 = vld [vmem:[%s2059 + $0xdc] sm:$0xf]
    %v2463 = vld [vmem:[%s2059 + $0xe0] sm:$0x1]
    %v2464 = vld [vmem:[%s2059 + $0xe4] sm:$0xf]
    %v2465 = vld [vmem:[%s2059 + $0xe8] sm:$0xf]
    %v2466 = vld [vmem:[%s2059 + $0xec] sm:$0x1]
    %v2467 = vld [vmem:[%s2059 + $0xf0] sm:$0xf]
    %v2468 = vld [vmem:[%s2059 + $0xf4] sm:$0xf]
    %v2469 = vld [vmem:[%s2059 + $0xf8] sm:$0x1]
    %v2470 = vld [vmem:[%s2059 + $0xfc] sm:$0xf]
    %v2471 = vld [vmem:[%s2059 + $0x100] sm:$0xf]
    %v2472 = vld [vmem:[%s2059 + $0x104] sm:$0x1]
    %v2473 = vld [vmem:[%s2059 + $0x108] sm:$0xf]
    %v2474 = vld [vmem:[%s2059 + $0x10c] sm:$0xf]
    %v2475 = vld [vmem:[%s2059 + $0x110] sm:$0x1]
    %v2476 = vld [vmem:[%s2059 + $0x114] sm:$0xf]
    %v2477 = vld [vmem:[%s2059 + $0x118] sm:$0xf]
    %v2478 = vld [vmem:[%s2059 + $0x11c] sm:$0x1]
    %v2479 = vld [vmem:[%s2059 + $0x120] sm:$0xf]
    %v2480 = vld [vmem:[%s2059 + $0x124] sm:$0xf]
    %v2481 = vld [vmem:[%s2059 + $0x128] sm:$0x1]
    %v2482 = vld [vmem:[%s2059 + $0x12c] sm:$0xf]
    %v2483 = vld [vmem:[%s2059 + $0x130] sm:$0xf]
    %v2484 = vld [vmem:[%s2059 + $0x134] sm:$0x1]
    %v2485 = vld [vmem:[%s2059 + $0x138] sm:$0xf]
    %v2486 = vld [vmem:[%s2059 + $0x13c] sm:$0xf]
    %v2487 = vld [vmem:[%s2059 + $0x140] sm:$0x1]
    %v2488 = vld [vmem:[%s2059 + $0x144] sm:$0xf]
    %v2489 = vld [vmem:[%s2059 + $0x148] sm:$0xf]
    %v2490 = vld [vmem:[%s2059 + $0x14c] sm:$0x1]
    %v2491 = vld [vmem:[%s2059 + $0x150] sm:$0xf]
    %v2492 = vld [vmem:[%s2059 + $0x154] sm:$0xf]
    %v2493 = vld [vmem:[%s2059 + $0x158] sm:$0x1]
    %v2494 = vld [vmem:[%s2059 + $0x15c] sm:$0xf]
    %v2495 = vld [vmem:[%s2059 + $0x160] sm:$0xf]
    %v2496 = vld [vmem:[%s2059 + $0x164] sm:$0x1]
    %v2497 = vld [vmem:[%s2059 + $0x168] sm:$0xf]
    %v2498 = vld [vmem:[%s2059 + $0x16c] sm:$0xf]
    %v2499 = vld [vmem:[%s2059 + $0x170] sm:$0x1]
    %v2500 = vld [vmem:[%s2059 + $0x174] sm:$0xf]
    %v2501 = vld [vmem:[%s2059 + $0x178] sm:$0xf]
    %v2502 = vld [vmem:[%s2059 + $0x17c] sm:$0x1]
    %v2503 = vld [vmem:[%s2059 + $0x180] sm:$0xf]
    %v2504 = vld [vmem:[%s2059 + $0x184] sm:$0xf]
    %v2505 = vld [vmem:[%s2059 + $0x188] sm:$0x1]
    %v2506 = vld [vmem:[%s2059 + $0x18c] sm:$0xf]
    %v2507 = vld [vmem:[%s2059 + $0x190] sm:$0xf]
    %v2508 = vld [vmem:[%s2059 + $0x194] sm:$0x1]
    %v2510 = vshrl.u32 %v2413, 16
    %v2512 = vrot.slane %v2510, 4
    %v2513 = vshll.u32 %v2413, 16
    %v2515 = vrot.slane %v2513, 5
    %v2516 = vor.u32 %v2512, %v2515
    %v2517 = vrot.slane %v2516, 4
    %v2519 = vshll.u32 %v2414, 16
    %v2521 = vrot.slane %v2519, 5
    %v2522 = vsel %vm421, %v2517, %v2521
    %v2523 = vshrl.u32 %v2414, 16
    %v2525 = vrot.slane %v2523, 4
    %v2526 = vor.u32 %v2525, %v2521
    %v2527 = vrot.slane %v2526, 4
    %v2529 = vshll.u32 %v2415, 16
    %v2531 = vrot.slane %v2529, 5
    %v2532 = vsel %vm421, %v2527, %v2531
    %v2534 = vshrl.u32 %v2416, 16
    %v2536 = vrot.slane %v2534, 4
    %v2537 = vshll.u32 %v2416, 16
    %v2539 = vrot.slane %v2537, 5
    %v2540 = vor.u32 %v2536, %v2539
    %v2541 = vrot.slane %v2540, 4
    %v2543 = vshll.u32 %v2417, 16
    %v2545 = vrot.slane %v2543, 5
    %v2546 = vsel %vm421, %v2541, %v2545
    %v2547 = vshrl.u32 %v2417, 16
    %v2549 = vrot.slane %v2547, 4
    %v2550 = vor.u32 %v2549, %v2545
    %v2551 = vrot.slane %v2550, 4
    %v2553 = vshll.u32 %v2418, 16
    %v2555 = vrot.slane %v2553, 5
    %v2556 = vsel %vm421, %v2551, %v2555
    %v2558 = vshrl.u32 %v2419, 16
    %v2560 = vrot.slane %v2558, 4
    %v2561 = vshll.u32 %v2419, 16
    %v2563 = vrot.slane %v2561, 5
    %v2564 = vor.u32 %v2560, %v2563
    %v2565 = vrot.slane %v2564, 4
    %v2567 = vshll.u32 %v2420, 16
    %v2569 = vrot.slane %v2567, 5
    %v2570 = vsel %vm421, %v2565, %v2569
    %v2571 = vshrl.u32 %v2420, 16
    %v2573 = vrot.slane %v2571, 4
    %v2574 = vor.u32 %v2573, %v2569
    %v2575 = vrot.slane %v2574, 4
    %v2577 = vshll.u32 %v2421, 16
    %v2579 = vrot.slane %v2577, 5
    %v2580 = vsel %vm421, %v2575, %v2579
    %v2582 = vshrl.u32 %v2422, 16
    %v2584 = vrot.slane %v2582, 4
    %v2585 = vshll.u32 %v2422, 16
    %v2587 = vrot.slane %v2585, 5
    %v2588 = vor.u32 %v2584, %v2587
    %v2589 = vrot.slane %v2588, 4
    %v2591 = vshll.u32 %v2423, 16
    %v2593 = vrot.slane %v2591, 5
    %v2594 = vsel %vm421, %v2589, %v2593
    %v2595 = vshrl.u32 %v2423, 16
    %v2597 = vrot.slane %v2595, 4
    %v2598 = vor.u32 %v2597, %v2593
    %v2599 = vrot.slane %v2598, 4
    %v2601 = vshll.u32 %v2424, 16
    %v2603 = vrot.slane %v2601, 5
    %v2604 = vsel %vm421, %v2599, %v2603
    %v2606 = vshrl.u32 %v2425, 16
    %v2608 = vrot.slane %v2606, 4
    %v2609 = vshll.u32 %v2425, 16
    %v2611 = vrot.slane %v2609, 5
    %v2612 = vor.u32 %v2608, %v2611
    %v2613 = vrot.slane %v2612, 4
    %v2615 = vshll.u32 %v2426, 16
    %v2617 = vrot.slane %v2615, 5
    %v2618 = vsel %vm421, %v2613, %v2617
    %v2619 = vshrl.u32 %v2426, 16
    %v2621 = vrot.slane %v2619, 4
    %v2622 = vor.u32 %v2621, %v2617
    %v2623 = vrot.slane %v2622, 4
    %v2625 = vshll.u32 %v2427, 16
    %v2627 = vrot.slane %v2625, 5
    %v2628 = vsel %vm421, %v2623, %v2627
    %v2630 = vshrl.u32 %v2428, 16
    %v2632 = vrot.slane %v2630, 4
    %v2633 = vshll.u32 %v2428, 16
    %v2635 = vrot.slane %v2633, 5
    %v2636 = vor.u32 %v2632, %v2635
    %v2637 = vrot.slane %v2636, 4
    %v2639 = vshll.u32 %v2429, 16
    %v2641 = vrot.slane %v2639, 5
    %v2642 = vsel %vm421, %v2637, %v2641
    %v2643 = vshrl.u32 %v2429, 16
    %v2645 = vrot.slane %v2643, 4
    %v2646 = vor.u32 %v2645, %v2641
    %v2647 = vrot.slane %v2646, 4
    %v2649 = vshll.u32 %v2430, 16
    %v2651 = vrot.slane %v2649, 5
    %v2652 = vsel %vm421, %v2647, %v2651
    %v2654 = vshrl.u32 %v2431, 16
    %v2656 = vrot.slane %v2654, 4
    %v2657 = vshll.u32 %v2431, 16
    %v2659 = vrot.slane %v2657, 5
    %v2660 = vor.u32 %v2656, %v2659
    %v2661 = vrot.slane %v2660, 4
    %v2663 = vshll.u32 %v2432, 16
    %v2665 = vrot.slane %v2663, 5
    %v2666 = vsel %vm421, %v2661, %v2665
    %v2667 = vshrl.u32 %v2432, 16
    %v2669 = vrot.slane %v2667, 4
    %v2670 = vor.u32 %v2669, %v2665
    %v2671 = vrot.slane %v2670, 4
    %v2673 = vshll.u32 %v2433, 16
    %v2675 = vrot.slane %v2673, 5
    %v2676 = vsel %vm421, %v2671, %v2675
    %v2678 = vshrl.u32 %v2434, 16
    %v2680 = vrot.slane %v2678, 4
    %v2681 = vshll.u32 %v2434, 16
    %v2683 = vrot.slane %v2681, 5
    %v2684 = vor.u32 %v2680, %v2683
    %v2685 = vrot.slane %v2684, 4
    %v2687 = vshll.u32 %v2435, 16
    %v2689 = vrot.slane %v2687, 5
    %v2690 = vsel %vm421, %v2685, %v2689
    %v2691 = vshrl.u32 %v2435, 16
    %v2693 = vrot.slane %v2691, 4
    %v2694 = vor.u32 %v2693, %v2689
    %v2695 = vrot.slane %v2694, 4
    %v2697 = vshll.u32 %v2436, 16
    %v2699 = vrot.slane %v2697, 5
    %v2700 = vsel %vm421, %v2695, %v2699
    %v2702 = vshrl.u32 %v2437, 16
    %v2704 = vrot.slane %v2702, 4
    %v2705 = vshll.u32 %v2437, 16
    %v2707 = vrot.slane %v2705, 5
    %v2708 = vor.u32 %v2704, %v2707
    %v2709 = vrot.slane %v2708, 4
    %v2711 = vshll.u32 %v2438, 16
    %v2713 = vrot.slane %v2711, 5
    %v2714 = vsel %vm421, %v2709, %v2713
    %v2715 = vshrl.u32 %v2438, 16
    %v2717 = vrot.slane %v2715, 4
    %v2718 = vor.u32 %v2717, %v2713
    %v2719 = vrot.slane %v2718, 4
    %v2721 = vshll.u32 %v2439, 16
    %v2723 = vrot.slane %v2721, 5
    %v2724 = vsel %vm421, %v2719, %v2723
    %v2726 = vshrl.u32 %v2440, 16
    %v2728 = vrot.slane %v2726, 4
    %v2729 = vshll.u32 %v2440, 16
    %v2731 = vrot.slane %v2729, 5
    %v2732 = vor.u32 %v2728, %v2731
    %v2733 = vrot.slane %v2732, 4
    %v2735 = vshll.u32 %v2441, 16
    %v2737 = vrot.slane %v2735, 5
    %v2738 = vsel %vm421, %v2733, %v2737
    %v2739 = vshrl.u32 %v2441, 16
    %v2741 = vrot.slane %v2739, 4
    %v2742 = vor.u32 %v2741, %v2737
    %v2743 = vrot.slane %v2742, 4
    %v2745 = vshll.u32 %v2442, 16
    %v2747 = vrot.slane %v2745, 5
    %v2748 = vsel %vm421, %v2743, %v2747
    %v2750 = vshrl.u32 %v2443, 16
    %v2752 = vrot.slane %v2750, 4
    %v2753 = vshll.u32 %v2443, 16
    %v2755 = vrot.slane %v2753, 5
    %v2756 = vor.u32 %v2752, %v2755
    %v2757 = vrot.slane %v2756, 4
    %v2759 = vshll.u32 %v2444, 16
    %v2761 = vrot.slane %v2759, 5
    %v2762 = vsel %vm421, %v2757, %v2761
    %v2763 = vshrl.u32 %v2444, 16
    %v2765 = vrot.slane %v2763, 4
    %v2766 = vor.u32 %v2765, %v2761
    %v2767 = vrot.slane %v2766, 4
    %v2769 = vshll.u32 %v2445, 16
    %v2771 = vrot.slane %v2769, 5
    %v2772 = vsel %vm421, %v2767, %v2771
    %v2774 = vshrl.u32 %v2446, 16
    %v2776 = vrot.slane %v2774, 4
    %v2777 = vshll.u32 %v2446, 16
    %v2779 = vrot.slane %v2777, 5
    %v2780 = vor.u32 %v2776, %v2779
    %v2781 = vrot.slane %v2780, 4
    %v2783 = vshll.u32 %v2447, 16
    %v2785 = vrot.slane %v2783, 5
    %v2786 = vsel %vm421, %v2781, %v2785
    %v2787 = vshrl.u32 %v2447, 16
    %v2789 = vrot.slane %v2787, 4
    %v2790 = vor.u32 %v2789, %v2785
    %v2791 = vrot.slane %v2790, 4
    %v2793 = vshll.u32 %v2448, 16
    %v2795 = vrot.slane %v2793, 5
    %v2796 = vsel %vm421, %v2791, %v2795
    %v2798 = vshrl.u32 %v2449, 16
    %v2800 = vrot.slane %v2798, 4
    %v2801 = vshll.u32 %v2449, 16
    %v2803 = vrot.slane %v2801, 5
    %v2804 = vor.u32 %v2800, %v2803
    %v2805 = vrot.slane %v2804, 4
    %v2807 = vshll.u32 %v2450, 16
    %v2809 = vrot.slane %v2807, 5
    %v2810 = vsel %vm421, %v2805, %v2809
    %v2811 = vshrl.u32 %v2450, 16
    %v2813 = vrot.slane %v2811, 4
    %v2814 = vor.u32 %v2813, %v2809
    %v2815 = vrot.slane %v2814, 4
    %v2817 = vshll.u32 %v2451, 16
    %v2819 = vrot.slane %v2817, 5
    %v2820 = vsel %vm421, %v2815, %v2819
    %v2822 = vshrl.u32 %v2452, 16
    %v2824 = vrot.slane %v2822, 4
    %v2825 = vshll.u32 %v2452, 16
    %v2827 = vrot.slane %v2825, 5
    %v2828 = vor.u32 %v2824, %v2827
    %v2829 = vrot.slane %v2828, 4
    %v2831 = vshll.u32 %v2453, 16
    %v2833 = vrot.slane %v2831, 5
    %v2834 = vsel %vm421, %v2829, %v2833
    %v2835 = vshrl.u32 %v2453, 16
    %v2837 = vrot.slane %v2835, 4
    %v2838 = vor.u32 %v2837, %v2833
    %v2839 = vrot.slane %v2838, 4
    %v2841 = vshll.u32 %v2454, 16
    %v2843 = vrot.slane %v2841, 5
    %v2844 = vsel %vm421, %v2839, %v2843
    %v2846 = vshrl.u32 %v2455, 16
    %v2848 = vrot.slane %v2846, 4
    %v2849 = vshll.u32 %v2455, 16
    %v2851 = vrot.slane %v2849, 5
    %v2852 = vor.u32 %v2848, %v2851
    %v2853 = vrot.slane %v2852, 4
    %v2855 = vshll.u32 %v2456, 16
    %v2857 = vrot.slane %v2855, 5
    %v2858 = vsel %vm421, %v2853, %v2857
    %v2859 = vshrl.u32 %v2456, 16
    %v2861 = vrot.slane %v2859, 4
    %v2862 = vor.u32 %v2861, %v2857
    %v2863 = vrot.slane %v2862, 4
    %v2865 = vshll.u32 %v2457, 16
    %v2867 = vrot.slane %v2865, 5
    %v2868 = vsel %vm421, %v2863, %v2867
    %v2870 = vshrl.u32 %v2458, 16
    %v2872 = vrot.slane %v2870, 4
    %v2873 = vshll.u32 %v2458, 16
    %v2875 = vrot.slane %v2873, 5
    %v2876 = vor.u32 %v2872, %v2875
    %v2877 = vrot.slane %v2876, 4
    %v2879 = vshll.u32 %v2459, 16
    %v2881 = vrot.slane %v2879, 5
    %v2882 = vsel %vm421, %v2877, %v2881
    %v2883 = vshrl.u32 %v2459, 16
    %v2885 = vrot.slane %v2883, 4
    %v2886 = vor.u32 %v2885, %v2881
    %v2887 = vrot.slane %v2886, 4
    %v2889 = vshll.u32 %v2460, 16
    %v2891 = vrot.slane %v2889, 5
    %v2892 = vsel %vm421, %v2887, %v2891
    %v2894 = vshrl.u32 %v2461, 16
    %v2896 = vrot.slane %v2894, 4
    %v2897 = vshll.u32 %v2461, 16
    %v2899 = vrot.slane %v2897, 5
    %v2900 = vor.u32 %v2896, %v2899
    %v2901 = vrot.slane %v2900, 4
    %v2903 = vshll.u32 %v2462, 16
    %v2905 = vrot.slane %v2903, 5
    %v2906 = vsel %vm421, %v2901, %v2905
    %v2907 = vshrl.u32 %v2462, 16
    %v2909 = vrot.slane %v2907, 4
    %v2910 = vor.u32 %v2909, %v2905
    %v2911 = vrot.slane %v2910, 4
    %v2913 = vshll.u32 %v2463, 16
    %v2915 = vrot.slane %v2913, 5
    %v2916 = vsel %vm421, %v2911, %v2915
    %v2918 = vshrl.u32 %v2464, 16
    %v2920 = vrot.slane %v2918, 4
    %v2921 = vshll.u32 %v2464, 16
    %v2923 = vrot.slane %v2921, 5
    %v2924 = vor.u32 %v2920, %v2923
    %v2925 = vrot.slane %v2924, 4
    %v2927 = vshll.u32 %v2465, 16
    %v2929 = vrot.slane %v2927, 5
    %v2930 = vsel %vm421, %v2925, %v2929
    %v2931 = vshrl.u32 %v2465, 16
    %v2933 = vrot.slane %v2931, 4
    %v2934 = vor.u32 %v2933, %v2929
    %v2935 = vrot.slane %v2934, 4
    %v2937 = vshll.u32 %v2466, 16
    %v2939 = vrot.slane %v2937, 5
    %v2940 = vsel %vm421, %v2935, %v2939
    %v2942 = vshrl.u32 %v2467, 16
    %v2944 = vrot.slane %v2942, 4
    %v2945 = vshll.u32 %v2467, 16
    %v2947 = vrot.slane %v2945, 5
    %v2948 = vor.u32 %v2944, %v2947
    %v2949 = vrot.slane %v2948, 4
    %v2951 = vshll.u32 %v2468, 16
    %v2953 = vrot.slane %v2951, 5
    %v2954 = vsel %vm421, %v2949, %v2953
    %v2955 = vshrl.u32 %v2468, 16
    %v2957 = vrot.slane %v2955, 4
    %v2958 = vor.u32 %v2957, %v2953
    %v2959 = vrot.slane %v2958, 4
    %v2961 = vshll.u32 %v2469, 16
    %v2963 = vrot.slane %v2961, 5
    %v2964 = vsel %vm421, %v2959, %v2963
    %v2966 = vshrl.u32 %v2470, 16
    %v2968 = vrot.slane %v2966, 4
    %v2969 = vshll.u32 %v2470, 16
    %v2971 = vrot.slane %v2969, 5
    %v2972 = vor.u32 %v2968, %v2971
    %v2973 = vrot.slane %v2972, 4
    %v2975 = vshll.u32 %v2471, 16
    %v2977 = vrot.slane %v2975, 5
    %v2978 = vsel %vm421, %v2973, %v2977
    %v2979 = vshrl.u32 %v2471, 16
    %v2981 = vrot.slane %v2979, 4
    %v2982 = vor.u32 %v2981, %v2977
    %v2983 = vrot.slane %v2982, 4
    %v2985 = vshll.u32 %v2472, 16
    %v2987 = vrot.slane %v2985, 5
    %v2988 = vsel %vm421, %v2983, %v2987
    %v2990 = vshrl.u32 %v2473, 16
    %v2992 = vrot.slane %v2990, 4
    %v2993 = vshll.u32 %v2473, 16
    %v2995 = vrot.slane %v2993, 5
    %v2996 = vor.u32 %v2992, %v2995
    %v2997 = vrot.slane %v2996, 4
    %v2999 = vshll.u32 %v2474, 16
    %v3001 = vrot.slane %v2999, 5
    %v3002 = vsel %vm421, %v2997, %v3001
    %v3003 = vshrl.u32 %v2474, 16
    %v3005 = vrot.slane %v3003, 4
    %v3006 = vor.u32 %v3005, %v3001
    %v3007 = vrot.slane %v3006, 4
    %v3009 = vshll.u32 %v2475, 16
    %v3011 = vrot.slane %v3009, 5
    %v3012 = vsel %vm421, %v3007, %v3011
    %v3014 = vshrl.u32 %v2476, 16
    %v3016 = vrot.slane %v3014, 4
    %v3017 = vshll.u32 %v2476, 16
    %v3019 = vrot.slane %v3017, 5
    %v3020 = vor.u32 %v3016, %v3019
    %v3021 = vrot.slane %v3020, 4
    %v3023 = vshll.u32 %v2477, 16
    %v3025 = vrot.slane %v3023, 5
    %v3026 = vsel %vm421, %v3021, %v3025
    %v3027 = vshrl.u32 %v2477, 16
    %v3029 = vrot.slane %v3027, 4
    %v3030 = vor.u32 %v3029, %v3025
    %v3031 = vrot.slane %v3030, 4
    %v3033 = vshll.u32 %v2478, 16
    %v3035 = vrot.slane %v3033, 5
    %v3036 = vsel %vm421, %v3031, %v3035
    %v3038 = vshrl.u32 %v2479, 16
    %v3040 = vrot.slane %v3038, 4
    %v3041 = vshll.u32 %v2479, 16
    %v3043 = vrot.slane %v3041, 5
    %v3044 = vor.u32 %v3040, %v3043
    %v3045 = vrot.slane %v3044, 4
    %v3047 = vshll.u32 %v2480, 16
    %v3049 = vrot.slane %v3047, 5
    %v3050 = vsel %vm421, %v3045, %v3049
    %v3051 = vshrl.u32 %v2480, 16
    %v3053 = vrot.slane %v3051, 4
    %v3054 = vor.u32 %v3053, %v3049
    %v3055 = vrot.slane %v3054, 4
    %v3057 = vshll.u32 %v2481, 16
    %v3059 = vrot.slane %v3057, 5
    %v3060 = vsel %vm421, %v3055, %v3059
    %v3062 = vshrl.u32 %v2482, 16
    %v3064 = vrot.slane %v3062, 4
    %v3065 = vshll.u32 %v2482, 16
    %v3067 = vrot.slane %v3065, 5
    %v3068 = vor.u32 %v3064, %v3067
    %v3069 = vrot.slane %v3068, 4
    %v3071 = vshll.u32 %v2483, 16
    %v3073 = vrot.slane %v3071, 5
    %v3074 = vsel %vm421, %v3069, %v3073
    %v3075 = vshrl.u32 %v2483, 16
    %v3077 = vrot.slane %v3075, 4
    %v3078 = vor.u32 %v3077, %v3073
    %v3079 = vrot.slane %v3078, 4
    %v3081 = vshll.u32 %v2484, 16
    %v3083 = vrot.slane %v3081, 5
    %v3084 = vsel %vm421, %v3079, %v3083
    %v3086 = vshrl.u32 %v2485, 16
    %v3088 = vrot.slane %v3086, 4
    %v3089 = vshll.u32 %v2485, 16
    %v3091 = vrot.slane %v3089, 5
    %v3092 = vor.u32 %v3088, %v3091
    %v3093 = vrot.slane %v3092, 4
    %v3095 = vshll.u32 %v2486, 16
    %v3097 = vrot.slane %v3095, 5
    %v3098 = vsel %vm421, %v3093, %v3097
    %v3099 = vshrl.u32 %v2486, 16
    %v3101 = vrot.slane %v3099, 4
    %v3102 = vor.u32 %v3101, %v3097
    %v3103 = vrot.slane %v3102, 4
    %v3105 = vshll.u32 %v2487, 16
    %v3107 = vrot.slane %v3105, 5
    %v3108 = vsel %vm421, %v3103, %v3107
    %v3110 = vshrl.u32 %v2488, 16
    %v3112 = vrot.slane %v3110, 4
    %v3113 = vshll.u32 %v2488, 16
    %v3115 = vrot.slane %v3113, 5
    %v3116 = vor.u32 %v3112, %v3115
    %v3117 = vrot.slane %v3116, 4
    %v3119 = vshll.u32 %v2489, 16
    %v3121 = vrot.slane %v3119, 5
    %v3122 = vsel %vm421, %v3117, %v3121
    %v3123 = vshrl.u32 %v2489, 16
    %v3125 = vrot.slane %v3123, 4
    %v3126 = vor.u32 %v3125, %v3121
    %v3127 = vrot.slane %v3126, 4
    %v3129 = vshll.u32 %v2490, 16
    %v3131 = vrot.slane %v3129, 5
    %v3132 = vsel %vm421, %v3127, %v3131
    %v3134 = vshrl.u32 %v2491, 16
    %v3136 = vrot.slane %v3134, 4
    %v3137 = vshll.u32 %v2491, 16
    %v3139 = vrot.slane %v3137, 5
    %v3140 = vor.u32 %v3136, %v3139
    %v3141 = vrot.slane %v3140, 4
    %v3143 = vshll.u32 %v2492, 16
    %v3145 = vrot.slane %v3143, 5
    %v3146 = vsel %vm421, %v3141, %v3145
    %v3147 = vshrl.u32 %v2492, 16
    %v3149 = vrot.slane %v3147, 4
    %v3150 = vor.u32 %v3149, %v3145
    %v3151 = vrot.slane %v3150, 4
    %v3153 = vshll.u32 %v2493, 16
    %v3155 = vrot.slane %v3153, 5
    %v3156 = vsel %vm421, %v3151, %v3155
    %v3158 = vshrl.u32 %v2494, 16
    %v3160 = vrot.slane %v3158, 4
    %v3161 = vshll.u32 %v2494, 16
    %v3163 = vrot.slane %v3161, 5
    %v3164 = vor.u32 %v3160, %v3163
    %v3165 = vrot.slane %v3164, 4
    %v3167 = vshll.u32 %v2495, 16
    %v3169 = vrot.slane %v3167, 5
    %v3170 = vsel %vm421, %v3165, %v3169
    %v3171 = vshrl.u32 %v2495, 16
    %v3173 = vrot.slane %v3171, 4
    %v3174 = vor.u32 %v3173, %v3169
    %v3175 = vrot.slane %v3174, 4
    %v3177 = vshll.u32 %v2496, 16
    %v3179 = vrot.slane %v3177, 5
    %v3180 = vsel %vm421, %v3175, %v3179
    %v3182 = vshrl.u32 %v2497, 16
    %v3184 = vrot.slane %v3182, 4
    %v3185 = vshll.u32 %v2497, 16
    %v3187 = vrot.slane %v3185, 5
    %v3188 = vor.u32 %v3184, %v3187
    %v3189 = vrot.slane %v3188, 4
    %v3191 = vshll.u32 %v2498, 16
    %v3193 = vrot.slane %v3191, 5
    %v3194 = vsel %vm421, %v3189, %v3193
    %v3195 = vshrl.u32 %v2498, 16
    %v3197 = vrot.slane %v3195, 4
    %v3198 = vor.u32 %v3197, %v3193
    %v3199 = vrot.slane %v3198, 4
    %v3201 = vshll.u32 %v2499, 16
    %v3203 = vrot.slane %v3201, 5
    %v3204 = vsel %vm421, %v3199, %v3203
    %v3206 = vshrl.u32 %v2500, 16
    %v3208 = vrot.slane %v3206, 4
    %v3209 = vshll.u32 %v2500, 16
    %v3211 = vrot.slane %v3209, 5
    %v3212 = vor.u32 %v3208, %v3211
    %v3213 = vrot.slane %v3212, 4
    %v3215 = vshll.u32 %v2501, 16
    %v3217 = vrot.slane %v3215, 5
    %v3218 = vsel %vm421, %v3213, %v3217
    %v3219 = vshrl.u32 %v2501, 16
    %v3221 = vrot.slane %v3219, 4
    %v3222 = vor.u32 %v3221, %v3217
    %v3223 = vrot.slane %v3222, 4
    %v3225 = vshll.u32 %v2502, 16
    %v3227 = vrot.slane %v3225, 5
    %v3228 = vsel %vm421, %v3223, %v3227
    %v3230 = vshrl.u32 %v2503, 16
    %v3232 = vrot.slane %v3230, 4
    %v3233 = vshll.u32 %v2503, 16
    %v3235 = vrot.slane %v3233, 5
    %v3236 = vor.u32 %v3232, %v3235
    %v3237 = vrot.slane %v3236, 4
    %v3239 = vshll.u32 %v2504, 16
    %v3241 = vrot.slane %v3239, 5
    %v3242 = vsel %vm421, %v3237, %v3241
    %v3243 = vshrl.u32 %v2504, 16
    %v3245 = vrot.slane %v3243, 4
    %v3246 = vor.u32 %v3245, %v3241
    %v3247 = vrot.slane %v3246, 4
    %v3249 = vshll.u32 %v2505, 16
    %v3251 = vrot.slane %v3249, 5
    %v3252 = vsel %vm421, %v3247, %v3251
    %v3254 = vshrl.u32 %v2506, 16
    %v3256 = vrot.slane %v3254, 4
    %v3257 = vshll.u32 %v2506, 16
    %v3259 = vrot.slane %v3257, 5
    %v3260 = vor.u32 %v3256, %v3259
    %v3261 = vrot.slane %v3260, 4
    %v3263 = vshll.u32 %v2507, 16
    %v3265 = vrot.slane %v3263, 5
    %v3266 = vsel %vm421, %v3261, %v3265
    %v3267 = vshrl.u32 %v2507, 16
    %v3269 = vrot.slane %v3267, 4
    %v3270 = vor.u32 %v3269, %v3265
    %v3271 = vrot.slane %v3270, 4
    %v3273 = vshll.u32 %v2508, 16
    %v3275 = vrot.slane %v3273, 5
    %v3276 = vsel %vm421, %v3271, %v3275
    %v3277 = vunpack.c.l.b16 %v2522
    %v3278 = vunpack.c.l.b16 %v2532
    %v3279 = vunpack.c.l.b16 %v2546
    %v3280 = vunpack.c.l.b16 %v2556
    %v3281 = vunpack.c.l.b16 %v2570
    %v3282 = vunpack.c.l.b16 %v2580
    %v3283 = vunpack.c.l.b16 %v2594
    %v3284 = vunpack.c.l.b16 %v2604
    %v3285 = vunpack.c.l.b16 %v2618
    %v3286 = vunpack.c.l.b16 %v2628
    %v3287 = vunpack.c.l.b16 %v2642
    %v3288 = vunpack.c.l.b16 %v2652
    %v3289 = vunpack.c.l.b16 %v2666
    %v3290 = vunpack.c.l.b16 %v2676
    %v3291 = vunpack.c.l.b16 %v2690
    %v3292 = vunpack.c.l.b16 %v2700
    %v3293 = vunpack.c.l.b16 %v2714
    %v3294 = vunpack.c.l.b16 %v2724
    %v3295 = vunpack.c.l.b16 %v2738
    %v3296 = vunpack.c.l.b16 %v2748
    %v3297 = vunpack.c.l.b16 %v2762
    %v3298 = vunpack.c.l.b16 %v2772
    %v3299 = vunpack.c.l.b16 %v2786
    %v3300 = vunpack.c.l.b16 %v2796
    %v3301 = vunpack.c.l.b16 %v2810
    %v3302 = vunpack.c.l.b16 %v2820
    %v3303 = vunpack.c.l.b16 %v2834
    %v3304 = vunpack.c.l.b16 %v2844
    %v3305 = vunpack.c.l.b16 %v2858
    %v3306 = vunpack.c.l.b16 %v2868
    %v3307 = vunpack.c.l.b16 %v2882
    %v3308 = vunpack.c.l.b16 %v2892
    %v3309 = vunpack.c.l.b16 %v2906
    %v3310 = vunpack.c.l.b16 %v2916
    %v3311 = vunpack.c.l.b16 %v2930
    %v3312 = vunpack.c.l.b16 %v2940
    %v3313 = vunpack.c.l.b16 %v2954
    %v3314 = vunpack.c.l.b16 %v2964
    %v3315 = vunpack.c.l.b16 %v2978
    %v3316 = vunpack.c.l.b16 %v2988
    %v3317 = vunpack.c.l.b16 %v3002
    %v3318 = vunpack.c.l.b16 %v3012
    %v3319 = vunpack.c.l.b16 %v3026
    %v3320 = vunpack.c.l.b16 %v3036
    %v3321 = vunpack.c.l.b16 %v3050
    %v3322 = vunpack.c.l.b16 %v3060
    %v3323 = vunpack.c.l.b16 %v3074
    %v3324 = vunpack.c.l.b16 %v3084
    %v3325 = vunpack.c.l.b16 %v3098
    %v3326 = vunpack.c.l.b16 %v3108
    %v3327 = vunpack.c.l.b16 %v3122
    %v3328 = vunpack.c.l.b16 %v3132
    %v3329 = vunpack.c.l.b16 %v3146
    %v3330 = vunpack.c.l.b16 %v3156
    %v3331 = vunpack.c.l.b16 %v3170
    %v3332 = vunpack.c.l.b16 %v3180
    %v3333 = vunpack.c.l.b16 %v3194
    %v3334 = vunpack.c.l.b16 %v3204
    %v3335 = vunpack.c.l.b16 %v3218
    %v3336 = vunpack.c.l.b16 %v3228
    %v3337 = vunpack.c.l.b16 %v3242
    %v3338 = vunpack.c.l.b16 %v3252
    %v3339 = vunpack.c.l.b16 %v3266
    %v3340 = vunpack.c.l.b16 %v3276
    %v3341 = vpack.c.b16 %v3278, %v3277
    %v3342 = vpack.c.b16 %v3280, %v3279
    %v3343 = vpack.c.b16 %v3282, %v3281
    %v3344 = vpack.c.b16 %v3284, %v3283
    %v3345 = vpack.c.b16 %v3286, %v3285
    %v3346 = vpack.c.b16 %v3288, %v3287
    %v3347 = vpack.c.b16 %v3290, %v3289
    %v3348 = vpack.c.b16 %v3292, %v3291
    %v3349 = vpack.c.b16 %v3294, %v3293
    %v3350 = vpack.c.b16 %v3296, %v3295
    %v3351 = vpack.c.b16 %v3298, %v3297
    %v3352 = vpack.c.b16 %v3300, %v3299
    %v3353 = vpack.c.b16 %v3302, %v3301
    %v3354 = vpack.c.b16 %v3304, %v3303
    %v3355 = vpack.c.b16 %v3306, %v3305
    %v3356 = vpack.c.b16 %v3308, %v3307
    %v3357 = vpack.c.b16 %v3310, %v3309
    %v3358 = vpack.c.b16 %v3312, %v3311
    %v3359 = vpack.c.b16 %v3314, %v3313
    %v3360 = vpack.c.b16 %v3316, %v3315
    %v3361 = vpack.c.b16 %v3318, %v3317
    %v3362 = vpack.c.b16 %v3320, %v3319
    %v3363 = vpack.c.b16 %v3322, %v3321
    %v3364 = vpack.c.b16 %v3324, %v3323
    %v3365 = vpack.c.b16 %v3326, %v3325
    %v3366 = vpack.c.b16 %v3328, %v3327
    %v3367 = vpack.c.b16 %v3330, %v3329
    %v3368 = vpack.c.b16 %v3332, %v3331
    %v3369 = vpack.c.b16 %v3334, %v3333
    %v3370 = vpack.c.b16 %v3336, %v3335
    %v3371 = vpack.c.b16 %v3338, %v3337
    %v3372 = vpack.c.b16 %v3340, %v3339
    %3373 = vrot.lane.b32.xlu0 %v3341, 16
    %v3374 = vpop.permute.xlu0 %3373
    %3375 = vrot.lane.b32.xlu0 %v3342, 16
    %v3376 = vpop.permute.xlu0 %3375
    %3377 = vrot.lane.b32.xlu0 %v3343, 16
    %v3378 = vpop.permute.xlu0 %3377
    %3379 = vrot.lane.b32.xlu0 %v3344, 16
    %v3380 = vpop.permute.xlu0 %3379
    %3381 = vrot.lane.b32.xlu0 %v3345, 16
    %v3382 = vpop.permute.xlu0 %3381
    %3383 = vrot.lane.b32.xlu0 %v3346, 16
    %v3384 = vpop.permute.xlu0 %3383
    %3385 = vrot.lane.b32.xlu0 %v3347, 16
    %v3386 = vpop.permute.xlu0 %3385
    %3387 = vrot.lane.b32.xlu0 %v3348, 16
    %v3388 = vpop.permute.xlu0 %3387
    %3389 = vrot.lane.b32.xlu0 %v3349, 16
    %v3390 = vpop.permute.xlu0 %3389
    %3391 = vrot.lane.b32.xlu0 %v3350, 16
    %v3392 = vpop.permute.xlu0 %3391
    %3393 = vrot.lane.b32.xlu0 %v3351, 16
    %v3394 = vpop.permute.xlu0 %3393
    %3395 = vrot.lane.b32.xlu0 %v3352, 16
    %v3396 = vpop.permute.xlu0 %3395
    %3397 = vrot.lane.b32.xlu0 %v3353, 16
    %v3398 = vpop.permute.xlu0 %3397
    %3399 = vrot.lane.b32.xlu0 %v3354, 16
    %v3400 = vpop.permute.xlu0 %3399
    %3401 = vrot.lane.b32.xlu0 %v3355, 16
    %v3402 = vpop.permute.xlu0 %3401
    %3403 = vrot.lane.b32.xlu0 %v3356, 16
    %v3404 = vpop.permute.xlu0 %3403
    %3405 = vrot.lane.b32.xlu0 %v3357, 16
    %v3406 = vpop.permute.xlu0 %3405
    %3407 = vrot.lane.b32.xlu0 %v3358, 16
    %v3408 = vpop.permute.xlu0 %3407
    %3409 = vrot.lane.b32.xlu0 %v3359, 16
    %v3410 = vpop.permute.xlu0 %3409
    %3411 = vrot.lane.b32.xlu0 %v3360, 16
    %v3412 = vpop.permute.xlu0 %3411
    %3413 = vrot.lane.b32.xlu0 %v3361, 16
    %v3414 = vpop.permute.xlu0 %3413
    %3415 = vrot.lane.b32.xlu0 %v3362, 16
    %v3416 = vpop.permute.xlu0 %3415
    %3417 = vrot.lane.b32.xlu0 %v3363, 16
    %v3418 = vpop.permute.xlu0 %3417
    %3419 = vrot.lane.b32.xlu0 %v3364, 16
    %v3420 = vpop.permute.xlu0 %3419
    %3421 = vrot.lane.b32.xlu0 %v3365, 16
    %v3422 = vpop.permute.xlu0 %3421
    %3423 = vrot.lane.b32.xlu0 %v3366, 16
    %v3424 = vpop.permute.xlu0 %3423
    %3425 = vrot.lane.b32.xlu0 %v3367, 16
    %v3426 = vpop.permute.xlu0 %3425
    %3427 = vrot.lane.b32.xlu0 %v3368, 16
    %v3428 = vpop.permute.xlu0 %3427
    %3429 = vrot.lane.b32.xlu0 %v3369, 16
    %v3430 = vpop.permute.xlu0 %3429
    %3431 = vrot.lane.b32.xlu0 %v3370, 16
    %v3432 = vpop.permute.xlu0 %3431
    %3433 = vrot.lane.b32.xlu0 %v3371, 16
    %v3434 = vpop.permute.xlu0 %3433
    %3435 = vrot.lane.b32.xlu0 %v3372, 16
    %v3436 = vpop.permute.xlu0 %3435
    %vm3469 = vcmask 162944
    %3470 = vst.msk [vmem:[#allocation3] sm:$0xff] %vm3469, %v3374
    %3471 = vst.msk [vmem:[#allocation3 + $0x8] sm:$0xff] %vm3469, %v3376
    %3472 = vst.msk [vmem:[#allocation3 + $0x10] sm:$0xff] %vm3469, %v3378
    %3473 = vst.msk [vmem:[#allocation3 + $0x18] sm:$0xff] %vm3469, %v3380
    %3474 = vst.msk [vmem:[#allocation3 + $0x20] sm:$0xff] %vm3469, %v3382
    %3475 = vst.msk [vmem:[#allocation3 + $0x28] sm:$0xff] %vm3469, %v3384
    %3476 = vst.msk [vmem:[#allocation3 + $0x30] sm:$0xff] %vm3469, %v3386
    %3477 = vst.msk [vmem:[#allocation3 + $0x38] sm:$0xff] %vm3469, %v3388
    %3478 = vst.msk [vmem:[#allocation3 + $0x40] sm:$0xff] %vm3469, %v3390
    %3479 = vst.msk [vmem:[#allocation3 + $0x48] sm:$0xff] %vm3469, %v3392
    %3480 = vst.msk [vmem:[#allocation3 + $0x50] sm:$0xff] %vm3469, %v3394
    %3481 = vst.msk [vmem:[#allocation3 + $0x58] sm:$0xff] %vm3469, %v3396
    %3482 = vst.msk [vmem:[#allocation3 + $0x60] sm:$0xff] %vm3469, %v3398
    %3483 = vst.msk [vmem:[#allocation3 + $0x68] sm:$0xff] %vm3469, %v3400
    %3484 = vst.msk [vmem:[#allocation3 + $0x70] sm:$0xff] %vm3469, %v3402
    %3485 = vst.msk [vmem:[#allocation3 + $0x78] sm:$0xff] %vm3469, %v3404
    %3486 = vst.msk [vmem:[#allocation3 + $0x80] sm:$0xff] %vm3469, %v3406
    %3487 = vst.msk [vmem:[#allocation3 + $0x88] sm:$0xff] %vm3469, %v3408
    %3488 = vst.msk [vmem:[#allocation3 + $0x90] sm:$0xff] %vm3469, %v3410
    %3489 = vst.msk [vmem:[#allocation3 + $0x98] sm:$0xff] %vm3469, %v3412
    %3490 = vst.msk [vmem:[#allocation3 + $0xa0] sm:$0xff] %vm3469, %v3414
    %3491 = vst.msk [vmem:[#allocation3 + $0xa8] sm:$0xff] %vm3469, %v3416
    %3492 = vst.msk [vmem:[#allocation3 + $0xb0] sm:$0xff] %vm3469, %v3418
    %3493 = vst.msk [vmem:[#allocation3 + $0xb8] sm:$0xff] %vm3469, %v3420
    %3494 = vst.msk [vmem:[#allocation3 + $0xc0] sm:$0xff] %vm3469, %v3422
    %3495 = vst.msk [vmem:[#allocation3 + $0xc8] sm:$0xff] %vm3469, %v3424
    %3496 = vst.msk [vmem:[#allocation3 + $0xd0] sm:$0xff] %vm3469, %v3426
    %3497 = vst.msk [vmem:[#allocation3 + $0xd8] sm:$0xff] %vm3469, %v3428
    %3498 = vst.msk [vmem:[#allocation3 + $0xe0] sm:$0xff] %vm3469, %v3430
    %3499 = vst.msk [vmem:[#allocation3 + $0xe8] sm:$0xff] %vm3469, %v3432
    %3500 = vst.msk [vmem:[#allocation3 + $0xf0] sm:$0xff] %vm3469, %v3434
    %3501 = vst.msk [vmem:[#allocation3 + $0xf8] sm:$0xff] %vm3469, %v3436
    %v3502 = vld [vmem:[%s2059] sm:$0xe]
    %v3503 = vld [vmem:[%s2059 + $0x4] sm:$0xf]
    %v3504 = vld [vmem:[%s2059 + $0x8] sm:$0x1]
    %v3505 = vld [vmem:[%s2059 + $0xc] sm:$0xe]
    %v3506 = vld [vmem:[%s2059 + $0x10] sm:$0xf]
    %v3507 = vld [vmem:[%s2059 + $0x14] sm:$0x1]
    %v3508 = vld [vmem:[%s2059 + $0x18] sm:$0xe]
    %v3509 = vld [vmem:[%s2059 + $0x1c] sm:$0xf]
    %v3510 = vld [vmem:[%s2059 + $0x20] sm:$0x1]
    %v3511 = vld [vmem:[%s2059 + $0x24] sm:$0xe]
    %v3512 = vld [vmem:[%s2059 + $0x28] sm:$0xf]
    %v3513 = vld [vmem:[%s2059 + $0x2c] sm:$0x1]
    %v3514 = vld [vmem:[%s2059 + $0x30] sm:$0xe]
    %v3515 = vld [vmem:[%s2059 + $0x34] sm:$0xf]
    %v3516 = vld [vmem:[%s2059 + $0x38] sm:$0x1]
    %v3517 = vld [vmem:[%s2059 + $0x3c] sm:$0xe]
    %v3518 = vld [vmem:[%s2059 + $0x40] sm:$0xf]
    %v3519 = vld [vmem:[%s2059 + $0x44] sm:$0x1]
    %v3520 = vld [vmem:[%s2059 + $0x48] sm:$0xe]
    %v3521 = vld [vmem:[%s2059 + $0x4c] sm:$0xf]
    %v3522 = vld [vmem:[%s2059 + $0x50] sm:$0x1]
    %v3523 = vld [vmem:[%s2059 + $0x54] sm:$0xe]
    %v3524 = vld [vmem:[%s2059 + $0x58] sm:$0xf]
    %v3525 = vld [vmem:[%s2059 + $0x5c] sm:$0x1]
    %v3526 = vld [vmem:[%s2059 + $0x60] sm:$0xe]
    %v3527 = vld [vmem:[%s2059 + $0x64] sm:$0xf]
    %v3528 = vld [vmem:[%s2059 + $0x68] sm:$0x1]
    %v3529 = vld [vmem:[%s2059 + $0x6c] sm:$0xe]
    %v3530 = vld [vmem:[%s2059 + $0x70] sm:$0xf]
    %v3531 = vld [vmem:[%s2059 + $0x74] sm:$0x1]
    %v3532 = vld [vmem:[%s2059 + $0x78] sm:$0xe]
    %v3533 = vld [vmem:[%s2059 + $0x7c] sm:$0xf]
    %v3534 = vld [vmem:[%s2059 + $0x80] sm:$0x1]
    %v3535 = vld [vmem:[%s2059 + $0x84] sm:$0xe]
    %v3536 = vld [vmem:[%s2059 + $0x88] sm:$0xf]
    %v3537 = vld [vmem:[%s2059 + $0x8c] sm:$0x1]
    %v3538 = vld [vmem:[%s2059 + $0x90] sm:$0xe]
    %v3539 = vld [vmem:[%s2059 + $0x94] sm:$0xf]
    %v3540 = vld [vmem:[%s2059 + $0x98] sm:$0x1]
    %v3541 = vld [vmem:[%s2059 + $0x9c] sm:$0xe]
    %v3542 = vld [vmem:[%s2059 + $0xa0] sm:$0xf]
    %v3543 = vld [vmem:[%s2059 + $0xa4] sm:$0x1]
    %v3544 = vld [vmem:[%s2059 + $0xa8] sm:$0xe]
    %v3545 = vld [vmem:[%s2059 + $0xac] sm:$0xf]
    %v3546 = vld [vmem:[%s2059 + $0xb0] sm:$0x1]
    %v3547 = vld [vmem:[%s2059 + $0xb4] sm:$0xe]
    %v3548 = vld [vmem:[%s2059 + $0xb8] sm:$0xf]
    %v3549 = vld [vmem:[%s2059 + $0xbc] sm:$0x1]
    %v3550 = vld [vmem:[%s2059 + $0xd8] sm:$0xe]
    %v3551 = vld [vmem:[%s2059 + $0xdc] sm:$0xf]
    %v3552 = vld [vmem:[%s2059 + $0xe0] sm:$0x1]
    %v3553 = vld [vmem:[%s2059 + $0xe4] sm:$0xe]
    %v3554 = vld [vmem:[%s2059 + $0xe8] sm:$0xf]
    %v3555 = vld [vmem:[%s2059 + $0xec] sm:$0x1]
    %v3556 = vld [vmem:[%s2059 + $0xf0] sm:$0xe]
    %v3557 = vld [vmem:[%s2059 + $0xf4] sm:$0xf]
    %v3558 = vld [vmem:[%s2059 + $0xf8] sm:$0x1]
    %v3559 = vld [vmem:[%s2059 + $0xfc] sm:$0xe]
    %v3560 = vld [vmem:[%s2059 + $0x100] sm:$0xf]
    %v3561 = vld [vmem:[%s2059 + $0x104] sm:$0x1]
    %v3562 = vld [vmem:[%s2059 + $0x108] sm:$0xe]
    %v3563 = vld [vmem:[%s2059 + $0x10c] sm:$0xf]
    %v3564 = vld [vmem:[%s2059 + $0x110] sm:$0x1]
    %v3565 = vld [vmem:[%s2059 + $0x114] sm:$0xe]
    %v3566 = vld [vmem:[%s2059 + $0x118] sm:$0xf]
    %v3567 = vld [vmem:[%s2059 + $0x11c] sm:$0x1]
    %v3568 = vld [vmem:[%s2059 + $0x120] sm:$0xe]
    %v3569 = vld [vmem:[%s2059 + $0x124] sm:$0xf]
    %v3570 = vld [vmem:[%s2059 + $0x128] sm:$0x1]
    %v3571 = vld [vmem:[%s2059 + $0x12c] sm:$0xe]
    %v3572 = vld [vmem:[%s2059 + $0x130] sm:$0xf]
    %v3573 = vld [vmem:[%s2059 + $0x134] sm:$0x1]
    %v3574 = vld [vmem:[%s2059 + $0x138] sm:$0xe]
    %v3575 = vld [vmem:[%s2059 + $0x13c] sm:$0xf]
    %v3576 = vld [vmem:[%s2059 + $0x140] sm:$0x1]
    %v3577 = vld [vmem:[%s2059 + $0x144] sm:$0xe]
    %v3578 = vld [vmem:[%s2059 + $0x148] sm:$0xf]
    %v3579 = vld [vmem:[%s2059 + $0x14c] sm:$0x1]
    %v3580 = vld [vmem:[%s2059 + $0x150] sm:$0xe]
    %v3581 = vld [vmem:[%s2059 + $0x154] sm:$0xf]
    %v3582 = vld [vmem:[%s2059 + $0x158] sm:$0x1]
    %v3583 = vld [vmem:[%s2059 + $0x15c] sm:$0xe]
    %v3584 = vld [vmem:[%s2059 + $0x160] sm:$0xf]
    %v3585 = vld [vmem:[%s2059 + $0x164] sm:$0x1]
    %v3586 = vld [vmem:[%s2059 + $0x168] sm:$0xe]
    %v3587 = vld [vmem:[%s2059 + $0x16c] sm:$0xf]
    %v3588 = vld [vmem:[%s2059 + $0x170] sm:$0x1]
    %v3589 = vld [vmem:[%s2059 + $0x174] sm:$0xe]
    %v3590 = vld [vmem:[%s2059 + $0x178] sm:$0xf]
    %v3591 = vld [vmem:[%s2059 + $0x17c] sm:$0x1]
    %v3592 = vld [vmem:[%s2059 + $0x180] sm:$0xe]
    %v3593 = vld [vmem:[%s2059 + $0x184] sm:$0xf]
    %v3594 = vld [vmem:[%s2059 + $0x188] sm:$0x1]
    %v3595 = vld [vmem:[%s2059 + $0x18c] sm:$0xe]
    %v3596 = vld [vmem:[%s2059 + $0x190] sm:$0xf]
    %v3597 = vld [vmem:[%s2059 + $0x194] sm:$0x1]
    %v3694 = vrot.slane %v3502, 5
    %v3695 = vrot.slane %v3694, 4
    %v3696 = vrot.slane %v3503, 5
    %v3697 = vsel %vm1609, %v3695, %v3696
    %v3698 = vrot.slane %v3696, 4
    %v3699 = vrot.slane %v3504, 5
    %v3700 = vsel %vm1609, %v3698, %v3699
    %v3701 = vrot.slane %v3505, 5
    %v3702 = vrot.slane %v3701, 4
    %v3703 = vrot.slane %v3506, 5
    %v3704 = vsel %vm1609, %v3702, %v3703
    %v3705 = vrot.slane %v3703, 4
    %v3706 = vrot.slane %v3507, 5
    %v3707 = vsel %vm1609, %v3705, %v3706
    %v3708 = vrot.slane %v3508, 5
    %v3709 = vrot.slane %v3708, 4
    %v3710 = vrot.slane %v3509, 5
    %v3711 = vsel %vm1609, %v3709, %v3710
    %v3712 = vrot.slane %v3710, 4
    %v3713 = vrot.slane %v3510, 5
    %v3714 = vsel %vm1609, %v3712, %v3713
    %v3715 = vrot.slane %v3511, 5
    %v3716 = vrot.slane %v3715, 4
    %v3717 = vrot.slane %v3512, 5
    %v3718 = vsel %vm1609, %v3716, %v3717
    %v3719 = vrot.slane %v3717, 4
    %v3720 = vrot.slane %v3513, 5
    %v3721 = vsel %vm1609, %v3719, %v3720
    %v3722 = vrot.slane %v3514, 5
    %v3723 = vrot.slane %v3722, 4
    %v3724 = vrot.slane %v3515, 5
    %v3725 = vsel %vm1609, %v3723, %v3724
    %v3726 = vrot.slane %v3724, 4
    %v3727 = vrot.slane %v3516, 5
    %v3728 = vsel %vm1609, %v3726, %v3727
    %v3729 = vrot.slane %v3517, 5
    %v3730 = vrot.slane %v3729, 4
    %v3731 = vrot.slane %v3518, 5
    %v3732 = vsel %vm1609, %v3730, %v3731
    %v3733 = vrot.slane %v3731, 4
    %v3734 = vrot.slane %v3519, 5
    %v3735 = vsel %vm1609, %v3733, %v3734
    %v3736 = vrot.slane %v3520, 5
    %v3737 = vrot.slane %v3736, 4
    %v3738 = vrot.slane %v3521, 5
    %v3739 = vsel %vm1609, %v3737, %v3738
    %v3740 = vrot.slane %v3738, 4
    %v3741 = vrot.slane %v3522, 5
    %v3742 = vsel %vm1609, %v3740, %v3741
    %v3743 = vrot.slane %v3523, 5
    %v3744 = vrot.slane %v3743, 4
    %v3745 = vrot.slane %v3524, 5
    %v3746 = vsel %vm1609, %v3744, %v3745
    %v3747 = vrot.slane %v3745, 4
    %v3748 = vrot.slane %v3525, 5
    %v3749 = vsel %vm1609, %v3747, %v3748
    %v3750 = vrot.slane %v3526, 5
    %v3751 = vrot.slane %v3750, 4
    %v3752 = vrot.slane %v3527, 5
    %v3753 = vsel %vm1609, %v3751, %v3752
    %v3754 = vrot.slane %v3752, 4
    %v3755 = vrot.slane %v3528, 5
    %v3756 = vsel %vm1609, %v3754, %v3755
    %v3757 = vrot.slane %v3529, 5
    %v3758 = vrot.slane %v3757, 4
    %v3759 = vrot.slane %v3530, 5
    %v3760 = vsel %vm1609, %v3758, %v3759
    %v3761 = vrot.slane %v3759, 4
    %v3762 = vrot.slane %v3531, 5
    %v3763 = vsel %vm1609, %v3761, %v3762
    %v3764 = vrot.slane %v3532, 5
    %v3765 = vrot.slane %v3764, 4
    %v3766 = vrot.slane %v3533, 5
    %v3767 = vsel %vm1609, %v3765, %v3766
    %v3768 = vrot.slane %v3766, 4
    %v3769 = vrot.slane %v3534, 5
    %v3770 = vsel %vm1609, %v3768, %v3769
    %v3771 = vrot.slane %v3535, 5
    %v3772 = vrot.slane %v3771, 4
    %v3773 = vrot.slane %v3536, 5
    %v3774 = vsel %vm1609, %v3772, %v3773
    %v3775 = vrot.slane %v3773, 4
    %v3776 = vrot.slane %v3537, 5
    %v3777 = vsel %vm1609, %v3775, %v3776
    %v3778 = vrot.slane %v3538, 5
    %v3779 = vrot.slane %v3778, 4
    %v3780 = vrot.slane %v3539, 5
    %v3781 = vsel %vm1609, %v3779, %v3780
    %v3782 = vrot.slane %v3780, 4
    %v3783 = vrot.slane %v3540, 5
    %v3784 = vsel %vm1609, %v3782, %v3783
    %v3785 = vrot.slane %v3541, 5
    %v3786 = vrot.slane %v3785, 4
    %v3787 = vrot.slane %v3542, 5
    %v3788 = vsel %vm1609, %v3786, %v3787
    %v3789 = vrot.slane %v3787, 4
    %v3790 = vrot.slane %v3543, 5
    %v3791 = vsel %vm1609, %v3789, %v3790
    %v3792 = vrot.slane %v3544, 5
    %v3793 = vrot.slane %v3792, 4
    %v3794 = vrot.slane %v3545, 5
    %v3795 = vsel %vm1609, %v3793, %v3794
    %v3796 = vrot.slane %v3794, 4
    %v3797 = vrot.slane %v3546, 5
    %v3798 = vsel %vm1609, %v3796, %v3797
    %v3799 = vrot.slane %v3547, 5
    %v3800 = vrot.slane %v3799, 4
    %v3801 = vrot.slane %v3548, 5
    %v3802 = vsel %vm1609, %v3800, %v3801
    %v3803 = vrot.slane %v3801, 4
    %v3804 = vrot.slane %v3549, 5
    %v3805 = vsel %vm1609, %v3803, %v3804
    %v3806 = vrot.slane %v3550, 5
    %v3807 = vrot.slane %v3806, 4
    %v3808 = vrot.slane %v3551, 5
    %v3809 = vsel %vm1609, %v3807, %v3808
    %v3810 = vrot.slane %v3808, 4
    %v3811 = vrot.slane %v3552, 5
    %v3812 = vsel %vm1609, %v3810, %v3811
    %v3813 = vrot.slane %v3553, 5
    %v3814 = vrot.slane %v3813, 4
    %v3815 = vrot.slane %v3554, 5
    %v3816 = vsel %vm1609, %v3814, %v3815
    %v3817 = vrot.slane %v3815, 4
    %v3818 = vrot.slane %v3555, 5
    %v3819 = vsel %vm1609, %v3817, %v3818
    %v3820 = vrot.slane %v3556, 5
    %v3821 = vrot.slane %v3820, 4
    %v3822 = vrot.slane %v3557, 5
    %v3823 = vsel %vm1609, %v3821, %v3822
    %v3824 = vrot.slane %v3822, 4
    %v3825 = vrot.slane %v3558, 5
    %v3826 = vsel %vm1609, %v3824, %v3825
    %v3827 = vrot.slane %v3559, 5
    %v3828 = vrot.slane %v3827, 4
    %v3829 = vrot.slane %v3560, 5
    %v3830 = vsel %vm1609, %v3828, %v3829
    %v3831 = vrot.slane %v3829, 4
    %v3832 = vrot.slane %v3561, 5
    %v3833 = vsel %vm1609, %v3831, %v3832
    %v3834 = vrot.slane %v3562, 5
    %v3835 = vrot.slane %v3834, 4
    %v3836 = vrot.slane %v3563, 5
    %v3837 = vsel %vm1609, %v3835, %v3836
    %v3838 = vrot.slane %v3836, 4
    %v3839 = vrot.slane %v3564, 5
    %v3840 = vsel %vm1609, %v3838, %v3839
    %v3841 = vrot.slane %v3565, 5
    %v3842 = vrot.slane %v3841, 4
    %v3843 = vrot.slane %v3566, 5
    %v3844 = vsel %vm1609, %v3842, %v3843
    %v3845 = vrot.slane %v3843, 4
    %v3846 = vrot.slane %v3567, 5
    %v3847 = vsel %vm1609, %v3845, %v3846
    %v3848 = vrot.slane %v3568, 5
    %v3849 = vrot.slane %v3848, 4
    %v3850 = vrot.slane %v3569, 5
    %v3851 = vsel %vm1609, %v3849, %v3850
    %v3852 = vrot.slane %v3850, 4
    %v3853 = vrot.slane %v3570, 5
    %v3854 = vsel %vm1609, %v3852, %v3853
    %v3855 = vrot.slane %v3571, 5
    %v3856 = vrot.slane %v3855, 4
    %v3857 = vrot.slane %v3572, 5
    %v3858 = vsel %vm1609, %v3856, %v3857
    %v3859 = vrot.slane %v3857, 4
    %v3860 = vrot.slane %v3573, 5
    %v3861 = vsel %vm1609, %v3859, %v3860
    %v3862 = vrot.slane %v3574, 5
    %v3863 = vrot.slane %v3862, 4
    %v3864 = vrot.slane %v3575, 5
    %v3865 = vsel %vm1609, %v3863, %v3864
    %v3866 = vrot.slane %v3864, 4
    %v3867 = vrot.slane %v3576, 5
    %v3868 = vsel %vm1609, %v3866, %v3867
    %v3869 = vrot.slane %v3577, 5
    %v3870 = vrot.slane %v3869, 4
    %v3871 = vrot.slane %v3578, 5
    %v3872 = vsel %vm1609, %v3870, %v3871
    %v3873 = vrot.slane %v3871, 4
    %v3874 = vrot.slane %v3579, 5
    %v3875 = vsel %vm1609, %v3873, %v3874
    %v3876 = vrot.slane %v3580, 5
    %v3877 = vrot.slane %v3876, 4
    %v3878 = vrot.slane %v3581, 5
    %v3879 = vsel %vm1609, %v3877, %v3878
    %v3880 = vrot.slane %v3878, 4
    %v3881 = vrot.slane %v3582, 5
    %v3882 = vsel %vm1609, %v3880, %v3881
    %v3883 = vrot.slane %v3583, 5
    %v3884 = vrot.slane %v3883, 4
    %v3885 = vrot.slane %v3584, 5
    %v3886 = vsel %vm1609, %v3884, %v3885
    %v3887 = vrot.slane %v3885, 4
    %v3888 = vrot.slane %v3585, 5
    %v3889 = vsel %vm1609, %v3887, %v3888
    %v3890 = vrot.slane %v3586, 5
    %v3891 = vrot.slane %v3890, 4
    %v3892 = vrot.slane %v3587, 5
    %v3893 = vsel %vm1609, %v3891, %v3892
    %v3894 = vrot.slane %v3892, 4
    %v3895 = vrot.slane %v3588, 5
    %v3896 = vsel %vm1609, %v3894, %v3895
    %v3897 = vrot.slane %v3589, 5
    %v3898 = vrot.slane %v3897, 4
    %v3899 = vrot.slane %v3590, 5
    %v3900 = vsel %vm1609, %v3898, %v3899
    %v3901 = vrot.slane %v3899, 4
    %v3902 = vrot.slane %v3591, 5
    %v3903 = vsel %vm1609, %v3901, %v3902
    %v3904 = vrot.slane %v3592, 5
    %v3905 = vrot.slane %v3904, 4
    %v3906 = vrot.slane %v3593, 5
    %v3907 = vsel %vm1609, %v3905, %v3906
    %v3908 = vrot.slane %v3906, 4
    %v3909 = vrot.slane %v3594, 5
    %v3910 = vsel %vm1609, %v3908, %v3909
    %v3911 = vrot.slane %v3595, 5
    %v3912 = vrot.slane %v3911, 4
    %v3913 = vrot.slane %v3596, 5
    %v3914 = vsel %vm1609, %v3912, %v3913
    %v3915 = vrot.slane %v3913, 4
    %v3916 = vrot.slane %v3597, 5
    %v3917 = vsel %vm1609, %v3915, %v3916
    %v3918 = vunpack.c.l.b16 %v3697
    %v3919 = vunpack.c.l.b16 %v3700
    %v3920 = vunpack.c.l.b16 %v3704
    %v3921 = vunpack.c.l.b16 %v3707
    %v3922 = vunpack.c.l.b16 %v3711
    %v3923 = vunpack.c.l.b16 %v3714
    %v3924 = vunpack.c.l.b16 %v3718
    %v3925 = vunpack.c.l.b16 %v3721
    %v3926 = vunpack.c.l.b16 %v3725
    %v3927 = vunpack.c.l.b16 %v3728
    %v3928 = vunpack.c.l.b16 %v3732
    %v3929 = vunpack.c.l.b16 %v3735
    %v3930 = vunpack.c.l.b16 %v3739
    %v3931 = vunpack.c.l.b16 %v3742
    %v3932 = vunpack.c.l.b16 %v3746
    %v3933 = vunpack.c.l.b16 %v3749
    %v3934 = vunpack.c.l.b16 %v3753
    %v3935 = vunpack.c.l.b16 %v3756
    %v3936 = vunpack.c.l.b16 %v3760
    %v3937 = vunpack.c.l.b16 %v3763
    %v3938 = vunpack.c.l.b16 %v3767
    %v3939 = vunpack.c.l.b16 %v3770
    %v3940 = vunpack.c.l.b16 %v3774
    %v3941 = vunpack.c.l.b16 %v3777
    %v3942 = vunpack.c.l.b16 %v3781
    %v3943 = vunpack.c.l.b16 %v3784
    %v3944 = vunpack.c.l.b16 %v3788
    %v3945 = vunpack.c.l.b16 %v3791
    %v3946 = vunpack.c.l.b16 %v3795
    %v3947 = vunpack.c.l.b16 %v3798
    %v3948 = vunpack.c.l.b16 %v3802
    %v3949 = vunpack.c.l.b16 %v3805
    %v3950 = vunpack.c.l.b16 %v3809
    %v3951 = vunpack.c.l.b16 %v3812
    %v3952 = vunpack.c.l.b16 %v3816
    %v3953 = vunpack.c.l.b16 %v3819
    %v3954 = vunpack.c.l.b16 %v3823
    %v3955 = vunpack.c.l.b16 %v3826
    %v3956 = vunpack.c.l.b16 %v3830
    %v3957 = vunpack.c.l.b16 %v3833
    %v3958 = vunpack.c.l.b16 %v3837
    %v3959 = vunpack.c.l.b16 %v3840
    %v3960 = vunpack.c.l.b16 %v3844
    %v3961 = vunpack.c.l.b16 %v3847
    %v3962 = vunpack.c.l.b16 %v3851
    %v3963 = vunpack.c.l.b16 %v3854
    %v3964 = vunpack.c.l.b16 %v3858
    %v3965 = vunpack.c.l.b16 %v3861
    %v3966 = vunpack.c.l.b16 %v3865
    %v3967 = vunpack.c.l.b16 %v3868
    %v3968 = vunpack.c.l.b16 %v3872
    %v3969 = vunpack.c.l.b16 %v3875
    %v3970 = vunpack.c.l.b16 %v3879
    %v3971 = vunpack.c.l.b16 %v3882
    %v3972 = vunpack.c.l.b16 %v3886
    %v3973 = vunpack.c.l.b16 %v3889
    %v3974 = vunpack.c.l.b16 %v3893
    %v3975 = vunpack.c.l.b16 %v3896
    %v3976 = vunpack.c.l.b16 %v3900
    %v3977 = vunpack.c.l.b16 %v3903
    %v3978 = vunpack.c.l.b16 %v3907
    %v3979 = vunpack.c.l.b16 %v3910
    %v3980 = vunpack.c.l.b16 %v3914
    %v3981 = vunpack.c.l.b16 %v3917
    %v3982 = vpack.c.b16 %v3919, %v3918
    %v3983 = vpack.c.b16 %v3921, %v3920
    %v3984 = vpack.c.b16 %v3923, %v3922
    %v3985 = vpack.c.b16 %v3925, %v3924
    %v3986 = vpack.c.b16 %v3927, %v3926
    %v3987 = vpack.c.b16 %v3929, %v3928
    %v3988 = vpack.c.b16 %v3931, %v3930
    %v3989 = vpack.c.b16 %v3933, %v3932
    %v3990 = vpack.c.b16 %v3935, %v3934
    %v3991 = vpack.c.b16 %v3937, %v3936
    %v3992 = vpack.c.b16 %v3939, %v3938
    %v3993 = vpack.c.b16 %v3941, %v3940
    %v3994 = vpack.c.b16 %v3943, %v3942
    %v3995 = vpack.c.b16 %v3945, %v3944
    %v3996 = vpack.c.b16 %v3947, %v3946
    %v3997 = vpack.c.b16 %v3949, %v3948
    %v3998 = vpack.c.b16 %v3951, %v3950
    %v3999 = vpack.c.b16 %v3953, %v3952
    %v4000 = vpack.c.b16 %v3955, %v3954
    %v4001 = vpack.c.b16 %v3957, %v3956
    %v4002 = vpack.c.b16 %v3959, %v3958
    %v4003 = vpack.c.b16 %v3961, %v3960
    %v4004 = vpack.c.b16 %v3963, %v3962
    %v4005 = vpack.c.b16 %v3965, %v3964
    %v4006 = vpack.c.b16 %v3967, %v3966
    %v4007 = vpack.c.b16 %v3969, %v3968
    %v4008 = vpack.c.b16 %v3971, %v3970
    %v4009 = vpack.c.b16 %v3973, %v3972
    %v4010 = vpack.c.b16 %v3975, %v3974
    %v4011 = vpack.c.b16 %v3977, %v3976
    %v4012 = vpack.c.b16 %v3979, %v3978
    %v4013 = vpack.c.b16 %v3981, %v3980
    %4014 = vrot.lane.b32.xlu0 %v3982, 20
    %v4015 = vpop.permute.xlu0 %4014
    %4016 = vrot.lane.b32.xlu0 %v3983, 20
    %v4017 = vpop.permute.xlu0 %4016
    %4018 = vrot.lane.b32.xlu0 %v3984, 20
    %v4019 = vpop.permute.xlu0 %4018
    %4020 = vrot.lane.b32.xlu0 %v3985, 20
    %v4021 = vpop.permute.xlu0 %4020
    %4022 = vrot.lane.b32.xlu0 %v3986, 20
    %v4023 = vpop.permute.xlu0 %4022
    %4024 = vrot.lane.b32.xlu0 %v3987, 20
    %v4025 = vpop.permute.xlu0 %4024
    %4026 = vrot.lane.b32.xlu0 %v3988, 20
    %v4027 = vpop.permute.xlu0 %4026
    %4028 = vrot.lane.b32.xlu0 %v3989, 20
    %v4029 = vpop.permute.xlu0 %4028
    %4030 = vrot.lane.b32.xlu0 %v3990, 20
    %v4031 = vpop.permute.xlu0 %4030
    %4032 = vrot.lane.b32.xlu0 %v3991, 20
    %v4033 = vpop.permute.xlu0 %4032
    %4034 = vrot.lane.b32.xlu0 %v3992, 20
    %v4035 = vpop.permute.xlu0 %4034
    %4036 = vrot.lane.b32.xlu0 %v3993, 20
    %v4037 = vpop.permute.xlu0 %4036
    %4038 = vrot.lane.b32.xlu0 %v3994, 20
    %v4039 = vpop.permute.xlu0 %4038
    %4040 = vrot.lane.b32.xlu0 %v3995, 20
    %v4041 = vpop.permute.xlu0 %4040
    %4042 = vrot.lane.b32.xlu0 %v3996, 20
    %v4043 = vpop.permute.xlu0 %4042
    %4044 = vrot.lane.b32.xlu0 %v3997, 20
    %v4045 = vpop.permute.xlu0 %4044
    %4046 = vrot.lane.b32.xlu0 %v3998, 20
    %v4047 = vpop.permute.xlu0 %4046
    %4048 = vrot.lane.b32.xlu0 %v3999, 20
    %v4049 = vpop.permute.xlu0 %4048
    %4050 = vrot.lane.b32.xlu0 %v4000, 20
    %v4051 = vpop.permute.xlu0 %4050
    %4052 = vrot.lane.b32.xlu0 %v4001, 20
    %v4053 = vpop.permute.xlu0 %4052
    %4054 = vrot.lane.b32.xlu0 %v4002, 20
    %v4055 = vpop.permute.xlu0 %4054
    %4056 = vrot.lane.b32.xlu0 %v4003, 20
    %v4057 = vpop.permute.xlu0 %4056
    %4058 = vrot.lane.b32.xlu0 %v4004, 20
    %v4059 = vpop.permute.xlu0 %4058
    %4060 = vrot.lane.b32.xlu0 %v4005, 20
    %v4061 = vpop.permute.xlu0 %4060
    %4062 = vrot.lane.b32.xlu0 %v4006, 20
    %v4063 = vpop.permute.xlu0 %4062
    %4064 = vrot.lane.b32.xlu0 %v4007, 20
    %v4065 = vpop.permute.xlu0 %4064
    %4066 = vrot.lane.b32.xlu0 %v4008, 20
    %v4067 = vpop.permute.xlu0 %4066
    %4068 = vrot.lane.b32.xlu0 %v4009, 20
    %v4069 = vpop.permute.xlu0 %4068
    %4070 = vrot.lane.b32.xlu0 %v4010, 20
    %v4071 = vpop.permute.xlu0 %4070
    %4072 = vrot.lane.b32.xlu0 %v4011, 20
    %v4073 = vpop.permute.xlu0 %4072
    %4074 = vrot.lane.b32.xlu0 %v4012, 20
    %v4075 = vpop.permute.xlu0 %4074
    %4076 = vrot.lane.b32.xlu0 %v4013, 20
    %v4077 = vpop.permute.xlu0 %4076
    %vm4110 = vcmask 195744
    %4111 = vst.msk [vmem:[#allocation3] sm:$0xff] %vm4110, %v4015
    %4112 = vst.msk [vmem:[#allocation3 + $0x8] sm:$0xff] %vm4110, %v4017
    %4113 = vst.msk [vmem:[#allocation3 + $0x10] sm:$0xff] %vm4110, %v4019
    %4114 = vst.msk [vmem:[#allocation3 + $0x18] sm:$0xff] %vm4110, %v4021
    %4115 = vst.msk [vmem:[#allocation3 + $0x20] sm:$0xff] %vm4110, %v4023
    %4116 = vst.msk [vmem:[#allocation3 + $0x28] sm:$0xff] %vm4110, %v4025
    %4117 = vst.msk [vmem:[#allocation3 + $0x30] sm:$0xff] %vm4110, %v4027
    %4118 = vst.msk [vmem:[#allocation3 + $0x38] sm:$0xff] %vm4110, %v4029
    %4119 = vst.msk [vmem:[#allocation3 + $0x40] sm:$0xff] %vm4110, %v4031
    %4120 = vst.msk [vmem:[#allocation3 + $0x48] sm:$0xff] %vm4110, %v4033
    %4121 = vst.msk [vmem:[#allocation3 + $0x50] sm:$0xff] %vm4110, %v4035
    %4122 = vst.msk [vmem:[#allocation3 + $0x58] sm:$0xff] %vm4110, %v4037
    %4123 = vst.msk [vmem:[#allocation3 + $0x60] sm:$0xff] %vm4110, %v4039
    %4124 = vst.msk [vmem:[#allocation3 + $0x68] sm:$0xff] %vm4110, %v4041
    %4125 = vst.msk [vmem:[#allocation3 + $0x70] sm:$0xff] %vm4110, %v4043
    %4126 = vst.msk [vmem:[#allocation3 + $0x78] sm:$0xff] %vm4110, %v4045
    %4127 = vst.msk [vmem:[#allocation3 + $0x80] sm:$0xff] %vm4110, %v4047
    %4128 = vst.msk [vmem:[#allocation3 + $0x88] sm:$0xff] %vm4110, %v4049
    %4129 = vst.msk [vmem:[#allocation3 + $0x90] sm:$0xff] %vm4110, %v4051
    %4130 = vst.msk [vmem:[#allocation3 + $0x98] sm:$0xff] %vm4110, %v4053
    %4131 = vst.msk [vmem:[#allocation3 + $0xa0] sm:$0xff] %vm4110, %v4055
    %4132 = vst.msk [vmem:[#allocation3 + $0xa8] sm:$0xff] %vm4110, %v4057
    %4133 = vst.msk [vmem:[#allocation3 + $0xb0] sm:$0xff] %vm4110, %v4059
    %4134 = vst.msk [vmem:[#allocation3 + $0xb8] sm:$0xff] %vm4110, %v4061
    %4135 = vst.msk [vmem:[#allocation3 + $0xc0] sm:$0xff] %vm4110, %v4063
    %4136 = vst.msk [vmem:[#allocation3 + $0xc8] sm:$0xff] %vm4110, %v4065
    %4137 = vst.msk [vmem:[#allocation3 + $0xd0] sm:$0xff] %vm4110, %v4067
    %4138 = vst.msk [vmem:[#allocation3 + $0xd8] sm:$0xff] %vm4110, %v4069
    %4139 = vst.msk [vmem:[#allocation3 + $0xe0] sm:$0xff] %vm4110, %v4071
    %4140 = vst.msk [vmem:[#allocation3 + $0xe8] sm:$0xff] %vm4110, %v4073
    %4141 = vst.msk [vmem:[#allocation3 + $0xf0] sm:$0xff] %vm4110, %v4075
    %4142 = vst.msk [vmem:[#allocation3 + $0xf8] sm:$0xff] %vm4110, %v4077
    %s4143 = scalar_lea.vmem %s0, 24
    %v4144 = vld [vmem:[%s4143] sm:$0xf]
    %v4145 = vld [vmem:[%s4143 + $0x4] sm:$0xf]
    %v4146 = vld [vmem:[%s4143 + $0xc] sm:$0xf]
    %v4147 = vld [vmem:[%s4143 + $0x10] sm:$0xf]
    %v4148 = vld [vmem:[%s4143 + $0x18] sm:$0xf]
    %v4149 = vld [vmem:[%s4143 + $0x1c] sm:$0xf]
    %v4150 = vld [vmem:[%s4143 + $0x24] sm:$0xf]
    %v4151 = vld [vmem:[%s4143 + $0x28] sm:$0xf]
    %v4152 = vld [vmem:[%s4143 + $0x30] sm:$0xf]
    %v4153 = vld [vmem:[%s4143 + $0x34] sm:$0xf]
    %v4154 = vld [vmem:[%s4143 + $0x3c] sm:$0xf]
    %v4155 = vld [vmem:[%s4143 + $0x40] sm:$0xf]
    %v4156 = vld [vmem:[%s4143 + $0x48] sm:$0xf]
    %v4157 = vld [vmem:[%s4143 + $0x4c] sm:$0xf]
    %v4158 = vld [vmem:[%s4143 + $0x54] sm:$0xf]
    %v4159 = vld [vmem:[%s4143 + $0x58] sm:$0xf]
    %v4160 = vld [vmem:[%s4143 + $0x60] sm:$0xf]
    %v4161 = vld [vmem:[%s4143 + $0x64] sm:$0xf]
    %v4162 = vld [vmem:[%s4143 + $0x6c] sm:$0xf]
    %v4163 = vld [vmem:[%s4143 + $0x70] sm:$0xf]
    %v4164 = vld [vmem:[%s4143 + $0x78] sm:$0xf]
    %v4165 = vld [vmem:[%s4143 + $0x7c] sm:$0xf]
    %v4166 = vld [vmem:[%s4143 + $0x84] sm:$0xf]
    %v4167 = vld [vmem:[%s4143 + $0x88] sm:$0xf]
    %v4168 = vld [vmem:[%s4143 + $0x90] sm:$0xf]
    %v4169 = vld [vmem:[%s4143 + $0x94] sm:$0xf]
    %v4170 = vld [vmem:[%s4143 + $0x9c] sm:$0xf]
    %v4171 = vld [vmem:[%s4143 + $0xa0] sm:$0xf]
    %v4172 = vld [vmem:[%s4143 + $0xa8] sm:$0xf]
    %v4173 = vld [vmem:[%s4143 + $0xac] sm:$0xf]
    %v4174 = vld [vmem:[%s4143 + $0xb4] sm:$0xf]
    %v4175 = vld [vmem:[%s4143 + $0xb8] sm:$0xf]
    %v4176 = vld [vmem:[%s4143 + $0xd8] sm:$0xf]
    %v4177 = vld [vmem:[%s4143 + $0xdc] sm:$0xf]
    %v4178 = vld [vmem:[%s4143 + $0xe4] sm:$0xf]
    %v4179 = vld [vmem:[%s4143 + $0xe8] sm:$0xf]
    %v4180 = vld [vmem:[%s4143 + $0xf0] sm:$0xf]
    %v4181 = vld [vmem:[%s4143 + $0xf4] sm:$0xf]
    %v4182 = vld [vmem:[%s4143 + $0xfc] sm:$0xf]
    %v4183 = vld [vmem:[%s4143 + $0x100] sm:$0xf]
    %v4184 = vld [vmem:[%s4143 + $0x108] sm:$0xf]
    %v4185 = vld [vmem:[%s4143 + $0x10c] sm:$0xf]
    %v4186 = vld [vmem:[%s4143 + $0x114] sm:$0xf]
    %v4187 = vld [vmem:[%s4143 + $0x118] sm:$0xf]
    %v4188 = vld [vmem:[%s4143 + $0x120] sm:$0xf]
    %v4189 = vld [vmem:[%s4143 + $0x124] sm:$0xf]
    %v4190 = vld [vmem:[%s4143 + $0x12c] sm:$0xf]
    %v4191 = vld [vmem:[%s4143 + $0x130] sm:$0xf]
    %v4192 = vld [vmem:[%s4143 + $0x138] sm:$0xf]
    %v4193 = vld [vmem:[%s4143 + $0x13c] sm:$0xf]
    %v4194 = vld [vmem:[%s4143 + $0x144] sm:$0xf]
    %v4195 = vld [vmem:[%s4143 + $0x148] sm:$0xf]
    %v4196 = vld [vmem:[%s4143 + $0x150] sm:$0xf]
    %v4197 = vld [vmem:[%s4143 + $0x154] sm:$0xf]
    %v4198 = vld [vmem:[%s4143 + $0x15c] sm:$0xf]
    %v4199 = vld [vmem:[%s4143 + $0x160] sm:$0xf]
    %v4200 = vld [vmem:[%s4143 + $0x168] sm:$0xf]
    %v4201 = vld [vmem:[%s4143 + $0x16c] sm:$0xf]
    %v4202 = vld [vmem:[%s4143 + $0x174] sm:$0xf]
    %v4203 = vld [vmem:[%s4143 + $0x178] sm:$0xf]
    %v4204 = vld [vmem:[%s4143 + $0x180] sm:$0xf]
    %v4205 = vld [vmem:[%s4143 + $0x184] sm:$0xf]
    %v4206 = vld [vmem:[%s4143 + $0x18c] sm:$0xf]
    %v4207 = vld [vmem:[%s4143 + $0x190] sm:$0xf]
    %v4272 = vunpack.c.l.b16 %v4144
    %v4273 = vunpack.c.l.b16 %v4145
    %v4274 = vunpack.c.l.b16 %v4146
    %v4275 = vunpack.c.l.b16 %v4147
    %v4276 = vunpack.c.l.b16 %v4148
    %v4277 = vunpack.c.l.b16 %v4149
    %v4278 = vunpack.c.l.b16 %v4150
    %v4279 = vunpack.c.l.b16 %v4151
    %v4280 = vunpack.c.l.b16 %v4152
    %v4281 = vunpack.c.l.b16 %v4153
    %v4282 = vunpack.c.l.b16 %v4154
    %v4283 = vunpack.c.l.b16 %v4155
    %v4284 = vunpack.c.l.b16 %v4156
    %v4285 = vunpack.c.l.b16 %v4157
    %v4286 = vunpack.c.l.b16 %v4158
    %v4287 = vunpack.c.l.b16 %v4159
    %v4288 = vunpack.c.l.b16 %v4160
    %v4289 = vunpack.c.l.b16 %v4161
    %v4290 = vunpack.c.l.b16 %v4162
    %v4291 = vunpack.c.l.b16 %v4163
    %v4292 = vunpack.c.l.b16 %v4164
    %v4293 = vunpack.c.l.b16 %v4165
    %v4294 = vunpack.c.l.b16 %v4166
    %v4295 = vunpack.c.l.b16 %v4167
    %v4296 = vunpack.c.l.b16 %v4168
    %v4297 = vunpack.c.l.b16 %v4169
    %v4298 = vunpack.c.l.b16 %v4170
    %v4299 = vunpack.c.l.b16 %v4171
    %v4300 = vunpack.c.l.b16 %v4172
    %v4301 = vunpack.c.l.b16 %v4173
    %v4302 = vunpack.c.l.b16 %v4174
    %v4303 = vunpack.c.l.b16 %v4175
    %v4304 = vunpack.c.l.b16 %v4176
    %v4305 = vunpack.c.l.b16 %v4177
    %v4306 = vunpack.c.l.b16 %v4178
    %v4307 = vunpack.c.l.b16 %v4179
    %v4308 = vunpack.c.l.b16 %v4180
    %v4309 = vunpack.c.l.b16 %v4181
    %v4310 = vunpack.c.l.b16 %v4182
    %v4311 = vunpack.c.l.b16 %v4183
    %v4312 = vunpack.c.l.b16 %v4184
    %v4313 = vunpack.c.l.b16 %v4185
    %v4314 = vunpack.c.l.b16 %v4186
    %v4315 = vunpack.c.l.b16 %v4187
    %v4316 = vunpack.c.l.b16 %v4188
    %v4317 = vunpack.c.l.b16 %v4189
    %v4318 = vunpack.c.l.b16 %v4190
    %v4319 = vunpack.c.l.b16 %v4191
    %v4320 = vunpack.c.l.b16 %v4192
    %v4321 = vunpack.c.l.b16 %v4193
    %v4322 = vunpack.c.l.b16 %v4194
    %v4323 = vunpack.c.l.b16 %v4195
    %v4324 = vunpack.c.l.b16 %v4196
    %v4325 = vunpack.c.l.b16 %v4197
    %v4326 = vunpack.c.l.b16 %v4198
    %v4327 = vunpack.c.l.b16 %v4199
    %v4328 = vunpack.c.l.b16 %v4200
    %v4329 = vunpack.c.l.b16 %v4201
    %v4330 = vunpack.c.l.b16 %v4202
    %v4331 = vunpack.c.l.b16 %v4203
    %v4332 = vunpack.c.l.b16 %v4204
    %v4333 = vunpack.c.l.b16 %v4205
    %v4334 = vunpack.c.l.b16 %v4206
    %v4335 = vunpack.c.l.b16 %v4207
    %v4336 = vpack.c.b16 %v4273, %v4272
    %v4337 = vpack.c.b16 %v4275, %v4274
    %v4338 = vpack.c.b16 %v4277, %v4276
    %v4339 = vpack.c.b16 %v4279, %v4278
    %v4340 = vpack.c.b16 %v4281, %v4280
    %v4341 = vpack.c.b16 %v4283, %v4282
    %v4342 = vpack.c.b16 %v4285, %v4284
    %v4343 = vpack.c.b16 %v4287, %v4286
    %v4344 = vpack.c.b16 %v4289, %v4288
    %v4345 = vpack.c.b16 %v4291, %v4290
    %v4346 = vpack.c.b16 %v4293, %v4292
    %v4347 = vpack.c.b16 %v4295, %v4294
    %v4348 = vpack.c.b16 %v4297, %v4296
    %v4349 = vpack.c.b16 %v4299, %v4298
    %v4350 = vpack.c.b16 %v4301, %v4300
    %v4351 = vpack.c.b16 %v4303, %v4302
    %v4352 = vpack.c.b16 %v4305, %v4304
    %v4353 = vpack.c.b16 %v4307, %v4306
    %v4354 = vpack.c.b16 %v4309, %v4308
    %v4355 = vpack.c.b16 %v4311, %v4310
    %v4356 = vpack.c.b16 %v4313, %v4312
    %v4357 = vpack.c.b16 %v4315, %v4314
    %v4358 = vpack.c.b16 %v4317, %v4316
    %v4359 = vpack.c.b16 %v4319, %v4318
    %v4360 = vpack.c.b16 %v4321, %v4320
    %v4361 = vpack.c.b16 %v4323, %v4322
    %v4362 = vpack.c.b16 %v4325, %v4324
    %v4363 = vpack.c.b16 %v4327, %v4326
    %v4364 = vpack.c.b16 %v4329, %v4328
    %v4365 = vpack.c.b16 %v4331, %v4330
    %v4366 = vpack.c.b16 %v4333, %v4332
    %v4367 = vpack.c.b16 %v4335, %v4334
    %4368 = vrot.lane.b32.xlu0 %v4336, 24
    %v4369 = vpop.permute.xlu0 %4368
    %4370 = vrot.lane.b32.xlu0 %v4337, 24
    %v4371 = vpop.permute.xlu0 %4370
    %4372 = vrot.lane.b32.xlu0 %v4338, 24
    %v4373 = vpop.permute.xlu0 %4372
    %4374 = vrot.lane.b32.xlu0 %v4339, 24
    %v4375 = vpop.permute.xlu0 %4374
    %4376 = vrot.lane.b32.xlu0 %v4340, 24
    %v4377 = vpop.permute.xlu0 %4376
    %4378 = vrot.lane.b32.xlu0 %v4341, 24
    %v4379 = vpop.permute.xlu0 %4378
    %4380 = vrot.lane.b32.xlu0 %v4342, 24
    %v4381 = vpop.permute.xlu0 %4380
    %4382 = vrot.lane.b32.xlu0 %v4343, 24
    %v4383 = vpop.permute.xlu0 %4382
    %4384 = vrot.lane.b32.xlu0 %v4344, 24
    %v4385 = vpop.permute.xlu0 %4384
    %4386 = vrot.lane.b32.xlu0 %v4345, 24
    %v4387 = vpop.permute.xlu0 %4386
    %4388 = vrot.lane.b32.xlu0 %v4346, 24
    %v4389 = vpop.permute.xlu0 %4388
    %4390 = vrot.lane.b32.xlu0 %v4347, 24
    %v4391 = vpop.permute.xlu0 %4390
    %4392 = vrot.lane.b32.xlu0 %v4348, 24
    %v4393 = vpop.permute.xlu0 %4392
    %4394 = vrot.lane.b32.xlu0 %v4349, 24
    %v4395 = vpop.permute.xlu0 %4394
    %4396 = vrot.lane.b32.xlu0 %v4350, 24
    %v4397 = vpop.permute.xlu0 %4396
    %4398 = vrot.lane.b32.xlu0 %v4351, 24
    %v4399 = vpop.permute.xlu0 %4398
    %4400 = vrot.lane.b32.xlu0 %v4352, 24
    %v4401 = vpop.permute.xlu0 %4400
    %4402 = vrot.lane.b32.xlu0 %v4353, 24
    %v4403 = vpop.permute.xlu0 %4402
    %4404 = vrot.lane.b32.xlu0 %v4354, 24
    %v4405 = vpop.permute.xlu0 %4404
    %4406 = vrot.lane.b32.xlu0 %v4355, 24
    %v4407 = vpop.permute.xlu0 %4406
    %4408 = vrot.lane.b32.xlu0 %v4356, 24
    %v4409 = vpop.permute.xlu0 %4408
    %4410 = vrot.lane.b32.xlu0 %v4357, 24
    %v4411 = vpop.permute.xlu0 %4410
    %4412 = vrot.lane.b32.xlu0 %v4358, 24
    %v4413 = vpop.permute.xlu0 %4412
    %4414 = vrot.lane.b32.xlu0 %v4359, 24
    %v4415 = vpop.permute.xlu0 %4414
    %4416 = vrot.lane.b32.xlu0 %v4360, 24
    %v4417 = vpop.permute.xlu0 %4416
    %4418 = vrot.lane.b32.xlu0 %v4361, 24
    %v4419 = vpop.permute.xlu0 %4418
    %4420 = vrot.lane.b32.xlu0 %v4362, 24
    %v4421 = vpop.permute.xlu0 %4420
    %4422 = vrot.lane.b32.xlu0 %v4363, 24
    %v4423 = vpop.permute.xlu0 %4422
    %4424 = vrot.lane.b32.xlu0 %v4364, 24
    %v4425 = vpop.permute.xlu0 %4424
    %4426 = vrot.lane.b32.xlu0 %v4365, 24
    %v4427 = vpop.permute.xlu0 %4426
    %4428 = vrot.lane.b32.xlu0 %v4366, 24
    %v4429 = vpop.permute.xlu0 %4428
    %4430 = vrot.lane.b32.xlu0 %v4367, 24
    %v4431 = vpop.permute.xlu0 %4430
    %vm4464 = vcmask 228544
    %4465 = vst.msk [vmem:[#allocation3] sm:$0xff] %vm4464, %v4369
    %4466 = vst.msk [vmem:[#allocation3 + $0x8] sm:$0xff] %vm4464, %v4371
    %4467 = vst.msk [vmem:[#allocation3 + $0x10] sm:$0xff] %vm4464, %v4373
    %4468 = vst.msk [vmem:[#allocation3 + $0x18] sm:$0xff] %vm4464, %v4375
    %4469 = vst.msk [vmem:[#allocation3 + $0x20] sm:$0xff] %vm4464, %v4377
    %4470 = vst.msk [vmem:[#allocation3 + $0x28] sm:$0xff] %vm4464, %v4379
    %4471 = vst.msk [vmem:[#allocation3 + $0x30] sm:$0xff] %vm4464, %v4381
    %4472 = vst.msk [vmem:[#allocation3 + $0x38] sm:$0xff] %vm4464, %v4383
    %4473 = vst.msk [vmem:[#allocation3 + $0x40] sm:$0xff] %vm4464, %v4385
    %4474 = vst.msk [vmem:[#allocation3 + $0x48] sm:$0xff] %vm4464, %v4387
    %4475 = vst.msk [vmem:[#allocation3 + $0x50] sm:$0xff] %vm4464, %v4389
    %4476 = vst.msk [vmem:[#allocation3 + $0x58] sm:$0xff] %vm4464, %v4391
    %4477 = vst.msk [vmem:[#allocation3 + $0x60] sm:$0xff] %vm4464, %v4393
    %4478 = vst.msk [vmem:[#allocation3 + $0x68] sm:$0xff] %vm4464, %v4395
    %4479 = vst.msk [vmem:[#allocation3 + $0x70] sm:$0xff] %vm4464, %v4397
    %4480 = vst.msk [vmem:[#allocation3 + $0x78] sm:$0xff] %vm4464, %v4399
    %4481 = vst.msk [vmem:[#allocation3 + $0x80] sm:$0xff] %vm4464, %v4401
    %4482 = vst.msk [vmem:[#allocation3 + $0x88] sm:$0xff] %vm4464, %v4403
    %4483 = vst.msk [vmem:[#allocation3 + $0x90] sm:$0xff] %vm4464, %v4405
    %4484 = vst.msk [vmem:[#allocation3 + $0x98] sm:$0xff] %vm4464, %v4407
    %4485 = vst.msk [vmem:[#allocation3 + $0xa0] sm:$0xff] %vm4464, %v4409
    %4486 = vst.msk [vmem:[#allocation3 + $0xa8] sm:$0xff] %vm4464, %v4411
    %4487 = vst.msk [vmem:[#allocation3 + $0xb0] sm:$0xff] %vm4464, %v4413
    %4488 = vst.msk [vmem:[#allocation3 + $0xb8] sm:$0xff] %vm4464, %v4415
    %4489 = vst.msk [vmem:[#allocation3 + $0xc0] sm:$0xff] %vm4464, %v4417
    %4490 = vst.msk [vmem:[#allocation3 + $0xc8] sm:$0xff] %vm4464, %v4419
    %4491 = vst.msk [vmem:[#allocation3 + $0xd0] sm:$0xff] %vm4464, %v4421
    %4492 = vst.msk [vmem:[#allocation3 + $0xd8] sm:$0xff] %vm4464, %v4423
    %4493 = vst.msk [vmem:[#allocation3 + $0xe0] sm:$0xff] %vm4464, %v4425
    %4494 = vst.msk [vmem:[#allocation3 + $0xe8] sm:$0xff] %vm4464, %v4427
    %4495 = vst.msk [vmem:[#allocation3 + $0xf0] sm:$0xff] %vm4464, %v4429
    %4496 = vst.msk [vmem:[#allocation3 + $0xf8] sm:$0xff] %vm4464, %v4431
    %v4497 = vld [vmem:[%s4143] sm:$0xf]
    %v4498 = vld [vmem:[%s4143 + $0x4] sm:$0xf]
    %v4499 = vld [vmem:[%s4143 + $0x8] sm:$0x1]
    %v4500 = vld [vmem:[%s4143 + $0xc] sm:$0xf]
    %v4501 = vld [vmem:[%s4143 + $0x10] sm:$0xf]
    %v4502 = vld [vmem:[%s4143 + $0x14] sm:$0x1]
    %v4503 = vld [vmem:[%s4143 + $0x18] sm:$0xf]
    %v4504 = vld [vmem:[%s4143 + $0x1c] sm:$0xf]
    %v4505 = vld [vmem:[%s4143 + $0x20] sm:$0x1]
    %v4506 = vld [vmem:[%s4143 + $0x24] sm:$0xf]
    %v4507 = vld [vmem:[%s4143 + $0x28] sm:$0xf]
    %v4508 = vld [vmem:[%s4143 + $0x2c] sm:$0x1]
    %v4509 = vld [vmem:[%s4143 + $0x30] sm:$0xf]
    %v4510 = vld [vmem:[%s4143 + $0x34] sm:$0xf]
    %v4511 = vld [vmem:[%s4143 + $0x38] sm:$0x1]
    %v4512 = vld [vmem:[%s4143 + $0x3c] sm:$0xf]
    %v4513 = vld [vmem:[%s4143 + $0x40] sm:$0xf]
    %v4514 = vld [vmem:[%s4143 + $0x44] sm:$0x1]
    %v4515 = vld [vmem:[%s4143 + $0x48] sm:$0xf]
    %v4516 = vld [vmem:[%s4143 + $0x4c] sm:$0xf]
    %v4517 = vld [vmem:[%s4143 + $0x50] sm:$0x1]
    %v4518 = vld [vmem:[%s4143 + $0x54] sm:$0xf]
    %v4519 = vld [vmem:[%s4143 + $0x58] sm:$0xf]
    %v4520 = vld [vmem:[%s4143 + $0x5c] sm:$0x1]
    %v4521 = vld [vmem:[%s4143 + $0x60] sm:$0xf]
    %v4522 = vld [vmem:[%s4143 + $0x64] sm:$0xf]
    %v4523 = vld [vmem:[%s4143 + $0x68] sm:$0x1]
    %v4524 = vld [vmem:[%s4143 + $0x6c] sm:$0xf]
    %v4525 = vld [vmem:[%s4143 + $0x70] sm:$0xf]
    %v4526 = vld [vmem:[%s4143 + $0x74] sm:$0x1]
    %v4527 = vld [vmem:[%s4143 + $0x78] sm:$0xf]
    %v4528 = vld [vmem:[%s4143 + $0x7c] sm:$0xf]
    %v4529 = vld [vmem:[%s4143 + $0x80] sm:$0x1]
    %v4530 = vld [vmem:[%s4143 + $0x84] sm:$0xf]
    %v4531 = vld [vmem:[%s4143 + $0x88] sm:$0xf]
    %v4532 = vld [vmem:[%s4143 + $0x8c] sm:$0x1]
    %v4533 = vld [vmem:[%s4143 + $0x90] sm:$0xf]
    %v4534 = vld [vmem:[%s4143 + $0x94] sm:$0xf]
    %v4535 = vld [vmem:[%s4143 + $0x98] sm:$0x1]
    %v4536 = vld [vmem:[%s4143 + $0x9c] sm:$0xf]
    %v4537 = vld [vmem:[%s4143 + $0xa0] sm:$0xf]
    %v4538 = vld [vmem:[%s4143 + $0xa4] sm:$0x1]
    %v4539 = vld [vmem:[%s4143 + $0xa8] sm:$0xf]
    %v4540 = vld [vmem:[%s4143 + $0xac] sm:$0xf]
    %v4541 = vld [vmem:[%s4143 + $0xb0] sm:$0x1]
    %v4542 = vld [vmem:[%s4143 + $0xb4] sm:$0xf]
    %v4543 = vld [vmem:[%s4143 + $0xb8] sm:$0xf]
    %v4544 = vld [vmem:[%s4143 + $0xbc] sm:$0x1]
    %v4545 = vld [vmem:[%s4143 + $0xd8] sm:$0xf]
    %v4546 = vld [vmem:[%s4143 + $0xdc] sm:$0xf]
    %v4547 = vld [vmem:[%s4143 + $0xe0] sm:$0x1]
    %v4548 = vld [vmem:[%s4143 + $0xe4] sm:$0xf]
    %v4549 = vld [vmem:[%s4143 + $0xe8] sm:$0xf]
    %v4550 = vld [vmem:[%s4143 + $0xec] sm:$0x1]
    %v4551 = vld [vmem:[%s4143 + $0xf0] sm:$0xf]
    %v4552 = vld [vmem:[%s4143 + $0xf4] sm:$0xf]
    %v4553 = vld [vmem:[%s4143 + $0xf8] sm:$0x1]
    %v4554 = vld [vmem:[%s4143 + $0xfc] sm:$0xf]
    %v4555 = vld [vmem:[%s4143 + $0x100] sm:$0xf]
    %v4556 = vld [vmem:[%s4143 + $0x104] sm:$0x1]
    %v4557 = vld [vmem:[%s4143 + $0x108] sm:$0xf]
    %v4558 = vld [vmem:[%s4143 + $0x10c] sm:$0xf]
    %v4559 = vld [vmem:[%s4143 + $0x110] sm:$0x1]
    %v4560 = vld [vmem:[%s4143 + $0x114] sm:$0xf]
    %v4561 = vld [vmem:[%s4143 + $0x118] sm:$0xf]
    %v4562 = vld [vmem:[%s4143 + $0x11c] sm:$0x1]
    %v4563 = vld [vmem:[%s4143 + $0x120] sm:$0xf]
    %v4564 = vld [vmem:[%s4143 + $0x124] sm:$0xf]
    %v4565 = vld [vmem:[%s4143 + $0x128] sm:$0x1]
    %v4566 = vld [vmem:[%s4143 + $0x12c] sm:$0xf]
    %v4567 = vld [vmem:[%s4143 + $0x130] sm:$0xf]
    %v4568 = vld [vmem:[%s4143 + $0x134] sm:$0x1]
    %v4569 = vld [vmem:[%s4143 + $0x138] sm:$0xf]
    %v4570 = vld [vmem:[%s4143 + $0x13c] sm:$0xf]
    %v4571 = vld [vmem:[%s4143 + $0x140] sm:$0x1]
    %v4572 = vld [vmem:[%s4143 + $0x144] sm:$0xf]
    %v4573 = vld [vmem:[%s4143 + $0x148] sm:$0xf]
    %v4574 = vld [vmem:[%s4143 + $0x14c] sm:$0x1]
    %v4575 = vld [vmem:[%s4143 + $0x150] sm:$0xf]
    %v4576 = vld [vmem:[%s4143 + $0x154] sm:$0xf]
    %v4577 = vld [vmem:[%s4143 + $0x158] sm:$0x1]
    %v4578 = vld [vmem:[%s4143 + $0x15c] sm:$0xf]
    %v4579 = vld [vmem:[%s4143 + $0x160] sm:$0xf]
    %v4580 = vld [vmem:[%s4143 + $0x164] sm:$0x1]
    %v4581 = vld [vmem:[%s4143 + $0x168] sm:$0xf]
    %v4582 = vld [vmem:[%s4143 + $0x16c] sm:$0xf]
    %v4583 = vld [vmem:[%s4143 + $0x170] sm:$0x1]
    %v4584 = vld [vmem:[%s4143 + $0x174] sm:$0xf]
    %v4585 = vld [vmem:[%s4143 + $0x178] sm:$0xf]
    %v4586 = vld [vmem:[%s4143 + $0x17c] sm:$0x1]
    %v4587 = vld [vmem:[%s4143 + $0x180] sm:$0xf]
    %v4588 = vld [vmem:[%s4143 + $0x184] sm:$0xf]
    %v4589 = vld [vmem:[%s4143 + $0x188] sm:$0x1]
    %v4590 = vld [vmem:[%s4143 + $0x18c] sm:$0xf]
    %v4591 = vld [vmem:[%s4143 + $0x190] sm:$0xf]
    %v4592 = vld [vmem:[%s4143 + $0x194] sm:$0x1]
    %v4594 = vshrl.u32 %v4497, 16
    %v4596 = vrot.slane %v4594, 4
    %v4597 = vshll.u32 %v4497, 16
    %v4599 = vrot.slane %v4597, 5
    %v4600 = vor.u32 %v4596, %v4599
    %v4601 = vrot.slane %v4600, 4
    %v4603 = vshll.u32 %v4498, 16
    %v4605 = vrot.slane %v4603, 5
    %v4606 = vsel %vm421, %v4601, %v4605
    %v4607 = vshrl.u32 %v4498, 16
    %v4609 = vrot.slane %v4607, 4
    %v4610 = vor.u32 %v4609, %v4605
    %v4611 = vrot.slane %v4610, 4
    %v4613 = vshll.u32 %v4499, 16
    %v4615 = vrot.slane %v4613, 5
    %v4616 = vsel %vm421, %v4611, %v4615
    %v4618 = vshrl.u32 %v4500, 16
    %v4620 = vrot.slane %v4618, 4
    %v4621 = vshll.u32 %v4500, 16
    %v4623 = vrot.slane %v4621, 5
    %v4624 = vor.u32 %v4620, %v4623
    %v4625 = vrot.slane %v4624, 4
    %v4627 = vshll.u32 %v4501, 16
    %v4629 = vrot.slane %v4627, 5
    %v4630 = vsel %vm421, %v4625, %v4629
    %v4631 = vshrl.u32 %v4501, 16
    %v4633 = vrot.slane %v4631, 4
    %v4634 = vor.u32 %v4633, %v4629
    %v4635 = vrot.slane %v4634, 4
    %v4637 = vshll.u32 %v4502, 16
    %v4639 = vrot.slane %v4637, 5
    %v4640 = vsel %vm421, %v4635, %v4639
    %v4642 = vshrl.u32 %v4503, 16
    %v4644 = vrot.slane %v4642, 4
    %v4645 = vshll.u32 %v4503, 16
    %v4647 = vrot.slane %v4645, 5
    %v4648 = vor.u32 %v4644, %v4647
    %v4649 = vrot.slane %v4648, 4
    %v4651 = vshll.u32 %v4504, 16
    %v4653 = vrot.slane %v4651, 5
    %v4654 = vsel %vm421, %v4649, %v4653
    %v4655 = vshrl.u32 %v4504, 16
    %v4657 = vrot.slane %v4655, 4
    %v4658 = vor.u32 %v4657, %v4653
    %v4659 = vrot.slane %v4658, 4
    %v4661 = vshll.u32 %v4505, 16
    %v4663 = vrot.slane %v4661, 5
    %v4664 = vsel %vm421, %v4659, %v4663
    %v4666 = vshrl.u32 %v4506, 16
    %v4668 = vrot.slane %v4666, 4
    %v4669 = vshll.u32 %v4506, 16
    %v4671 = vrot.slane %v4669, 5
    %v4672 = vor.u32 %v4668, %v4671
    %v4673 = vrot.slane %v4672, 4
    %v4675 = vshll.u32 %v4507, 16
    %v4677 = vrot.slane %v4675, 5
    %v4678 = vsel %vm421, %v4673, %v4677
    %v4679 = vshrl.u32 %v4507, 16
    %v4681 = vrot.slane %v4679, 4
    %v4682 = vor.u32 %v4681, %v4677
    %v4683 = vrot.slane %v4682, 4
    %v4685 = vshll.u32 %v4508, 16
    %v4687 = vrot.slane %v4685, 5
    %v4688 = vsel %vm421, %v4683, %v4687
    %v4690 = vshrl.u32 %v4509, 16
    %v4692 = vrot.slane %v4690, 4
    %v4693 = vshll.u32 %v4509, 16
    %v4695 = vrot.slane %v4693, 5
    %v4696 = vor.u32 %v4692, %v4695
    %v4697 = vrot.slane %v4696, 4
    %v4699 = vshll.u32 %v4510, 16
    %v4701 = vrot.slane %v4699, 5
    %v4702 = vsel %vm421, %v4697, %v4701
    %v4703 = vshrl.u32 %v4510, 16
    %v4705 = vrot.slane %v4703, 4
    %v4706 = vor.u32 %v4705, %v4701
    %v4707 = vrot.slane %v4706, 4
    %v4709 = vshll.u32 %v4511, 16
    %v4711 = vrot.slane %v4709, 5
    %v4712 = vsel %vm421, %v4707, %v4711
    %v4714 = vshrl.u32 %v4512, 16
    %v4716 = vrot.slane %v4714, 4
    %v4717 = vshll.u32 %v4512, 16
    %v4719 = vrot.slane %v4717, 5
    %v4720 = vor.u32 %v4716, %v4719
    %v4721 = vrot.slane %v4720, 4
    %v4723 = vshll.u32 %v4513, 16
    %v4725 = vrot.slane %v4723, 5
    %v4726 = vsel %vm421, %v4721, %v4725
    %v4727 = vshrl.u32 %v4513, 16
    %v4729 = vrot.slane %v4727, 4
    %v4730 = vor.u32 %v4729, %v4725
    %v4731 = vrot.slane %v4730, 4
    %v4733 = vshll.u32 %v4514, 16
    %v4735 = vrot.slane %v4733, 5
    %v4736 = vsel %vm421, %v4731, %v4735
    %v4738 = vshrl.u32 %v4515, 16
    %v4740 = vrot.slane %v4738, 4
    %v4741 = vshll.u32 %v4515, 16
    %v4743 = vrot.slane %v4741, 5
    %v4744 = vor.u32 %v4740, %v4743
    %v4745 = vrot.slane %v4744, 4
    %v4747 = vshll.u32 %v4516, 16
    %v4749 = vrot.slane %v4747, 5
    %v4750 = vsel %vm421, %v4745, %v4749
    %v4751 = vshrl.u32 %v4516, 16
    %v4753 = vrot.slane %v4751, 4
    %v4754 = vor.u32 %v4753, %v4749
    %v4755 = vrot.slane %v4754, 4
    %v4757 = vshll.u32 %v4517, 16
    %v4759 = vrot.slane %v4757, 5
    %v4760 = vsel %vm421, %v4755, %v4759
    %v4762 = vshrl.u32 %v4518, 16
    %v4764 = vrot.slane %v4762, 4
    %v4765 = vshll.u32 %v4518, 16
    %v4767 = vrot.slane %v4765, 5
    %v4768 = vor.u32 %v4764, %v4767
    %v4769 = vrot.slane %v4768, 4
    %v4771 = vshll.u32 %v4519, 16
    %v4773 = vrot.slane %v4771, 5
    %v4774 = vsel %vm421, %v4769, %v4773
    %v4775 = vshrl.u32 %v4519, 16
    %v4777 = vrot.slane %v4775, 4
    %v4778 = vor.u32 %v4777, %v4773
    %v4779 = vrot.slane %v4778, 4
    %v4781 = vshll.u32 %v4520, 16
    %v4783 = vrot.slane %v4781, 5
    %v4784 = vsel %vm421, %v4779, %v4783
    %v4786 = vshrl.u32 %v4521, 16
    %v4788 = vrot.slane %v4786, 4
    %v4789 = vshll.u32 %v4521, 16
    %v4791 = vrot.slane %v4789, 5
    %v4792 = vor.u32 %v4788, %v4791
    %v4793 = vrot.slane %v4792, 4
    %v4795 = vshll.u32 %v4522, 16
    %v4797 = vrot.slane %v4795, 5
    %v4798 = vsel %vm421, %v4793, %v4797
    %v4799 = vshrl.u32 %v4522, 16
    %v4801 = vrot.slane %v4799, 4
    %v4802 = vor.u32 %v4801, %v4797
    %v4803 = vrot.slane %v4802, 4
    %v4805 = vshll.u32 %v4523, 16
    %v4807 = vrot.slane %v4805, 5
    %v4808 = vsel %vm421, %v4803, %v4807
    %v4810 = vshrl.u32 %v4524, 16
    %v4812 = vrot.slane %v4810, 4
    %v4813 = vshll.u32 %v4524, 16
    %v4815 = vrot.slane %v4813, 5
    %v4816 = vor.u32 %v4812, %v4815
    %v4817 = vrot.slane %v4816, 4
    %v4819 = vshll.u32 %v4525, 16
    %v4821 = vrot.slane %v4819, 5
    %v4822 = vsel %vm421, %v4817, %v4821
    %v4823 = vshrl.u32 %v4525, 16
    %v4825 = vrot.slane %v4823, 4
    %v4826 = vor.u32 %v4825, %v4821
    %v4827 = vrot.slane %v4826, 4
    %v4829 = vshll.u32 %v4526, 16
    %v4831 = vrot.slane %v4829, 5
    %v4832 = vsel %vm421, %v4827, %v4831
    %v4834 = vshrl.u32 %v4527, 16
    %v4836 = vrot.slane %v4834, 4
    %v4837 = vshll.u32 %v4527, 16
    %v4839 = vrot.slane %v4837, 5
    %v4840 = vor.u32 %v4836, %v4839
    %v4841 = vrot.slane %v4840, 4
    %v4843 = vshll.u32 %v4528, 16
    %v4845 = vrot.slane %v4843, 5
    %v4846 = vsel %vm421, %v4841, %v4845
    %v4847 = vshrl.u32 %v4528, 16
    %v4849 = vrot.slane %v4847, 4
    %v4850 = vor.u32 %v4849, %v4845
    %v4851 = vrot.slane %v4850, 4
    %v4853 = vshll.u32 %v4529, 16
    %v4855 = vrot.slane %v4853, 5
    %v4856 = vsel %vm421, %v4851, %v4855
    %v4858 = vshrl.u32 %v4530, 16
    %v4860 = vrot.slane %v4858, 4
    %v4861 = vshll.u32 %v4530, 16
    %v4863 = vrot.slane %v4861, 5
    %v4864 = vor.u32 %v4860, %v4863
    %v4865 = vrot.slane %v4864, 4
    %v4867 = vshll.u32 %v4531, 16
    %v4869 = vrot.slane %v4867, 5
    %v4870 = vsel %vm421, %v4865, %v4869
    %v4871 = vshrl.u32 %v4531, 16
    %v4873 = vrot.slane %v4871, 4
    %v4874 = vor.u32 %v4873, %v4869
    %v4875 = vrot.slane %v4874, 4
    %v4877 = vshll.u32 %v4532, 16
    %v4879 = vrot.slane %v4877, 5
    %v4880 = vsel %vm421, %v4875, %v4879
    %v4882 = vshrl.u32 %v4533, 16
    %v4884 = vrot.slane %v4882, 4
    %v4885 = vshll.u32 %v4533, 16
    %v4887 = vrot.slane %v4885, 5
    %v4888 = vor.u32 %v4884, %v4887
    %v4889 = vrot.slane %v4888, 4
    %v4891 = vshll.u32 %v4534, 16
    %v4893 = vrot.slane %v4891, 5
    %v4894 = vsel %vm421, %v4889, %v4893
    %v4895 = vshrl.u32 %v4534, 16
    %v4897 = vrot.slane %v4895, 4
    %v4898 = vor.u32 %v4897, %v4893
    %v4899 = vrot.slane %v4898, 4
    %v4901 = vshll.u32 %v4535, 16
    %v4903 = vrot.slane %v4901, 5
    %v4904 = vsel %vm421, %v4899, %v4903
    %v4906 = vshrl.u32 %v4536, 16
    %v4908 = vrot.slane %v4906, 4
    %v4909 = vshll.u32 %v4536, 16
    %v4911 = vrot.slane %v4909, 5
    %v4912 = vor.u32 %v4908, %v4911
    %v4913 = vrot.slane %v4912, 4
    %v4915 = vshll.u32 %v4537, 16
    %v4917 = vrot.slane %v4915, 5
    %v4918 = vsel %vm421, %v4913, %v4917
    %v4919 = vshrl.u32 %v4537, 16
    %v4921 = vrot.slane %v4919, 4
    %v4922 = vor.u32 %v4921, %v4917
    %v4923 = vrot.slane %v4922, 4
    %v4925 = vshll.u32 %v4538, 16
    %v4927 = vrot.slane %v4925, 5
    %v4928 = vsel %vm421, %v4923, %v4927
    %v4930 = vshrl.u32 %v4539, 16
    %v4932 = vrot.slane %v4930, 4
    %v4933 = vshll.u32 %v4539, 16
    %v4935 = vrot.slane %v4933, 5
    %v4936 = vor.u32 %v4932, %v4935
    %v4937 = vrot.slane %v4936, 4
    %v4939 = vshll.u32 %v4540, 16
    %v4941 = vrot.slane %v4939, 5
    %v4942 = vsel %vm421, %v4937, %v4941
    %v4943 = vshrl.u32 %v4540, 16
    %v4945 = vrot.slane %v4943, 4
    %v4946 = vor.u32 %v4945, %v4941
    %v4947 = vrot.slane %v4946, 4
    %v4949 = vshll.u32 %v4541, 16
    %v4951 = vrot.slane %v4949, 5
    %v4952 = vsel %vm421, %v4947, %v4951
    %v4954 = vshrl.u32 %v4542, 16
    %v4956 = vrot.slane %v4954, 4
    %v4957 = vshll.u32 %v4542, 16
    %v4959 = vrot.slane %v4957, 5
    %v4960 = vor.u32 %v4956, %v4959
    %v4961 = vrot.slane %v4960, 4
    %v4963 = vshll.u32 %v4543, 16
    %v4965 = vrot.slane %v4963, 5
    %v4966 = vsel %vm421, %v4961, %v4965
    %v4967 = vshrl.u32 %v4543, 16
    %v4969 = vrot.slane %v4967, 4
    %v4970 = vor.u32 %v4969, %v4965
    %v4971 = vrot.slane %v4970, 4
    %v4973 = vshll.u32 %v4544, 16
    %v4975 = vrot.slane %v4973, 5
    %v4976 = vsel %vm421, %v4971, %v4975
    %v4978 = vshrl.u32 %v4545, 16
    %v4980 = vrot.slane %v4978, 4
    %v4981 = vshll.u32 %v4545, 16
    %v4983 = vrot.slane %v4981, 5
    %v4984 = vor.u32 %v4980, %v4983
    %v4985 = vrot.slane %v4984, 4
    %v4987 = vshll.u32 %v4546, 16
    %v4989 = vrot.slane %v4987, 5
    %v4990 = vsel %vm421, %v4985, %v4989
    %v4991 = vshrl.u32 %v4546, 16
    %v4993 = vrot.slane %v4991, 4
    %v4994 = vor.u32 %v4993, %v4989
    %v4995 = vrot.slane %v4994, 4
    %v4997 = vshll.u32 %v4547, 16
    %v4999 = vrot.slane %v4997, 5
    %v5000 = vsel %vm421, %v4995, %v4999
    %v5002 = vshrl.u32 %v4548, 16
    %v5004 = vrot.slane %v5002, 4
    %v5005 = vshll.u32 %v4548, 16
    %v5007 = vrot.slane %v5005, 5
    %v5008 = vor.u32 %v5004, %v5007
    %v5009 = vrot.slane %v5008, 4
    %v5011 = vshll.u32 %v4549, 16
    %v5013 = vrot.slane %v5011, 5
    %v5014 = vsel %vm421, %v5009, %v5013
    %v5015 = vshrl.u32 %v4549, 16
    %v5017 = vrot.slane %v5015, 4
    %v5018 = vor.u32 %v5017, %v5013
    %v5019 = vrot.slane %v5018, 4
    %v5021 = vshll.u32 %v4550, 16
    %v5023 = vrot.slane %v5021, 5
    %v5024 = vsel %vm421, %v5019, %v5023
    %v5026 = vshrl.u32 %v4551, 16
    %v5028 = vrot.slane %v5026, 4
    %v5029 = vshll.u32 %v4551, 16
    %v5031 = vrot.slane %v5029, 5
    %v5032 = vor.u32 %v5028, %v5031
    %v5033 = vrot.slane %v5032, 4
    %v5035 = vshll.u32 %v4552, 16
    %v5037 = vrot.slane %v5035, 5
    %v5038 = vsel %vm421, %v5033, %v5037
    %v5039 = vshrl.u32 %v4552, 16
    %v5041 = vrot.slane %v5039, 4
    %v5042 = vor.u32 %v5041, %v5037
    %v5043 = vrot.slane %v5042, 4
    %v5045 = vshll.u32 %v4553, 16
    %v5047 = vrot.slane %v5045, 5
    %v5048 = vsel %vm421, %v5043, %v5047
    %v5050 = vshrl.u32 %v4554, 16
    %v5052 = vrot.slane %v5050, 4
    %v5053 = vshll.u32 %v4554, 16
    %v5055 = vrot.slane %v5053, 5
    %v5056 = vor.u32 %v5052, %v5055
    %v5057 = vrot.slane %v5056, 4
    %v5059 = vshll.u32 %v4555, 16
    %v5061 = vrot.slane %v5059, 5
    %v5062 = vsel %vm421, %v5057, %v5061
    %v5063 = vshrl.u32 %v4555, 16
    %v5065 = vrot.slane %v5063, 4
    %v5066 = vor.u32 %v5065, %v5061
    %v5067 = vrot.slane %v5066, 4
    %v5069 = vshll.u32 %v4556, 16
    %v5071 = vrot.slane %v5069, 5
    %v5072 = vsel %vm421, %v5067, %v5071
    %v5074 = vshrl.u32 %v4557, 16
    %v5076 = vrot.slane %v5074, 4
    %v5077 = vshll.u32 %v4557, 16
    %v5079 = vrot.slane %v5077, 5
    %v5080 = vor.u32 %v5076, %v5079
    %v5081 = vrot.slane %v5080, 4
    %v5083 = vshll.u32 %v4558, 16
    %v5085 = vrot.slane %v5083, 5
    %v5086 = vsel %vm421, %v5081, %v5085
    %v5087 = vshrl.u32 %v4558, 16
    %v5089 = vrot.slane %v5087, 4
    %v5090 = vor.u32 %v5089, %v5085
    %v5091 = vrot.slane %v5090, 4
    %v5093 = vshll.u32 %v4559, 16
    %v5095 = vrot.slane %v5093, 5
    %v5096 = vsel %vm421, %v5091, %v5095
    %v5098 = vshrl.u32 %v4560, 16
    %v5100 = vrot.slane %v5098, 4
    %v5101 = vshll.u32 %v4560, 16
    %v5103 = vrot.slane %v5101, 5
    %v5104 = vor.u32 %v5100, %v5103
    %v5105 = vrot.slane %v5104, 4
    %v5107 = vshll.u32 %v4561, 16
    %v5109 = vrot.slane %v5107, 5
    %v5110 = vsel %vm421, %v5105, %v5109
    %v5111 = vshrl.u32 %v4561, 16
    %v5113 = vrot.slane %v5111, 4
    %v5114 = vor.u32 %v5113, %v5109
    %v5115 = vrot.slane %v5114, 4
    %v5117 = vshll.u32 %v4562, 16
    %v5119 = vrot.slane %v5117, 5
    %v5120 = vsel %vm421, %v5115, %v5119
    %v5122 = vshrl.u32 %v4563, 16
    %v5124 = vrot.slane %v5122, 4
    %v5125 = vshll.u32 %v4563, 16
    %v5127 = vrot.slane %v5125, 5
    %v5128 = vor.u32 %v5124, %v5127
    %v5129 = vrot.slane %v5128, 4
    %v5131 = vshll.u32 %v4564, 16
    %v5133 = vrot.slane %v5131, 5
    %v5134 = vsel %vm421, %v5129, %v5133
    %v5135 = vshrl.u32 %v4564, 16
    %v5137 = vrot.slane %v5135, 4
    %v5138 = vor.u32 %v5137, %v5133
    %v5139 = vrot.slane %v5138, 4
    %v5141 = vshll.u32 %v4565, 16
    %v5143 = vrot.slane %v5141, 5
    %v5144 = vsel %vm421, %v5139, %v5143
    %v5146 = vshrl.u32 %v4566, 16
    %v5148 = vrot.slane %v5146, 4
    %v5149 = vshll.u32 %v4566, 16
    %v5151 = vrot.slane %v5149, 5
    %v5152 = vor.u32 %v5148, %v5151
    %v5153 = vrot.slane %v5152, 4
    %v5155 = vshll.u32 %v4567, 16
    %v5157 = vrot.slane %v5155, 5
    %v5158 = vsel %vm421, %v5153, %v5157
    %v5159 = vshrl.u32 %v4567, 16
    %v5161 = vrot.slane %v5159, 4
    %v5162 = vor.u32 %v5161, %v5157
    %v5163 = vrot.slane %v5162, 4
    %v5165 = vshll.u32 %v4568, 16
    %v5167 = vrot.slane %v5165, 5
    %v5168 = vsel %vm421, %v5163, %v5167
    %v5170 = vshrl.u32 %v4569, 16
    %v5172 = vrot.slane %v5170, 4
    %v5173 = vshll.u32 %v4569, 16
    %v5175 = vrot.slane %v5173, 5
    %v5176 = vor.u32 %v5172, %v5175
    %v5177 = vrot.slane %v5176, 4
    %v5179 = vshll.u32 %v4570, 16
    %v5181 = vrot.slane %v5179, 5
    %v5182 = vsel %vm421, %v5177, %v5181
    %v5183 = vshrl.u32 %v4570, 16
    %v5185 = vrot.slane %v5183, 4
    %v5186 = vor.u32 %v5185, %v5181
    %v5187 = vrot.slane %v5186, 4
    %v5189 = vshll.u32 %v4571, 16
    %v5191 = vrot.slane %v5189, 5
    %v5192 = vsel %vm421, %v5187, %v5191
    %v5194 = vshrl.u32 %v4572, 16
    %v5196 = vrot.slane %v5194, 4
    %v5197 = vshll.u32 %v4572, 16
    %v5199 = vrot.slane %v5197, 5
    %v5200 = vor.u32 %v5196, %v5199
    %v5201 = vrot.slane %v5200, 4
    %v5203 = vshll.u32 %v4573, 16
    %v5205 = vrot.slane %v5203, 5
    %v5206 = vsel %vm421, %v5201, %v5205
    %v5207 = vshrl.u32 %v4573, 16
    %v5209 = vrot.slane %v5207, 4
    %v5210 = vor.u32 %v5209, %v5205
    %v5211 = vrot.slane %v5210, 4
    %v5213 = vshll.u32 %v4574, 16
    %v5215 = vrot.slane %v5213, 5
    %v5216 = vsel %vm421, %v5211, %v5215
    %v5218 = vshrl.u32 %v4575, 16
    %v5220 = vrot.slane %v5218, 4
    %v5221 = vshll.u32 %v4575, 16
    %v5223 = vrot.slane %v5221, 5
    %v5224 = vor.u32 %v5220, %v5223
    %v5225 = vrot.slane %v5224, 4
    %v5227 = vshll.u32 %v4576, 16
    %v5229 = vrot.slane %v5227, 5
    %v5230 = vsel %vm421, %v5225, %v5229
    %v5231 = vshrl.u32 %v4576, 16
    %v5233 = vrot.slane %v5231, 4
    %v5234 = vor.u32 %v5233, %v5229
    %v5235 = vrot.slane %v5234, 4
    %v5237 = vshll.u32 %v4577, 16
    %v5239 = vrot.slane %v5237, 5
    %v5240 = vsel %vm421, %v5235, %v5239
    %v5242 = vshrl.u32 %v4578, 16
    %v5244 = vrot.slane %v5242, 4
    %v5245 = vshll.u32 %v4578, 16
    %v5247 = vrot.slane %v5245, 5
    %v5248 = vor.u32 %v5244, %v5247
    %v5249 = vrot.slane %v5248, 4
    %v5251 = vshll.u32 %v4579, 16
    %v5253 = vrot.slane %v5251, 5
    %v5254 = vsel %vm421, %v5249, %v5253
    %v5255 = vshrl.u32 %v4579, 16
    %v5257 = vrot.slane %v5255, 4
    %v5258 = vor.u32 %v5257, %v5253
    %v5259 = vrot.slane %v5258, 4
    %v5261 = vshll.u32 %v4580, 16
    %v5263 = vrot.slane %v5261, 5
    %v5264 = vsel %vm421, %v5259, %v5263
    %v5266 = vshrl.u32 %v4581, 16
    %v5268 = vrot.slane %v5266, 4
    %v5269 = vshll.u32 %v4581, 16
    %v5271 = vrot.slane %v5269, 5
    %v5272 = vor.u32 %v5268, %v5271
    %v5273 = vrot.slane %v5272, 4
    %v5275 = vshll.u32 %v4582, 16
    %v5277 = vrot.slane %v5275, 5
    %v5278 = vsel %vm421, %v5273, %v5277
    %v5279 = vshrl.u32 %v4582, 16
    %v5281 = vrot.slane %v5279, 4
    %v5282 = vor.u32 %v5281, %v5277
    %v5283 = vrot.slane %v5282, 4
    %v5285 = vshll.u32 %v4583, 16
    %v5287 = vrot.slane %v5285, 5
    %v5288 = vsel %vm421, %v5283, %v5287
    %v5290 = vshrl.u32 %v4584, 16
    %v5292 = vrot.slane %v5290, 4
    %v5293 = vshll.u32 %v4584, 16
    %v5295 = vrot.slane %v5293, 5
    %v5296 = vor.u32 %v5292, %v5295
    %v5297 = vrot.slane %v5296, 4
    %v5299 = vshll.u32 %v4585, 16
    %v5301 = vrot.slane %v5299, 5
    %v5302 = vsel %vm421, %v5297, %v5301
    %v5303 = vshrl.u32 %v4585, 16
    %v5305 = vrot.slane %v5303, 4
    %v5306 = vor.u32 %v5305, %v5301
    %v5307 = vrot.slane %v5306, 4
    %v5309 = vshll.u32 %v4586, 16
    %v5311 = vrot.slane %v5309, 5
    %v5312 = vsel %vm421, %v5307, %v5311
    %v5314 = vshrl.u32 %v4587, 16
    %v5316 = vrot.slane %v5314, 4
    %v5317 = vshll.u32 %v4587, 16
    %v5319 = vrot.slane %v5317, 5
    %v5320 = vor.u32 %v5316, %v5319
    %v5321 = vrot.slane %v5320, 4
    %v5323 = vshll.u32 %v4588, 16
    %v5325 = vrot.slane %v5323, 5
    %v5326 = vsel %vm421, %v5321, %v5325
    %v5327 = vshrl.u32 %v4588, 16
    %v5329 = vrot.slane %v5327, 4
    %v5330 = vor.u32 %v5329, %v5325
    %v5331 = vrot.slane %v5330, 4
    %v5333 = vshll.u32 %v4589, 16
    %v5335 = vrot.slane %v5333, 5
    %v5336 = vsel %vm421, %v5331, %v5335
    %v5338 = vshrl.u32 %v4590, 16
    %v5340 = vrot.slane %v5338, 4
    %v5341 = vshll.u32 %v4590, 16
    %v5343 = vrot.slane %v5341, 5
    %v5344 = vor.u32 %v5340, %v5343
    %v5345 = vrot.slane %v5344, 4
    %v5347 = vshll.u32 %v4591, 16
    %v5349 = vrot.slane %v5347, 5
    %v5350 = vsel %vm421, %v5345, %v5349
    %v5351 = vshrl.u32 %v4591, 16
    %v5353 = vrot.slane %v5351, 4
    %v5354 = vor.u32 %v5353, %v5349
    %v5355 = vrot.slane %v5354, 4
    %v5357 = vshll.u32 %v4592, 16
    %v5359 = vrot.slane %v5357, 5
    %v5360 = vsel %vm421, %v5355, %v5359
    %v5361 = vunpack.c.l.b16 %v4606
    %v5362 = vunpack.c.l.b16 %v4616
    %v5363 = vunpack.c.l.b16 %v4630
    %v5364 = vunpack.c.l.b16 %v4640
    %v5365 = vunpack.c.l.b16 %v4654
    %v5366 = vunpack.c.l.b16 %v4664
    %v5367 = vunpack.c.l.b16 %v4678
    %v5368 = vunpack.c.l.b16 %v4688
    %v5369 = vunpack.c.l.b16 %v4702
    %v5370 = vunpack.c.l.b16 %v4712
    %v5371 = vunpack.c.l.b16 %v4726
    %v5372 = vunpack.c.l.b16 %v4736
    %v5373 = vunpack.c.l.b16 %v4750
    %v5374 = vunpack.c.l.b16 %v4760
    %v5375 = vunpack.c.l.b16 %v4774
    %v5376 = vunpack.c.l.b16 %v4784
    %v5377 = vunpack.c.l.b16 %v4798
    %v5378 = vunpack.c.l.b16 %v4808
    %v5379 = vunpack.c.l.b16 %v4822
    %v5380 = vunpack.c.l.b16 %v4832
    %v5381 = vunpack.c.l.b16 %v4846
    %v5382 = vunpack.c.l.b16 %v4856
    %v5383 = vunpack.c.l.b16 %v4870
    %v5384 = vunpack.c.l.b16 %v4880
    %v5385 = vunpack.c.l.b16 %v4894
    %v5386 = vunpack.c.l.b16 %v4904
    %v5387 = vunpack.c.l.b16 %v4918
    %v5388 = vunpack.c.l.b16 %v4928
    %v5389 = vunpack.c.l.b16 %v4942
    %v5390 = vunpack.c.l.b16 %v4952
    %v5391 = vunpack.c.l.b16 %v4966
    %v5392 = vunpack.c.l.b16 %v4976
    %v5393 = vunpack.c.l.b16 %v4990
    %v5394 = vunpack.c.l.b16 %v5000
    %v5395 = vunpack.c.l.b16 %v5014
    %v5396 = vunpack.c.l.b16 %v5024
    %v5397 = vunpack.c.l.b16 %v5038
    %v5398 = vunpack.c.l.b16 %v5048
    %v5399 = vunpack.c.l.b16 %v5062
    %v5400 = vunpack.c.l.b16 %v5072
    %v5401 = vunpack.c.l.b16 %v5086
    %v5402 = vunpack.c.l.b16 %v5096
    %v5403 = vunpack.c.l.b16 %v5110
    %v5404 = vunpack.c.l.b16 %v5120
    %v5405 = vunpack.c.l.b16 %v5134
    %v5406 = vunpack.c.l.b16 %v5144
    %v5407 = vunpack.c.l.b16 %v5158
    %v5408 = vunpack.c.l.b16 %v5168
    %v5409 = vunpack.c.l.b16 %v5182
    %v5410 = vunpack.c.l.b16 %v5192
    %v5411 = vunpack.c.l.b16 %v5206
    %v5412 = vunpack.c.l.b16 %v5216
    %v5413 = vunpack.c.l.b16 %v5230
    %v5414 = vunpack.c.l.b16 %v5240
    %v5415 = vunpack.c.l.b16 %v5254
    %v5416 = vunpack.c.l.b16 %v5264
    %v5417 = vunpack.c.l.b16 %v5278
    %v5418 = vunpack.c.l.b16 %v5288
    %v5419 = vunpack.c.l.b16 %v5302
    %v5420 = vunpack.c.l.b16 %v5312
    %v5421 = vunpack.c.l.b16 %v5326
    %v5422 = vunpack.c.l.b16 %v5336
    %v5423 = vunpack.c.l.b16 %v5350
    %v5424 = vunpack.c.l.b16 %v5360
    %v5425 = vpack.c.b16 %v5362, %v5361
    %v5426 = vpack.c.b16 %v5364, %v5363
    %v5427 = vpack.c.b16 %v5366, %v5365
    %v5428 = vpack.c.b16 %v5368, %v5367
    %v5429 = vpack.c.b16 %v5370, %v5369
    %v5430 = vpack.c.b16 %v5372, %v5371
    %v5431 = vpack.c.b16 %v5374, %v5373
    %v5432 = vpack.c.b16 %v5376, %v5375
    %v5433 = vpack.c.b16 %v5378, %v5377
    %v5434 = vpack.c.b16 %v5380, %v5379
    %v5435 = vpack.c.b16 %v5382, %v5381
    %v5436 = vpack.c.b16 %v5384, %v5383
    %v5437 = vpack.c.b16 %v5386, %v5385
    %v5438 = vpack.c.b16 %v5388, %v5387
    %v5439 = vpack.c.b16 %v5390, %v5389
    %v5440 = vpack.c.b16 %v5392, %v5391
    %v5441 = vpack.c.b16 %v5394, %v5393
    %v5442 = vpack.c.b16 %v5396, %v5395
    %v5443 = vpack.c.b16 %v5398, %v5397
    %v5444 = vpack.c.b16 %v5400, %v5399
    %v5445 = vpack.c.b16 %v5402, %v5401
    %v5446 = vpack.c.b16 %v5404, %v5403
    %v5447 = vpack.c.b16 %v5406, %v5405
    %v5448 = vpack.c.b16 %v5408, %v5407
    %v5449 = vpack.c.b16 %v5410, %v5409
    %v5450 = vpack.c.b16 %v5412, %v5411
    %v5451 = vpack.c.b16 %v5414, %v5413
    %v5452 = vpack.c.b16 %v5416, %v5415
    %v5453 = vpack.c.b16 %v5418, %v5417
    %v5454 = vpack.c.b16 %v5420, %v5419
    %v5455 = vpack.c.b16 %v5422, %v5421
    %v5456 = vpack.c.b16 %v5424, %v5423
    %5457 = vrot.lane.b32.xlu0 %v5425, 28
    %v5458 = vpop.permute.xlu0 %5457
    %5459 = vrot.lane.b32.xlu0 %v5426, 28
    %v5460 = vpop.permute.xlu0 %5459
    %5461 = vrot.lane.b32.xlu0 %v5427, 28
    %v5462 = vpop.permute.xlu0 %5461
    %5463 = vrot.lane.b32.xlu0 %v5428, 28
    %v5464 = vpop.permute.xlu0 %5463
    %5465 = vrot.lane.b32.xlu0 %v5429, 28
    %v5466 = vpop.permute.xlu0 %5465
    %5467 = vrot.lane.b32.xlu0 %v5430, 28
    %v5468 = vpop.permute.xlu0 %5467
    %5469 = vrot.lane.b32.xlu0 %v5431, 28
    %v5470 = vpop.permute.xlu0 %5469
    %5471 = vrot.lane.b32.xlu0 %v5432, 28
    %v5472 = vpop.permute.xlu0 %5471
    %5473 = vrot.lane.b32.xlu0 %v5433, 28
    %v5474 = vpop.permute.xlu0 %5473
    %5475 = vrot.lane.b32.xlu0 %v5434, 28
    %v5476 = vpop.permute.xlu0 %5475
    %5477 = vrot.lane.b32.xlu0 %v5435, 28
    %v5478 = vpop.permute.xlu0 %5477
    %5479 = vrot.lane.b32.xlu0 %v5436, 28
    %v5480 = vpop.permute.xlu0 %5479
    %5481 = vrot.lane.b32.xlu0 %v5437, 28
    %v5482 = vpop.permute.xlu0 %5481
    %5483 = vrot.lane.b32.xlu0 %v5438, 28
    %v5484 = vpop.permute.xlu0 %5483
    %5485 = vrot.lane.b32.xlu0 %v5439, 28
    %v5486 = vpop.permute.xlu0 %5485
    %5487 = vrot.lane.b32.xlu0 %v5440, 28
    %v5488 = vpop.permute.xlu0 %5487
    %5489 = vrot.lane.b32.xlu0 %v5441, 28
    %v5490 = vpop.permute.xlu0 %5489
    %5491 = vrot.lane.b32.xlu0 %v5442, 28
    %v5492 = vpop.permute.xlu0 %5491
    %5493 = vrot.lane.b32.xlu0 %v5443, 28
    %v5494 = vpop.permute.xlu0 %5493
    %5495 = vrot.lane.b32.xlu0 %v5444, 28
    %v5496 = vpop.permute.xlu0 %5495
    %5497 = vrot.lane.b32.xlu0 %v5445, 28
    %v5498 = vpop.permute.xlu0 %5497
    %5499 = vrot.lane.b32.xlu0 %v5446, 28
    %v5500 = vpop.permute.xlu0 %5499
    %5501 = vrot.lane.b32.xlu0 %v5447, 28
    %v5502 = vpop.permute.xlu0 %5501
    %5503 = vrot.lane.b32.xlu0 %v5448, 28
    %v5504 = vpop.permute.xlu0 %5503
    %5505 = vrot.lane.b32.xlu0 %v5449, 28
    %v5506 = vpop.permute.xlu0 %5505
    %5507 = vrot.lane.b32.xlu0 %v5450, 28
    %v5508 = vpop.permute.xlu0 %5507
    %5509 = vrot.lane.b32.xlu0 %v5451, 28
    %v5510 = vpop.permute.xlu0 %5509
    %5511 = vrot.lane.b32.xlu0 %v5452, 28
    %v5512 = vpop.permute.xlu0 %5511
    %5513 = vrot.lane.b32.xlu0 %v5453, 28
    %v5514 = vpop.permute.xlu0 %5513
    %5515 = vrot.lane.b32.xlu0 %v5454, 28
    %v5516 = vpop.permute.xlu0 %5515
    %5517 = vrot.lane.b32.xlu0 %v5455, 28
    %v5518 = vpop.permute.xlu0 %5517
    %5519 = vrot.lane.b32.xlu0 %v5456, 28
    %v5520 = vpop.permute.xlu0 %5519
    %vm5553 = vcmask 261344
    %5554 = vst.msk [vmem:[#allocation3] sm:$0xff] %vm5553, %v5458
    %5555 = vst.msk [vmem:[#allocation3 + $0x8] sm:$0xff] %vm5553, %v5460
    %5556 = vst.msk [vmem:[#allocation3 + $0x10] sm:$0xff] %vm5553, %v5462
    %5557 = vst.msk [vmem:[#allocation3 + $0x18] sm:$0xff] %vm5553, %v5464
    %5558 = vst.msk [vmem:[#allocation3 + $0x20] sm:$0xff] %vm5553, %v5466
    %5559 = vst.msk [vmem:[#allocation3 + $0x28] sm:$0xff] %vm5553, %v5468
    %5560 = vst.msk [vmem:[#allocation3 + $0x30] sm:$0xff] %vm5553, %v5470
    %5561 = vst.msk [vmem:[#allocation3 + $0x38] sm:$0xff] %vm5553, %v5472
    %5562 = vst.msk [vmem:[#allocation3 + $0x40] sm:$0xff] %vm5553, %v5474
    %5563 = vst.msk [vmem:[#allocation3 + $0x48] sm:$0xff] %vm5553, %v5476
    %5564 = vst.msk [vmem:[#allocation3 + $0x50] sm:$0xff] %vm5553, %v5478
    %5565 = vst.msk [vmem:[#allocation3 + $0x58] sm:$0xff] %vm5553, %v5480
    %5566 = vst.msk [vmem:[#allocation3 + $0x60] sm:$0xff] %vm5553, %v5482
    %5567 = vst.msk [vmem:[#allocation3 + $0x68] sm:$0xff] %vm5553, %v5484
    %5568 = vst.msk [vmem:[#allocation3 + $0x70] sm:$0xff] %vm5553, %v5486
    %5569 = vst.msk [vmem:[#allocation3 + $0x78] sm:$0xff] %vm5553, %v5488
    %5570 = vst.msk [vmem:[#allocation3 + $0x80] sm:$0xff] %vm5553, %v5490
    %5571 = vst.msk [vmem:[#allocation3 + $0x88] sm:$0xff] %vm5553, %v5492
    %5572 = vst.msk [vmem:[#allocation3 + $0x90] sm:$0xff] %vm5553, %v5494
    %5573 = vst.msk [vmem:[#allocation3 + $0x98] sm:$0xff] %vm5553, %v5496
    %5574 = vst.msk [vmem:[#allocation3 + $0xa0] sm:$0xff] %vm5553, %v5498
    %5575 = vst.msk [vmem:[#allocation3 + $0xa8] sm:$0xff] %vm5553, %v5500
    %5576 = vst.msk [vmem:[#allocation3 + $0xb0] sm:$0xff] %vm5553, %v5502
    %5577 = vst.msk [vmem:[#allocation3 + $0xb8] sm:$0xff] %vm5553, %v5504
    %5578 = vst.msk [vmem:[#allocation3 + $0xc0] sm:$0xff] %vm5553, %v5506
    %5579 = vst.msk [vmem:[#allocation3 + $0xc8] sm:$0xff] %vm5553, %v5508
    %5580 = vst.msk [vmem:[#allocation3 + $0xd0] sm:$0xff] %vm5553, %v5510
    %5581 = vst.msk [vmem:[#allocation3 + $0xd8] sm:$0xff] %vm5553, %v5512
    %5582 = vst.msk [vmem:[#allocation3 + $0xe0] sm:$0xff] %vm5553, %v5514
    %5583 = vst.msk [vmem:[#allocation3 + $0xe8] sm:$0xff] %vm5553, %v5516
    %5584 = vst.msk [vmem:[#allocation3 + $0xf0] sm:$0xff] %vm5553, %v5518
    %5585 = vst.msk [vmem:[#allocation3 + $0xf8] sm:$0xff] %vm5553, %v5520
    %v5586 = vld [vmem:[%s4143] sm:$0xe]
    %v5587 = vld [vmem:[%s4143 + $0x4] sm:$0xf]
    %v5588 = vld [vmem:[%s4143 + $0x8] sm:$0x1]
    %v5589 = vld [vmem:[%s4143 + $0xc] sm:$0xe]
    %v5590 = vld [vmem:[%s4143 + $0x10] sm:$0xf]
    %v5591 = vld [vmem:[%s4143 + $0x14] sm:$0x1]
    %v5592 = vld [vmem:[%s4143 + $0x18] sm:$0xe]
    %v5593 = vld [vmem:[%s4143 + $0x1c] sm:$0xf]
    %v5594 = vld [vmem:[%s4143 + $0x20] sm:$0x1]
    %v5595 = vld [vmem:[%s4143 + $0x24] sm:$0xe]
    %v5596 = vld [vmem:[%s4143 + $0x28] sm:$0xf]
    %v5597 = vld [vmem:[%s4143 + $0x2c] sm:$0x1]
    %v5598 = vld [vmem:[%s4143 + $0x30] sm:$0xe]
    %v5599 = vld [vmem:[%s4143 + $0x34] sm:$0xf]
    %v5600 = vld [vmem:[%s4143 + $0x38] sm:$0x1]
    %v5601 = vld [vmem:[%s4143 + $0x3c] sm:$0xe]
    %v5602 = vld [vmem:[%s4143 + $0x40] sm:$0xf]
    %v5603 = vld [vmem:[%s4143 + $0x44] sm:$0x1]
    %v5604 = vld [vmem:[%s4143 + $0x48] sm:$0xe]
    %v5605 = vld [vmem:[%s4143 + $0x4c] sm:$0xf]
    %v5606 = vld [vmem:[%s4143 + $0x50] sm:$0x1]
    %v5607 = vld [vmem:[%s4143 + $0x54] sm:$0xe]
    %v5608 = vld [vmem:[%s4143 + $0x58] sm:$0xf]
    %v5609 = vld [vmem:[%s4143 + $0x5c] sm:$0x1]
    %v5610 = vld [vmem:[%s4143 + $0x60] sm:$0xe]
    %v5611 = vld [vmem:[%s4143 + $0x64] sm:$0xf]
    %v5612 = vld [vmem:[%s4143 + $0x68] sm:$0x1]
    %v5613 = vld [vmem:[%s4143 + $0x6c] sm:$0xe]
    %v5614 = vld [vmem:[%s4143 + $0x70] sm:$0xf]
    %v5615 = vld [vmem:[%s4143 + $0x74] sm:$0x1]
    %v5616 = vld [vmem:[%s4143 + $0x78] sm:$0xe]
    %v5617 = vld [vmem:[%s4143 + $0x7c] sm:$0xf]
    %v5618 = vld [vmem:[%s4143 + $0x80] sm:$0x1]
    %v5619 = vld [vmem:[%s4143 + $0x84] sm:$0xe]
    %v5620 = vld [vmem:[%s4143 + $0x88] sm:$0xf]
    %v5621 = vld [vmem:[%s4143 + $0x8c] sm:$0x1]
    %v5622 = vld [vmem:[%s4143 + $0x90] sm:$0xe]
    %v5623 = vld [vmem:[%s4143 + $0x94] sm:$0xf]
    %v5624 = vld [vmem:[%s4143 + $0x98] sm:$0x1]
    %v5625 = vld [vmem:[%s4143 + $0x9c] sm:$0xe]
    %v5626 = vld [vmem:[%s4143 + $0xa0] sm:$0xf]
    %v5627 = vld [vmem:[%s4143 + $0xa4] sm:$0x1]
    %v5628 = vld [vmem:[%s4143 + $0xa8] sm:$0xe]
    %v5629 = vld [vmem:[%s4143 + $0xac] sm:$0xf]
    %v5630 = vld [vmem:[%s4143 + $0xb0] sm:$0x1]
    %v5631 = vld [vmem:[%s4143 + $0xb4] sm:$0xe]
    %v5632 = vld [vmem:[%s4143 + $0xb8] sm:$0xf]
    %v5633 = vld [vmem:[%s4143 + $0xbc] sm:$0x1]
    %v5634 = vld [vmem:[%s4143 + $0xd8] sm:$0xe]
    %v5635 = vld [vmem:[%s4143 + $0xdc] sm:$0xf]
    %v5636 = vld [vmem:[%s4143 + $0xe0] sm:$0x1]
    %v5637 = vld [vmem:[%s4143 + $0xe4] sm:$0xe]
    %v5638 = vld [vmem:[%s4143 + $0xe8] sm:$0xf]
    %v5639 = vld [vmem:[%s4143 + $0xec] sm:$0x1]
    %v5640 = vld [vmem:[%s4143 + $0xf0] sm:$0xe]
    %v5641 = vld [vmem:[%s4143 + $0xf4] sm:$0xf]
    %v5642 = vld [vmem:[%s4143 + $0xf8] sm:$0x1]
    %v5643 = vld [vmem:[%s4143 + $0xfc] sm:$0xe]
    %v5644 = vld [vmem:[%s4143 + $0x100] sm:$0xf]
    %v5645 = vld [vmem:[%s4143 + $0x104] sm:$0x1]
    %v5646 = vld [vmem:[%s4143 + $0x108] sm:$0xe]
    %v5647 = vld [vmem:[%s4143 + $0x10c] sm:$0xf]
    %v5648 = vld [vmem:[%s4143 + $0x110] sm:$0x1]
    %v5649 = vld [vmem:[%s4143 + $0x114] sm:$0xe]
    %v5650 = vld [vmem:[%s4143 + $0x118] sm:$0xf]
    %v5651 = vld [vmem:[%s4143 + $0x11c] sm:$0x1]
    %v5652 = vld [vmem:[%s4143 + $0x120] sm:$0xe]
    %v5653 = vld [vmem:[%s4143 + $0x124] sm:$0xf]
    %v5654 = vld [vmem:[%s4143 + $0x128] sm:$0x1]
    %v5655 = vld [vmem:[%s4143 + $0x12c] sm:$0xe]
    %v5656 = vld [vmem:[%s4143 + $0x130] sm:$0xf]
    %v5657 = vld [vmem:[%s4143 + $0x134] sm:$0x1]
    %v5658 = vld [vmem:[%s4143 + $0x138] sm:$0xe]
    %v5659 = vld [vmem:[%s4143 + $0x13c] sm:$0xf]
    %v5660 = vld [vmem:[%s4143 + $0x140] sm:$0x1]
    %v5661 = vld [vmem:[%s4143 + $0x144] sm:$0xe]
    %v5662 = vld [vmem:[%s4143 + $0x148] sm:$0xf]
    %v5663 = vld [vmem:[%s4143 + $0x14c] sm:$0x1]
    %v5664 = vld [vmem:[%s4143 + $0x150] sm:$0xe]
    %v5665 = vld [vmem:[%s4143 + $0x154] sm:$0xf]
    %v5666 = vld [vmem:[%s4143 + $0x158] sm:$0x1]
    %v5667 = vld [vmem:[%s4143 + $0x15c] sm:$0xe]
    %v5668 = vld [vmem:[%s4143 + $0x160] sm:$0xf]
    %v5669 = vld [vmem:[%s4143 + $0x164] sm:$0x1]
    %v5670 = vld [vmem:[%s4143 + $0x168] sm:$0xe]
    %v5671 = vld [vmem:[%s4143 + $0x16c] sm:$0xf]
    %v5672 = vld [vmem:[%s4143 + $0x170] sm:$0x1]
    %v5673 = vld [vmem:[%s4143 + $0x174] sm:$0xe]
    %v5674 = vld [vmem:[%s4143 + $0x178] sm:$0xf]
    %v5675 = vld [vmem:[%s4143 + $0x17c] sm:$0x1]
    %v5676 = vld [vmem:[%s4143 + $0x180] sm:$0xe]
    %v5677 = vld [vmem:[%s4143 + $0x184] sm:$0xf]
    %v5678 = vld [vmem:[%s4143 + $0x188] sm:$0x1]
    %v5679 = vld [vmem:[%s4143 + $0x18c] sm:$0xe]
    %v5680 = vld [vmem:[%s4143 + $0x190] sm:$0xf]
    %v5681 = vld [vmem:[%s4143 + $0x194] sm:$0x1]
    %v5778 = vrot.slane %v5586, 5
    %v5779 = vrot.slane %v5778, 4
    %v5780 = vrot.slane %v5587, 5
    %v5781 = vsel %vm1609, %v5779, %v5780
    %v5782 = vrot.slane %v5780, 4
    %v5783 = vrot.slane %v5588, 5
    %v5784 = vsel %vm1609, %v5782, %v5783
    %v5785 = vrot.slane %v5589, 5
    %v5786 = vrot.slane %v5785, 4
    %v5787 = vrot.slane %v5590, 5
    %v5788 = vsel %vm1609, %v5786, %v5787
    %v5789 = vrot.slane %v5787, 4
    %v5790 = vrot.slane %v5591, 5
    %v5791 = vsel %vm1609, %v5789, %v5790
    %v5792 = vrot.slane %v5592, 5
    %v5793 = vrot.slane %v5792, 4
    %v5794 = vrot.slane %v5593, 5
    %v5795 = vsel %vm1609, %v5793, %v5794
    %v5796 = vrot.slane %v5794, 4
    %v5797 = vrot.slane %v5594, 5
    %v5798 = vsel %vm1609, %v5796, %v5797
    %v5799 = vrot.slane %v5595, 5
    %v5800 = vrot.slane %v5799, 4
    %v5801 = vrot.slane %v5596, 5
    %v5802 = vsel %vm1609, %v5800, %v5801
    %v5803 = vrot.slane %v5801, 4
    %v5804 = vrot.slane %v5597, 5
    %v5805 = vsel %vm1609, %v5803, %v5804
    %v5806 = vrot.slane %v5598, 5
    %v5807 = vrot.slane %v5806, 4
    %v5808 = vrot.slane %v5599, 5
    %v5809 = vsel %vm1609, %v5807, %v5808
    %v5810 = vrot.slane %v5808, 4
    %v5811 = vrot.slane %v5600, 5
    %v5812 = vsel %vm1609, %v5810, %v5811
    %v5813 = vrot.slane %v5601, 5
    %v5814 = vrot.slane %v5813, 4
    %v5815 = vrot.slane %v5602, 5
    %v5816 = vsel %vm1609, %v5814, %v5815
    %v5817 = vrot.slane %v5815, 4
    %v5818 = vrot.slane %v5603, 5
    %v5819 = vsel %vm1609, %v5817, %v5818
    %v5820 = vrot.slane %v5604, 5
    %v5821 = vrot.slane %v5820, 4
    %v5822 = vrot.slane %v5605, 5
    %v5823 = vsel %vm1609, %v5821, %v5822
    %v5824 = vrot.slane %v5822, 4
    %v5825 = vrot.slane %v5606, 5
    %v5826 = vsel %vm1609, %v5824, %v5825
    %v5827 = vrot.slane %v5607, 5
    %v5828 = vrot.slane %v5827, 4
    %v5829 = vrot.slane %v5608, 5
    %v5830 = vsel %vm1609, %v5828, %v5829
    %v5831 = vrot.slane %v5829, 4
    %v5832 = vrot.slane %v5609, 5
    %v5833 = vsel %vm1609, %v5831, %v5832
    %v5834 = vrot.slane %v5610, 5
    %v5835 = vrot.slane %v5834, 4
    %v5836 = vrot.slane %v5611, 5
    %v5837 = vsel %vm1609, %v5835, %v5836
    %v5838 = vrot.slane %v5836, 4
    %v5839 = vrot.slane %v5612, 5
    %v5840 = vsel %vm1609, %v5838, %v5839
    %v5841 = vrot.slane %v5613, 5
    %v5842 = vrot.slane %v5841, 4
    %v5843 = vrot.slane %v5614, 5
    %v5844 = vsel %vm1609, %v5842, %v5843
    %v5845 = vrot.slane %v5843, 4
    %v5846 = vrot.slane %v5615, 5
    %v5847 = vsel %vm1609, %v5845, %v5846
    %v5848 = vrot.slane %v5616, 5
    %v5849 = vrot.slane %v5848, 4
    %v5850 = vrot.slane %v5617, 5
    %v5851 = vsel %vm1609, %v5849, %v5850
    %v5852 = vrot.slane %v5850, 4
    %v5853 = vrot.slane %v5618, 5
    %v5854 = vsel %vm1609, %v5852, %v5853
    %v5855 = vrot.slane %v5619, 5
    %v5856 = vrot.slane %v5855, 4
    %v5857 = vrot.slane %v5620, 5
    %v5858 = vsel %vm1609, %v5856, %v5857
    %v5859 = vrot.slane %v5857, 4
    %v5860 = vrot.slane %v5621, 5
    %v5861 = vsel %vm1609, %v5859, %v5860
    %v5862 = vrot.slane %v5622, 5
    %v5863 = vrot.slane %v5862, 4
    %v5864 = vrot.slane %v5623, 5
    %v5865 = vsel %vm1609, %v5863, %v5864
    %v5866 = vrot.slane %v5864, 4
    %v5867 = vrot.slane %v5624, 5
    %v5868 = vsel %vm1609, %v5866, %v5867
    %v5869 = vrot.slane %v5625, 5
    %v5870 = vrot.slane %v5869, 4
    %v5871 = vrot.slane %v5626, 5
    %v5872 = vsel %vm1609, %v5870, %v5871
    %v5873 = vrot.slane %v5871, 4
    %v5874 = vrot.slane %v5627, 5
    %v5875 = vsel %vm1609, %v5873, %v5874
    %v5876 = vrot.slane %v5628, 5
    %v5877 = vrot.slane %v5876, 4
    %v5878 = vrot.slane %v5629, 5
    %v5879 = vsel %vm1609, %v5877, %v5878
    %v5880 = vrot.slane %v5878, 4
    %v5881 = vrot.slane %v5630, 5
    %v5882 = vsel %vm1609, %v5880, %v5881
    %v5883 = vrot.slane %v5631, 5
    %v5884 = vrot.slane %v5883, 4
    %v5885 = vrot.slane %v5632, 5
    %v5886 = vsel %vm1609, %v5884, %v5885
    %v5887 = vrot.slane %v5885, 4
    %v5888 = vrot.slane %v5633, 5
    %v5889 = vsel %vm1609, %v5887, %v5888
    %v5890 = vrot.slane %v5634, 5
    %v5891 = vrot.slane %v5890, 4
    %v5892 = vrot.slane %v5635, 5
    %v5893 = vsel %vm1609, %v5891, %v5892
    %v5894 = vrot.slane %v5892, 4
    %v5895 = vrot.slane %v5636, 5
    %v5896 = vsel %vm1609, %v5894, %v5895
    %v5897 = vrot.slane %v5637, 5
    %v5898 = vrot.slane %v5897, 4
    %v5899 = vrot.slane %v5638, 5
    %v5900 = vsel %vm1609, %v5898, %v5899
    %v5901 = vrot.slane %v5899, 4
    %v5902 = vrot.slane %v5639, 5
    %v5903 = vsel %vm1609, %v5901, %v5902
    %v5904 = vrot.slane %v5640, 5
    %v5905 = vrot.slane %v5904, 4
    %v5906 = vrot.slane %v5641, 5
    %v5907 = vsel %vm1609, %v5905, %v5906
    %v5908 = vrot.slane %v5906, 4
    %v5909 = vrot.slane %v5642, 5
    %v5910 = vsel %vm1609, %v5908, %v5909
    %v5911 = vrot.slane %v5643, 5
    %v5912 = vrot.slane %v5911, 4
    %v5913 = vrot.slane %v5644, 5
    %v5914 = vsel %vm1609, %v5912, %v5913
    %v5915 = vrot.slane %v5913, 4
    %v5916 = vrot.slane %v5645, 5
    %v5917 = vsel %vm1609, %v5915, %v5916
    %v5918 = vrot.slane %v5646, 5
    %v5919 = vrot.slane %v5918, 4
    %v5920 = vrot.slane %v5647, 5
    %v5921 = vsel %vm1609, %v5919, %v5920
    %v5922 = vrot.slane %v5920, 4
    %v5923 = vrot.slane %v5648, 5
    %v5924 = vsel %vm1609, %v5922, %v5923
    %v5925 = vrot.slane %v5649, 5
    %v5926 = vrot.slane %v5925, 4
    %v5927 = vrot.slane %v5650, 5
    %v5928 = vsel %vm1609, %v5926, %v5927
    %v5929 = vrot.slane %v5927, 4
    %v5930 = vrot.slane %v5651, 5
    %v5931 = vsel %vm1609, %v5929, %v5930
    %v5932 = vrot.slane %v5652, 5
    %v5933 = vrot.slane %v5932, 4
    %v5934 = vrot.slane %v5653, 5
    %v5935 = vsel %vm1609, %v5933, %v5934
    %v5936 = vrot.slane %v5934, 4
    %v5937 = vrot.slane %v5654, 5
    %v5938 = vsel %vm1609, %v5936, %v5937
    %v5939 = vrot.slane %v5655, 5
    %v5940 = vrot.slane %v5939, 4
    %v5941 = vrot.slane %v5656, 5
    %v5942 = vsel %vm1609, %v5940, %v5941
    %v5943 = vrot.slane %v5941, 4
    %v5944 = vrot.slane %v5657, 5
    %v5945 = vsel %vm1609, %v5943, %v5944
    %v5946 = vrot.slane %v5658, 5
    %v5947 = vrot.slane %v5946, 4
    %v5948 = vrot.slane %v5659, 5
    %v5949 = vsel %vm1609, %v5947, %v5948
    %v5950 = vrot.slane %v5948, 4
    %v5951 = vrot.slane %v5660, 5
    %v5952 = vsel %vm1609, %v5950, %v5951
    %v5953 = vrot.slane %v5661, 5
    %v5954 = vrot.slane %v5953, 4
    %v5955 = vrot.slane %v5662, 5
    %v5956 = vsel %vm1609, %v5954, %v5955
    %v5957 = vrot.slane %v5955, 4
    %v5958 = vrot.slane %v5663, 5
    %v5959 = vsel %vm1609, %v5957, %v5958
    %v5960 = vrot.slane %v5664, 5
    %v5961 = vrot.slane %v5960, 4
    %v5962 = vrot.slane %v5665, 5
    %v5963 = vsel %vm1609, %v5961, %v5962
    %v5964 = vrot.slane %v5962, 4
    %v5965 = vrot.slane %v5666, 5
    %v5966 = vsel %vm1609, %v5964, %v5965
    %v5967 = vrot.slane %v5667, 5
    %v5968 = vrot.slane %v5967, 4
    %v5969 = vrot.slane %v5668, 5
    %v5970 = vsel %vm1609, %v5968, %v5969
    %v5971 = vrot.slane %v5969, 4
    %v5972 = vrot.slane %v5669, 5
    %v5973 = vsel %vm1609, %v5971, %v5972
    %v5974 = vrot.slane %v5670, 5
    %v5975 = vrot.slane %v5974, 4
    %v5976 = vrot.slane %v5671, 5
    %v5977 = vsel %vm1609, %v5975, %v5976
    %v5978 = vrot.slane %v5976, 4
    %v5979 = vrot.slane %v5672, 5
    %v5980 = vsel %vm1609, %v5978, %v5979
    %v5981 = vrot.slane %v5673, 5
    %v5982 = vrot.slane %v5981, 4
    %v5983 = vrot.slane %v5674, 5
    %v5984 = vsel %vm1609, %v5982, %v5983
    %v5985 = vrot.slane %v5983, 4
    %v5986 = vrot.slane %v5675, 5
    %v5987 = vsel %vm1609, %v5985, %v5986
    %v5988 = vrot.slane %v5676, 5
    %v5989 = vrot.slane %v5988, 4
    %v5990 = vrot.slane %v5677, 5
    %v5991 = vsel %vm1609, %v5989, %v5990
    %v5992 = vrot.slane %v5990, 4
    %v5993 = vrot.slane %v5678, 5
    %v5994 = vsel %vm1609, %v5992, %v5993
    %v5995 = vrot.slane %v5679, 5
    %v5996 = vrot.slane %v5995, 4
    %v5997 = vrot.slane %v5680, 5
    %v5998 = vsel %vm1609, %v5996, %v5997
    %v5999 = vrot.slane %v5997, 4
    %v6000 = vrot.slane %v5681, 5
    %v6001 = vsel %vm1609, %v5999, %v6000
    %v6002 = vunpack.c.l.b16 %v5781
    %v6003 = vunpack.c.l.b16 %v5784
    %v6004 = vunpack.c.l.b16 %v5788
    %v6005 = vunpack.c.l.b16 %v5791
    %v6006 = vunpack.c.l.b16 %v5795
    %v6007 = vunpack.c.l.b16 %v5798
    %v6008 = vunpack.c.l.b16 %v5802
    %v6009 = vunpack.c.l.b16 %v5805
    %v6010 = vunpack.c.l.b16 %v5809
    %v6011 = vunpack.c.l.b16 %v5812
    %v6012 = vunpack.c.l.b16 %v5816
    %v6013 = vunpack.c.l.b16 %v5819
    %v6014 = vunpack.c.l.b16 %v5823
    %v6015 = vunpack.c.l.b16 %v5826
    %v6016 = vunpack.c.l.b16 %v5830
    %v6017 = vunpack.c.l.b16 %v5833
    %v6018 = vunpack.c.l.b16 %v5837
    %v6019 = vunpack.c.l.b16 %v5840
    %v6020 = vunpack.c.l.b16 %v5844
    %v6021 = vunpack.c.l.b16 %v5847
    %v6022 = vunpack.c.l.b16 %v5851
    %v6023 = vunpack.c.l.b16 %v5854
    %v6024 = vunpack.c.l.b16 %v5858
    %v6025 = vunpack.c.l.b16 %v5861
    %v6026 = vunpack.c.l.b16 %v5865
    %v6027 = vunpack.c.l.b16 %v5868
    %v6028 = vunpack.c.l.b16 %v5872
    %v6029 = vunpack.c.l.b16 %v5875
    %v6030 = vunpack.c.l.b16 %v5879
    %v6031 = vunpack.c.l.b16 %v5882
    %v6032 = vunpack.c.l.b16 %v5886
    %v6033 = vunpack.c.l.b16 %v5889
    %v6034 = vunpack.c.l.b16 %v5893
    %v6035 = vunpack.c.l.b16 %v5896
    %v6036 = vunpack.c.l.b16 %v5900
    %v6037 = vunpack.c.l.b16 %v5903
    %v6038 = vunpack.c.l.b16 %v5907
    %v6039 = vunpack.c.l.b16 %v5910
    %v6040 = vunpack.c.l.b16 %v5914
    %v6041 = vunpack.c.l.b16 %v5917
    %v6042 = vunpack.c.l.b16 %v5921
    %v6043 = vunpack.c.l.b16 %v5924
    %v6044 = vunpack.c.l.b16 %v5928
    %v6045 = vunpack.c.l.b16 %v5931
    %v6046 = vunpack.c.l.b16 %v5935
    %v6047 = vunpack.c.l.b16 %v5938
    %v6048 = vunpack.c.l.b16 %v5942
    %v6049 = vunpack.c.l.b16 %v5945
    %v6050 = vunpack.c.l.b16 %v5949
    %v6051 = vunpack.c.l.b16 %v5952
    %v6052 = vunpack.c.l.b16 %v5956
    %v6053 = vunpack.c.l.b16 %v5959
    %v6054 = vunpack.c.l.b16 %v5963
    %v6055 = vunpack.c.l.b16 %v5966
    %v6056 = vunpack.c.l.b16 %v5970
    %v6057 = vunpack.c.l.b16 %v5973
    %v6058 = vunpack.c.l.b16 %v5977
    %v6059 = vunpack.c.l.b16 %v5980
    %v6060 = vunpack.c.l.b16 %v5984
    %v6061 = vunpack.c.l.b16 %v5987
    %v6062 = vunpack.c.l.b16 %v5991
    %v6063 = vunpack.c.l.b16 %v5994
    %v6064 = vunpack.c.l.b16 %v5998
    %v6065 = vunpack.c.l.b16 %v6001
    %v6066 = vpack.c.b16 %v6003, %v6002
    %v6067 = vpack.c.b16 %v6005, %v6004
    %v6068 = vpack.c.b16 %v6007, %v6006
    %v6069 = vpack.c.b16 %v6009, %v6008
    %v6070 = vpack.c.b16 %v6011, %v6010
    %v6071 = vpack.c.b16 %v6013, %v6012
    %v6072 = vpack.c.b16 %v6015, %v6014
    %v6073 = vpack.c.b16 %v6017, %v6016
    %v6074 = vpack.c.b16 %v6019, %v6018
    %v6075 = vpack.c.b16 %v6021, %v6020
    %v6076 = vpack.c.b16 %v6023, %v6022
    %v6077 = vpack.c.b16 %v6025, %v6024
    %v6078 = vpack.c.b16 %v6027, %v6026
    %v6079 = vpack.c.b16 %v6029, %v6028
    %v6080 = vpack.c.b16 %v6031, %v6030
    %v6081 = vpack.c.b16 %v6033, %v6032
    %v6082 = vpack.c.b16 %v6035, %v6034
    %v6083 = vpack.c.b16 %v6037, %v6036
    %v6084 = vpack.c.b16 %v6039, %v6038
    %v6085 = vpack.c.b16 %v6041, %v6040
    %v6086 = vpack.c.b16 %v6043, %v6042
    %v6087 = vpack.c.b16 %v6045, %v6044
    %v6088 = vpack.c.b16 %v6047, %v6046
    %v6089 = vpack.c.b16 %v6049, %v6048
    %v6090 = vpack.c.b16 %v6051, %v6050
    %v6091 = vpack.c.b16 %v6053, %v6052
    %v6092 = vpack.c.b16 %v6055, %v6054
    %v6093 = vpack.c.b16 %v6057, %v6056
    %v6094 = vpack.c.b16 %v6059, %v6058
    %v6095 = vpack.c.b16 %v6061, %v6060
    %v6096 = vpack.c.b16 %v6063, %v6062
    %v6097 = vpack.c.b16 %v6065, %v6064
    %6098 = vrot.lane.b32.xlu0 %v6066, 32
    %v6099 = vpop.permute.xlu0 %6098
    %6100 = vrot.lane.b32.xlu0 %v6067, 32
    %v6101 = vpop.permute.xlu0 %6100
    %6102 = vrot.lane.b32.xlu0 %v6068, 32
    %v6103 = vpop.permute.xlu0 %6102
    %6104 = vrot.lane.b32.xlu0 %v6069, 32
    %v6105 = vpop.permute.xlu0 %6104
    %6106 = vrot.lane.b32.xlu0 %v6070, 32
    %v6107 = vpop.permute.xlu0 %6106
    %6108 = vrot.lane.b32.xlu0 %v6071, 32
    %v6109 = vpop.permute.xlu0 %6108
    %6110 = vrot.lane.b32.xlu0 %v6072, 32
    %v6111 = vpop.permute.xlu0 %6110
    %6112 = vrot.lane.b32.xlu0 %v6073, 32
    %v6113 = vpop.permute.xlu0 %6112
    %6114 = vrot.lane.b32.xlu0 %v6074, 32
    %v6115 = vpop.permute.xlu0 %6114
    %6116 = vrot.lane.b32.xlu0 %v6075, 32
    %v6117 = vpop.permute.xlu0 %6116
    %6118 = vrot.lane.b32.xlu0 %v6076, 32
    %v6119 = vpop.permute.xlu0 %6118
    %6120 = vrot.lane.b32.xlu0 %v6077, 32
    %v6121 = vpop.permute.xlu0 %6120
    %6122 = vrot.lane.b32.xlu0 %v6078, 32
    %v6123 = vpop.permute.xlu0 %6122
    %6124 = vrot.lane.b32.xlu0 %v6079, 32
    %v6125 = vpop.permute.xlu0 %6124
    %6126 = vrot.lane.b32.xlu0 %v6080, 32
    %v6127 = vpop.permute.xlu0 %6126
    %6128 = vrot.lane.b32.xlu0 %v6081, 32
    %v6129 = vpop.permute.xlu0 %6128
    %6130 = vrot.lane.b32.xlu0 %v6082, 32
    %v6131 = vpop.permute.xlu0 %6130
    %6132 = vrot.lane.b32.xlu0 %v6083, 32
    %v6133 = vpop.permute.xlu0 %6132
    %6134 = vrot.lane.b32.xlu0 %v6084, 32
    %v6135 = vpop.permute.xlu0 %6134
    %6136 = vrot.lane.b32.xlu0 %v6085, 32
    %v6137 = vpop.permute.xlu0 %6136
    %6138 = vrot.lane.b32.xlu0 %v6086, 32
    %v6139 = vpop.permute.xlu0 %6138
    %6140 = vrot.lane.b32.xlu0 %v6087, 32
    %v6141 = vpop.permute.xlu0 %6140
    %6142 = vrot.lane.b32.xlu0 %v6088, 32
    %v6143 = vpop.permute.xlu0 %6142
    %6144 = vrot.lane.b32.xlu0 %v6089, 32
    %v6145 = vpop.permute.xlu0 %6144
    %6146 = vrot.lane.b32.xlu0 %v6090, 32
    %v6147 = vpop.permute.xlu0 %6146
    %6148 = vrot.lane.b32.xlu0 %v6091, 32
    %v6149 = vpop.permute.xlu0 %6148
    %6150 = vrot.lane.b32.xlu0 %v6092, 32
    %v6151 = vpop.permute.xlu0 %6150
    %6152 = vrot.lane.b32.xlu0 %v6093, 32
    %v6153 = vpop.permute.xlu0 %6152
    %6154 = vrot.lane.b32.xlu0 %v6094, 32
    %v6155 = vpop.permute.xlu0 %6154
    %6156 = vrot.lane.b32.xlu0 %v6095, 32
    %v6157 = vpop.permute.xlu0 %6156
    %6158 = vrot.lane.b32.xlu0 %v6096, 32
    %v6159 = vpop.permute.xlu0 %6158
    %6160 = vrot.lane.b32.xlu0 %v6097, 32
    %v6161 = vpop.permute.xlu0 %6160
    %vm6194 = vcmask 294144
    %6195 = vst.msk [vmem:[#allocation3] sm:$0xff] %vm6194, %v6099
    %6196 = vst.msk [vmem:[#allocation3 + $0x8] sm:$0xff] %vm6194, %v6101
    %6197 = vst.msk [vmem:[#allocation3 + $0x10] sm:$0xff] %vm6194, %v6103
    %6198 = vst.msk [vmem:[#allocation3 + $0x18] sm:$0xff] %vm6194, %v6105
    %6199 = vst.msk [vmem:[#allocation3 + $0x20] sm:$0xff] %vm6194, %v6107
    %6200 = vst.msk [vmem:[#allocation3 + $0x28] sm:$0xff] %vm6194, %v6109
    %6201 = vst.msk [vmem:[#allocation3 + $0x30] sm:$0xff] %vm6194, %v6111
    %6202 = vst.msk [vmem:[#allocation3 + $0x38] sm:$0xff] %vm6194, %v6113
    %6203 = vst.msk [vmem:[#allocation3 + $0x40] sm:$0xff] %vm6194, %v6115
    %6204 = vst.msk [vmem:[#allocation3 + $0x48] sm:$0xff] %vm6194, %v6117
    %6205 = vst.msk [vmem:[#allocation3 + $0x50] sm:$0xff] %vm6194, %v6119
    %6206 = vst.msk [vmem:[#allocation3 + $0x58] sm:$0xff] %vm6194, %v6121
    %6207 = vst.msk [vmem:[#allocation3 + $0x60] sm:$0xff] %vm6194, %v6123
    %6208 = vst.msk [vmem:[#allocation3 + $0x68] sm:$0xff] %vm6194, %v6125
    %6209 = vst.msk [vmem:[#allocation3 + $0x70] sm:$0xff] %vm6194, %v6127
    %6210 = vst.msk [vmem:[#allocation3 + $0x78] sm:$0xff] %vm6194, %v6129
    %6211 = vst.msk [vmem:[#allocation3 + $0x80] sm:$0xff] %vm6194, %v6131
    %6212 = vst.msk [vmem:[#allocation3 + $0x88] sm:$0xff] %vm6194, %v6133
    %6213 = vst.msk [vmem:[#allocation3 + $0x90] sm:$0xff] %vm6194, %v6135
    %6214 = vst.msk [vmem:[#allocation3 + $0x98] sm:$0xff] %vm6194, %v6137
    %6215 = vst.msk [vmem:[#allocation3 + $0xa0] sm:$0xff] %vm6194, %v6139
    %6216 = vst.msk [vmem:[#allocation3 + $0xa8] sm:$0xff] %vm6194, %v6141
    %6217 = vst.msk [vmem:[#allocation3 + $0xb0] sm:$0xff] %vm6194, %v6143
    %6218 = vst.msk [vmem:[#allocation3 + $0xb8] sm:$0xff] %vm6194, %v6145
    %6219 = vst.msk [vmem:[#allocation3 + $0xc0] sm:$0xff] %vm6194, %v6147
    %6220 = vst.msk [vmem:[#allocation3 + $0xc8] sm:$0xff] %vm6194, %v6149
    %6221 = vst.msk [vmem:[#allocation3 + $0xd0] sm:$0xff] %vm6194, %v6151
    %6222 = vst.msk [vmem:[#allocation3 + $0xd8] sm:$0xff] %vm6194, %v6153
    %6223 = vst.msk [vmem:[#allocation3 + $0xe0] sm:$0xff] %vm6194, %v6155
    %6224 = vst.msk [vmem:[#allocation3 + $0xe8] sm:$0xff] %vm6194, %v6157
    %6225 = vst.msk [vmem:[#allocation3 + $0xf0] sm:$0xff] %vm6194, %v6159
    %6226 = vst.msk [vmem:[#allocation3 + $0xf8] sm:$0xff] %vm6194, %v6161
    %v6227 = vld [vmem:[%s2] sm:$0xff]
    %v6228 = vld [vmem:[%s3] sm:$0xff]
    %v6229 = vld [vmem:[%s4] sm:$0xff]
    %v6230 = vld [vmem:[%s1] sm:$0xf]
    %v6231 = vld [vmem:[#allocation3] sm:$0xff]
    %v6232 = vld [vmem:[#allocation3 + $0x8] sm:$0xff]
    %v6233 = vld [vmem:[#allocation3 + $0x10] sm:$0xff]
    %v6234 = vld [vmem:[#allocation3 + $0x18] sm:$0xff]
    %v6235 = vld [vmem:[#allocation3 + $0x20] sm:$0xff]
    %v6236 = vld [vmem:[#allocation3 + $0x28] sm:$0xff]
    %v6237 = vld [vmem:[#allocation3 + $0x30] sm:$0xff]
    %v6238 = vld [vmem:[#allocation3 + $0x38] sm:$0xff]
    %v6239 = vld [vmem:[#allocation3 + $0x40] sm:$0xff]
    %v6240 = vld [vmem:[#allocation3 + $0x48] sm:$0xff]
    %v6241 = vld [vmem:[#allocation3 + $0x50] sm:$0xff]
    %v6242 = vld [vmem:[#allocation3 + $0x58] sm:$0xff]
    %v6243 = vld [vmem:[#allocation3 + $0x60] sm:$0xff]
    %v6244 = vld [vmem:[#allocation3 + $0x68] sm:$0xff]
    %v6245 = vld [vmem:[#allocation3 + $0x70] sm:$0xff]
    %v6246 = vld [vmem:[#allocation3 + $0x78] sm:$0xff]
    %v6247 = vld [vmem:[#allocation3 + $0x80] sm:$0xff]
    %v6248 = vld [vmem:[#allocation3 + $0x88] sm:$0xff]
    %v6249 = vld [vmem:[#allocation3 + $0x90] sm:$0xff]
    %v6250 = vld [vmem:[#allocation3 + $0x98] sm:$0xff]
    %v6251 = vld [vmem:[#allocation3 + $0xa0] sm:$0xff]
    %v6252 = vld [vmem:[#allocation3 + $0xa8] sm:$0xff]
    %v6253 = vld [vmem:[#allocation3 + $0xb0] sm:$0xff]
    %v6254 = vld [vmem:[#allocation3 + $0xb8] sm:$0xff]
    %v6255 = vld [vmem:[#allocation3 + $0xc0] sm:$0xff]
    %v6256 = vld [vmem:[#allocation3 + $0xc8] sm:$0xff]
    %v6257 = vld [vmem:[#allocation3 + $0xd0] sm:$0xff]
    %v6258 = vld [vmem:[#allocation3 + $0xd8] sm:$0xff]
    %v6259 = vld [vmem:[#allocation3 + $0xe0] sm:$0xff]
    %v6260 = vld [vmem:[#allocation3 + $0xe8] sm:$0xff]
    %v6261 = vld [vmem:[#allocation3 + $0xf0] sm:$0xff]
    %v6262 = vld [vmem:[#allocation3 + $0xf8] sm:$0xff]
    %6264 = vset.pattern.permute.xlu0 0
    %6265 = vperm.xlu0 %6264, %v6227
    %v6266 = vpop.permute.xlu0 %6265
    %vm6268 = vcmask 293888
    %v6270 = vsel %vm6268, %v6230, 0
    %v6273 = vsel %vm6268, %v6231, 0
    %v6276 = vsel %vm6268, %v6232, 0
    %v6279 = vsel %vm6268, %v6233, 0
    %v6282 = vsel %vm6268, %v6234, 0
    %v6285 = vsel %vm6268, %v6235, 0
    %v6288 = vsel %vm6268, %v6236, 0
    %v6291 = vsel %vm6268, %v6237, 0
    %v6294 = vsel %vm6268, %v6238, 0
    %v6297 = vsel %vm6268, %v6239, 0
    %v6300 = vsel %vm6268, %v6240, 0
    %v6303 = vsel %vm6268, %v6241, 0
    %v6306 = vsel %vm6268, %v6242, 0
    %v6309 = vsel %vm6268, %v6243, 0
    %v6312 = vsel %vm6268, %v6244, 0
    %v6315 = vsel %vm6268, %v6245, 0
    %v6318 = vsel %vm6268, %v6246, 0
    %v6321 = vsel %vm6268, %v6247, 0
    %v6324 = vsel %vm6268, %v6248, 0
    %v6327 = vsel %vm6268, %v6249, 0
    %v6330 = vsel %vm6268, %v6250, 0
    %v6333 = vsel %vm6268, %v6251, 0
    %v6336 = vsel %vm6268, %v6252, 0
    %v6339 = vsel %vm6268, %v6253, 0
    %v6342 = vsel %vm6268, %v6254, 0
    %v6345 = vsel %vm6268, %v6255, 0
    %v6348 = vsel %vm6268, %v6256, 0
    %v6351 = vsel %vm6268, %v6257, 0
    %v6354 = vsel %vm6268, %v6258, 0
    %v6357 = vsel %vm6268, %v6259, 0
    %v6360 = vsel %vm6268, %v6260, 0
    %v6363 = vsel %vm6268, %v6261, 0
    %v6366 = vsel %vm6268, %v6262, 0
    %6368 = vmatprep.subr.bf16.mxu0 0
    %6369 = vmatpush1.bf16.xpose.msra.mxu0 %v6273
    %6370 = vmatprep.subr.bf16.mxu0 0
    %6371 = vmatpush1.bf16.xpose.msra.mxu0 %v6276
    %6372 = vmatprep.subr.bf16.mxu0 0
    %6373 = vmatpush1.bf16.xpose.msra.mxu0 %v6279
    %6374 = vmatprep.subr.bf16.mxu0 0
    %6375 = vmatpush1.bf16.xpose.msra.mxu0 %v6282
    %6376 = vmatprep.subr.bf16.mxu0 0
    %6377 = vmatpush1.bf16.xpose.msra.mxu0 %v6285
    %6378 = vmatprep.subr.bf16.mxu0 0
    %6379 = vmatpush1.bf16.xpose.msra.mxu0 %v6288
    %6380 = vmatprep.subr.bf16.mxu0 0
    %6381 = vmatpush1.bf16.xpose.msra.mxu0 %v6291
    %6382 = vmatprep.subr.bf16.mxu0 0
    %6383 = vmatpush1.bf16.xpose.msra.mxu0 %v6294
    %6384 = vmatprep.subr.bf16.mxu0 0
    %6385 = vmatpush1.bf16.xpose.msra.mxu0 %v6297
    %6386 = vmatprep.subr.bf16.mxu0 0
    %6387 = vmatpush1.bf16.xpose.msra.mxu0 %v6300
    %6388 = vmatprep.subr.bf16.mxu0 0
    %6389 = vmatpush1.bf16.xpose.msra.mxu0 %v6303
    %6390 = vmatprep.subr.bf16.mxu0 0
    %6391 = vmatpush1.bf16.xpose.msra.mxu0 %v6306
    %6392 = vmatprep.subr.bf16.mxu0 0
    %6393 = vmatpush1.bf16.xpose.msra.mxu0 %v6309
    %6394 = vmatprep.subr.bf16.mxu0 0
    %6395 = vmatpush1.bf16.xpose.msra.mxu0 %v6312
    %6396 = vmatprep.subr.bf16.mxu0 0
    %6397 = vmatpush1.bf16.xpose.msra.mxu0 %v6315
    %6398 = vmatprep.subr.bf16.mxu0 0
    %6399 = vmatpush1.bf16.xpose.msra.mxu0 %v6318
    %6400 = vmatprep.mubr.bf16.mxu0 0
    %6401 = vmatmul.mubr.bf16.gmra.mrb[0].mxu0 %v6270
    %v6402 = vpop.f32.mrb[0].mxu0
    %v6403 = vadd.f32 %v6266, %v6402
    %v6404 = vpop.f32.mrb[0].mxu0
    %v6405 = vadd.f32 %v6266, %v6404
    %v6406 = vpop.f32.mrb[0].mxu0
    %v6407 = vpop.f32.mrb[0].mxu0
    %6408 = vdwg.mxu0
    %6409 = vmatprep.subr.bf16.mxu0 0
    %6410 = vmatpush1.bf16.xpose.msra.mxu0 %v6321
    %6411 = vmatprep.subr.bf16.mxu0 0
    %6412 = vmatpush1.bf16.xpose.msra.mxu0 %v6324
    %6413 = vmatprep.subr.bf16.mxu0 0
    %6414 = vmatpush1.bf16.xpose.msra.mxu0 %v6327
    %6415 = vmatprep.subr.bf16.mxu0 0
    %6416 = vmatpush1.bf16.xpose.msra.mxu0 %v6330
    %6417 = vmatprep.subr.bf16.mxu0 0
    %6418 = vmatpush1.bf16.xpose.msra.mxu0 %v6333
    %6419 = vmatprep.subr.bf16.mxu0 0
    %6420 = vmatpush1.bf16.xpose.msra.mxu0 %v6336
    %6421 = vmatprep.subr.bf16.mxu0 0
    %6422 = vmatpush1.bf16.xpose.msra.mxu0 %v6339
    %6423 = vmatprep.subr.bf16.mxu0 0
    %6424 = vmatpush1.bf16.xpose.msra.mxu0 %v6342
    %6425 = vmatprep.subr.bf16.mxu0 0
    %6426 = vmatpush1.bf16.xpose.msra.mxu0 %v6345
    %6427 = vmatprep.subr.bf16.mxu0 0
    %6428 = vmatpush1.bf16.xpose.msra.mxu0 %v6348
    %6429 = vmatprep.subr.bf16.mxu0 0
    %6430 = vmatpush1.bf16.xpose.msra.mxu0 %v6351
    %6431 = vmatprep.subr.bf16.mxu0 0
    %6432 = vmatpush1.bf16.xpose.msra.mxu0 %v6354
    %6433 = vmatprep.subr.bf16.mxu0 0
    %6434 = vmatpush1.bf16.xpose.msra.mxu0 %v6357
    %6435 = vmatprep.subr.bf16.mxu0 0
    %6436 = vmatpush1.bf16.xpose.msra.mxu0 %v6360
    %6437 = vmatprep.subr.bf16.mxu0 0
    %6438 = vmatpush1.bf16.xpose.msra.mxu0 %v6363
    %6439 = vmatprep.subr.bf16.mxu0 0
    %6440 = vmatpush1.bf16.xpose.msra.mxu0 %v6366
    %6441 = vmatprep.mubr.bf16.mxu0 0
    %6442 = vmatmul.mubr.bf16.gmra.mrb[0].mxu0 %v6270
    %v6443 = vpop.f32.mrb[0].mxu0
    %v6444 = vadd.f32 %v6266, %v6443
    %v6445 = vpop.f32.mrb[0].mxu0
    %v6446 = vadd.f32 %v6266, %v6445
    %v6447 = vpop.f32.mrb[0].mxu0
    %v6448 = vpop.f32.mrb[0].mxu0
    %6449 = vdwg.mxu0
    %v6450 = vadd.f32 %v6403, %v6405
    %v6451 = vadd.f32 %v6450, %v6444
    %v6452 = vadd.f32 %v6451, %v6446
    %6453 = vadd.xlane.f32.xlu0 %v6452
    %v6454 = vpop.xlane.xlu0 %6453
    %v6455 = vmul.f32 %v6454, 0.001953125
    %v6456 = vsub.f32 %v6403, %v6455
    %v6457 = vsub.f32 %v6405, %v6455
    %v6458 = vsub.f32 %v6444, %v6455
    %v6459 = vsub.f32 %v6446, %v6455
    %v6460 = vmul.f32 %v6456, %v6456
    %v6461 = vmul.f32 %v6457, %v6457
    %v6462 = vmul.f32 %v6458, %v6458
    %v6463 = vmul.f32 %v6459, %v6459
    %v6464 = vadd.f32 %v6460, %v6461
    %v6465 = vadd.f32 %v6464, %v6462
    %v6466 = vadd.f32 %v6465, %v6463
    %6467 = vadd.xlane.f32.xlu0 %v6466
    %v6468 = vpop.xlane.xlu0 %6467
    %v6469 = vmul.f32 %v6468, 0.001953125
    %v6470 = vadd.f32 %v6469, 1e-05
    %v6471 = vrsqrt.pop %v6470
    %v6472 = vmul.f32 %v6228, %v6471
    %v6473 = vmul.f32 %v6455, %v6472
    %v6474 = vsub.f32 %v6229, %v6473
    %6476 = vset.pattern.permute.xlu0 0
    %6477 = vperm.xlu0 %6476, %v6472
    %v6478 = vpop.permute.xlu0 %6477
    %v6480 = vmul.f32 %v6403, %v6478
    %v6481 = vmul.f32 %v6405, %v6478
    %v6482 = vmul.f32 %v6444, %v6478
    %v6483 = vmul.f32 %v6446, %v6478
    %6485 = vset.pattern.permute.xlu0 0
    %6486 = vperm.xlu0 %6485, %v6474
    %v6487 = vpop.permute.xlu0 %6486
    %v6489 = vadd.f32 %v6480, %v6487
    %v6490 = vadd.f32 %v6481, %v6487
    %v6491 = vadd.f32 %v6482, %v6487
    %v6492 = vadd.f32 %v6483, %v6487
    %v6493 = vmax.f32 %v6489, 0.0
    %v6494 = vmax.f32 %v6490, 0.0
    %v6495 = vmax.f32 %v6491, 0.0
    %v6496 = vmax.f32 %v6492, 0.0
    %vm6497 = vcmask 60416
    %6498 = vst.msk [vmem:[#allocation2] sm:$0xf] %vm6497, 0
    %6499 = vst.msk [vmem:[#allocation2 + $0x4] sm:$0xf] %vm6497, 0
    %vm6500 = vcmask 57344
    %6501 = vst.msk [vmem:[#allocation2 + $0x8] sm:$0x1] %vm6500, 0
    %6502 = vst.msk [vmem:[#allocation2 + $0xd8] sm:$0xf] %vm6497, 0
    %6503 = vst.msk [vmem:[#allocation2 + $0xdc] sm:$0xf] %vm6497, 0
    %6504 = vst.msk [vmem:[#allocation2 + $0xe0] sm:$0x1] %vm6500, 0
    %s6505 = scalar_lea.vmem [#allocation2], 204
    %6506 = vst.msk [vmem:[%s6505] sm:$0xf] %vm6497, 0
    %6507 = vst.msk [vmem:[%s6505 + $0x4] sm:$0xf] %vm6497, 0
    %6508 = vst.msk [vmem:[%s6505 + $0x8] sm:$0x1] %vm6500, 0
    %6509 = vst.msk [vmem:[%s6505 + $0xd8] sm:$0xf] %vm6497, 0
    %6510 = vst.msk [vmem:[%s6505 + $0xdc] sm:$0xf] %vm6497, 0
    %6511 = vst.msk [vmem:[%s6505 + $0xe0] sm:$0x1] %vm6500, 0
    %s6512 = scalar_lea.vmem [#allocation2], 12
    %vm6513 = vcmask 57344
    %vm6514 = vsmask.f32 256
    %vm6515 = vmand %vm6513, %vm6514
    %v6516 = vld [vmem:[%s6512] sm:$0x1]
    %v6517 = vsel %vm6515, 0, %v6516
    %6518 = vst [vmem:[%s6512] sm:$0x1] %v6517
    %v6519 = vld [vmem:[%s6512 + $0xc] sm:$0x1]
    %v6520 = vsel %vm6515, 0, %v6519
    %6521 = vst [vmem:[%s6512 + $0xc] sm:$0x1] %v6520
    %v6522 = vld [vmem:[%s6512 + $0x18] sm:$0x1]
    %v6523 = vsel %vm6515, 0, %v6522
    %6524 = vst [vmem:[%s6512 + $0x18] sm:$0x1] %v6523
    %v6525 = vld [vmem:[%s6512 + $0x24] sm:$0x1]
    %v6526 = vsel %vm6515, 0, %v6525
    %6527 = vst [vmem:[%s6512 + $0x24] sm:$0x1] %v6526
    %v6528 = vld [vmem:[%s6512 + $0x30] sm:$0x1]
    %v6529 = vsel %vm6515, 0, %v6528
    %6530 = vst [vmem:[%s6512 + $0x30] sm:$0x1] %v6529
    %v6531 = vld [vmem:[%s6512 + $0x3c] sm:$0x1]
    %v6532 = vsel %vm6515, 0, %v6531
    %6533 = vst [vmem:[%s6512 + $0x3c] sm:$0x1] %v6532
    %v6534 = vld [vmem:[%s6512 + $0x48] sm:$0x1]
    %v6535 = vsel %vm6515, 0, %v6534
    %6536 = vst [vmem:[%s6512 + $0x48] sm:$0x1] %v6535
    %v6537 = vld [vmem:[%s6512 + $0x54] sm:$0x1]
    %v6538 = vsel %vm6515, 0, %v6537
    %6539 = vst [vmem:[%s6512 + $0x54] sm:$0x1] %v6538
    %v6540 = vld [vmem:[%s6512 + $0x60] sm:$0x1]
    %v6541 = vsel %vm6515, 0, %v6540
    %6542 = vst [vmem:[%s6512 + $0x60] sm:$0x1] %v6541
    %v6543 = vld [vmem:[%s6512 + $0x6c] sm:$0x1]
    %v6544 = vsel %vm6515, 0, %v6543
    %6545 = vst [vmem:[%s6512 + $0x6c] sm:$0x1] %v6544
    %v6546 = vld [vmem:[%s6512 + $0x78] sm:$0x1]
    %v6547 = vsel %vm6515, 0, %v6546
    %6548 = vst [vmem:[%s6512 + $0x78] sm:$0x1] %v6547
    %v6549 = vld [vmem:[%s6512 + $0x84] sm:$0x1]
    %v6550 = vsel %vm6515, 0, %v6549
    %6551 = vst [vmem:[%s6512 + $0x84] sm:$0x1] %v6550
    %v6552 = vld [vmem:[%s6512 + $0x90] sm:$0x1]
    %v6553 = vsel %vm6515, 0, %v6552
    %6554 = vst [vmem:[%s6512 + $0x90] sm:$0x1] %v6553
    %v6555 = vld [vmem:[%s6512 + $0x9c] sm:$0x1]
    %v6556 = vsel %vm6515, 0, %v6555
    %6557 = vst [vmem:[%s6512 + $0x9c] sm:$0x1] %v6556
    %v6558 = vld [vmem:[%s6512 + $0xa8] sm:$0x1]
    %v6559 = vsel %vm6515, 0, %v6558
    %6560 = vst [vmem:[%s6512 + $0xa8] sm:$0x1] %v6559
    %v6561 = vld [vmem:[%s6512 + $0xb4] sm:$0x1]
    %v6562 = vsel %vm6515, 0, %v6561
    %6563 = vst [vmem:[%s6512 + $0xb4] sm:$0x1] %v6562
    %v6564 = vld [vmem:[%s6512 + $0xd8] sm:$0x1]
    %v6565 = vsel %vm6515, 0, %v6564
    %6566 = vst [vmem:[%s6512 + $0xd8] sm:$0x1] %v6565
    %v6567 = vld [vmem:[%s6512 + $0xe4] sm:$0x1]
    %v6568 = vsel %vm6515, 0, %v6567
    %6569 = vst [vmem:[%s6512 + $0xe4] sm:$0x1] %v6568
    %v6570 = vld [vmem:[%s6512 + $0xf0] sm:$0x1]
    %v6571 = vsel %vm6515, 0, %v6570
    %6572 = vst [vmem:[%s6512 + $0xf0] sm:$0x1] %v6571
    %v6573 = vld [vmem:[%s6512 + $0xfc] sm:$0x1]
    %v6574 = vsel %vm6515, 0, %v6573
    %6575 = vst [vmem:[%s6512 + $0xfc] sm:$0x1] %v6574
    %v6576 = vld [vmem:[%s6512 + $0x108] sm:$0x1]
    %v6577 = vsel %vm6515, 0, %v6576
    %6578 = vst [vmem:[%s6512 + $0x108] sm:$0x1] %v6577
    %v6579 = vld [vmem:[%s6512 + $0x114] sm:$0x1]
    %v6580 = vsel %vm6515, 0, %v6579
    %6581 = vst [vmem:[%s6512 + $0x114] sm:$0x1] %v6580
    %v6582 = vld [vmem:[%s6512 + $0x120] sm:$0x1]
    %v6583 = vsel %vm6515, 0, %v6582
    %6584 = vst [vmem:[%s6512 + $0x120] sm:$0x1] %v6583
    %v6585 = vld [vmem:[%s6512 + $0x12c] sm:$0x1]
    %v6586 = vsel %vm6515, 0, %v6585
    %6587 = vst [vmem:[%s6512 + $0x12c] sm:$0x1] %v6586
    %v6588 = vld [vmem:[%s6512 + $0x138] sm:$0x1]
    %v6589 = vsel %vm6515, 0, %v6588
    %6590 = vst [vmem:[%s6512 + $0x138] sm:$0x1] %v6589
    %v6591 = vld [vmem:[%s6512 + $0x144] sm:$0x1]
    %v6592 = vsel %vm6515, 0, %v6591
    %6593 = vst [vmem:[%s6512 + $0x144] sm:$0x1] %v6592
    %v6594 = vld [vmem:[%s6512 + $0x150] sm:$0x1]
    %v6595 = vsel %vm6515, 0, %v6594
    %6596 = vst [vmem:[%s6512 + $0x150] sm:$0x1] %v6595
    %v6597 = vld [vmem:[%s6512 + $0x15c] sm:$0x1]
    %v6598 = vsel %vm6515, 0, %v6597
    %6599 = vst [vmem:[%s6512 + $0x15c] sm:$0x1] %v6598
    %v6600 = vld [vmem:[%s6512 + $0x168] sm:$0x1]
    %v6601 = vsel %vm6515, 0, %v6600
    %6602 = vst [vmem:[%s6512 + $0x168] sm:$0x1] %v6601
    %v6603 = vld [vmem:[%s6512 + $0x174] sm:$0x1]
    %v6604 = vsel %vm6515, 0, %v6603
    %6605 = vst [vmem:[%s6512 + $0x174] sm:$0x1] %v6604
    %v6606 = vld [vmem:[%s6512 + $0x180] sm:$0x1]
    %v6607 = vsel %vm6515, 0, %v6606
    %6608 = vst [vmem:[%s6512 + $0x180] sm:$0x1] %v6607
    %v6609 = vld [vmem:[%s6512 + $0x18c] sm:$0x1]
    %v6610 = vsel %vm6515, 0, %v6609
    %6611 = vst [vmem:[%s6512 + $0x18c] sm:$0x1] %v6610
    %vm6612 = vsmask.f32 7938
    %vm6613 = vmand %vm6513, %vm6612
    %v6614 = vld [vmem:[%s6512 + $0x8] sm:$0x1]
    %v6615 = vsel %vm6613, 0, %v6614
    %6616 = vst [vmem:[%s6512 + $0x8] sm:$0x1] %v6615
    %v6617 = vld [vmem:[%s6512 + $0x14] sm:$0x1]
    %v6618 = vsel %vm6613, 0, %v6617
    %6619 = vst [vmem:[%s6512 + $0x14] sm:$0x1] %v6618
    %v6620 = vld [vmem:[%s6512 + $0x20] sm:$0x1]
    %v6621 = vsel %vm6613, 0, %v6620
    %6622 = vst [vmem:[%s6512 + $0x20] sm:$0x1] %v6621
    %v6623 = vld [vmem:[%s6512 + $0x2c] sm:$0x1]
    %v6624 = vsel %vm6613, 0, %v6623
    %6625 = vst [vmem:[%s6512 + $0x2c] sm:$0x1] %v6624
    %v6626 = vld [vmem:[%s6512 + $0x38] sm:$0x1]
    %v6627 = vsel %vm6613, 0, %v6626
    %6628 = vst [vmem:[%s6512 + $0x38] sm:$0x1] %v6627
    %v6629 = vld [vmem:[%s6512 + $0x44] sm:$0x1]
    %v6630 = vsel %vm6613, 0, %v6629
    %6631 = vst [vmem:[%s6512 + $0x44] sm:$0x1] %v6630
    %v6632 = vld [vmem:[%s6512 + $0x50] sm:$0x1]
    %v6633 = vsel %vm6613, 0, %v6632
    %6634 = vst [vmem:[%s6512 + $0x50] sm:$0x1] %v6633
    %v6635 = vld [vmem:[%s6512 + $0x5c] sm:$0x1]
    %v6636 = vsel %vm6613, 0, %v6635
    %6637 = vst [vmem:[%s6512 + $0x5c] sm:$0x1] %v6636
    %v6638 = vld [vmem:[%s6512 + $0x68] sm:$0x1]
    %v6639 = vsel %vm6613, 0, %v6638
    %6640 = vst [vmem:[%s6512 + $0x68] sm:$0x1] %v6639
    %v6641 = vld [vmem:[%s6512 + $0x74] sm:$0x1]
    %v6642 = vsel %vm6613, 0, %v6641
    %6643 = vst [vmem:[%s6512 + $0x74] sm:$0x1] %v6642
    %v6644 = vld [vmem:[%s6512 + $0x80] sm:$0x1]
    %v6645 = vsel %vm6613, 0, %v6644
    %6646 = vst [vmem:[%s6512 + $0x80] sm:$0x1] %v6645
    %v6647 = vld [vmem:[%s6512 + $0x8c] sm:$0x1]
    %v6648 = vsel %vm6613, 0, %v6647
    %6649 = vst [vmem:[%s6512 + $0x8c] sm:$0x1] %v6648
    %v6650 = vld [vmem:[%s6512 + $0x98] sm:$0x1]
    %v6651 = vsel %vm6613, 0, %v6650
    %6652 = vst [vmem:[%s6512 + $0x98] sm:$0x1] %v6651
    %v6653 = vld [vmem:[%s6512 + $0xa4] sm:$0x1]
    %v6654 = vsel %vm6613, 0, %v6653
    %6655 = vst [vmem:[%s6512 + $0xa4] sm:$0x1] %v6654
    %v6656 = vld [vmem:[%s6512 + $0xb0] sm:$0x1]
    %v6657 = vsel %vm6613, 0, %v6656
    %6658 = vst [vmem:[%s6512 + $0xb0] sm:$0x1] %v6657
    %v6659 = vld [vmem:[%s6512 + $0xbc] sm:$0x1]
    %v6660 = vsel %vm6613, 0, %v6659
    %6661 = vst [vmem:[%s6512 + $0xbc] sm:$0x1] %v6660
    %v6662 = vld [vmem:[%s6512 + $0xe0] sm:$0x1]
    %v6663 = vsel %vm6613, 0, %v6662
    %6664 = vst [vmem:[%s6512 + $0xe0] sm:$0x1] %v6663
    %v6665 = vld [vmem:[%s6512 + $0xec] sm:$0x1]
    %v6666 = vsel %vm6613, 0, %v6665
    %6667 = vst [vmem:[%s6512 + $0xec] sm:$0x1] %v6666
    %v6668 = vld [vmem:[%s6512 + $0xf8] sm:$0x1]
    %v6669 = vsel %vm6613, 0, %v6668
    %6670 = vst [vmem:[%s6512 + $0xf8] sm:$0x1] %v6669
    %v6671 = vld [vmem:[%s6512 + $0x104] sm:$0x1]
    %v6672 = vsel %vm6613, 0, %v6671
    %6673 = vst [vmem:[%s6512 + $0x104] sm:$0x1] %v6672
    %v6674 = vld [vmem:[%s6512 + $0x110] sm:$0x1]
    %v6675 = vsel %vm6613, 0, %v6674
    %6676 = vst [vmem:[%s6512 + $0x110] sm:$0x1] %v6675
    %v6677 = vld [vmem:[%s6512 + $0x11c] sm:$0x1]
    %v6678 = vsel %vm6613, 0, %v6677
    %6679 = vst [vmem:[%s6512 + $0x11c] sm:$0x1] %v6678
    %v6680 = vld [vmem:[%s6512 + $0x128] sm:$0x1]
    %v6681 = vsel %vm6613, 0, %v6680
    %6682 = vst [vmem:[%s6512 + $0x128] sm:$0x1] %v6681
    %v6683 = vld [vmem:[%s6512 + $0x134] sm:$0x1]
    %v6684 = vsel %vm6613, 0, %v6683
    %6685 = vst [vmem:[%s6512 + $0x134] sm:$0x1] %v6684
    %v6686 = vld [vmem:[%s6512 + $0x140] sm:$0x1]
    %v6687 = vsel %vm6613, 0, %v6686
    %6688 = vst [vmem:[%s6512 + $0x140] sm:$0x1] %v6687
    %v6689 = vld [vmem:[%s6512 + $0x14c] sm:$0x1]
    %v6690 = vsel %vm6613, 0, %v6689
    %6691 = vst [vmem:[%s6512 + $0x14c] sm:$0x1] %v6690
    %v6692 = vld [vmem:[%s6512 + $0x158] sm:$0x1]
    %v6693 = vsel %vm6613, 0, %v6692
    %6694 = vst [vmem:[%s6512 + $0x158] sm:$0x1] %v6693
    %v6695 = vld [vmem:[%s6512 + $0x164] sm:$0x1]
    %v6696 = vsel %vm6613, 0, %v6695
    %6697 = vst [vmem:[%s6512 + $0x164] sm:$0x1] %v6696
    %v6698 = vld [vmem:[%s6512 + $0x170] sm:$0x1]
    %v6699 = vsel %vm6613, 0, %v6698
    %6700 = vst [vmem:[%s6512 + $0x170] sm:$0x1] %v6699
    %v6701 = vld [vmem:[%s6512 + $0x17c] sm:$0x1]
    %v6702 = vsel %vm6613, 0, %v6701
    %6703 = vst [vmem:[%s6512 + $0x17c] sm:$0x1] %v6702
    %v6704 = vld [vmem:[%s6512 + $0x188] sm:$0x1]
    %v6705 = vsel %vm6613, 0, %v6704
    %6706 = vst [vmem:[%s6512 + $0x188] sm:$0x1] %v6705
    %v6707 = vld [vmem:[%s6512 + $0x194] sm:$0x1]
    %v6708 = vsel %vm6613, 0, %v6707
    %6709 = vst [vmem:[%s6512 + $0x194] sm:$0x1] %v6708
    %6710 = vxpose.xlu0.b32.start [1/16] %v6493, 128
    %6711 = vxpose.xlu0.b32.cont [2/16] 0.0, 128
    %6712 = vxpose.xlu0.b32.cont [3/16] 0.0, 128
    %6713 = vxpose.xlu0.b32.cont [4/16] 0.0, 128
    %6714 = vxpose.xlu0.b32.cont [5/16] 0.0, 128
    %6715 = vxpose.xlu0.b32.cont [6/16] 0.0, 128
    %6716 = vxpose.xlu0.b32.cont [7/16] 0.0, 128
    %6717 = vxpose.xlu0.b32.cont [8/16] 0.0, 128
    %6718 = vxpose.xlu0.b32.cont [9/16] 0.0, 128
    %6719 = vxpose.xlu0.b32.cont [10/16] 0.0, 128
    %6720 = vxpose.xlu0.b32.cont [11/16] 0.0, 128
    %6721 = vxpose.xlu0.b32.cont [12/16] 0.0, 128
    %6722 = vxpose.xlu0.b32.cont [13/16] 0.0, 128
    %6723 = vxpose.xlu0.b32.cont [14/16] 0.0, 128
    %6724 = vxpose.xlu0.b32.cont [15/16] 0.0, 128
    %6725 = vxpose.xlu0.b32.end [16/16] 0.0, 128
    %v6726 = vpop.trf.xlu0
    %v6727 = vpop.trf.xlu0
    %v6728 = vpop.trf.xlu0
    %v6729 = vpop.trf.xlu0
    %v6730 = vpop.trf.xlu0
    %v6731 = vpop.trf.xlu0
    %v6732 = vpop.trf.xlu0
    %v6733 = vpop.trf.xlu0
    %v6734 = vpop.trf.xlu0
    %v6735 = vpop.trf.xlu0
    %v6736 = vpop.trf.xlu0
    %v6737 = vpop.trf.xlu0
    %v6738 = vpop.trf.xlu0
    %v6739 = vpop.trf.xlu0
    %v6740 = vpop.trf.xlu0
    %v6741 = vpop.trf.xlu0
    %6742 = vxpose.xlu0.b32.start [1/16] %v6494, 128
    %6743 = vxpose.xlu0.b32.cont [2/16] 0.0, 128
    %6744 = vxpose.xlu0.b32.cont [3/16] 0.0, 128
    %6745 = vxpose.xlu0.b32.cont [4/16] 0.0, 128
    %6746 = vxpose.xlu0.b32.cont [5/16] 0.0, 128
    %6747 = vxpose.xlu0.b32.cont [6/16] 0.0, 128
    %6748 = vxpose.xlu0.b32.cont [7/16] 0.0, 128
    %6749 = vxpose.xlu0.b32.cont [8/16] 0.0, 128
    %6750 = vxpose.xlu0.b32.cont [9/16] 0.0, 128
    %6751 = vxpose.xlu0.b32.cont [10/16] 0.0, 128
    %6752 = vxpose.xlu0.b32.cont [11/16] 0.0, 128
    %6753 = vxpose.xlu0.b32.cont [12/16] 0.0, 128
    %6754 = vxpose.xlu0.b32.cont [13/16] 0.0, 128
    %6755 = vxpose.xlu0.b32.cont [14/16] 0.0, 128
    %6756 = vxpose.xlu0.b32.cont [15/16] 0.0, 128
    %6757 = vxpose.xlu0.b32.end [16/16] 0.0, 128
    %v6758 = vpop.trf.xlu0
    %v6759 = vpop.trf.xlu0
    %v6760 = vpop.trf.xlu0
    %v6761 = vpop.trf.xlu0
    %v6762 = vpop.trf.xlu0
    %v6763 = vpop.trf.xlu0
    %v6764 = vpop.trf.xlu0
    %v6765 = vpop.trf.xlu0
    %v6766 = vpop.trf.xlu0
    %v6767 = vpop.trf.xlu0
    %v6768 = vpop.trf.xlu0
    %v6769 = vpop.trf.xlu0
    %v6770 = vpop.trf.xlu0
    %v6771 = vpop.trf.xlu0
    %v6772 = vpop.trf.xlu0
    %v6773 = vpop.trf.xlu0
    %6774 = vxpose.xlu0.b32.start [1/16] %v6495, 128
    %6775 = vxpose.xlu0.b32.cont [2/16] 0.0, 128
    %6776 = vxpose.xlu0.b32.cont [3/16] 0.0, 128
    %6777 = vxpose.xlu0.b32.cont [4/16] 0.0, 128
    %6778 = vxpose.xlu0.b32.cont [5/16] 0.0, 128
    %6779 = vxpose.xlu0.b32.cont [6/16] 0.0, 128
    %6780 = vxpose.xlu0.b32.cont [7/16] 0.0, 128
    %6781 = vxpose.xlu0.b32.cont [8/16] 0.0, 128
    %6782 = vxpose.xlu0.b32.cont [9/16] 0.0, 128
    %6783 = vxpose.xlu0.b32.cont [10/16] 0.0, 128
    %6784 = vxpose.xlu0.b32.cont [11/16] 0.0, 128
    %6785 = vxpose.xlu0.b32.cont [12/16] 0.0, 128
    %6786 = vxpose.xlu0.b32.cont [13/16] 0.0, 128
    %6787 = vxpose.xlu0.b32.cont [14/16] 0.0, 128
    %6788 = vxpose.xlu0.b32.cont [15/16] 0.0, 128
    %6789 = vxpose.xlu0.b32.end [16/16] 0.0, 128
    %v6790 = vpop.trf.xlu0
    %v6791 = vpop.trf.xlu0
    %v6792 = vpop.trf.xlu0
    %v6793 = vpop.trf.xlu0
    %v6794 = vpop.trf.xlu0
    %v6795 = vpop.trf.xlu0
    %v6796 = vpop.trf.xlu0
    %v6797 = vpop.trf.xlu0
    %v6798 = vpop.trf.xlu0
    %v6799 = vpop.trf.xlu0
    %v6800 = vpop.trf.xlu0
    %v6801 = vpop.trf.xlu0
    %v6802 = vpop.trf.xlu0
    %v6803 = vpop.trf.xlu0
    %v6804 = vpop.trf.xlu0
    %v6805 = vpop.trf.xlu0
    %6806 = vxpose.xlu0.b32.start [1/16] %v6496, 128
    %6807 = vxpose.xlu0.b32.cont [2/16] 0.0, 128
    %6808 = vxpose.xlu0.b32.cont [3/16] 0.0, 128
    %6809 = vxpose.xlu0.b32.cont [4/16] 0.0, 128
    %6810 = vxpose.xlu0.b32.cont [5/16] 0.0, 128
    %6811 = vxpose.xlu0.b32.cont [6/16] 0.0, 128
    %6812 = vxpose.xlu0.b32.cont [7/16] 0.0, 128
    %6813 = vxpose.xlu0.b32.cont [8/16] 0.0, 128
    %6814 = vxpose.xlu0.b32.cont [9/16] 0.0, 128
    %6815 = vxpose.xlu0.b32.cont [10/16] 0.0, 128
    %6816 = vxpose.xlu0.b32.cont [11/16] 0.0, 128
    %6817 = vxpose.xlu0.b32.cont [12/16] 0.0, 128
    %6818 = vxpose.xlu0.b32.cont [13/16] 0.0, 128
    %6819 = vxpose.xlu0.b32.cont [14/16] 0.0, 128
    %6820 = vxpose.xlu0.b32.cont [15/16] 0.0, 128
    %6821 = vxpose.xlu0.b32.end [16/16] 0.0, 128
    %v6822 = vpop.trf.xlu0
    %v6823 = vpop.trf.xlu0
    %v6824 = vpop.trf.xlu0
    %v6825 = vpop.trf.xlu0
    %v6826 = vpop.trf.xlu0
    %v6827 = vpop.trf.xlu0
    %v6828 = vpop.trf.xlu0
    %v6829 = vpop.trf.xlu0
    %v6830 = vpop.trf.xlu0
    %v6831 = vpop.trf.xlu0
    %v6832 = vpop.trf.xlu0
    %v6833 = vpop.trf.xlu0
    %v6834 = vpop.trf.xlu0
    %v6835 = vpop.trf.xlu0
    %v6836 = vpop.trf.xlu0
    %v6837 = vpop.trf.xlu0
    %v6838 = vpack.c.bf16 %v6727, %v6726
    %v6839 = vpack.c.bf16 %v6729, %v6728
    %v6840 = vpack.c.bf16 %v6731, %v6730
    %v6841 = vpack.c.bf16 %v6733, %v6732
    %v6842 = vpack.c.bf16 %v6735, %v6734
    %v6843 = vpack.c.bf16 %v6737, %v6736
    %v6844 = vpack.c.bf16 %v6739, %v6738
    %v6845 = vpack.c.bf16 %v6741, %v6740
    %v6846 = vpack.c.bf16 %v6759, %v6758
    %v6847 = vpack.c.bf16 %v6761, %v6760
    %v6848 = vpack.c.bf16 %v6763, %v6762
    %v6849 = vpack.c.bf16 %v6765, %v6764
    %v6850 = vpack.c.bf16 %v6767, %v6766
    %v6851 = vpack.c.bf16 %v6769, %v6768
    %v6852 = vpack.c.bf16 %v6771, %v6770
    %v6853 = vpack.c.bf16 %v6773, %v6772
    %v6854 = vpack.c.bf16 %v6791, %v6790
    %v6855 = vpack.c.bf16 %v6793, %v6792
    %v6856 = vpack.c.bf16 %v6795, %v6794
    %v6857 = vpack.c.bf16 %v6797, %v6796
    %v6858 = vpack.c.bf16 %v6799, %v6798
    %v6859 = vpack.c.bf16 %v6801, %v6800
    %v6860 = vpack.c.bf16 %v6803, %v6802
    %v6861 = vpack.c.bf16 %v6805, %v6804
    %v6862 = vpack.c.bf16 %v6823, %v6822
    %v6863 = vpack.c.bf16 %v6825, %v6824
    %v6864 = vpack.c.bf16 %v6827, %v6826
    %v6865 = vpack.c.bf16 %v6829, %v6828
    %v6866 = vpack.c.bf16 %v6831, %v6830
    %v6867 = vpack.c.bf16 %v6833, %v6832
    %v6868 = vpack.c.bf16 %v6835, %v6834
    %v6869 = vpack.c.bf16 %v6837, %v6836
    %v6902 = vunpack.c.l.b16 %v6838
    %v6903 = vunpack.c.h.b16 %v6838
    %v6904 = vunpack.c.l.b16 %v6839
    %v6905 = vunpack.c.h.b16 %v6839
    %v6906 = vunpack.c.l.b16 %v6840
    %v6907 = vunpack.c.h.b16 %v6840
    %v6908 = vunpack.c.l.b16 %v6841
    %v6909 = vunpack.c.h.b16 %v6841
    %v6910 = vunpack.c.l.b16 %v6842
    %v6911 = vunpack.c.h.b16 %v6842
    %v6912 = vunpack.c.l.b16 %v6843
    %v6913 = vunpack.c.h.b16 %v6843
    %v6914 = vunpack.c.l.b16 %v6844
    %v6915 = vunpack.c.h.b16 %v6844
    %v6916 = vunpack.c.l.b16 %v6845
    %v6917 = vunpack.c.h.b16 %v6845
    %v6918 = vunpack.c.l.b16 %v6846
    %v6919 = vunpack.c.h.b16 %v6846
    %v6920 = vunpack.c.l.b16 %v6847
    %v6921 = vunpack.c.h.b16 %v6847
    %v6922 = vunpack.c.l.b16 %v6848
    %v6923 = vunpack.c.h.b16 %v6848
    %v6924 = vunpack.c.l.b16 %v6849
    %v6925 = vunpack.c.h.b16 %v6849
    %v6926 = vunpack.c.l.b16 %v6850
    %v6927 = vunpack.c.h.b16 %v6850
    %v6928 = vunpack.c.l.b16 %v6851
    %v6929 = vunpack.c.h.b16 %v6851
    %v6930 = vunpack.c.l.b16 %v6852
    %v6931 = vunpack.c.h.b16 %v6852
    %v6932 = vunpack.c.l.b16 %v6853
    %v6933 = vunpack.c.h.b16 %v6853
    %v6934 = vunpack.c.l.b16 %v6854
    %v6935 = vunpack.c.h.b16 %v6854
    %v6936 = vunpack.c.l.b16 %v6855
    %v6937 = vunpack.c.h.b16 %v6855
    %v6938 = vunpack.c.l.b16 %v6856
    %v6939 = vunpack.c.h.b16 %v6856
    %v6940 = vunpack.c.l.b16 %v6857
    %v6941 = vunpack.c.h.b16 %v6857
    %v6942 = vunpack.c.l.b16 %v6858
    %v6943 = vunpack.c.h.b16 %v6858
    %v6944 = vunpack.c.l.b16 %v6859
    %v6945 = vunpack.c.h.b16 %v6859
    %v6946 = vunpack.c.l.b16 %v6860
    %v6947 = vunpack.c.h.b16 %v6860
    %v6948 = vunpack.c.l.b16 %v6861
    %v6949 = vunpack.c.h.b16 %v6861
    %v6950 = vunpack.c.l.b16 %v6862
    %v6951 = vunpack.c.h.b16 %v6862
    %v6952 = vunpack.c.l.b16 %v6863
    %v6953 = vunpack.c.h.b16 %v6863
    %v6954 = vunpack.c.l.b16 %v6864
    %v6955 = vunpack.c.h.b16 %v6864
    %v6956 = vunpack.c.l.b16 %v6865
    %v6957 = vunpack.c.h.b16 %v6865
    %v6958 = vunpack.c.l.b16 %v6866
    %v6959 = vunpack.c.h.b16 %v6866
    %v6960 = vunpack.c.l.b16 %v6867
    %v6961 = vunpack.c.h.b16 %v6867
    %v6962 = vunpack.c.l.b16 %v6868
    %v6963 = vunpack.c.h.b16 %v6868
    %v6964 = vunpack.c.l.b16 %v6869
    %v6965 = vunpack.c.h.b16 %v6869
    %v6966 = vpack.c.b16 %v6902, %v6902
    %v6967 = vpack.c.b16 %v6903, %v6903
    %v6968 = vpack.c.b16 %v6904, %v6904
    %v6969 = vpack.c.b16 %v6905, %v6905
    %v6970 = vpack.c.b16 %v6906, %v6906
    %v6971 = vpack.c.b16 %v6907, %v6907
    %v6972 = vpack.c.b16 %v6908, %v6908
    %v6973 = vpack.c.b16 %v6909, %v6909
    %v6974 = vpack.c.b16 %v6910, %v6910
    %v6975 = vpack.c.b16 %v6911, %v6911
    %v6976 = vpack.c.b16 %v6912, %v6912
    %v6977 = vpack.c.b16 %v6913, %v6913
    %v6978 = vpack.c.b16 %v6914, %v6914
    %v6979 = vpack.c.b16 %v6915, %v6915
    %v6980 = vpack.c.b16 %v6916, %v6916
    %v6981 = vpack.c.b16 %v6917, %v6917
    %v6982 = vpack.c.b16 %v6918, %v6918
    %v6983 = vpack.c.b16 %v6919, %v6919
    %v6984 = vpack.c.b16 %v6920, %v6920
    %v6985 = vpack.c.b16 %v6921, %v6921
    %v6986 = vpack.c.b16 %v6922, %v6922
    %v6987 = vpack.c.b16 %v6923, %v6923
    %v6988 = vpack.c.b16 %v6924, %v6924
    %v6989 = vpack.c.b16 %v6925, %v6925
    %v6990 = vpack.c.b16 %v6926, %v6926
    %v6991 = vpack.c.b16 %v6927, %v6927
    %v6992 = vpack.c.b16 %v6928, %v6928
    %v6993 = vpack.c.b16 %v6929, %v6929
    %v6994 = vpack.c.b16 %v6930, %v6930
    %v6995 = vpack.c.b16 %v6931, %v6931
    %v6996 = vpack.c.b16 %v6932, %v6932
    %v6997 = vpack.c.b16 %v6933, %v6933
    %v6998 = vpack.c.b16 %v6934, %v6934
    %v6999 = vpack.c.b16 %v6935, %v6935
    %v7000 = vpack.c.b16 %v6936, %v6936
    %v7001 = vpack.c.b16 %v6937, %v6937
    %v7002 = vpack.c.b16 %v6938, %v6938
    %v7003 = vpack.c.b16 %v6939, %v6939
    %v7004 = vpack.c.b16 %v6940, %v6940
    %v7005 = vpack.c.b16 %v6941, %v6941
    %v7006 = vpack.c.b16 %v6942, %v6942
    %v7007 = vpack.c.b16 %v6943, %v6943
    %v7008 = vpack.c.b16 %v6944, %v6944
    %v7009 = vpack.c.b16 %v6945, %v6945
    %v7010 = vpack.c.b16 %v6946, %v6946
    %v7011 = vpack.c.b16 %v6947, %v6947
    %v7012 = vpack.c.b16 %v6948, %v6948
    %v7013 = vpack.c.b16 %v6949, %v6949
    %v7014 = vpack.c.b16 %v6950, %v6950
    %v7015 = vpack.c.b16 %v6951, %v6951
    %v7016 = vpack.c.b16 %v6952, %v6952
    %v7017 = vpack.c.b16 %v6953, %v6953
    %v7018 = vpack.c.b16 %v6954, %v6954
    %v7019 = vpack.c.b16 %v6955, %v6955
    %v7020 = vpack.c.b16 %v6956, %v6956
    %v7021 = vpack.c.b16 %v6957, %v6957
    %v7022 = vpack.c.b16 %v6958, %v6958
    %v7023 = vpack.c.b16 %v6959, %v6959
    %v7024 = vpack.c.b16 %v6960, %v6960
    %v7025 = vpack.c.b16 %v6961, %v6961
    %v7026 = vpack.c.b16 %v6962, %v6962
    %v7027 = vpack.c.b16 %v6963, %v6963
    %v7028 = vpack.c.b16 %v6964, %v6964
    %v7029 = vpack.c.b16 %v6965, %v6965
    %vm7030 = vsmask.f32 4368
    %vm7031 = vmor %vm6514, %vm7030
    %v7033 = vshrl.u32 %v6966, 16
    %v7035 = vrot.slane %v7033, 7
    %v7036 = vshll.u32 %v6966, 16
    %v7038 = vor.u32 %v7035, %v7036
    %v7039 = vrot.slane %v7035, 4
    %v7041 = vshrl.u32 %v6967, 16
    %v7043 = vrot.slane %v7041, 7
    %v7044 = vshll.u32 %v6967, 16
    %v7046 = vor.u32 %v7043, %v7044
    %v7047 = vsel %vm7031, %v7039, %v7046
    %v7048 = vrot.slane %v7043, 4
    %v7050 = vshrl.u32 %v6968, 16
    %v7052 = vrot.slane %v7050, 7
    %v7053 = vshll.u32 %v6968, 16
    %v7055 = vor.u32 %v7052, %v7053
    %v7056 = vrot.slane %v7052, 4
    %v7058 = vshrl.u32 %v6969, 16
    %v7060 = vrot.slane %v7058, 7
    %v7061 = vshll.u32 %v6969, 16
    %v7063 = vor.u32 %v7060, %v7061
    %v7064 = vsel %vm7031, %v7056, %v7063
    %v7065 = vrot.slane %v7060, 4
    %v7067 = vshrl.u32 %v6970, 16
    %v7069 = vrot.slane %v7067, 7
    %v7070 = vshll.u32 %v6970, 16
    %v7072 = vor.u32 %v7069, %v7070
    %v7073 = vrot.slane %v7069, 4
    %v7075 = vshrl.u32 %v6971, 16
    %v7077 = vrot.slane %v7075, 7
    %v7078 = vshll.u32 %v6971, 16
    %v7080 = vor.u32 %v7077, %v7078
    %v7081 = vsel %vm7031, %v7073, %v7080
    %v7082 = vrot.slane %v7077, 4
    %v7084 = vshrl.u32 %v6972, 16
    %v7086 = vrot.slane %v7084, 7
    %v7087 = vshll.u32 %v6972, 16
    %v7089 = vor.u32 %v7086, %v7087
    %v7090 = vrot.slane %v7086, 4
    %v7092 = vshrl.u32 %v6973, 16
    %v7094 = vrot.slane %v7092, 7
    %v7095 = vshll.u32 %v6973, 16
    %v7097 = vor.u32 %v7094, %v7095
    %v7098 = vsel %vm7031, %v7090, %v7097
    %v7099 = vrot.slane %v7094, 4
    %v7101 = vshrl.u32 %v6974, 16
    %v7103 = vrot.slane %v7101, 7
    %v7104 = vshll.u32 %v6974, 16
    %v7106 = vor.u32 %v7103, %v7104
    %v7107 = vrot.slane %v7103, 4
    %v7109 = vshrl.u32 %v6975, 16
    %v7111 = vrot.slane %v7109, 7
    %v7112 = vshll.u32 %v6975, 16
    %v7114 = vor.u32 %v7111, %v7112
    %v7115 = vsel %vm7031, %v7107, %v7114
    %v7116 = vrot.slane %v7111, 4
    %v7118 = vshrl.u32 %v6976, 16
    %v7120 = vrot.slane %v7118, 7
    %v7121 = vshll.u32 %v6976, 16
    %v7123 = vor.u32 %v7120, %v7121
    %v7124 = vrot.slane %v7120, 4
    %v7126 = vshrl.u32 %v6977, 16
    %v7128 = vrot.slane %v7126, 7
    %v7129 = vshll.u32 %v6977, 16
    %v7131 = vor.u32 %v7128, %v7129
    %v7132 = vsel %vm7031, %v7124, %v7131
    %v7133 = vrot.slane %v7128, 4
    %v7135 = vshrl.u32 %v6978, 16
    %v7137 = vrot.slane %v7135, 7
    %v7138 = vshll.u32 %v6978, 16
    %v7140 = vor.u32 %v7137, %v7138
    %v7141 = vrot.slane %v7137, 4
    %v7143 = vshrl.u32 %v6979, 16
    %v7145 = vrot.slane %v7143, 7
    %v7146 = vshll.u32 %v6979, 16
    %v7148 = vor.u32 %v7145, %v7146
    %v7149 = vsel %vm7031, %v7141, %v7148
    %v7150 = vrot.slane %v7145, 4
    %v7152 = vshrl.u32 %v6980, 16
    %v7154 = vrot.slane %v7152, 7
    %v7155 = vshll.u32 %v6980, 16
    %v7157 = vor.u32 %v7154, %v7155
    %v7158 = vrot.slane %v7154, 4
    %v7160 = vshrl.u32 %v6981, 16
    %v7162 = vrot.slane %v7160, 7
    %v7163 = vshll.u32 %v6981, 16
    %v7165 = vor.u32 %v7162, %v7163
    %v7166 = vsel %vm7031, %v7158, %v7165
    %v7167 = vrot.slane %v7162, 4
    %v7169 = vshrl.u32 %v6982, 16
    %v7171 = vrot.slane %v7169, 7
    %v7172 = vshll.u32 %v6982, 16
    %v7174 = vor.u32 %v7171, %v7172
    %v7175 = vrot.slane %v7171, 4
    %v7177 = vshrl.u32 %v6983, 16
    %v7179 = vrot.slane %v7177, 7
    %v7180 = vshll.u32 %v6983, 16
    %v7182 = vor.u32 %v7179, %v7180
    %v7183 = vsel %vm7031, %v7175, %v7182
    %v7184 = vrot.slane %v7179, 4
    %v7186 = vshrl.u32 %v6984, 16
    %v7188 = vrot.slane %v7186, 7
    %v7189 = vshll.u32 %v6984, 16
    %v7191 = vor.u32 %v7188, %v7189
    %v7192 = vrot.slane %v7188, 4
    %v7194 = vshrl.u32 %v6985, 16
    %v7196 = vrot.slane %v7194, 7
    %v7197 = vshll.u32 %v6985, 16
    %v7199 = vor.u32 %v7196, %v7197
    %v7200 = vsel %vm7031, %v7192, %v7199
    %v7201 = vrot.slane %v7196, 4
    %v7203 = vshrl.u32 %v6986, 16
    %v7205 = vrot.slane %v7203, 7
    %v7206 = vshll.u32 %v6986, 16
    %v7208 = vor.u32 %v7205, %v7206
    %v7209 = vrot.slane %v7205, 4
    %v7211 = vshrl.u32 %v6987, 16
    %v7213 = vrot.slane %v7211, 7
    %v7214 = vshll.u32 %v6987, 16
    %v7216 = vor.u32 %v7213, %v7214
    %v7217 = vsel %vm7031, %v7209, %v7216
    %v7218 = vrot.slane %v7213, 4
    %v7220 = vshrl.u32 %v6988, 16
    %v7222 = vrot.slane %v7220, 7
    %v7223 = vshll.u32 %v6988, 16
    %v7225 = vor.u32 %v7222, %v7223
    %v7226 = vrot.slane %v7222, 4
    %v7228 = vshrl.u32 %v6989, 16
    %v7230 = vrot.slane %v7228, 7
    %v7231 = vshll.u32 %v6989, 16
    %v7233 = vor.u32 %v7230, %v7231
    %v7234 = vsel %vm7031, %v7226, %v7233
    %v7235 = vrot.slane %v7230, 4
    %v7237 = vshrl.u32 %v6990, 16
    %v7239 = vrot.slane %v7237, 7
    %v7240 = vshll.u32 %v6990, 16
    %v7242 = vor.u32 %v7239, %v7240
    %v7243 = vrot.slane %v7239, 4
    %v7245 = vshrl.u32 %v6991, 16
    %v7247 = vrot.slane %v7245, 7
    %v7248 = vshll.u32 %v6991, 16
    %v7250 = vor.u32 %v7247, %v7248
    %v7251 = vsel %vm7031, %v7243, %v7250
    %v7252 = vrot.slane %v7247, 4
    %v7254 = vshrl.u32 %v6992, 16
    %v7256 = vrot.slane %v7254, 7
    %v7257 = vshll.u32 %v6992, 16
    %v7259 = vor.u32 %v7256, %v7257
    %v7260 = vrot.slane %v7256, 4
    %v7262 = vshrl.u32 %v6993, 16
    %v7264 = vrot.slane %v7262, 7
    %v7265 = vshll.u32 %v6993, 16
    %v7267 = vor.u32 %v7264, %v7265
    %v7268 = vsel %vm7031, %v7260, %v7267
    %v7269 = vrot.slane %v7264, 4
    %v7271 = vshrl.u32 %v6994, 16
    %v7273 = vrot.slane %v7271, 7
    %v7274 = vshll.u32 %v6994, 16
    %v7276 = vor.u32 %v7273, %v7274
    %v7277 = vrot.slane %v7273, 4
    %v7279 = vshrl.u32 %v6995, 16
    %v7281 = vrot.slane %v7279, 7
    %v7282 = vshll.u32 %v6995, 16
    %v7284 = vor.u32 %v7281, %v7282
    %v7285 = vsel %vm7031, %v7277, %v7284
    %v7286 = vrot.slane %v7281, 4
    %v7288 = vshrl.u32 %v6996, 16
    %v7290 = vrot.slane %v7288, 7
    %v7291 = vshll.u32 %v6996, 16
    %v7293 = vor.u32 %v7290, %v7291
    %v7294 = vrot.slane %v7290, 4
    %v7296 = vshrl.u32 %v6997, 16
    %v7298 = vrot.slane %v7296, 7
    %v7299 = vshll.u32 %v6997, 16
    %v7301 = vor.u32 %v7298, %v7299
    %v7302 = vsel %vm7031, %v7294, %v7301
    %v7303 = vrot.slane %v7298, 4
    %v7305 = vshrl.u32 %v6998, 16
    %v7307 = vrot.slane %v7305, 7
    %v7308 = vshll.u32 %v6998, 16
    %v7310 = vor.u32 %v7307, %v7308
    %v7311 = vrot.slane %v7307, 4
    %v7313 = vshrl.u32 %v6999, 16
    %v7315 = vrot.slane %v7313, 7
    %v7316 = vshll.u32 %v6999, 16
    %v7318 = vor.u32 %v7315, %v7316
    %v7319 = vsel %vm7031, %v7311, %v7318
    %v7320 = vrot.slane %v7315, 4
    %v7322 = vshrl.u32 %v7000, 16
    %v7324 = vrot.slane %v7322, 7
    %v7325 = vshll.u32 %v7000, 16
    %v7327 = vor.u32 %v7324, %v7325
    %v7328 = vrot.slane %v7324, 4
    %v7330 = vshrl.u32 %v7001, 16
    %v7332 = vrot.slane %v7330, 7
    %v7333 = vshll.u32 %v7001, 16
    %v7335 = vor.u32 %v7332, %v7333
    %v7336 = vsel %vm7031, %v7328, %v7335
    %v7337 = vrot.slane %v7332, 4
    %v7339 = vshrl.u32 %v7002, 16
    %v7341 = vrot.slane %v7339, 7
    %v7342 = vshll.u32 %v7002, 16
    %v7344 = vor.u32 %v7341, %v7342
    %v7345 = vrot.slane %v7341, 4
    %v7347 = vshrl.u32 %v7003, 16
    %v7349 = vrot.slane %v7347, 7
    %v7350 = vshll.u32 %v7003, 16
    %v7352 = vor.u32 %v7349, %v7350
    %v7353 = vsel %vm7031, %v7345, %v7352
    %v7354 = vrot.slane %v7349, 4
    %v7356 = vshrl.u32 %v7004, 16
    %v7358 = vrot.slane %v7356, 7
    %v7359 = vshll.u32 %v7004, 16
    %v7361 = vor.u32 %v7358, %v7359
    %v7362 = vrot.slane %v7358, 4
    %v7364 = vshrl.u32 %v7005, 16
    %v7366 = vrot.slane %v7364, 7
    %v7367 = vshll.u32 %v7005, 16
    %v7369 = vor.u32 %v7366, %v7367
    %v7370 = vsel %vm7031, %v7362, %v7369
    %v7371 = vrot.slane %v7366, 4
    %v7373 = vshrl.u32 %v7006, 16
    %v7375 = vrot.slane %v7373, 7
    %v7376 = vshll.u32 %v7006, 16
    %v7378 = vor.u32 %v7375, %v7376
    %v7379 = vrot.slane %v7375, 4
    %v7381 = vshrl.u32 %v7007, 16
    %v7383 = vrot.slane %v7381, 7
    %v7384 = vshll.u32 %v7007, 16
    %v7386 = vor.u32 %v7383, %v7384
    %v7387 = vsel %vm7031, %v7379, %v7386
    %v7388 = vrot.slane %v7383, 4
    %v7390 = vshrl.u32 %v7008, 16
    %v7392 = vrot.slane %v7390, 7
    %v7393 = vshll.u32 %v7008, 16
    %v7395 = vor.u32 %v7392, %v7393
    %v7396 = vrot.slane %v7392, 4
    %v7398 = vshrl.u32 %v7009, 16
    %v7400 = vrot.slane %v7398, 7
    %v7401 = vshll.u32 %v7009, 16
    %v7403 = vor.u32 %v7400, %v7401
    %v7404 = vsel %vm7031, %v7396, %v7403
    %v7405 = vrot.slane %v7400, 4
    %v7407 = vshrl.u32 %v7010, 16
    %v7409 = vrot.slane %v7407, 7
    %v7410 = vshll.u32 %v7010, 16
    %v7412 = vor.u32 %v7409, %v7410
    %v7413 = vrot.slane %v7409, 4
    %v7415 = vshrl.u32 %v7011, 16
    %v7417 = vrot.slane %v7415, 7
    %v7418 = vshll.u32 %v7011, 16
    %v7420 = vor.u32 %v7417, %v7418
    %v7421 = vsel %vm7031, %v7413, %v7420
    %v7422 = vrot.slane %v7417, 4
    %v7424 = vshrl.u32 %v7012, 16
    %v7426 = vrot.slane %v7424, 7
    %v7427 = vshll.u32 %v7012, 16
    %v7429 = vor.u32 %v7426, %v7427
    %v7430 = vrot.slane %v7426, 4
    %v7432 = vshrl.u32 %v7013, 16
    %v7434 = vrot.slane %v7432, 7
    %v7435 = vshll.u32 %v7013, 16
    %v7437 = vor.u32 %v7434, %v7435
    %v7438 = vsel %vm7031, %v7430, %v7437
    %v7439 = vrot.slane %v7434, 4
    %v7441 = vshrl.u32 %v7014, 16
    %v7443 = vrot.slane %v7441, 7
    %v7444 = vshll.u32 %v7014, 16
    %v7446 = vor.u32 %v7443, %v7444
    %v7447 = vrot.slane %v7443, 4
    %v7449 = vshrl.u32 %v7015, 16
    %v7451 = vrot.slane %v7449, 7
    %v7452 = vshll.u32 %v7015, 16
    %v7454 = vor.u32 %v7451, %v7452
    %v7455 = vsel %vm7031, %v7447, %v7454
    %v7456 = vrot.slane %v7451, 4
    %v7458 = vshrl.u32 %v7016, 16
    %v7460 = vrot.slane %v7458, 7
    %v7461 = vshll.u32 %v7016, 16
    %v7463 = vor.u32 %v7460, %v7461
    %v7464 = vrot.slane %v7460, 4
    %v7466 = vshrl.u32 %v7017, 16
    %v7468 = vrot.slane %v7466, 7
    %v7469 = vshll.u32 %v7017, 16
    %v7471 = vor.u32 %v7468, %v7469
    %v7472 = vsel %vm7031, %v7464, %v7471
    %v7473 = vrot.slane %v7468, 4
    %v7475 = vshrl.u32 %v7018, 16
    %v7477 = vrot.slane %v7475, 7
    %v7478 = vshll.u32 %v7018, 16
    %v7480 = vor.u32 %v7477, %v7478
    %v7481 = vrot.slane %v7477, 4
    %v7483 = vshrl.u32 %v7019, 16
    %v7485 = vrot.slane %v7483, 7
    %v7486 = vshll.u32 %v7019, 16
    %v7488 = vor.u32 %v7485, %v7486
    %v7489 = vsel %vm7031, %v7481, %v7488
    %v7490 = vrot.slane %v7485, 4
    %v7492 = vshrl.u32 %v7020, 16
    %v7494 = vrot.slane %v7492, 7
    %v7495 = vshll.u32 %v7020, 16
    %v7497 = vor.u32 %v7494, %v7495
    %v7498 = vrot.slane %v7494, 4
    %v7500 = vshrl.u32 %v7021, 16
    %v7502 = vrot.slane %v7500, 7
    %v7503 = vshll.u32 %v7021, 16
    %v7505 = vor.u32 %v7502, %v7503
    %v7506 = vsel %vm7031, %v7498, %v7505
    %v7507 = vrot.slane %v7502, 4
    %v7509 = vshrl.u32 %v7022, 16
    %v7511 = vrot.slane %v7509, 7
    %v7512 = vshll.u32 %v7022, 16
    %v7514 = vor.u32 %v7511, %v7512
    %v7515 = vrot.slane %v7511, 4
    %v7517 = vshrl.u32 %v7023, 16
    %v7519 = vrot.slane %v7517, 7
    %v7520 = vshll.u32 %v7023, 16
    %v7522 = vor.u32 %v7519, %v7520
    %v7523 = vsel %vm7031, %v7515, %v7522
    %v7524 = vrot.slane %v7519, 4
    %v7526 = vshrl.u32 %v7024, 16
    %v7528 = vrot.slane %v7526, 7
    %v7529 = vshll.u32 %v7024, 16
    %v7531 = vor.u32 %v7528, %v7529
    %v7532 = vrot.slane %v7528, 4
    %v7534 = vshrl.u32 %v7025, 16
    %v7536 = vrot.slane %v7534, 7
    %v7537 = vshll.u32 %v7025, 16
    %v7539 = vor.u32 %v7536, %v7537
    %v7540 = vsel %vm7031, %v7532, %v7539
    %v7541 = vrot.slane %v7536, 4
    %v7543 = vshrl.u32 %v7026, 16
    %v7545 = vrot.slane %v7543, 7
    %v7546 = vshll.u32 %v7026, 16
    %v7548 = vor.u32 %v7545, %v7546
    %v7549 = vrot.slane %v7545, 4
    %v7551 = vshrl.u32 %v7027, 16
    %v7553 = vrot.slane %v7551, 7
    %v7554 = vshll.u32 %v7027, 16
    %v7556 = vor.u32 %v7553, %v7554
    %v7557 = vsel %vm7031, %v7549, %v7556
    %v7558 = vrot.slane %v7553, 4
    %v7560 = vshrl.u32 %v7028, 16
    %v7562 = vrot.slane %v7560, 7
    %v7563 = vshll.u32 %v7028, 16
    %v7565 = vor.u32 %v7562, %v7563
    %v7566 = vrot.slane %v7562, 4
    %v7568 = vshrl.u32 %v7029, 16
    %v7570 = vrot.slane %v7568, 7
    %v7571 = vshll.u32 %v7029, 16
    %v7573 = vor.u32 %v7570, %v7571
    %v7574 = vsel %vm7031, %v7566, %v7573
    %v7575 = vrot.slane %v7570, 4
    %vm7672 = vcmask 60416
    %vm7673 = vmand %vm7672, %vm6612
    %v7674 = vld [vmem:[%s6512] sm:$0xf]
    %v7675 = vsel %vm7673, %v7038, %v7674
    %7676 = vst [vmem:[%s6512] sm:$0xf] %v7675
    %7677 = vst.msk [vmem:[%s6512 + $0x4] sm:$0xf] %vm6497, %v7047
    %v7678 = vld [vmem:[%s6512 + $0x8] sm:$0x1]
    %v7679 = vsel %vm6515, %v7048, %v7678
    %7680 = vst [vmem:[%s6512 + $0x8] sm:$0x1] %v7679
    %v7681 = vld [vmem:[%s6512 + $0xc] sm:$0xf]
    %v7682 = vsel %vm7673, %v7055, %v7681
    %7683 = vst [vmem:[%s6512 + $0xc] sm:$0xf] %v7682
    %7684 = vst.msk [vmem:[%s6512 + $0x10] sm:$0xf] %vm6497, %v7064
    %v7685 = vld [vmem:[%s6512 + $0x14] sm:$0x1]
    %v7686 = vsel %vm6515, %v7065, %v7685
    %7687 = vst [vmem:[%s6512 + $0x14] sm:$0x1] %v7686
    %v7688 = vld [vmem:[%s6512 + $0x18] sm:$0xf]
    %v7689 = vsel %vm7673, %v7072, %v7688
    %7690 = vst [vmem:[%s6512 + $0x18] sm:$0xf] %v7689
    %7691 = vst.msk [vmem:[%s6512 + $0x1c] sm:$0xf] %vm6497, %v7081
    %v7692 = vld [vmem:[%s6512 + $0x20] sm:$0x1]
    %v7693 = vsel %vm6515, %v7082, %v7692
    %7694 = vst [vmem:[%s6512 + $0x20] sm:$0x1] %v7693
    %v7695 = vld [vmem:[%s6512 + $0x24] sm:$0xf]
    %v7696 = vsel %vm7673, %v7089, %v7695
    %7697 = vst [vmem:[%s6512 + $0x24] sm:$0xf] %v7696
    %7698 = vst.msk [vmem:[%s6512 + $0x28] sm:$0xf] %vm6497, %v7098
    %v7699 = vld [vmem:[%s6512 + $0x2c] sm:$0x1]
    %v7700 = vsel %vm6515, %v7099, %v7699
    %7701 = vst [vmem:[%s6512 + $0x2c] sm:$0x1] %v7700
    %v7702 = vld [vmem:[%s6512 + $0x30] sm:$0xf]
    %v7703 = vsel %vm7673, %v7106, %v7702
    %7704 = vst [vmem:[%s6512 + $0x30] sm:$0xf] %v7703
    %7705 = vst.msk [vmem:[%s6512 + $0x34] sm:$0xf] %vm6497, %v7115
    %v7706 = vld [vmem:[%s6512 + $0x38] sm:$0x1]
    %v7707 = vsel %vm6515, %v7116, %v7706
    %7708 = vst [vmem:[%s6512 + $0x38] sm:$0x1] %v7707
    %v7709 = vld [vmem:[%s6512 + $0x3c] sm:$0xf]
    %v7710 = vsel %vm7673, %v7123, %v7709
    %7711 = vst [vmem:[%s6512 + $0x3c] sm:$0xf] %v7710
    %7712 = vst.msk [vmem:[%s6512 + $0x40] sm:$0xf] %vm6497, %v7132
    %v7713 = vld [vmem:[%s6512 + $0x44] sm:$0x1]
    %v7714 = vsel %vm6515, %v7133, %v7713
    %7715 = vst [vmem:[%s6512 + $0x44] sm:$0x1] %v7714
    %v7716 = vld [vmem:[%s6512 + $0x48] sm:$0xf]
    %v7717 = vsel %vm7673, %v7140, %v7716
    %7718 = vst [vmem:[%s6512 + $0x48] sm:$0xf] %v7717
    %7719 = vst.msk [vmem:[%s6512 + $0x4c] sm:$0xf] %vm6497, %v7149
    %v7720 = vld [vmem:[%s6512 + $0x50] sm:$0x1]
    %v7721 = vsel %vm6515, %v7150, %v7720
    %7722 = vst [vmem:[%s6512 + $0x50] sm:$0x1] %v7721
    %v7723 = vld [vmem:[%s6512 + $0x54] sm:$0xf]
    %v7724 = vsel %vm7673, %v7157, %v7723
    %7725 = vst [vmem:[%s6512 + $0x54] sm:$0xf] %v7724
    %7726 = vst.msk [vmem:[%s6512 + $0x58] sm:$0xf] %vm6497, %v7166
    %v7727 = vld [vmem:[%s6512 + $0x5c] sm:$0x1]
    %v7728 = vsel %vm6515, %v7167, %v7727
    %7729 = vst [vmem:[%s6512 + $0x5c] sm:$0x1] %v7728
    %v7730 = vld [vmem:[%s6512 + $0x60] sm:$0xf]
    %v7731 = vsel %vm7673, %v7174, %v7730
    %7732 = vst [vmem:[%s6512 + $0x60] sm:$0xf] %v7731
    %7733 = vst.msk [vmem:[%s6512 + $0x64] sm:$0xf] %vm6497, %v7183
    %v7734 = vld [vmem:[%s6512 + $0x68] sm:$0x1]
    %v7735 = vsel %vm6515, %v7184, %v7734
    %7736 = vst [vmem:[%s6512 + $0x68] sm:$0x1] %v7735
    %v7737 = vld [vmem:[%s6512 + $0x6c] sm:$0xf]
    %v7738 = vsel %vm7673, %v7191, %v7737
    %7739 = vst [vmem:[%s6512 + $0x6c] sm:$0xf] %v7738
    %7740 = vst.msk [vmem:[%s6512 + $0x70] sm:$0xf] %vm6497, %v7200
    %v7741 = vld [vmem:[%s6512 + $0x74] sm:$0x1]
    %v7742 = vsel %vm6515, %v7201, %v7741
    %7743 = vst [vmem:[%s6512 + $0x74] sm:$0x1] %v7742
    %v7744 = vld [vmem:[%s6512 + $0x78] sm:$0xf]
    %v7745 = vsel %vm7673, %v7208, %v7744
    %7746 = vst [vmem:[%s6512 + $0x78] sm:$0xf] %v7745
    %7747 = vst.msk [vmem:[%s6512 + $0x7c] sm:$0xf] %vm6497, %v7217
    %v7748 = vld [vmem:[%s6512 + $0x80] sm:$0x1]
    %v7749 = vsel %vm6515, %v7218, %v7748
    %7750 = vst [vmem:[%s6512 + $0x80] sm:$0x1] %v7749
    %v7751 = vld [vmem:[%s6512 + $0x84] sm:$0xf]
    %v7752 = vsel %vm7673, %v7225, %v7751
    %7753 = vst [vmem:[%s6512 + $0x84] sm:$0xf] %v7752
    %7754 = vst.msk [vmem:[%s6512 + $0x88] sm:$0xf] %vm6497, %v7234
    %v7755 = vld [vmem:[%s6512 + $0x8c] sm:$0x1]
    %v7756 = vsel %vm6515, %v7235, %v7755
    %7757 = vst [vmem:[%s6512 + $0x8c] sm:$0x1] %v7756
    %v7758 = vld [vmem:[%s6512 + $0x90] sm:$0xf]
    %v7759 = vsel %vm7673, %v7242, %v7758
    %7760 = vst [vmem:[%s6512 + $0x90] sm:$0xf] %v7759
    %7761 = vst.msk [vmem:[%s6512 + $0x94] sm:$0xf] %vm6497, %v7251
    %v7762 = vld [vmem:[%s6512 + $0x98] sm:$0x1]
    %v7763 = vsel %vm6515, %v7252, %v7762
    %7764 = vst [vmem:[%s6512 + $0x98] sm:$0x1] %v7763
    %v7765 = vld [vmem:[%s6512 + $0x9c] sm:$0xf]
    %v7766 = vsel %vm7673, %v7259, %v7765
    %7767 = vst [vmem:[%s6512 + $0x9c] sm:$0xf] %v7766
    %7768 = vst.msk [vmem:[%s6512 + $0xa0] sm:$0xf] %vm6497, %v7268
    %v7769 = vld [vmem:[%s6512 + $0xa4] sm:$0x1]
    %v7770 = vsel %vm6515, %v7269, %v7769
    %7771 = vst [vmem:[%s6512 + $0xa4] sm:$0x1] %v7770
    %v7772 = vld [vmem:[%s6512 + $0xa8] sm:$0xf]
    %v7773 = vsel %vm7673, %v7276, %v7772
    %7774 = vst [vmem:[%s6512 + $0xa8] sm:$0xf] %v7773
    %7775 = vst.msk [vmem:[%s6512 + $0xac] sm:$0xf] %vm6497, %v7285
    %v7776 = vld [vmem:[%s6512 + $0xb0] sm:$0x1]
    %v7777 = vsel %vm6515, %v7286, %v7776
    %7778 = vst [vmem:[%s6512 + $0xb0] sm:$0x1] %v7777
    %v7779 = vld [vmem:[%s6512 + $0xb4] sm:$0xf]
    %v7780 = vsel %vm7673, %v7293, %v7779
    %7781 = vst [vmem:[%s6512 + $0xb4] sm:$0xf] %v7780
    %7782 = vst.msk [vmem:[%s6512 + $0xb8] sm:$0xf] %vm6497, %v7302
    %v7783 = vld [vmem:[%s6512 + $0xbc] sm:$0x1]
    %v7784 = vsel %vm6515, %v7303, %v7783
    %7785 = vst [vmem:[%s6512 + $0xbc] sm:$0x1] %v7784
    %v7786 = vld [vmem:[%s6512 + $0xd8] sm:$0xf]
    %v7787 = vsel %vm7673, %v7310, %v7786
    %7788 = vst [vmem:[%s6512 + $0xd8] sm:$0xf] %v7787
    %7789 = vst.msk [vmem:[%s6512 + $0xdc] sm:$0xf] %vm6497, %v7319
    %v7790 = vld [vmem:[%s6512 + $0xe0] sm:$0x1]
    %v7791 = vsel %vm6515, %v7320, %v7790
    %7792 = vst [vmem:[%s6512 + $0xe0] sm:$0x1] %v7791
    %v7793 = vld [vmem:[%s6512 + $0xe4] sm:$0xf]
    %v7794 = vsel %vm7673, %v7327, %v7793
    %7795 = vst [vmem:[%s6512 + $0xe4] sm:$0xf] %v7794
    %7796 = vst.msk [vmem:[%s6512 + $0xe8] sm:$0xf] %vm6497, %v7336
    %v7797 = vld [vmem:[%s6512 + $0xec] sm:$0x1]
    %v7798 = vsel %vm6515, %v7337, %v7797
    %7799 = vst [vmem:[%s6512 + $0xec] sm:$0x1] %v7798
    %v7800 = vld [vmem:[%s6512 + $0xf0] sm:$0xf]
    %v7801 = vsel %vm7673, %v7344, %v7800
    %7802 = vst [vmem:[%s6512 + $0xf0] sm:$0xf] %v7801
    %7803 = vst.msk [vmem:[%s6512 + $0xf4] sm:$0xf] %vm6497, %v7353
    %v7804 = vld [vmem:[%s6512 + $0xf8] sm:$0x1]
    %v7805 = vsel %vm6515, %v7354, %v7804
    %7806 = vst [vmem:[%s6512 + $0xf8] sm:$0x1] %v7805
    %v7807 = vld [vmem:[%s6512 + $0xfc] sm:$0xf]
    %v7808 = vsel %vm7673, %v7361, %v7807
    %7809 = vst [vmem:[%s6512 + $0xfc] sm:$0xf] %v7808
    %7810 = vst.msk [vmem:[%s6512 + $0x100] sm:$0xf] %vm6497, %v7370
    %v7811 = vld [vmem:[%s6512 + $0x104] sm:$0x1]
    %v7812 = vsel %vm6515, %v7371, %v7811
    %7813 = vst [vmem:[%s6512 + $0x104] sm:$0x1] %v7812
    %v7814 = vld [vmem:[%s6512 + $0x108] sm:$0xf]
    %v7815 = vsel %vm7673, %v7378, %v7814
    %7816 = vst [vmem:[%s6512 + $0x108] sm:$0xf] %v7815
    %7817 = vst.msk [vmem:[%s6512 + $0x10c] sm:$0xf] %vm6497, %v7387
    %v7818 = vld [vmem:[%s6512 + $0x110] sm:$0x1]
    %v7819 = vsel %vm6515, %v7388, %v7818
    %7820 = vst [vmem:[%s6512 + $0x110] sm:$0x1] %v7819
    %v7821 = vld [vmem:[%s6512 + $0x114] sm:$0xf]
    %v7822 = vsel %vm7673, %v7395, %v7821
    %7823 = vst [vmem:[%s6512 + $0x114] sm:$0xf] %v7822
    %7824 = vst.msk [vmem:[%s6512 + $0x118] sm:$0xf] %vm6497, %v7404
    %v7825 = vld [vmem:[%s6512 + $0x11c] sm:$0x1]
    %v7826 = vsel %vm6515, %v7405, %v7825
    %7827 = vst [vmem:[%s6512 + $0x11c] sm:$0x1] %v7826
    %v7828 = vld [vmem:[%s6512 + $0x120] sm:$0xf]
    %v7829 = vsel %vm7673, %v7412, %v7828
    %7830 = vst [vmem:[%s6512 + $0x120] sm:$0xf] %v7829
    %7831 = vst.msk [vmem:[%s6512 + $0x124] sm:$0xf] %vm6497, %v7421
    %v7832 = vld [vmem:[%s6512 + $0x128] sm:$0x1]
    %v7833 = vsel %vm6515, %v7422, %v7832
    %7834 = vst [vmem:[%s6512 + $0x128] sm:$0x1] %v7833
    %v7835 = vld [vmem:[%s6512 + $0x12c] sm:$0xf]
    %v7836 = vsel %vm7673, %v7429, %v7835
    %7837 = vst [vmem:[%s6512 + $0x12c] sm:$0xf] %v7836
    %7838 = vst.msk [vmem:[%s6512 + $0x130] sm:$0xf] %vm6497, %v7438
    %v7839 = vld [vmem:[%s6512 + $0x134] sm:$0x1]
    %v7840 = vsel %vm6515, %v7439, %v7839
    %7841 = vst [vmem:[%s6512 + $0x134] sm:$0x1] %v7840
    %v7842 = vld [vmem:[%s6512 + $0x138] sm:$0xf]
    %v7843 = vsel %vm7673, %v7446, %v7842
    %7844 = vst [vmem:[%s6512 + $0x138] sm:$0xf] %v7843
    %7845 = vst.msk [vmem:[%s6512 + $0x13c] sm:$0xf] %vm6497, %v7455
    %v7846 = vld [vmem:[%s6512 + $0x140] sm:$0x1]
    %v7847 = vsel %vm6515, %v7456, %v7846
    %7848 = vst [vmem:[%s6512 + $0x140] sm:$0x1] %v7847
    %v7849 = vld [vmem:[%s6512 + $0x144] sm:$0xf]
    %v7850 = vsel %vm7673, %v7463, %v7849
    %7851 = vst [vmem:[%s6512 + $0x144] sm:$0xf] %v7850
    %7852 = vst.msk [vmem:[%s6512 + $0x148] sm:$0xf] %vm6497, %v7472
    %v7853 = vld [vmem:[%s6512 + $0x14c] sm:$0x1]
    %v7854 = vsel %vm6515, %v7473, %v7853
    %7855 = vst [vmem:[%s6512 + $0x14c] sm:$0x1] %v7854
    %v7856 = vld [vmem:[%s6512 + $0x150] sm:$0xf]
    %v7857 = vsel %vm7673, %v7480, %v7856
    %7858 = vst [vmem:[%s6512 + $0x150] sm:$0xf] %v7857
    %7859 = vst.msk [vmem:[%s6512 + $0x154] sm:$0xf] %vm6497, %v7489
    %v7860 = vld [vmem:[%s6512 + $0x158] sm:$0x1]
    %v7861 = vsel %vm6515, %v7490, %v7860
    %7862 = vst [vmem:[%s6512 + $0x158] sm:$0x1] %v7861
    %v7863 = vld [vmem:[%s6512 + $0x15c] sm:$0xf]
    %v7864 = vsel %vm7673, %v7497, %v7863
    %7865 = vst [vmem:[%s6512 + $0x15c] sm:$0xf] %v7864
    %7866 = vst.msk [vmem:[%s6512 + $0x160] sm:$0xf] %vm6497, %v7506
    %v7867 = vld [vmem:[%s6512 + $0x164] sm:$0x1]
    %v7868 = vsel %vm6515, %v7507, %v7867
    %7869 = vst [vmem:[%s6512 + $0x164] sm:$0x1] %v7868
    %v7870 = vld [vmem:[%s6512 + $0x168] sm:$0xf]
    %v7871 = vsel %vm7673, %v7514, %v7870
    %7872 = vst [vmem:[%s6512 + $0x168] sm:$0xf] %v7871
    %7873 = vst.msk [vmem:[%s6512 + $0x16c] sm:$0xf] %vm6497, %v7523
    %v7874 = vld [vmem:[%s6512 + $0x170] sm:$0x1]
    %v7875 = vsel %vm6515, %v7524, %v7874
    %7876 = vst [vmem:[%s6512 + $0x170] sm:$0x1] %v7875
    %v7877 = vld [vmem:[%s6512 + $0x174] sm:$0xf]
    %v7878 = vsel %vm7673, %v7531, %v7877
    %7879 = vst [vmem:[%s6512 + $0x174] sm:$0xf] %v7878
    %7880 = vst.msk [vmem:[%s6512 + $0x178] sm:$0xf] %vm6497, %v7540
    %v7881 = vld [vmem:[%s6512 + $0x17c] sm:$0x1]
    %v7882 = vsel %vm6515, %v7541, %v7881
    %7883 = vst [vmem:[%s6512 + $0x17c] sm:$0x1] %v7882
    %v7884 = vld [vmem:[%s6512 + $0x180] sm:$0xf]
    %v7885 = vsel %vm7673, %v7548, %v7884
    %7886 = vst [vmem:[%s6512 + $0x180] sm:$0xf] %v7885
    %7887 = vst.msk [vmem:[%s6512 + $0x184] sm:$0xf] %vm6497, %v7557
    %v7888 = vld [vmem:[%s6512 + $0x188] sm:$0x1]
    %v7889 = vsel %vm6515, %v7558, %v7888
    %7890 = vst [vmem:[%s6512 + $0x188] sm:$0x1] %v7889
    %v7891 = vld [vmem:[%s6512 + $0x18c] sm:$0xf]
    %v7892 = vsel %vm7673, %v7565, %v7891
    %7893 = vst [vmem:[%s6512 + $0x18c] sm:$0xf] %v7892
    %7894 = vst.msk [vmem:[%s6512 + $0x190] sm:$0xf] %vm6497, %v7574
    %v7895 = vld [vmem:[%s6512 + $0x194] sm:$0x1]
    %v7896 = vsel %vm6515, %v7575, %v7895
    %7897 = vst [vmem:[%s6512 + $0x194] sm:$0x1] %v7896
    %v7898 = vld [vmem:[#allocation2] sm:$0xf]
    %v7899 = vld [vmem:[#allocation2 + $0x4] sm:$0xf]
    %v7900 = vld [vmem:[#allocation2 + $0xc] sm:$0xf]
    %v7901 = vld [vmem:[#allocation2 + $0x10] sm:$0xf]
    %v7902 = vld [vmem:[#allocation2 + $0x18] sm:$0xf]
    %v7903 = vld [vmem:[#allocation2 + $0x1c] sm:$0xf]
    %v7904 = vld [vmem:[#allocation2 + $0x24] sm:$0xf]
    %v7905 = vld [vmem:[#allocation2 + $0x28] sm:$0xf]
    %v7906 = vld [vmem:[#allocation2 + $0x30] sm:$0xf]
    %v7907 = vld [vmem:[#allocation2 + $0x34] sm:$0xf]
    %v7908 = vld [vmem:[#allocation2 + $0x3c] sm:$0xf]
    %v7909 = vld [vmem:[#allocation2 + $0x40] sm:$0xf]
    %v7910 = vld [vmem:[#allocation2 + $0x48] sm:$0xf]
    %v7911 = vld [vmem:[#allocation2 + $0x4c] sm:$0xf]
    %v7912 = vld [vmem:[#allocation2 + $0x54] sm:$0xf]
    %v7913 = vld [vmem:[#allocation2 + $0x58] sm:$0xf]
    %v7914 = vld [vmem:[#allocation2 + $0x60] sm:$0xf]
    %v7915 = vld [vmem:[#allocation2 + $0x64] sm:$0xf]
    %v7916 = vld [vmem:[#allocation2 + $0x6c] sm:$0xf]
    %v7917 = vld [vmem:[#allocation2 + $0x70] sm:$0xf]
    %v7918 = vld [vmem:[#allocation2 + $0x78] sm:$0xf]
    %v7919 = vld [vmem:[#allocation2 + $0x7c] sm:$0xf]
    %v7920 = vld [vmem:[#allocation2 + $0x84] sm:$0xf]
    %v7921 = vld [vmem:[#allocation2 + $0x88] sm:$0xf]
    %v7922 = vld [vmem:[#allocation2 + $0x90] sm:$0xf]
    %v7923 = vld [vmem:[#allocation2 + $0x94] sm:$0xf]
    %v7924 = vld [vmem:[#allocation2 + $0x9c] sm:$0xf]
    %v7925 = vld [vmem:[#allocation2 + $0xa0] sm:$0xf]
    %v7926 = vld [vmem:[#allocation2 + $0xa8] sm:$0xf]
    %v7927 = vld [vmem:[#allocation2 + $0xac] sm:$0xf]
    %v7928 = vld [vmem:[#allocation2 + $0xb4] sm:$0xf]
    %v7929 = vld [vmem:[#allocation2 + $0xb8] sm:$0xf]
    %v7930 = vld [vmem:[#allocation2 + $0xd8] sm:$0xf]
    %v7931 = vld [vmem:[#allocation2 + $0xdc] sm:$0xf]
    %v7932 = vld [vmem:[#allocation2 + $0xe4] sm:$0xf]
    %v7933 = vld [vmem:[#allocation2 + $0xe8] sm:$0xf]
    %v7934 = vld [vmem:[#allocation2 + $0xf0] sm:$0xf]
    %v7935 = vld [vmem:[#allocation2 + $0xf4] sm:$0xf]
    %v7936 = vld [vmem:[#allocation2 + $0xfc] sm:$0xf]
    %v7937 = vld [vmem:[#allocation2 + $0x100] sm:$0xf]
    %v7938 = vld [vmem:[#allocation2 + $0x108] sm:$0xf]
    %v7939 = vld [vmem:[#allocation2 + $0x10c] sm:$0xf]
    %v7940 = vld [vmem:[#allocation2 + $0x114] sm:$0xf]
    %v7941 = vld [vmem:[#allocation2 + $0x118] sm:$0xf]
    %v7942 = vld [vmem:[#allocation2 + $0x120] sm:$0xf]
    %v7943 = vld [vmem:[#allocation2 + $0x124] sm:$0xf]
    %v7944 = vld [vmem:[#allocation2 + $0x12c] sm:$0xf]
    %v7945 = vld [vmem:[#allocation2 + $0x130] sm:$0xf]
    %v7946 = vld [vmem:[#allocation2 + $0x138] sm:$0xf]
    %v7947 = vld [vmem:[#allocation2 + $0x13c] sm:$0xf]
    %v7948 = vld [vmem:[#allocation2 + $0x144] sm:$0xf]
    %v7949 = vld [vmem:[#allocation2 + $0x148] sm:$0xf]
    %v7950 = vld [vmem:[#allocation2 + $0x150] sm:$0xf]
    %v7951 = vld [vmem:[#allocation2 + $0x154] sm:$0xf]
    %v7952 = vld [vmem:[#allocation2 + $0x15c] sm:$0xf]
    %v7953 = vld [vmem:[#allocation2 + $0x160] sm:$0xf]
    %v7954 = vld [vmem:[#allocation2 + $0x168] sm:$0xf]
    %v7955 = vld [vmem:[#allocation2 + $0x16c] sm:$0xf]
    %v7956 = vld [vmem:[#allocation2 + $0x174] sm:$0xf]
    %v7957 = vld [vmem:[#allocation2 + $0x178] sm:$0xf]
    %v7958 = vld [vmem:[#allocation2 + $0x180] sm:$0xf]
    %v7959 = vld [vmem:[#allocation2 + $0x184] sm:$0xf]
    %v7960 = vld [vmem:[#allocation2 + $0x18c] sm:$0xf]
    %v7961 = vld [vmem:[#allocation2 + $0x190] sm:$0xf]
    %v8026 = vunpack.c.l.b16 %v7898
    %v8027 = vunpack.c.l.b16 %v7899
    %v8028 = vunpack.c.l.b16 %v7900
    %v8029 = vunpack.c.l.b16 %v7901
    %v8030 = vunpack.c.l.b16 %v7902
    %v8031 = vunpack.c.l.b16 %v7903
    %v8032 = vunpack.c.l.b16 %v7904
    %v8033 = vunpack.c.l.b16 %v7905
    %v8034 = vunpack.c.l.b16 %v7906
    %v8035 = vunpack.c.l.b16 %v7907
    %v8036 = vunpack.c.l.b16 %v7908
    %v8037 = vunpack.c.l.b16 %v7909
    %v8038 = vunpack.c.l.b16 %v7910
    %v8039 = vunpack.c.l.b16 %v7911
    %v8040 = vunpack.c.l.b16 %v7912
    %v8041 = vunpack.c.l.b16 %v7913
    %v8042 = vunpack.c.l.b16 %v7914
    %v8043 = vunpack.c.l.b16 %v7915
    %v8044 = vunpack.c.l.b16 %v7916
    %v8045 = vunpack.c.l.b16 %v7917
    %v8046 = vunpack.c.l.b16 %v7918
    %v8047 = vunpack.c.l.b16 %v7919
    %v8048 = vunpack.c.l.b16 %v7920
    %v8049 = vunpack.c.l.b16 %v7921
    %v8050 = vunpack.c.l.b16 %v7922
    %v8051 = vunpack.c.l.b16 %v7923
    %v8052 = vunpack.c.l.b16 %v7924
    %v8053 = vunpack.c.l.b16 %v7925
    %v8054 = vunpack.c.l.b16 %v7926
    %v8055 = vunpack.c.l.b16 %v7927
    %v8056 = vunpack.c.l.b16 %v7928
    %v8057 = vunpack.c.l.b16 %v7929
    %v8058 = vunpack.c.l.b16 %v7930
    %v8059 = vunpack.c.l.b16 %v7931
    %v8060 = vunpack.c.l.b16 %v7932
    %v8061 = vunpack.c.l.b16 %v7933
    %v8062 = vunpack.c.l.b16 %v7934
    %v8063 = vunpack.c.l.b16 %v7935
    %v8064 = vunpack.c.l.b16 %v7936
    %v8065 = vunpack.c.l.b16 %v7937
    %v8066 = vunpack.c.l.b16 %v7938
    %v8067 = vunpack.c.l.b16 %v7939
    %v8068 = vunpack.c.l.b16 %v7940
    %v8069 = vunpack.c.l.b16 %v7941
    %v8070 = vunpack.c.l.b16 %v7942
    %v8071 = vunpack.c.l.b16 %v7943
    %v8072 = vunpack.c.l.b16 %v7944
    %v8073 = vunpack.c.l.b16 %v7945
    %v8074 = vunpack.c.l.b16 %v7946
    %v8075 = vunpack.c.l.b16 %v7947
    %v8076 = vunpack.c.l.b16 %v7948
    %v8077 = vunpack.c.l.b16 %v7949
    %v8078 = vunpack.c.l.b16 %v7950
    %v8079 = vunpack.c.l.b16 %v7951
    %v8080 = vunpack.c.l.b16 %v7952
    %v8081 = vunpack.c.l.b16 %v7953
    %v8082 = vunpack.c.l.b16 %v7954
    %v8083 = vunpack.c.l.b16 %v7955
    %v8084 = vunpack.c.l.b16 %v7956
    %v8085 = vunpack.c.l.b16 %v7957
    %v8086 = vunpack.c.l.b16 %v7958
    %v8087 = vunpack.c.l.b16 %v7959
    %v8088 = vunpack.c.l.b16 %v7960
    %v8089 = vunpack.c.l.b16 %v7961
    %v8090 = vpack.c.b16 %v8027, %v8026
    %v8091 = vpack.c.b16 %v8029, %v8028
    %v8092 = vpack.c.b16 %v8031, %v8030
    %v8093 = vpack.c.b16 %v8033, %v8032
    %v8094 = vpack.c.b16 %v8035, %v8034
    %v8095 = vpack.c.b16 %v8037, %v8036
    %v8096 = vpack.c.b16 %v8039, %v8038
    %v8097 = vpack.c.b16 %v8041, %v8040
    %v8098 = vpack.c.b16 %v8043, %v8042
    %v8099 = vpack.c.b16 %v8045, %v8044
    %v8100 = vpack.c.b16 %v8047, %v8046
    %v8101 = vpack.c.b16 %v8049, %v8048
    %v8102 = vpack.c.b16 %v8051, %v8050
    %v8103 = vpack.c.b16 %v8053, %v8052
    %v8104 = vpack.c.b16 %v8055, %v8054
    %v8105 = vpack.c.b16 %v8057, %v8056
    %v8106 = vpack.c.b16 %v8059, %v8058
    %v8107 = vpack.c.b16 %v8061, %v8060
    %v8108 = vpack.c.b16 %v8063, %v8062
    %v8109 = vpack.c.b16 %v8065, %v8064
    %v8110 = vpack.c.b16 %v8067, %v8066
    %v8111 = vpack.c.b16 %v8069, %v8068
    %v8112 = vpack.c.b16 %v8071, %v8070
    %v8113 = vpack.c.b16 %v8073, %v8072
    %v8114 = vpack.c.b16 %v8075, %v8074
    %v8115 = vpack.c.b16 %v8077, %v8076
    %v8116 = vpack.c.b16 %v8079, %v8078
    %v8117 = vpack.c.b16 %v8081, %v8080
    %v8118 = vpack.c.b16 %v8083, %v8082
    %v8119 = vpack.c.b16 %v8085, %v8084
    %v8120 = vpack.c.b16 %v8087, %v8086
    %v8121 = vpack.c.b16 %v8089, %v8088
    %vm8154 = vcmask 64512
    %8155 = vst.msk [vmem:[#allocation4] sm:$0xff] %vm8154, %v8090
    %8156 = vst.msk [vmem:[#allocation4 + $0x8] sm:$0xff] %vm8154, %v8091
    %8157 = vst.msk [vmem:[#allocation4 + $0x10] sm:$0xff] %vm8154, %v8092
    %8158 = vst.msk [vmem:[#allocation4 + $0x18] sm:$0xff] %vm8154, %v8093
    %8159 = vst.msk [vmem:[#allocation4 + $0x20] sm:$0xff] %vm8154, %v8094
    %8160 = vst.msk [vmem:[#allocation4 + $0x28] sm:$0xff] %vm8154, %v8095
    %8161 = vst.msk [vmem:[#allocation4 + $0x30] sm:$0xff] %vm8154, %v8096
    %8162 = vst.msk [vmem:[#allocation4 + $0x38] sm:$0xff] %vm8154, %v8097
    %8163 = vst.msk [vmem:[#allocation4 + $0x40] sm:$0xff] %vm8154, %v8098
    %8164 = vst.msk [vmem:[#allocation4 + $0x48] sm:$0xff] %vm8154, %v8099
    %8165 = vst.msk [vmem:[#allocation4 + $0x50] sm:$0xff] %vm8154, %v8100
    %8166 = vst.msk [vmem:[#allocation4 + $0x58] sm:$0xff] %vm8154, %v8101
    %8167 = vst.msk [vmem:[#allocation4 + $0x60] sm:$0xff] %vm8154, %v8102
    %8168 = vst.msk [vmem:[#allocation4 + $0x68] sm:$0xff] %vm8154, %v8103
    %8169 = vst.msk [vmem:[#allocation4 + $0x70] sm:$0xff] %vm8154, %v8104
    %8170 = vst.msk [vmem:[#allocation4 + $0x78] sm:$0xff] %vm8154, %v8105
    %8171 = vst.msk [vmem:[#allocation4 + $0x80] sm:$0xff] %vm8154, %v8106
    %8172 = vst.msk [vmem:[#allocation4 + $0x88] sm:$0xff] %vm8154, %v8107
    %8173 = vst.msk [vmem:[#allocation4 + $0x90] sm:$0xff] %vm8154, %v8108
    %8174 = vst.msk [vmem:[#allocation4 + $0x98] sm:$0xff] %vm8154, %v8109
    %8175 = vst.msk [vmem:[#allocation4 + $0xa0] sm:$0xff] %vm8154, %v8110
    %8176 = vst.msk [vmem:[#allocation4 + $0xa8] sm:$0xff] %vm8154, %v8111
    %8177 = vst.msk [vmem:[#allocation4 + $0xb0] sm:$0xff] %vm8154, %v8112
    %8178 = vst.msk [vmem:[#allocation4 + $0xb8] sm:$0xff] %vm8154, %v8113
    %8179 = vst.msk [vmem:[#allocation4 + $0xc0] sm:$0xff] %vm8154, %v8114
    %8180 = vst.msk [vmem:[#allocation4 + $0xc8] sm:$0xff] %vm8154, %v8115
    %8181 = vst.msk [vmem:[#allocation4 + $0xd0] sm:$0xff] %vm8154, %v8116
    %8182 = vst.msk [vmem:[#allocation4 + $0xd8] sm:$0xff] %vm8154, %v8117
    %8183 = vst.msk [vmem:[#allocation4 + $0xe0] sm:$0xff] %vm8154, %v8118
    %8184 = vst.msk [vmem:[#allocation4 + $0xe8] sm:$0xff] %vm8154, %v8119
    %8185 = vst.msk [vmem:[#allocation4 + $0xf0] sm:$0xff] %vm8154, %v8120
    %8186 = vst.msk [vmem:[#allocation4 + $0xf8] sm:$0xff] %vm8154, %v8121
    %v8187 = vld [vmem:[#allocation2] sm:$0xf]
    %v8188 = vld [vmem:[#allocation2 + $0x4] sm:$0xf]
    %v8189 = vld [vmem:[#allocation2 + $0x8] sm:$0x1]
    %v8190 = vld [vmem:[#allocation2 + $0xc] sm:$0xf]
    %v8191 = vld [vmem:[#allocation2 + $0x10] sm:$0xf]
    %v8192 = vld [vmem:[#allocation2 + $0x14] sm:$0x1]
    %v8193 = vld [vmem:[#allocation2 + $0x18] sm:$0xf]
    %v8194 = vld [vmem:[#allocation2 + $0x1c] sm:$0xf]
    %v8195 = vld [vmem:[#allocation2 + $0x20] sm:$0x1]
    %v8196 = vld [vmem:[#allocation2 + $0x24] sm:$0xf]
    %v8197 = vld [vmem:[#allocation2 + $0x28] sm:$0xf]
    %v8198 = vld [vmem:[#allocation2 + $0x2c] sm:$0x1]
    %v8199 = vld [vmem:[#allocation2 + $0x30] sm:$0xf]
    %v8200 = vld [vmem:[#allocation2 + $0x34] sm:$0xf]
    %v8201 = vld [vmem:[#allocation2 + $0x38] sm:$0x1]
    %v8202 = vld [vmem:[#allocation2 + $0x3c] sm:$0xf]
    %v8203 = vld [vmem:[#allocation2 + $0x40] sm:$0xf]
    %v8204 = vld [vmem:[#allocation2 + $0x44] sm:$0x1]
    %v8205 = vld [vmem:[#allocation2 + $0x48] sm:$0xf]
    %v8206 = vld [vmem:[#allocation2 + $0x4c] sm:$0xf]
    %v8207 = vld [vmem:[#allocation2 + $0x50] sm:$0x1]
    %v8208 = vld [vmem:[#allocation2 + $0x54] sm:$0xf]
    %v8209 = vld [vmem:[#allocation2 + $0x58] sm:$0xf]
    %v8210 = vld [vmem:[#allocation2 + $0x5c] sm:$0x1]
    %v8211 = vld [vmem:[#allocation2 + $0x60] sm:$0xf]
    %v8212 = vld [vmem:[#allocation2 + $0x64] sm:$0xf]
    %v8213 = vld [vmem:[#allocation2 + $0x68] sm:$0x1]
    %v8214 = vld [vmem:[#allocation2 + $0x6c] sm:$0xf]
    %v8215 = vld [vmem:[#allocation2 + $0x70] sm:$0xf]
    %v8216 = vld [vmem:[#allocation2 + $0x74] sm:$0x1]
    %v8217 = vld [vmem:[#allocation2 + $0x78] sm:$0xf]
    %v8218 = vld [vmem:[#allocation2 + $0x7c] sm:$0xf]
    %v8219 = vld [vmem:[#allocation2 + $0x80] sm:$0x1]
    %v8220 = vld [vmem:[#allocation2 + $0x84] sm:$0xf]
    %v8221 = vld [vmem:[#allocation2 + $0x88] sm:$0xf]
    %v8222 = vld [vmem:[#allocation2 + $0x8c] sm:$0x1]
    %v8223 = vld [vmem:[#allocation2 + $0x90] sm:$0xf]
    %v8224 = vld [vmem:[#allocation2 + $0x94] sm:$0xf]
    %v8225 = vld [vmem:[#allocation2 + $0x98] sm:$0x1]
    %v8226 = vld [vmem:[#allocation2 + $0x9c] sm:$0xf]
    %v8227 = vld [vmem:[#allocation2 + $0xa0] sm:$0xf]
    %v8228 = vld [vmem:[#allocation2 + $0xa4] sm:$0x1]
    %v8229 = vld [vmem:[#allocation2 + $0xa8] sm:$0xf]
    %v8230 = vld [vmem:[#allocation2 + $0xac] sm:$0xf]
    %v8231 = vld [vmem:[#allocation2 + $0xb0] sm:$0x1]
    %v8232 = vld [vmem:[#allocation2 + $0xb4] sm:$0xf]
    %v8233 = vld [vmem:[#allocation2 + $0xb8] sm:$0xf]
    %v8234 = vld [vmem:[#allocation2 + $0xbc] sm:$0x1]
    %v8235 = vld [vmem:[#allocation2 + $0xd8] sm:$0xf]
    %v8236 = vld [vmem:[#allocation2 + $0xdc] sm:$0xf]
    %v8237 = vld [vmem:[#allocation2 + $0xe0] sm:$0x1]
    %v8238 = vld [vmem:[#allocation2 + $0xe4] sm:$0xf]
    %v8239 = vld [vmem:[#allocation2 + $0xe8] sm:$0xf]
    %v8240 = vld [vmem:[#allocation2 + $0xec] sm:$0x1]
    %v8241 = vld [vmem:[#allocation2 + $0xf0] sm:$0xf]
    %v8242 = vld [vmem:[#allocation2 + $0xf4] sm:$0xf]
    %v8243 = vld [vmem:[#allocation2 + $0xf8] sm:$0x1]
    %v8244 = vld [vmem:[#allocation2 + $0xfc] sm:$0xf]
    %v8245 = vld [vmem:[#allocation2 + $0x100] sm:$0xf]
    %v8246 = vld [vmem:[#allocation2 + $0x104] sm:$0x1]
    %v8247 = vld [vmem:[#allocation2 + $0x108] sm:$0xf]
    %v8248 = vld [vmem:[#allocation2 + $0x10c] sm:$0xf]
    %v8249 = vld [vmem:[#allocation2 + $0x110] sm:$0x1]
    %v8250 = vld [vmem:[#allocation2 + $0x114] sm:$0xf]
    %v8251 = vld [vmem:[#allocation2 + $0x118] sm:$0xf]
    %v8252 = vld [vmem:[#allocation2 + $0x11c] sm:$0x1]
    %v8253 = vld [vmem:[#allocation2 + $0x120] sm:$0xf]
    %v8254 = vld [vmem:[#allocation2 + $0x124] sm:$0xf]
    %v8255 = vld [vmem:[#allocation2 + $0x128] sm:$0x1]
    %v8256 = vld [vmem:[#allocation2 + $0x12c] sm:$0xf]
    %v8257 = vld [vmem:[#allocation2 + $0x130] sm:$0xf]
    %v8258 = vld [vmem:[#allocation2 + $0x134] sm:$0x1]
    %v8259 = vld [vmem:[#allocation2 + $0x138] sm:$0xf]
    %v8260 = vld [vmem:[#allocation2 + $0x13c] sm:$0xf]
    %v8261 = vld [vmem:[#allocation2 + $0x140] sm:$0x1]
    %v8262 = vld [vmem:[#allocation2 + $0x144] sm:$0xf]
    %v8263 = vld [vmem:[#allocation2 + $0x148] sm:$0xf]
    %v8264 = vld [vmem:[#allocation2 + $0x14c] sm:$0x1]
    %v8265 = vld [vmem:[#allocation2 + $0x150] sm:$0xf]
    %v8266 = vld [vmem:[#allocation2 + $0x154] sm:$0xf]
    %v8267 = vld [vmem:[#allocation2 + $0x158] sm:$0x1]
    %v8268 = vld [vmem:[#allocation2 + $0x15c] sm:$0xf]
    %v8269 = vld [vmem:[#allocation2 + $0x160] sm:$0xf]
    %v8270 = vld [vmem:[#allocation2 + $0x164] sm:$0x1]
    %v8271 = vld [vmem:[#allocation2 + $0x168] sm:$0xf]
    %v8272 = vld [vmem:[#allocation2 + $0x16c] sm:$0xf]
    %v8273 = vld [vmem:[#allocation2 + $0x170] sm:$0x1]
    %v8274 = vld [vmem:[#allocation2 + $0x174] sm:$0xf]
    %v8275 = vld [vmem:[#allocation2 + $0x178] sm:$0xf]
    %v8276 = vld [vmem:[#allocation2 + $0x17c] sm:$0x1]
    %v8277 = vld [vmem:[#allocation2 + $0x180] sm:$0xf]
    %v8278 = vld [vmem:[#allocation2 + $0x184] sm:$0xf]
    %v8279 = vld [vmem:[#allocation2 + $0x188] sm:$0x1]
    %v8280 = vld [vmem:[#allocation2 + $0x18c] sm:$0xf]
    %v8281 = vld [vmem:[#allocation2 + $0x190] sm:$0xf]
    %v8282 = vld [vmem:[#allocation2 + $0x194] sm:$0x1]
    %v8284 = vshrl.u32 %v8187, 16
    %v8286 = vrot.slane %v8284, 4
    %v8287 = vshll.u32 %v8187, 16
    %v8289 = vrot.slane %v8287, 5
    %v8290 = vor.u32 %v8286, %v8289
    %v8291 = vrot.slane %v8290, 4
    %v8293 = vshll.u32 %v8188, 16
    %v8295 = vrot.slane %v8293, 5
    %v8296 = vsel %vm421, %v8291, %v8295
    %v8297 = vshrl.u32 %v8188, 16
    %v8299 = vrot.slane %v8297, 4
    %v8300 = vor.u32 %v8299, %v8295
    %v8301 = vrot.slane %v8300, 4
    %v8303 = vshll.u32 %v8189, 16
    %v8305 = vrot.slane %v8303, 5
    %v8306 = vsel %vm421, %v8301, %v8305
    %v8308 = vshrl.u32 %v8190, 16
    %v8310 = vrot.slane %v8308, 4
    %v8311 = vshll.u32 %v8190, 16
    %v8313 = vrot.slane %v8311, 5
    %v8314 = vor.u32 %v8310, %v8313
    %v8315 = vrot.slane %v8314, 4
    %v8317 = vshll.u32 %v8191, 16
    %v8319 = vrot.slane %v8317, 5
    %v8320 = vsel %vm421, %v8315, %v8319
    %v8321 = vshrl.u32 %v8191, 16
    %v8323 = vrot.slane %v8321, 4
    %v8324 = vor.u32 %v8323, %v8319
    %v8325 = vrot.slane %v8324, 4
    %v8327 = vshll.u32 %v8192, 16
    %v8329 = vrot.slane %v8327, 5
    %v8330 = vsel %vm421, %v8325, %v8329
    %v8332 = vshrl.u32 %v8193, 16
    %v8334 = vrot.slane %v8332, 4
    %v8335 = vshll.u32 %v8193, 16
    %v8337 = vrot.slane %v8335, 5
    %v8338 = vor.u32 %v8334, %v8337
    %v8339 = vrot.slane %v8338, 4
    %v8341 = vshll.u32 %v8194, 16
    %v8343 = vrot.slane %v8341, 5
    %v8344 = vsel %vm421, %v8339, %v8343
    %v8345 = vshrl.u32 %v8194, 16
    %v8347 = vrot.slane %v8345, 4
    %v8348 = vor.u32 %v8347, %v8343
    %v8349 = vrot.slane %v8348, 4
    %v8351 = vshll.u32 %v8195, 16
    %v8353 = vrot.slane %v8351, 5
    %v8354 = vsel %vm421, %v8349, %v8353
    %v8356 = vshrl.u32 %v8196, 16
    %v8358 = vrot.slane %v8356, 4
    %v8359 = vshll.u32 %v8196, 16
    %v8361 = vrot.slane %v8359, 5
    %v8362 = vor.u32 %v8358, %v8361
    %v8363 = vrot.slane %v8362, 4
    %v8365 = vshll.u32 %v8197, 16
    %v8367 = vrot.slane %v8365, 5
    %v8368 = vsel %vm421, %v8363, %v8367
    %v8369 = vshrl.u32 %v8197, 16
    %v8371 = vrot.slane %v8369, 4
    %v8372 = vor.u32 %v8371, %v8367
    %v8373 = vrot.slane %v8372, 4
    %v8375 = vshll.u32 %v8198, 16
    %v8377 = vrot.slane %v8375, 5
    %v8378 = vsel %vm421, %v8373, %v8377
    %v8380 = vshrl.u32 %v8199, 16
    %v8382 = vrot.slane %v8380, 4
    %v8383 = vshll.u32 %v8199, 16
    %v8385 = vrot.slane %v8383, 5
    %v8386 = vor.u32 %v8382, %v8385
    %v8387 = vrot.slane %v8386, 4
    %v8389 = vshll.u32 %v8200, 16
    %v8391 = vrot.slane %v8389, 5
    %v8392 = vsel %vm421, %v8387, %v8391
    %v8393 = vshrl.u32 %v8200, 16
    %v8395 = vrot.slane %v8393, 4
    %v8396 = vor.u32 %v8395, %v8391
    %v8397 = vrot.slane %v8396, 4
    %v8399 = vshll.u32 %v8201, 16
    %v8401 = vrot.slane %v8399, 5
    %v8402 = vsel %vm421, %v8397, %v8401
    %v8404 = vshrl.u32 %v8202, 16
    %v8406 = vrot.slane %v8404, 4
    %v8407 = vshll.u32 %v8202, 16
    %v8409 = vrot.slane %v8407, 5
    %v8410 = vor.u32 %v8406, %v8409
    %v8411 = vrot.slane %v8410, 4
    %v8413 = vshll.u32 %v8203, 16
    %v8415 = vrot.slane %v8413, 5
    %v8416 = vsel %vm421, %v8411, %v8415
    %v8417 = vshrl.u32 %v8203, 16
    %v8419 = vrot.slane %v8417, 4
    %v8420 = vor.u32 %v8419, %v8415
    %v8421 = vrot.slane %v8420, 4
    %v8423 = vshll.u32 %v8204, 16
    %v8425 = vrot.slane %v8423, 5
    %v8426 = vsel %vm421, %v8421, %v8425
    %v8428 = vshrl.u32 %v8205, 16
    %v8430 = vrot.slane %v8428, 4
    %v8431 = vshll.u32 %v8205, 16
    %v8433 = vrot.slane %v8431, 5
    %v8434 = vor.u32 %v8430, %v8433
    %v8435 = vrot.slane %v8434, 4
    %v8437 = vshll.u32 %v8206, 16
    %v8439 = vrot.slane %v8437, 5
    %v8440 = vsel %vm421, %v8435, %v8439
    %v8441 = vshrl.u32 %v8206, 16
    %v8443 = vrot.slane %v8441, 4
    %v8444 = vor.u32 %v8443, %v8439
    %v8445 = vrot.slane %v8444, 4
    %v8447 = vshll.u32 %v8207, 16
    %v8449 = vrot.slane %v8447, 5
    %v8450 = vsel %vm421, %v8445, %v8449
    %v8452 = vshrl.u32 %v8208, 16
    %v8454 = vrot.slane %v8452, 4
    %v8455 = vshll.u32 %v8208, 16
    %v8457 = vrot.slane %v8455, 5
    %v8458 = vor.u32 %v8454, %v8457
    %v8459 = vrot.slane %v8458, 4
    %v8461 = vshll.u32 %v8209, 16
    %v8463 = vrot.slane %v8461, 5
    %v8464 = vsel %vm421, %v8459, %v8463
    %v8465 = vshrl.u32 %v8209, 16
    %v8467 = vrot.slane %v8465, 4
    %v8468 = vor.u32 %v8467, %v8463
    %v8469 = vrot.slane %v8468, 4
    %v8471 = vshll.u32 %v8210, 16
    %v8473 = vrot.slane %v8471, 5
    %v8474 = vsel %vm421, %v8469, %v8473
    %v8476 = vshrl.u32 %v8211, 16
    %v8478 = vrot.slane %v8476, 4
    %v8479 = vshll.u32 %v8211, 16
    %v8481 = vrot.slane %v8479, 5
    %v8482 = vor.u32 %v8478, %v8481
    %v8483 = vrot.slane %v8482, 4
    %v8485 = vshll.u32 %v8212, 16
    %v8487 = vrot.slane %v8485, 5
    %v8488 = vsel %vm421, %v8483, %v8487
    %v8489 = vshrl.u32 %v8212, 16
    %v8491 = vrot.slane %v8489, 4
    %v8492 = vor.u32 %v8491, %v8487
    %v8493 = vrot.slane %v8492, 4
    %v8495 = vshll.u32 %v8213, 16
    %v8497 = vrot.slane %v8495, 5
    %v8498 = vsel %vm421, %v8493, %v8497
    %v8500 = vshrl.u32 %v8214, 16
    %v8502 = vrot.slane %v8500, 4
    %v8503 = vshll.u32 %v8214, 16
    %v8505 = vrot.slane %v8503, 5
    %v8506 = vor.u32 %v8502, %v8505
    %v8507 = vrot.slane %v8506, 4
    %v8509 = vshll.u32 %v8215, 16
    %v8511 = vrot.slane %v8509, 5
    %v8512 = vsel %vm421, %v8507, %v8511
    %v8513 = vshrl.u32 %v8215, 16
    %v8515 = vrot.slane %v8513, 4
    %v8516 = vor.u32 %v8515, %v8511
    %v8517 = vrot.slane %v8516, 4
    %v8519 = vshll.u32 %v8216, 16
    %v8521 = vrot.slane %v8519, 5
    %v8522 = vsel %vm421, %v8517, %v8521
    %v8524 = vshrl.u32 %v8217, 16
    %v8526 = vrot.slane %v8524, 4
    %v8527 = vshll.u32 %v8217, 16
    %v8529 = vrot.slane %v8527, 5
    %v8530 = vor.u32 %v8526, %v8529
    %v8531 = vrot.slane %v8530, 4
    %v8533 = vshll.u32 %v8218, 16
    %v8535 = vrot.slane %v8533, 5
    %v8536 = vsel %vm421, %v8531, %v8535
    %v8537 = vshrl.u32 %v8218, 16
    %v8539 = vrot.slane %v8537, 4
    %v8540 = vor.u32 %v8539, %v8535
    %v8541 = vrot.slane %v8540, 4
    %v8543 = vshll.u32 %v8219, 16
    %v8545 = vrot.slane %v8543, 5
    %v8546 = vsel %vm421, %v8541, %v8545
    %v8548 = vshrl.u32 %v8220, 16
    %v8550 = vrot.slane %v8548, 4
    %v8551 = vshll.u32 %v8220, 16
    %v8553 = vrot.slane %v8551, 5
    %v8554 = vor.u32 %v8550, %v8553
    %v8555 = vrot.slane %v8554, 4
    %v8557 = vshll.u32 %v8221, 16
    %v8559 = vrot.slane %v8557, 5
    %v8560 = vsel %vm421, %v8555, %v8559
    %v8561 = vshrl.u32 %v8221, 16
    %v8563 = vrot.slane %v8561, 4
    %v8564 = vor.u32 %v8563, %v8559
    %v8565 = vrot.slane %v8564, 4
    %v8567 = vshll.u32 %v8222, 16
    %v8569 = vrot.slane %v8567, 5
    %v8570 = vsel %vm421, %v8565, %v8569
    %v8572 = vshrl.u32 %v8223, 16
    %v8574 = vrot.slane %v8572, 4
    %v8575 = vshll.u32 %v8223, 16
    %v8577 = vrot.slane %v8575, 5
    %v8578 = vor.u32 %v8574, %v8577
    %v8579 = vrot.slane %v8578, 4
    %v8581 = vshll.u32 %v8224, 16
    %v8583 = vrot.slane %v8581, 5
    %v8584 = vsel %vm421, %v8579, %v8583
    %v8585 = vshrl.u32 %v8224, 16
    %v8587 = vrot.slane %v8585, 4
    %v8588 = vor.u32 %v8587, %v8583
    %v8589 = vrot.slane %v8588, 4
    %v8591 = vshll.u32 %v8225, 16
    %v8593 = vrot.slane %v8591, 5
    %v8594 = vsel %vm421, %v8589, %v8593
    %v8596 = vshrl.u32 %v8226, 16
    %v8598 = vrot.slane %v8596, 4
    %v8599 = vshll.u32 %v8226, 16
    %v8601 = vrot.slane %v8599, 5
    %v8602 = vor.u32 %v8598, %v8601
    %v8603 = vrot.slane %v8602, 4
    %v8605 = vshll.u32 %v8227, 16
    %v8607 = vrot.slane %v8605, 5
    %v8608 = vsel %vm421, %v8603, %v8607
    %v8609 = vshrl.u32 %v8227, 16
    %v8611 = vrot.slane %v8609, 4
    %v8612 = vor.u32 %v8611, %v8607
    %v8613 = vrot.slane %v8612, 4
    %v8615 = vshll.u32 %v8228, 16
    %v8617 = vrot.slane %v8615, 5
    %v8618 = vsel %vm421, %v8613, %v8617
    %v8620 = vshrl.u32 %v8229, 16
    %v8622 = vrot.slane %v8620, 4
    %v8623 = vshll.u32 %v8229, 16
    %v8625 = vrot.slane %v8623, 5
    %v8626 = vor.u32 %v8622, %v8625
    %v8627 = vrot.slane %v8626, 4
    %v8629 = vshll.u32 %v8230, 16
    %v8631 = vrot.slane %v8629, 5
    %v8632 = vsel %vm421, %v8627, %v8631
    %v8633 = vshrl.u32 %v8230, 16
    %v8635 = vrot.slane %v8633, 4
    %v8636 = vor.u32 %v8635, %v8631
    %v8637 = vrot.slane %v8636, 4
    %v8639 = vshll.u32 %v8231, 16
    %v8641 = vrot.slane %v8639, 5
    %v8642 = vsel %vm421, %v8637, %v8641
    %v8644 = vshrl.u32 %v8232, 16
    %v8646 = vrot.slane %v8644, 4
    %v8647 = vshll.u32 %v8232, 16
    %v8649 = vrot.slane %v8647, 5
    %v8650 = vor.u32 %v8646, %v8649
    %v8651 = vrot.slane %v8650, 4
    %v8653 = vshll.u32 %v8233, 16
    %v8655 = vrot.slane %v8653, 5
    %v8656 = vsel %vm421, %v8651, %v8655
    %v8657 = vshrl.u32 %v8233, 16
    %v8659 = vrot.slane %v8657, 4
    %v8660 = vor.u32 %v8659, %v8655
    %v8661 = vrot.slane %v8660, 4
    %v8663 = vshll.u32 %v8234, 16
    %v8665 = vrot.slane %v8663, 5
    %v8666 = vsel %vm421, %v8661, %v8665
    %v8668 = vshrl.u32 %v8235, 16
    %v8670 = vrot.slane %v8668, 4
    %v8671 = vshll.u32 %v8235, 16
    %v8673 = vrot.slane %v8671, 5
    %v8674 = vor.u32 %v8670, %v8673
    %v8675 = vrot.slane %v8674, 4
    %v8677 = vshll.u32 %v8236, 16
    %v8679 = vrot.slane %v8677, 5
    %v8680 = vsel %vm421, %v8675, %v8679
    %v8681 = vshrl.u32 %v8236, 16
    %v8683 = vrot.slane %v8681, 4
    %v8684 = vor.u32 %v8683, %v8679
    %v8685 = vrot.slane %v8684, 4
    %v8687 = vshll.u32 %v8237, 16
    %v8689 = vrot.slane %v8687, 5
    %v8690 = vsel %vm421, %v8685, %v8689
    %v8692 = vshrl.u32 %v8238, 16
    %v8694 = vrot.slane %v8692, 4
    %v8695 = vshll.u32 %v8238, 16
    %v8697 = vrot.slane %v8695, 5
    %v8698 = vor.u32 %v8694, %v8697
    %v8699 = vrot.slane %v8698, 4
    %v8701 = vshll.u32 %v8239, 16
    %v8703 = vrot.slane %v8701, 5
    %v8704 = vsel %vm421, %v8699, %v8703
    %v8705 = vshrl.u32 %v8239, 16
    %v8707 = vrot.slane %v8705, 4
    %v8708 = vor.u32 %v8707, %v8703
    %v8709 = vrot.slane %v8708, 4
    %v8711 = vshll.u32 %v8240, 16
    %v8713 = vrot.slane %v8711, 5
    %v8714 = vsel %vm421, %v8709, %v8713
    %v8716 = vshrl.u32 %v8241, 16
    %v8718 = vrot.slane %v8716, 4
    %v8719 = vshll.u32 %v8241, 16
    %v8721 = vrot.slane %v8719, 5
    %v8722 = vor.u32 %v8718, %v8721
    %v8723 = vrot.slane %v8722, 4
    %v8725 = vshll.u32 %v8242, 16
    %v8727 = vrot.slane %v8725, 5
    %v8728 = vsel %vm421, %v8723, %v8727
    %v8729 = vshrl.u32 %v8242, 16
    %v8731 = vrot.slane %v8729, 4
    %v8732 = vor.u32 %v8731, %v8727
    %v8733 = vrot.slane %v8732, 4
    %v8735 = vshll.u32 %v8243, 16
    %v8737 = vrot.slane %v8735, 5
    %v8738 = vsel %vm421, %v8733, %v8737
    %v8740 = vshrl.u32 %v8244, 16
    %v8742 = vrot.slane %v8740, 4
    %v8743 = vshll.u32 %v8244, 16
    %v8745 = vrot.slane %v8743, 5
    %v8746 = vor.u32 %v8742, %v8745
    %v8747 = vrot.slane %v8746, 4
    %v8749 = vshll.u32 %v8245, 16
    %v8751 = vrot.slane %v8749, 5
    %v8752 = vsel %vm421, %v8747, %v8751
    %v8753 = vshrl.u32 %v8245, 16
    %v8755 = vrot.slane %v8753, 4
    %v8756 = vor.u32 %v8755, %v8751
    %v8757 = vrot.slane %v8756, 4
    %v8759 = vshll.u32 %v8246, 16
    %v8761 = vrot.slane %v8759, 5
    %v8762 = vsel %vm421, %v8757, %v8761
    %v8764 = vshrl.u32 %v8247, 16
    %v8766 = vrot.slane %v8764, 4
    %v8767 = vshll.u32 %v8247, 16
    %v8769 = vrot.slane %v8767, 5
    %v8770 = vor.u32 %v8766, %v8769
    %v8771 = vrot.slane %v8770, 4
    %v8773 = vshll.u32 %v8248, 16
    %v8775 = vrot.slane %v8773, 5
    %v8776 = vsel %vm421, %v8771, %v8775
    %v8777 = vshrl.u32 %v8248, 16
    %v8779 = vrot.slane %v8777, 4
    %v8780 = vor.u32 %v8779, %v8775
    %v8781 = vrot.slane %v8780, 4
    %v8783 = vshll.u32 %v8249, 16
    %v8785 = vrot.slane %v8783, 5
    %v8786 = vsel %vm421, %v8781, %v8785
    %v8788 = vshrl.u32 %v8250, 16
    %v8790 = vrot.slane %v8788, 4
    %v8791 = vshll.u32 %v8250, 16
    %v8793 = vrot.slane %v8791, 5
    %v8794 = vor.u32 %v8790, %v8793
    %v8795 = vrot.slane %v8794, 4
    %v8797 = vshll.u32 %v8251, 16
    %v8799 = vrot.slane %v8797, 5
    %v8800 = vsel %vm421, %v8795, %v8799
    %v8801 = vshrl.u32 %v8251, 16
    %v8803 = vrot.slane %v8801, 4
    %v8804 = vor.u32 %v8803, %v8799
    %v8805 = vrot.slane %v8804, 4
    %v8807 = vshll.u32 %v8252, 16
    %v8809 = vrot.slane %v8807, 5
    %v8810 = vsel %vm421, %v8805, %v8809
    %v8812 = vshrl.u32 %v8253, 16
    %v8814 = vrot.slane %v8812, 4
    %v8815 = vshll.u32 %v8253, 16
    %v8817 = vrot.slane %v8815, 5
    %v8818 = vor.u32 %v8814, %v8817
    %v8819 = vrot.slane %v8818, 4
    %v8821 = vshll.u32 %v8254, 16
    %v8823 = vrot.slane %v8821, 5
    %v8824 = vsel %vm421, %v8819, %v8823
    %v8825 = vshrl.u32 %v8254, 16
    %v8827 = vrot.slane %v8825, 4
    %v8828 = vor.u32 %v8827, %v8823
    %v8829 = vrot.slane %v8828, 4
    %v8831 = vshll.u32 %v8255, 16
    %v8833 = vrot.slane %v8831, 5
    %v8834 = vsel %vm421, %v8829, %v8833
    %v8836 = vshrl.u32 %v8256, 16
    %v8838 = vrot.slane %v8836, 4
    %v8839 = vshll.u32 %v8256, 16
    %v8841 = vrot.slane %v8839, 5
    %v8842 = vor.u32 %v8838, %v8841
    %v8843 = vrot.slane %v8842, 4
    %v8845 = vshll.u32 %v8257, 16
    %v8847 = vrot.slane %v8845, 5
    %v8848 = vsel %vm421, %v8843, %v8847
    %v8849 = vshrl.u32 %v8257, 16
    %v8851 = vrot.slane %v8849, 4
    %v8852 = vor.u32 %v8851, %v8847
    %v8853 = vrot.slane %v8852, 4
    %v8855 = vshll.u32 %v8258, 16
    %v8857 = vrot.slane %v8855, 5
    %v8858 = vsel %vm421, %v8853, %v8857
    %v8860 = vshrl.u32 %v8259, 16
    %v8862 = vrot.slane %v8860, 4
    %v8863 = vshll.u32 %v8259, 16
    %v8865 = vrot.slane %v8863, 5
    %v8866 = vor.u32 %v8862, %v8865
    %v8867 = vrot.slane %v8866, 4
    %v8869 = vshll.u32 %v8260, 16
    %v8871 = vrot.slane %v8869, 5
    %v8872 = vsel %vm421, %v8867, %v8871
    %v8873 = vshrl.u32 %v8260, 16
    %v8875 = vrot.slane %v8873, 4
    %v8876 = vor.u32 %v8875, %v8871
    %v8877 = vrot.slane %v8876, 4
    %v8879 = vshll.u32 %v8261, 16
    %v8881 = vrot.slane %v8879, 5
    %v8882 = vsel %vm421, %v8877, %v8881
    %v8884 = vshrl.u32 %v8262, 16
    %v8886 = vrot.slane %v8884, 4
    %v8887 = vshll.u32 %v8262, 16
    %v8889 = vrot.slane %v8887, 5
    %v8890 = vor.u32 %v8886, %v8889
    %v8891 = vrot.slane %v8890, 4
    %v8893 = vshll.u32 %v8263, 16
    %v8895 = vrot.slane %v8893, 5
    %v8896 = vsel %vm421, %v8891, %v8895
    %v8897 = vshrl.u32 %v8263, 16
    %v8899 = vrot.slane %v8897, 4
    %v8900 = vor.u32 %v8899, %v8895
    %v8901 = vrot.slane %v8900, 4
    %v8903 = vshll.u32 %v8264, 16
    %v8905 = vrot.slane %v8903, 5
    %v8906 = vsel %vm421, %v8901, %v8905
    %v8908 = vshrl.u32 %v8265, 16
    %v8910 = vrot.slane %v8908, 4
    %v8911 = vshll.u32 %v8265, 16
    %v8913 = vrot.slane %v8911, 5
    %v8914 = vor.u32 %v8910, %v8913
    %v8915 = vrot.slane %v8914, 4
    %v8917 = vshll.u32 %v8266, 16
    %v8919 = vrot.slane %v8917, 5
    %v8920 = vsel %vm421, %v8915, %v8919
    %v8921 = vshrl.u32 %v8266, 16
    %v8923 = vrot.slane %v8921, 4
    %v8924 = vor.u32 %v8923, %v8919
    %v8925 = vrot.slane %v8924, 4
    %v8927 = vshll.u32 %v8267, 16
    %v8929 = vrot.slane %v8927, 5
    %v8930 = vsel %vm421, %v8925, %v8929
    %v8932 = vshrl.u32 %v8268, 16
    %v8934 = vrot.slane %v8932, 4
    %v8935 = vshll.u32 %v8268, 16
    %v8937 = vrot.slane %v8935, 5
    %v8938 = vor.u32 %v8934, %v8937
    %v8939 = vrot.slane %v8938, 4
    %v8941 = vshll.u32 %v8269, 16
    %v8943 = vrot.slane %v8941, 5
    %v8944 = vsel %vm421, %v8939, %v8943
    %v8945 = vshrl.u32 %v8269, 16
    %v8947 = vrot.slane %v8945, 4
    %v8948 = vor.u32 %v8947, %v8943
    %v8949 = vrot.slane %v8948, 4
    %v8951 = vshll.u32 %v8270, 16
    %v8953 = vrot.slane %v8951, 5
    %v8954 = vsel %vm421, %v8949, %v8953
    %v8956 = vshrl.u32 %v8271, 16
    %v8958 = vrot.slane %v8956, 4
    %v8959 = vshll.u32 %v8271, 16
    %v8961 = vrot.slane %v8959, 5
    %v8962 = vor.u32 %v8958, %v8961
    %v8963 = vrot.slane %v8962, 4
    %v8965 = vshll.u32 %v8272, 16
    %v8967 = vrot.slane %v8965, 5
    %v8968 = vsel %vm421, %v8963, %v8967
    %v8969 = vshrl.u32 %v8272, 16
    %v8971 = vrot.slane %v8969, 4
    %v8972 = vor.u32 %v8971, %v8967
    %v8973 = vrot.slane %v8972, 4
    %v8975 = vshll.u32 %v8273, 16
    %v8977 = vrot.slane %v8975, 5
    %v8978 = vsel %vm421, %v8973, %v8977
    %v8980 = vshrl.u32 %v8274, 16
    %v8982 = vrot.slane %v8980, 4
    %v8983 = vshll.u32 %v8274, 16
    %v8985 = vrot.slane %v8983, 5
    %v8986 = vor.u32 %v8982, %v8985
    %v8987 = vrot.slane %v8986, 4
    %v8989 = vshll.u32 %v8275, 16
    %v8991 = vrot.slane %v8989, 5
    %v8992 = vsel %vm421, %v8987, %v8991
    %v8993 = vshrl.u32 %v8275, 16
    %v8995 = vrot.slane %v8993, 4
    %v8996 = vor.u32 %v8995, %v8991
    %v8997 = vrot.slane %v8996, 4
    %v8999 = vshll.u32 %v8276, 16
    %v9001 = vrot.slane %v8999, 5
    %v9002 = vsel %vm421, %v8997, %v9001
    %v9004 = vshrl.u32 %v8277, 16
    %v9006 = vrot.slane %v9004, 4
    %v9007 = vshll.u32 %v8277, 16
    %v9009 = vrot.slane %v9007, 5
    %v9010 = vor.u32 %v9006, %v9009
    %v9011 = vrot.slane %v9010, 4
    %v9013 = vshll.u32 %v8278, 16
    %v9015 = vrot.slane %v9013, 5
    %v9016 = vsel %vm421, %v9011, %v9015
    %v9017 = vshrl.u32 %v8278, 16
    %v9019 = vrot.slane %v9017, 4
    %v9020 = vor.u32 %v9019, %v9015
    %v9021 = vrot.slane %v9020, 4
    %v9023 = vshll.u32 %v8279, 16
    %v9025 = vrot.slane %v9023, 5
    %v9026 = vsel %vm421, %v9021, %v9025
    %v9028 = vshrl.u32 %v8280, 16
    %v9030 = vrot.slane %v9028, 4
    %v9031 = vshll.u32 %v8280, 16
    %v9033 = vrot.slane %v9031, 5
    %v9034 = vor.u32 %v9030, %v9033
    %v9035 = vrot.slane %v9034, 4
    %v9037 = vshll.u32 %v8281, 16
    %v9039 = vrot.slane %v9037, 5
    %v9040 = vsel %vm421, %v9035, %v9039
    %v9041 = vshrl.u32 %v8281, 16
    %v9043 = vrot.slane %v9041, 4
    %v9044 = vor.u32 %v9043, %v9039
    %v9045 = vrot.slane %v9044, 4
    %v9047 = vshll.u32 %v8282, 16
    %v9049 = vrot.slane %v9047, 5
    %v9050 = vsel %vm421, %v9045, %v9049
    %v9051 = vunpack.c.l.b16 %v8296
    %v9052 = vunpack.c.l.b16 %v8306
    %v9053 = vunpack.c.l.b16 %v8320
    %v9054 = vunpack.c.l.b16 %v8330
    %v9055 = vunpack.c.l.b16 %v8344
    %v9056 = vunpack.c.l.b16 %v8354
    %v9057 = vunpack.c.l.b16 %v8368
    %v9058 = vunpack.c.l.b16 %v8378
    %v9059 = vunpack.c.l.b16 %v8392
    %v9060 = vunpack.c.l.b16 %v8402
    %v9061 = vunpack.c.l.b16 %v8416
    %v9062 = vunpack.c.l.b16 %v8426
    %v9063 = vunpack.c.l.b16 %v8440
    %v9064 = vunpack.c.l.b16 %v8450
    %v9065 = vunpack.c.l.b16 %v8464
    %v9066 = vunpack.c.l.b16 %v8474
    %v9067 = vunpack.c.l.b16 %v8488
    %v9068 = vunpack.c.l.b16 %v8498
    %v9069 = vunpack.c.l.b16 %v8512
    %v9070 = vunpack.c.l.b16 %v8522
    %v9071 = vunpack.c.l.b16 %v8536
    %v9072 = vunpack.c.l.b16 %v8546
    %v9073 = vunpack.c.l.b16 %v8560
    %v9074 = vunpack.c.l.b16 %v8570
    %v9075 = vunpack.c.l.b16 %v8584
    %v9076 = vunpack.c.l.b16 %v8594
    %v9077 = vunpack.c.l.b16 %v8608
    %v9078 = vunpack.c.l.b16 %v8618
    %v9079 = vunpack.c.l.b16 %v8632
    %v9080 = vunpack.c.l.b16 %v8642
    %v9081 = vunpack.c.l.b16 %v8656
    %v9082 = vunpack.c.l.b16 %v8666
    %v9083 = vunpack.c.l.b16 %v8680
    %v9084 = vunpack.c.l.b16 %v8690
    %v9085 = vunpack.c.l.b16 %v8704
    %v9086 = vunpack.c.l.b16 %v8714
    %v9087 = vunpack.c.l.b16 %v8728
    %v9088 = vunpack.c.l.b16 %v8738
    %v9089 = vunpack.c.l.b16 %v8752
    %v9090 = vunpack.c.l.b16 %v8762
    %v9091 = vunpack.c.l.b16 %v8776
    %v9092 = vunpack.c.l.b16 %v8786
    %v9093 = vunpack.c.l.b16 %v8800
    %v9094 = vunpack.c.l.b16 %v8810
    %v9095 = vunpack.c.l.b16 %v8824
    %v9096 = vunpack.c.l.b16 %v8834
    %v9097 = vunpack.c.l.b16 %v8848
    %v9098 = vunpack.c.l.b16 %v8858
    %v9099 = vunpack.c.l.b16 %v8872
    %v9100 = vunpack.c.l.b16 %v8882
    %v9101 = vunpack.c.l.b16 %v8896
    %v9102 = vunpack.c.l.b16 %v8906
    %v9103 = vunpack.c.l.b16 %v8920
    %v9104 = vunpack.c.l.b16 %v8930
    %v9105 = vunpack.c.l.b16 %v8944
    %v9106 = vunpack.c.l.b16 %v8954
    %v9107 = vunpack.c.l.b16 %v8968
    %v9108 = vunpack.c.l.b16 %v8978
    %v9109 = vunpack.c.l.b16 %v8992
    %v9110 = vunpack.c.l.b16 %v9002
    %v9111 = vunpack.c.l.b16 %v9016
    %v9112 = vunpack.c.l.b16 %v9026
    %v9113 = vunpack.c.l.b16 %v9040
    %v9114 = vunpack.c.l.b16 %v9050
    %v9115 = vpack.c.b16 %v9052, %v9051
    %v9116 = vpack.c.b16 %v9054, %v9053
    %v9117 = vpack.c.b16 %v9056, %v9055
    %v9118 = vpack.c.b16 %v9058, %v9057
    %v9119 = vpack.c.b16 %v9060, %v9059
    %v9120 = vpack.c.b16 %v9062, %v9061
    %v9121 = vpack.c.b16 %v9064, %v9063
    %v9122 = vpack.c.b16 %v9066, %v9065
    %v9123 = vpack.c.b16 %v9068, %v9067
    %v9124 = vpack.c.b16 %v9070, %v9069
    %v9125 = vpack.c.b16 %v9072, %v9071
    %v9126 = vpack.c.b16 %v9074, %v9073
    %v9127 = vpack.c.b16 %v9076, %v9075
    %v9128 = vpack.c.b16 %v9078, %v9077
    %v9129 = vpack.c.b16 %v9080, %v9079
    %v9130 = vpack.c.b16 %v9082, %v9081
    %v9131 = vpack.c.b16 %v9084, %v9083
    %v9132 = vpack.c.b16 %v9086, %v9085
    %v9133 = vpack.c.b16 %v9088, %v9087
    %v9134 = vpack.c.b16 %v9090, %v9089
    %v9135 = vpack.c.b16 %v9092, %v9091
    %v9136 = vpack.c.b16 %v9094, %v9093
    %v9137 = vpack.c.b16 %v9096, %v9095
    %v9138 = vpack.c.b16 %v9098, %v9097
    %v9139 = vpack.c.b16 %v9100, %v9099
    %v9140 = vpack.c.b16 %v9102, %v9101
    %v9141 = vpack.c.b16 %v9104, %v9103
    %v9142 = vpack.c.b16 %v9106, %v9105
    %v9143 = vpack.c.b16 %v9108, %v9107
    %v9144 = vpack.c.b16 %v9110, %v9109
    %v9145 = vpack.c.b16 %v9112, %v9111
    %v9146 = vpack.c.b16 %v9114, %v9113
    %9147 = vrot.lane.b32.xlu0 %v9115, 8
    %v9148 = vpop.permute.xlu0 %9147
    %9149 = vrot.lane.b32.xlu0 %v9116, 8
    %v9150 = vpop.permute.xlu0 %9149
    %9151 = vrot.lane.b32.xlu0 %v9117, 8
    %v9152 = vpop.permute.xlu0 %9151
    %9153 = vrot.lane.b32.xlu0 %v9118, 8
    %v9154 = vpop.permute.xlu0 %9153
    %9155 = vrot.lane.b32.xlu0 %v9119, 8
    %v9156 = vpop.permute.xlu0 %9155
    %9157 = vrot.lane.b32.xlu0 %v9120, 8
    %v9158 = vpop.permute.xlu0 %9157
    %9159 = vrot.lane.b32.xlu0 %v9121, 8
    %v9160 = vpop.permute.xlu0 %9159
    %9161 = vrot.lane.b32.xlu0 %v9122, 8
    %v9162 = vpop.permute.xlu0 %9161
    %9163 = vrot.lane.b32.xlu0 %v9123, 8
    %v9164 = vpop.permute.xlu0 %9163
    %9165 = vrot.lane.b32.xlu0 %v9124, 8
    %v9166 = vpop.permute.xlu0 %9165
    %9167 = vrot.lane.b32.xlu0 %v9125, 8
    %v9168 = vpop.permute.xlu0 %9167
    %9169 = vrot.lane.b32.xlu0 %v9126, 8
    %v9170 = vpop.permute.xlu0 %9169
    %9171 = vrot.lane.b32.xlu0 %v9127, 8
    %v9172 = vpop.permute.xlu0 %9171
    %9173 = vrot.lane.b32.xlu0 %v9128, 8
    %v9174 = vpop.permute.xlu0 %9173
    %9175 = vrot.lane.b32.xlu0 %v9129, 8
    %v9176 = vpop.permute.xlu0 %9175
    %9177 = vrot.lane.b32.xlu0 %v9130, 8
    %v9178 = vpop.permute.xlu0 %9177
    %9179 = vrot.lane.b32.xlu0 %v9131, 8
    %v9180 = vpop.permute.xlu0 %9179
    %9181 = vrot.lane.b32.xlu0 %v9132, 8
    %v9182 = vpop.permute.xlu0 %9181
    %9183 = vrot.lane.b32.xlu0 %v9133, 8
    %v9184 = vpop.permute.xlu0 %9183
    %9185 = vrot.lane.b32.xlu0 %v9134, 8
    %v9186 = vpop.permute.xlu0 %9185
    %9187 = vrot.lane.b32.xlu0 %v9135, 8
    %v9188 = vpop.permute.xlu0 %9187
    %9189 = vrot.lane.b32.xlu0 %v9136, 8
    %v9190 = vpop.permute.xlu0 %9189
    %9191 = vrot.lane.b32.xlu0 %v9137, 8
    %v9192 = vpop.permute.xlu0 %9191
    %9193 = vrot.lane.b32.xlu0 %v9138, 8
    %v9194 = vpop.permute.xlu0 %9193
    %9195 = vrot.lane.b32.xlu0 %v9139, 8
    %v9196 = vpop.permute.xlu0 %9195
    %9197 = vrot.lane.b32.xlu0 %v9140, 8
    %v9198 = vpop.permute.xlu0 %9197
    %9199 = vrot.lane.b32.xlu0 %v9141, 8
    %v9200 = vpop.permute.xlu0 %9199
    %9201 = vrot.lane.b32.xlu0 %v9142, 8
    %v9202 = vpop.permute.xlu0 %9201
    %9203 = vrot.lane.b32.xlu0 %v9143, 8
    %v9204 = vpop.permute.xlu0 %9203
    %9205 = vrot.lane.b32.xlu0 %v9144, 8
    %v9206 = vpop.permute.xlu0 %9205
    %9207 = vrot.lane.b32.xlu0 %v9145, 8
    %v9208 = vpop.permute.xlu0 %9207
    %9209 = vrot.lane.b32.xlu0 %v9146, 8
    %v9210 = vpop.permute.xlu0 %9209
    %vm9243 = vcmask 130112
    %9244 = vst.msk [vmem:[#allocation4] sm:$0xff] %vm9243, %v9148
    %9245 = vst.msk [vmem:[#allocation4 + $0x8] sm:$0xff] %vm9243, %v9150
    %9246 = vst.msk [vmem:[#allocation4 + $0x10] sm:$0xff] %vm9243, %v9152
    %9247 = vst.msk [vmem:[#allocation4 + $0x18] sm:$0xff] %vm9243, %v9154
    %9248 = vst.msk [vmem:[#allocation4 + $0x20] sm:$0xff] %vm9243, %v9156
    %9249 = vst.msk [vmem:[#allocation4 + $0x28] sm:$0xff] %vm9243, %v9158
    %9250 = vst.msk [vmem:[#allocation4 + $0x30] sm:$0xff] %vm9243, %v9160
    %9251 = vst.msk [vmem:[#allocation4 + $0x38] sm:$0xff] %vm9243, %v9162
    %9252 = vst.msk [vmem:[#allocation4 + $0x40] sm:$0xff] %vm9243, %v9164
    %9253 = vst.msk [vmem:[#allocation4 + $0x48] sm:$0xff] %vm9243, %v9166
    %9254 = vst.msk [vmem:[#allocation4 + $0x50] sm:$0xff] %vm9243, %v9168
    %9255 = vst.msk [vmem:[#allocation4 + $0x58] sm:$0xff] %vm9243, %v9170
    %9256 = vst.msk [vmem:[#allocation4 + $0x60] sm:$0xff] %vm9243, %v9172
    %9257 = vst.msk [vmem:[#allocation4 + $0x68] sm:$0xff] %vm9243, %v9174
    %9258 = vst.msk [vmem:[#allocation4 + $0x70] sm:$0xff] %vm9243, %v9176
    %9259 = vst.msk [vmem:[#allocation4 + $0x78] sm:$0xff] %vm9243, %v9178
    %9260 = vst.msk [vmem:[#allocation4 + $0x80] sm:$0xff] %vm9243, %v9180
    %9261 = vst.msk [vmem:[#allocation4 + $0x88] sm:$0xff] %vm9243, %v9182
    %9262 = vst.msk [vmem:[#allocation4 + $0x90] sm:$0xff] %vm9243, %v9184
    %9263 = vst.msk [vmem:[#allocation4 + $0x98] sm:$0xff] %vm9243, %v9186
    %9264 = vst.msk [vmem:[#allocation4 + $0xa0] sm:$0xff] %vm9243, %v9188
    %9265 = vst.msk [vmem:[#allocation4 + $0xa8] sm:$0xff] %vm9243, %v9190
    %9266 = vst.msk [vmem:[#allocation4 + $0xb0] sm:$0xff] %vm9243, %v9192
    %9267 = vst.msk [vmem:[#allocation4 + $0xb8] sm:$0xff] %vm9243, %v9194
    %9268 = vst.msk [vmem:[#allocation4 + $0xc0] sm:$0xff] %vm9243, %v9196
    %9269 = vst.msk [vmem:[#allocation4 + $0xc8] sm:$0xff] %vm9243, %v9198
    %9270 = vst.msk [vmem:[#allocation4 + $0xd0] sm:$0xff] %vm9243, %v9200
    %9271 = vst.msk [vmem:[#allocation4 + $0xd8] sm:$0xff] %vm9243, %v9202
    %9272 = vst.msk [vmem:[#allocation4 + $0xe0] sm:$0xff] %vm9243, %v9204
    %9273 = vst.msk [vmem:[#allocation4 + $0xe8] sm:$0xff] %vm9243, %v9206
    %9274 = vst.msk [vmem:[#allocation4 + $0xf0] sm:$0xff] %vm9243, %v9208
    %9275 = vst.msk [vmem:[#allocation4 + $0xf8] sm:$0xff] %vm9243, %v9210
    %v9276 = vld [vmem:[#allocation2] sm:$0xe]
    %v9277 = vld [vmem:[#allocation2 + $0x4] sm:$0xf]
    %v9278 = vld [vmem:[#allocation2 + $0x8] sm:$0x1]
    %v9279 = vld [vmem:[#allocation2 + $0xc] sm:$0xe]
    %v9280 = vld [vmem:[#allocation2 + $0x10] sm:$0xf]
    %v9281 = vld [vmem:[#allocation2 + $0x14] sm:$0x1]
    %v9282 = vld [vmem:[#allocation2 + $0x18] sm:$0xe]
    %v9283 = vld [vmem:[#allocation2 + $0x1c] sm:$0xf]
    %v9284 = vld [vmem:[#allocation2 + $0x20] sm:$0x1]
    %v9285 = vld [vmem:[#allocation2 + $0x24] sm:$0xe]
    %v9286 = vld [vmem:[#allocation2 + $0x28] sm:$0xf]
    %v9287 = vld [vmem:[#allocation2 + $0x2c] sm:$0x1]
    %v9288 = vld [vmem:[#allocation2 + $0x30] sm:$0xe]
    %v9289 = vld [vmem:[#allocation2 + $0x34] sm:$0xf]
    %v9290 = vld [vmem:[#allocation2 + $0x38] sm:$0x1]
    %v9291 = vld [vmem:[#allocation2 + $0x3c] sm:$0xe]
    %v9292 = vld [vmem:[#allocation2 + $0x40] sm:$0xf]
    %v9293 = vld [vmem:[#allocation2 + $0x44] sm:$0x1]
    %v9294 = vld [vmem:[#allocation2 + $0x48] sm:$0xe]
    %v9295 = vld [vmem:[#allocation2 + $0x4c] sm:$0xf]
    %v9296 = vld [vmem:[#allocation2 + $0x50] sm:$0x1]
    %v9297 = vld [vmem:[#allocation2 + $0x54] sm:$0xe]
    %v9298 = vld [vmem:[#allocation2 + $0x58] sm:$0xf]
    %v9299 = vld [vmem:[#allocation2 + $0x5c] sm:$0x1]
    %v9300 = vld [vmem:[#allocation2 + $0x60] sm:$0xe]
    %v9301 = vld [vmem:[#allocation2 + $0x64] sm:$0xf]
    %v9302 = vld [vmem:[#allocation2 + $0x68] sm:$0x1]
    %v9303 = vld [vmem:[#allocation2 + $0x6c] sm:$0xe]
    %v9304 = vld [vmem:[#allocation2 + $0x70] sm:$0xf]
    %v9305 = vld [vmem:[#allocation2 + $0x74] sm:$0x1]
    %v9306 = vld [vmem:[#allocation2 + $0x78] sm:$0xe]
    %v9307 = vld [vmem:[#allocation2 + $0x7c] sm:$0xf]
    %v9308 = vld [vmem:[#allocation2 + $0x80] sm:$0x1]
    %v9309 = vld [vmem:[#allocation2 + $0x84] sm:$0xe]
    %v9310 = vld [vmem:[#allocation2 + $0x88] sm:$0xf]
    %v9311 = vld [vmem:[#allocation2 + $0x8c] sm:$0x1]
    %v9312 = vld [vmem:[#allocation2 + $0x90] sm:$0xe]
    %v9313 = vld [vmem:[#allocation2 + $0x94] sm:$0xf]
    %v9314 = vld [vmem:[#allocation2 + $0x98] sm:$0x1]
    %v9315 = vld [vmem:[#allocation2 + $0x9c] sm:$0xe]
    %v9316 = vld [vmem:[#allocation2 + $0xa0] sm:$0xf]
    %v9317 = vld [vmem:[#allocation2 + $0xa4] sm:$0x1]
    %v9318 = vld [vmem:[#allocation2 + $0xa8] sm:$0xe]
    %v9319 = vld [vmem:[#allocation2 + $0xac] sm:$0xf]
    %v9320 = vld [vmem:[#allocation2 + $0xb0] sm:$0x1]
    %v9321 = vld [vmem:[#allocation2 + $0xb4] sm:$0xe]
    %v9322 = vld [vmem:[#allocation2 + $0xb8] sm:$0xf]
    %v9323 = vld [vmem:[#allocation2 + $0xbc] sm:$0x1]
    %v9324 = vld [vmem:[#allocation2 + $0xd8] sm:$0xe]
    %v9325 = vld [vmem:[#allocation2 + $0xdc] sm:$0xf]
    %v9326 = vld [vmem:[#allocation2 + $0xe0] sm:$0x1]
    %v9327 = vld [vmem:[#allocation2 + $0xe4] sm:$0xe]
    %v9328 = vld [vmem:[#allocation2 + $0xe8] sm:$0xf]
    %v9329 = vld [vmem:[#allocation2 + $0xec] sm:$0x1]
    %v9330 = vld [vmem:[#allocation2 + $0xf0] sm:$0xe]
    %v9331 = vld [vmem:[#allocation2 + $0xf4] sm:$0xf]
    %v9332 = vld [vmem:[#allocation2 + $0xf8] sm:$0x1]
    %v9333 = vld [vmem:[#allocation2 + $0xfc] sm:$0xe]
    %v9334 = vld [vmem:[#allocation2 + $0x100] sm:$0xf]
    %v9335 = vld [vmem:[#allocation2 + $0x104] sm:$0x1]
    %v9336 = vld [vmem:[#allocation2 + $0x108] sm:$0xe]
    %v9337 = vld [vmem:[#allocation2 + $0x10c] sm:$0xf]
    %v9338 = vld [vmem:[#allocation2 + $0x110] sm:$0x1]
    %v9339 = vld [vmem:[#allocation2 + $0x114] sm:$0xe]
    %v9340 = vld [vmem:[#allocation2 + $0x118] sm:$0xf]
    %v9341 = vld [vmem:[#allocation2 + $0x11c] sm:$0x1]
    %v9342 = vld [vmem:[#allocation2 + $0x120] sm:$0xe]
    %v9343 = vld [vmem:[#allocation2 + $0x124] sm:$0xf]
    %v9344 = vld [vmem:[#allocation2 + $0x128] sm:$0x1]
    %v9345 = vld [vmem:[#allocation2 + $0x12c] sm:$0xe]
    %v9346 = vld [vmem:[#allocation2 + $0x130] sm:$0xf]
    %v9347 = vld [vmem:[#allocation2 + $0x134] sm:$0x1]
    %v9348 = vld [vmem:[#allocation2 + $0x138] sm:$0xe]
    %v9349 = vld [vmem:[#allocation2 + $0x13c] sm:$0xf]
    %v9350 = vld [vmem:[#allocation2 + $0x140] sm:$0x1]
    %v9351 = vld [vmem:[#allocation2 + $0x144] sm:$0xe]
    %v9352 = vld [vmem:[#allocation2 + $0x148] sm:$0xf]
    %v9353 = vld [vmem:[#allocation2 + $0x14c] sm:$0x1]
    %v9354 = vld [vmem:[#allocation2 + $0x150] sm:$0xe]
    %v9355 = vld [vmem:[#allocation2 + $0x154] sm:$0xf]
    %v9356 = vld [vmem:[#allocation2 + $0x158] sm:$0x1]
    %v9357 = vld [vmem:[#allocation2 + $0x15c] sm:$0xe]
    %v9358 = vld [vmem:[#allocation2 + $0x160] sm:$0xf]
    %v9359 = vld [vmem:[#allocation2 + $0x164] sm:$0x1]
    %v9360 = vld [vmem:[#allocation2 + $0x168] sm:$0xe]
    %v9361 = vld [vmem:[#allocation2 + $0x16c] sm:$0xf]
    %v9362 = vld [vmem:[#allocation2 + $0x170] sm:$0x1]
    %v9363 = vld [vmem:[#allocation2 + $0x174] sm:$0xe]
    %v9364 = vld [vmem:[#allocation2 + $0x178] sm:$0xf]
    %v9365 = vld [vmem:[#allocation2 + $0x17c] sm:$0x1]
    %v9366 = vld [vmem:[#allocation2 + $0x180] sm:$0xe]
    %v9367 = vld [vmem:[#allocation2 + $0x184] sm:$0xf]
    %v9368 = vld [vmem:[#allocation2 + $0x188] sm:$0x1]
    %v9369 = vld [vmem:[#allocation2 + $0x18c] sm:$0xe]
    %v9370 = vld [vmem:[#allocation2 + $0x190] sm:$0xf]
    %v9371 = vld [vmem:[#allocation2 + $0x194] sm:$0x1]
    %v9468 = vrot.slane %v9276, 5
    %v9469 = vrot.slane %v9468, 4
    %v9470 = vrot.slane %v9277, 5
    %v9471 = vsel %vm1609, %v9469, %v9470
    %v9472 = vrot.slane %v9470, 4
    %v9473 = vrot.slane %v9278, 5
    %v9474 = vsel %vm1609, %v9472, %v9473
    %v9475 = vrot.slane %v9279, 5
    %v9476 = vrot.slane %v9475, 4
    %v9477 = vrot.slane %v9280, 5
    %v9478 = vsel %vm1609, %v9476, %v9477
    %v9479 = vrot.slane %v9477, 4
    %v9480 = vrot.slane %v9281, 5
    %v9481 = vsel %vm1609, %v9479, %v9480
    %v9482 = vrot.slane %v9282, 5
    %v9483 = vrot.slane %v9482, 4
    %v9484 = vrot.slane %v9283, 5
    %v9485 = vsel %vm1609, %v9483, %v9484
    %v9486 = vrot.slane %v9484, 4
    %v9487 = vrot.slane %v9284, 5
    %v9488 = vsel %vm1609, %v9486, %v9487
    %v9489 = vrot.slane %v9285, 5
    %v9490 = vrot.slane %v9489, 4
    %v9491 = vrot.slane %v9286, 5
    %v9492 = vsel %vm1609, %v9490, %v9491
    %v9493 = vrot.slane %v9491, 4
    %v9494 = vrot.slane %v9287, 5
    %v9495 = vsel %vm1609, %v9493, %v9494
    %v9496 = vrot.slane %v9288, 5
    %v9497 = vrot.slane %v9496, 4
    %v9498 = vrot.slane %v9289, 5
    %v9499 = vsel %vm1609, %v9497, %v9498
    %v9500 = vrot.slane %v9498, 4
    %v9501 = vrot.slane %v9290, 5
    %v9502 = vsel %vm1609, %v9500, %v9501
    %v9503 = vrot.slane %v9291, 5
    %v9504 = vrot.slane %v9503, 4
    %v9505 = vrot.slane %v9292, 5
    %v9506 = vsel %vm1609, %v9504, %v9505
    %v9507 = vrot.slane %v9505, 4
    %v9508 = vrot.slane %v9293, 5
    %v9509 = vsel %vm1609, %v9507, %v9508
    %v9510 = vrot.slane %v9294, 5
    %v9511 = vrot.slane %v9510, 4
    %v9512 = vrot.slane %v9295, 5
    %v9513 = vsel %vm1609, %v9511, %v9512
    %v9514 = vrot.slane %v9512, 4
    %v9515 = vrot.slane %v9296, 5
    %v9516 = vsel %vm1609, %v9514, %v9515
    %v9517 = vrot.slane %v9297, 5
    %v9518 = vrot.slane %v9517, 4
    %v9519 = vrot.slane %v9298, 5
    %v9520 = vsel %vm1609, %v9518, %v9519
    %v9521 = vrot.slane %v9519, 4
    %v9522 = vrot.slane %v9299, 5
    %v9523 = vsel %vm1609, %v9521, %v9522
    %v9524 = vrot.slane %v9300, 5
    %v9525 = vrot.slane %v9524, 4
    %v9526 = vrot.slane %v9301, 5
    %v9527 = vsel %vm1609, %v9525, %v9526
    %v9528 = vrot.slane %v9526, 4
    %v9529 = vrot.slane %v9302, 5
    %v9530 = vsel %vm1609, %v9528, %v9529
    %v9531 = vrot.slane %v9303, 5
    %v9532 = vrot.slane %v9531, 4
    %v9533 = vrot.slane %v9304, 5
    %v9534 = vsel %vm1609, %v9532, %v9533
    %v9535 = vrot.slane %v9533, 4
    %v9536 = vrot.slane %v9305, 5
    %v9537 = vsel %vm1609, %v9535, %v9536
    %v9538 = vrot.slane %v9306, 5
    %v9539 = vrot.slane %v9538, 4
    %v9540 = vrot.slane %v9307, 5
    %v9541 = vsel %vm1609, %v9539, %v9540
    %v9542 = vrot.slane %v9540, 4
    %v9543 = vrot.slane %v9308, 5
    %v9544 = vsel %vm1609, %v9542, %v9543
    %v9545 = vrot.slane %v9309, 5
    %v9546 = vrot.slane %v9545, 4
    %v9547 = vrot.slane %v9310, 5
    %v9548 = vsel %vm1609, %v9546, %v9547
    %v9549 = vrot.slane %v9547, 4
    %v9550 = vrot.slane %v9311, 5
    %v9551 = vsel %vm1609, %v9549, %v9550
    %v9552 = vrot.slane %v9312, 5
    %v9553 = vrot.slane %v9552, 4
    %v9554 = vrot.slane %v9313, 5
    %v9555 = vsel %vm1609, %v9553, %v9554
    %v9556 = vrot.slane %v9554, 4
    %v9557 = vrot.slane %v9314, 5
    %v9558 = vsel %vm1609, %v9556, %v9557
    %v9559 = vrot.slane %v9315, 5
    %v9560 = vrot.slane %v9559, 4
    %v9561 = vrot.slane %v9316, 5
    %v9562 = vsel %vm1609, %v9560, %v9561
    %v9563 = vrot.slane %v9561, 4
    %v9564 = vrot.slane %v9317, 5
    %v9565 = vsel %vm1609, %v9563, %v9564
    %v9566 = vrot.slane %v9318, 5
    %v9567 = vrot.slane %v9566, 4
    %v9568 = vrot.slane %v9319, 5
    %v9569 = vsel %vm1609, %v9567, %v9568
    %v9570 = vrot.slane %v9568, 4
    %v9571 = vrot.slane %v9320, 5
    %v9572 = vsel %vm1609, %v9570, %v9571
    %v9573 = vrot.slane %v9321, 5
    %v9574 = vrot.slane %v9573, 4
    %v9575 = vrot.slane %v9322, 5
    %v9576 = vsel %vm1609, %v9574, %v9575
    %v9577 = vrot.slane %v9575, 4
    %v9578 = vrot.slane %v9323, 5
    %v9579 = vsel %vm1609, %v9577, %v9578
    %v9580 = vrot.slane %v9324, 5
    %v9581 = vrot.slane %v9580, 4
    %v9582 = vrot.slane %v9325, 5
    %v9583 = vsel %vm1609, %v9581, %v9582
    %v9584 = vrot.slane %v9582, 4
    %v9585 = vrot.slane %v9326, 5
    %v9586 = vsel %vm1609, %v9584, %v9585
    %v9587 = vrot.slane %v9327, 5
    %v9588 = vrot.slane %v9587, 4
    %v9589 = vrot.slane %v9328, 5
    %v9590 = vsel %vm1609, %v9588, %v9589
    %v9591 = vrot.slane %v9589, 4
    %v9592 = vrot.slane %v9329, 5
    %v9593 = vsel %vm1609, %v9591, %v9592
    %v9594 = vrot.slane %v9330, 5
    %v9595 = vrot.slane %v9594, 4
    %v9596 = vrot.slane %v9331, 5
    %v9597 = vsel %vm1609, %v9595, %v9596
    %v9598 = vrot.slane %v9596, 4
    %v9599 = vrot.slane %v9332, 5
    %v9600 = vsel %vm1609, %v9598, %v9599
    %v9601 = vrot.slane %v9333, 5
    %v9602 = vrot.slane %v9601, 4
    %v9603 = vrot.slane %v9334, 5
    %v9604 = vsel %vm1609, %v9602, %v9603
    %v9605 = vrot.slane %v9603, 4
    %v9606 = vrot.slane %v9335, 5
    %v9607 = vsel %vm1609, %v9605, %v9606
    %v9608 = vrot.slane %v9336, 5
    %v9609 = vrot.slane %v9608, 4
    %v9610 = vrot.slane %v9337, 5
    %v9611 = vsel %vm1609, %v9609, %v9610
    %v9612 = vrot.slane %v9610, 4
    %v9613 = vrot.slane %v9338, 5
    %v9614 = vsel %vm1609, %v9612, %v9613
    %v9615 = vrot.slane %v9339, 5
    %v9616 = vrot.slane %v9615, 4
    %v9617 = vrot.slane %v9340, 5
    %v9618 = vsel %vm1609, %v9616, %v9617
    %v9619 = vrot.slane %v9617, 4
    %v9620 = vrot.slane %v9341, 5
    %v9621 = vsel %vm1609, %v9619, %v9620
    %v9622 = vrot.slane %v9342, 5
    %v9623 = vrot.slane %v9622, 4
    %v9624 = vrot.slane %v9343, 5
    %v9625 = vsel %vm1609, %v9623, %v9624
    %v9626 = vrot.slane %v9624, 4
    %v9627 = vrot.slane %v9344, 5
    %v9628 = vsel %vm1609, %v9626, %v9627
    %v9629 = vrot.slane %v9345, 5
    %v9630 = vrot.slane %v9629, 4
    %v9631 = vrot.slane %v9346, 5
    %v9632 = vsel %vm1609, %v9630, %v9631
    %v9633 = vrot.slane %v9631, 4
    %v9634 = vrot.slane %v9347, 5
    %v9635 = vsel %vm1609, %v9633, %v9634
    %v9636 = vrot.slane %v9348, 5
    %v9637 = vrot.slane %v9636, 4
    %v9638 = vrot.slane %v9349, 5
    %v9639 = vsel %vm1609, %v9637, %v9638
    %v9640 = vrot.slane %v9638, 4
    %v9641 = vrot.slane %v9350, 5
    %v9642 = vsel %vm1609, %v9640, %v9641
    %v9643 = vrot.slane %v9351, 5
    %v9644 = vrot.slane %v9643, 4
    %v9645 = vrot.slane %v9352, 5
    %v9646 = vsel %vm1609, %v9644, %v9645
    %v9647 = vrot.slane %v9645, 4
    %v9648 = vrot.slane %v9353, 5
    %v9649 = vsel %vm1609, %v9647, %v9648
    %v9650 = vrot.slane %v9354, 5
    %v9651 = vrot.slane %v9650, 4
    %v9652 = vrot.slane %v9355, 5
    %v9653 = vsel %vm1609, %v9651, %v9652
    %v9654 = vrot.slane %v9652, 4
    %v9655 = vrot.slane %v9356, 5
    %v9656 = vsel %vm1609, %v9654, %v9655
    %v9657 = vrot.slane %v9357, 5
    %v9658 = vrot.slane %v9657, 4
    %v9659 = vrot.slane %v9358, 5
    %v9660 = vsel %vm1609, %v9658, %v9659
    %v9661 = vrot.slane %v9659, 4
    %v9662 = vrot.slane %v9359, 5
    %v9663 = vsel %vm1609, %v9661, %v9662
    %v9664 = vrot.slane %v9360, 5
    %v9665 = vrot.slane %v9664, 4
    %v9666 = vrot.slane %v9361, 5
    %v9667 = vsel %vm1609, %v9665, %v9666
    %v9668 = vrot.slane %v9666, 4
    %v9669 = vrot.slane %v9362, 5
    %v9670 = vsel %vm1609, %v9668, %v9669
    %v9671 = vrot.slane %v9363, 5
    %v9672 = vrot.slane %v9671, 4
    %v9673 = vrot.slane %v9364, 5
    %v9674 = vsel %vm1609, %v9672, %v9673
    %v9675 = vrot.slane %v9673, 4
    %v9676 = vrot.slane %v9365, 5
    %v9677 = vsel %vm1609, %v9675, %v9676
    %v9678 = vrot.slane %v9366, 5
    %v9679 = vrot.slane %v9678, 4
    %v9680 = vrot.slane %v9367, 5
    %v9681 = vsel %vm1609, %v9679, %v9680
    %v9682 = vrot.slane %v9680, 4
    %v9683 = vrot.slane %v9368, 5
    %v9684 = vsel %vm1609, %v9682, %v9683
    %v9685 = vrot.slane %v9369, 5
    %v9686 = vrot.slane %v9685, 4
    %v9687 = vrot.slane %v9370, 5
    %v9688 = vsel %vm1609, %v9686, %v9687
    %v9689 = vrot.slane %v9687, 4
    %v9690 = vrot.slane %v9371, 5
    %v9691 = vsel %vm1609, %v9689, %v9690
    %v9692 = vunpack.c.l.b16 %v9471
    %v9693 = vunpack.c.l.b16 %v9474
    %v9694 = vunpack.c.l.b16 %v9478
    %v9695 = vunpack.c.l.b16 %v9481
    %v9696 = vunpack.c.l.b16 %v9485
    %v9697 = vunpack.c.l.b16 %v9488
    %v9698 = vunpack.c.l.b16 %v9492
    %v9699 = vunpack.c.l.b16 %v9495
    %v9700 = vunpack.c.l.b16 %v9499
    %v9701 = vunpack.c.l.b16 %v9502
    %v9702 = vunpack.c.l.b16 %v9506
    %v9703 = vunpack.c.l.b16 %v9509
    %v9704 = vunpack.c.l.b16 %v9513
    %v9705 = vunpack.c.l.b16 %v9516
    %v9706 = vunpack.c.l.b16 %v9520
    %v9707 = vunpack.c.l.b16 %v9523
    %v9708 = vunpack.c.l.b16 %v9527
    %v9709 = vunpack.c.l.b16 %v9530
    %v9710 = vunpack.c.l.b16 %v9534
    %v9711 = vunpack.c.l.b16 %v9537
    %v9712 = vunpack.c.l.b16 %v9541
    %v9713 = vunpack.c.l.b16 %v9544
    %v9714 = vunpack.c.l.b16 %v9548
    %v9715 = vunpack.c.l.b16 %v9551
    %v9716 = vunpack.c.l.b16 %v9555
    %v9717 = vunpack.c.l.b16 %v9558
    %v9718 = vunpack.c.l.b16 %v9562
    %v9719 = vunpack.c.l.b16 %v9565
    %v9720 = vunpack.c.l.b16 %v9569
    %v9721 = vunpack.c.l.b16 %v9572
    %v9722 = vunpack.c.l.b16 %v9576
    %v9723 = vunpack.c.l.b16 %v9579
    %v9724 = vunpack.c.l.b16 %v9583
    %v9725 = vunpack.c.l.b16 %v9586
    %v9726 = vunpack.c.l.b16 %v9590
    %v9727 = vunpack.c.l.b16 %v9593
    %v9728 = vunpack.c.l.b16 %v9597
    %v9729 = vunpack.c.l.b16 %v9600
    %v9730 = vunpack.c.l.b16 %v9604
    %v9731 = vunpack.c.l.b16 %v9607
    %v9732 = vunpack.c.l.b16 %v9611
    %v9733 = vunpack.c.l.b16 %v9614
    %v9734 = vunpack.c.l.b16 %v9618
    %v9735 = vunpack.c.l.b16 %v9621
    %v9736 = vunpack.c.l.b16 %v9625
    %v9737 = vunpack.c.l.b16 %v9628
    %v9738 = vunpack.c.l.b16 %v9632
    %v9739 = vunpack.c.l.b16 %v9635
    %v9740 = vunpack.c.l.b16 %v9639
    %v9741 = vunpack.c.l.b16 %v9642
    %v9742 = vunpack.c.l.b16 %v9646
    %v9743 = vunpack.c.l.b16 %v9649
    %v9744 = vunpack.c.l.b16 %v9653
    %v9745 = vunpack.c.l.b16 %v9656
    %v9746 = vunpack.c.l.b16 %v9660
    %v9747 = vunpack.c.l.b16 %v9663
    %v9748 = vunpack.c.l.b16 %v9667
    %v9749 = vunpack.c.l.b16 %v9670
    %v9750 = vunpack.c.l.b16 %v9674
    %v9751 = vunpack.c.l.b16 %v9677
    %v9752 = vunpack.c.l.b16 %v9681
    %v9753 = vunpack.c.l.b16 %v9684
    %v9754 = vunpack.c.l.b16 %v9688
    %v9755 = vunpack.c.l.b16 %v9691
    %v9756 = vpack.c.b16 %v9693, %v9692
    %v9757 = vpack.c.b16 %v9695, %v9694
    %v9758 = vpack.c.b16 %v9697, %v9696
    %v9759 = vpack.c.b16 %v9699, %v9698
    %v9760 = vpack.c.b16 %v9701, %v9700
    %v9761 = vpack.c.b16 %v9703, %v9702
    %v9762 = vpack.c.b16 %v9705, %v9704
    %v9763 = vpack.c.b16 %v9707, %v9706
    %v9764 = vpack.c.b16 %v9709, %v9708
    %v9765 = vpack.c.b16 %v9711, %v9710
    %v9766 = vpack.c.b16 %v9713, %v9712
    %v9767 = vpack.c.b16 %v9715, %v9714
    %v9768 = vpack.c.b16 %v9717, %v9716
    %v9769 = vpack.c.b16 %v9719, %v9718
    %v9770 = vpack.c.b16 %v9721, %v9720
    %v9771 = vpack.c.b16 %v9723, %v9722
    %v9772 = vpack.c.b16 %v9725, %v9724
    %v9773 = vpack.c.b16 %v9727, %v9726
    %v9774 = vpack.c.b16 %v9729, %v9728
    %v9775 = vpack.c.b16 %v9731, %v9730
    %v9776 = vpack.c.b16 %v9733, %v9732
    %v9777 = vpack.c.b16 %v9735, %v9734
    %v9778 = vpack.c.b16 %v9737, %v9736
    %v9779 = vpack.c.b16 %v9739, %v9738
    %v9780 = vpack.c.b16 %v9741, %v9740
    %v9781 = vpack.c.b16 %v9743, %v9742
    %v9782 = vpack.c.b16 %v9745, %v9744
    %v9783 = vpack.c.b16 %v9747, %v9746
    %v9784 = vpack.c.b16 %v9749, %v9748
    %v9785 = vpack.c.b16 %v9751, %v9750
    %v9786 = vpack.c.b16 %v9753, %v9752
    %v9787 = vpack.c.b16 %v9755, %v9754
    %9788 = vrot.lane.b32.xlu0 %v9756, 16
    %v9789 = vpop.permute.xlu0 %9788
    %9790 = vrot.lane.b32.xlu0 %v9757, 16
    %v9791 = vpop.permute.xlu0 %9790
    %9792 = vrot.lane.b32.xlu0 %v9758, 16
    %v9793 = vpop.permute.xlu0 %9792
    %9794 = vrot.lane.b32.xlu0 %v9759, 16
    %v9795 = vpop.permute.xlu0 %9794
    %9796 = vrot.lane.b32.xlu0 %v9760, 16
    %v9797 = vpop.permute.xlu0 %9796
    %9798 = vrot.lane.b32.xlu0 %v9761, 16
    %v9799 = vpop.permute.xlu0 %9798
    %9800 = vrot.lane.b32.xlu0 %v9762, 16
    %v9801 = vpop.permute.xlu0 %9800
    %9802 = vrot.lane.b32.xlu0 %v9763, 16
    %v9803 = vpop.permute.xlu0 %9802
    %9804 = vrot.lane.b32.xlu0 %v9764, 16
    %v9805 = vpop.permute.xlu0 %9804
    %9806 = vrot.lane.b32.xlu0 %v9765, 16
    %v9807 = vpop.permute.xlu0 %9806
    %9808 = vrot.lane.b32.xlu0 %v9766, 16
    %v9809 = vpop.permute.xlu0 %9808
    %9810 = vrot.lane.b32.xlu0 %v9767, 16
    %v9811 = vpop.permute.xlu0 %9810
    %9812 = vrot.lane.b32.xlu0 %v9768, 16
    %v9813 = vpop.permute.xlu0 %9812
    %9814 = vrot.lane.b32.xlu0 %v9769, 16
    %v9815 = vpop.permute.xlu0 %9814
    %9816 = vrot.lane.b32.xlu0 %v9770, 16
    %v9817 = vpop.permute.xlu0 %9816
    %9818 = vrot.lane.b32.xlu0 %v9771, 16
    %v9819 = vpop.permute.xlu0 %9818
    %9820 = vrot.lane.b32.xlu0 %v9772, 16
    %v9821 = vpop.permute.xlu0 %9820
    %9822 = vrot.lane.b32.xlu0 %v9773, 16
    %v9823 = vpop.permute.xlu0 %9822
    %9824 = vrot.lane.b32.xlu0 %v9774, 16
    %v9825 = vpop.permute.xlu0 %9824
    %9826 = vrot.lane.b32.xlu0 %v9775, 16
    %v9827 = vpop.permute.xlu0 %9826
    %9828 = vrot.lane.b32.xlu0 %v9776, 16
    %v9829 = vpop.permute.xlu0 %9828
    %9830 = vrot.lane.b32.xlu0 %v9777, 16
    %v9831 = vpop.permute.xlu0 %9830
    %9832 = vrot.lane.b32.xlu0 %v9778, 16
    %v9833 = vpop.permute.xlu0 %9832
    %9834 = vrot.lane.b32.xlu0 %v9779, 16
    %v9835 = vpop.permute.xlu0 %9834
    %9836 = vrot.lane.b32.xlu0 %v9780, 16
    %v9837 = vpop.permute.xlu0 %9836
    %9838 = vrot.lane.b32.xlu0 %v9781, 16
    %v9839 = vpop.permute.xlu0 %9838
    %9840 = vrot.lane.b32.xlu0 %v9782, 16
    %v9841 = vpop.permute.xlu0 %9840
    %9842 = vrot.lane.b32.xlu0 %v9783, 16
    %v9843 = vpop.permute.xlu0 %9842
    %9844 = vrot.lane.b32.xlu0 %v9784, 16
    %v9845 = vpop.permute.xlu0 %9844
    %9846 = vrot.lane.b32.xlu0 %v9785, 16
    %v9847 = vpop.permute.xlu0 %9846
    %9848 = vrot.lane.b32.xlu0 %v9786, 16
    %v9849 = vpop.permute.xlu0 %9848
    %9850 = vrot.lane.b32.xlu0 %v9787, 16
    %v9851 = vpop.permute.xlu0 %9850
    %vm9884 = vcmask 195712
    %9885 = vst.msk [vmem:[#allocation4] sm:$0xff] %vm9884, %v9789
    %9886 = vst.msk [vmem:[#allocation4 + $0x8] sm:$0xff] %vm9884, %v9791
    %9887 = vst.msk [vmem:[#allocation4 + $0x10] sm:$0xff] %vm9884, %v9793
    %9888 = vst.msk [vmem:[#allocation4 + $0x18] sm:$0xff] %vm9884, %v9795
    %9889 = vst.msk [vmem:[#allocation4 + $0x20] sm:$0xff] %vm9884, %v9797
    %9890 = vst.msk [vmem:[#allocation4 + $0x28] sm:$0xff] %vm9884, %v9799
    %9891 = vst.msk [vmem:[#allocation4 + $0x30] sm:$0xff] %vm9884, %v9801
    %9892 = vst.msk [vmem:[#allocation4 + $0x38] sm:$0xff] %vm9884, %v9803
    %9893 = vst.msk [vmem:[#allocation4 + $0x40] sm:$0xff] %vm9884, %v9805
    %9894 = vst.msk [vmem:[#allocation4 + $0x48] sm:$0xff] %vm9884, %v9807
    %9895 = vst.msk [vmem:[#allocation4 + $0x50] sm:$0xff] %vm9884, %v9809
    %9896 = vst.msk [vmem:[#allocation4 + $0x58] sm:$0xff] %vm9884, %v9811
    %9897 = vst.msk [vmem:[#allocation4 + $0x60] sm:$0xff] %vm9884, %v9813
    %9898 = vst.msk [vmem:[#allocation4 + $0x68] sm:$0xff] %vm9884, %v9815
    %9899 = vst.msk [vmem:[#allocation4 + $0x70] sm:$0xff] %vm9884, %v9817
    %9900 = vst.msk [vmem:[#allocation4 + $0x78] sm:$0xff] %vm9884, %v9819
    %9901 = vst.msk [vmem:[#allocation4 + $0x80] sm:$0xff] %vm9884, %v9821
    %9902 = vst.msk [vmem:[#allocation4 + $0x88] sm:$0xff] %vm9884, %v9823
    %9903 = vst.msk [vmem:[#allocation4 + $0x90] sm:$0xff] %vm9884, %v9825
    %9904 = vst.msk [vmem:[#allocation4 + $0x98] sm:$0xff] %vm9884, %v9827
    %9905 = vst.msk [vmem:[#allocation4 + $0xa0] sm:$0xff] %vm9884, %v9829
    %9906 = vst.msk [vmem:[#allocation4 + $0xa8] sm:$0xff] %vm9884, %v9831
    %9907 = vst.msk [vmem:[#allocation4 + $0xb0] sm:$0xff] %vm9884, %v9833
    %9908 = vst.msk [vmem:[#allocation4 + $0xb8] sm:$0xff] %vm9884, %v9835
    %9909 = vst.msk [vmem:[#allocation4 + $0xc0] sm:$0xff] %vm9884, %v9837
    %9910 = vst.msk [vmem:[#allocation4 + $0xc8] sm:$0xff] %vm9884, %v9839
    %9911 = vst.msk [vmem:[#allocation4 + $0xd0] sm:$0xff] %vm9884, %v9841
    %9912 = vst.msk [vmem:[#allocation4 + $0xd8] sm:$0xff] %vm9884, %v9843
    %9913 = vst.msk [vmem:[#allocation4 + $0xe0] sm:$0xff] %vm9884, %v9845
    %9914 = vst.msk [vmem:[#allocation4 + $0xe8] sm:$0xff] %vm9884, %v9847
    %9915 = vst.msk [vmem:[#allocation4 + $0xf0] sm:$0xff] %vm9884, %v9849
    %9916 = vst.msk [vmem:[#allocation4 + $0xf8] sm:$0xff] %vm9884, %v9851
    %v9917 = vld [vmem:[%s6512] sm:$0xf]
    %v9918 = vld [vmem:[%s6512 + $0x4] sm:$0xf]
    %v9919 = vld [vmem:[%s6512 + $0xc] sm:$0xf]
    %v9920 = vld [vmem:[%s6512 + $0x10] sm:$0xf]
    %v9921 = vld [vmem:[%s6512 + $0x18] sm:$0xf]
    %v9922 = vld [vmem:[%s6512 + $0x1c] sm:$0xf]
    %v9923 = vld [vmem:[%s6512 + $0x24] sm:$0xf]
    %v9924 = vld [vmem:[%s6512 + $0x28] sm:$0xf]
    %v9925 = vld [vmem:[%s6512 + $0x30] sm:$0xf]
    %v9926 = vld [vmem:[%s6512 + $0x34] sm:$0xf]
    %v9927 = vld [vmem:[%s6512 + $0x3c] sm:$0xf]
    %v9928 = vld [vmem:[%s6512 + $0x40] sm:$0xf]
    %v9929 = vld [vmem:[%s6512 + $0x48] sm:$0xf]
    %v9930 = vld [vmem:[%s6512 + $0x4c] sm:$0xf]
    %v9931 = vld [vmem:[%s6512 + $0x54] sm:$0xf]
    %v9932 = vld [vmem:[%s6512 + $0x58] sm:$0xf]
    %v9933 = vld [vmem:[%s6512 + $0x60] sm:$0xf]
    %v9934 = vld [vmem:[%s6512 + $0x64] sm:$0xf]
    %v9935 = vld [vmem:[%s6512 + $0x6c] sm:$0xf]
    %v9936 = vld [vmem:[%s6512 + $0x70] sm:$0xf]
    %v9937 = vld [vmem:[%s6512 + $0x78] sm:$0xf]
    %v9938 = vld [vmem:[%s6512 + $0x7c] sm:$0xf]
    %v9939 = vld [vmem:[%s6512 + $0x84] sm:$0xf]
    %v9940 = vld [vmem:[%s6512 + $0x88] sm:$0xf]
    %v9941 = vld [vmem:[%s6512 + $0x90] sm:$0xf]
    %v9942 = vld [vmem:[%s6512 + $0x94] sm:$0xf]
    %v9943 = vld [vmem:[%s6512 + $0x9c] sm:$0xf]
    %v9944 = vld [vmem:[%s6512 + $0xa0] sm:$0xf]
    %v9945 = vld [vmem:[%s6512 + $0xa8] sm:$0xf]
    %v9946 = vld [vmem:[%s6512 + $0xac] sm:$0xf]
    %v9947 = vld [vmem:[%s6512 + $0xb4] sm:$0xf]
    %v9948 = vld [vmem:[%s6512 + $0xb8] sm:$0xf]
    %v9949 = vld [vmem:[%s6512 + $0xd8] sm:$0xf]
    %v9950 = vld [vmem:[%s6512 + $0xdc] sm:$0xf]
    %v9951 = vld [vmem:[%s6512 + $0xe4] sm:$0xf]
    %v9952 = vld [vmem:[%s6512 + $0xe8] sm:$0xf]
    %v9953 = vld [vmem:[%s6512 + $0xf0] sm:$0xf]
    %v9954 = vld [vmem:[%s6512 + $0xf4] sm:$0xf]
    %v9955 = vld [vmem:[%s6512 + $0xfc] sm:$0xf]
    %v9956 = vld [vmem:[%s6512 + $0x100] sm:$0xf]
    %v9957 = vld [vmem:[%s6512 + $0x108] sm:$0xf]
    %v9958 = vld [vmem:[%s6512 + $0x10c] sm:$0xf]
    %v9959 = vld [vmem:[%s6512 + $0x114] sm:$0xf]
    %v9960 = vld [vmem:[%s6512 + $0x118] sm:$0xf]
    %v9961 = vld [vmem:[%s6512 + $0x120] sm:$0xf]
    %v9962 = vld [vmem:[%s6512 + $0x124] sm:$0xf]
    %v9963 = vld [vmem:[%s6512 + $0x12c] sm:$0xf]
    %v9964 = vld [vmem:[%s6512 + $0x130] sm:$0xf]
    %v9965 = vld [vmem:[%s6512 + $0x138] sm:$0xf]
    %v9966 = vld [vmem:[%s6512 + $0x13c] sm:$0xf]
    %v9967 = vld [vmem:[%s6512 + $0x144] sm:$0xf]
    %v9968 = vld [vmem:[%s6512 + $0x148] sm:$0xf]
    %v9969 = vld [vmem:[%s6512 + $0x150] sm:$0xf]
    %v9970 = vld [vmem:[%s6512 + $0x154] sm:$0xf]
    %v9971 = vld [vmem:[%s6512 + $0x15c] sm:$0xf]
    %v9972 = vld [vmem:[%s6512 + $0x160] sm:$0xf]
    %v9973 = vld [vmem:[%s6512 + $0x168] sm:$0xf]
    %v9974 = vld [vmem:[%s6512 + $0x16c] sm:$0xf]
    %v9975 = vld [vmem:[%s6512 + $0x174] sm:$0xf]
    %v9976 = vld [vmem:[%s6512 + $0x178] sm:$0xf]
    %v9977 = vld [vmem:[%s6512 + $0x180] sm:$0xf]
    %v9978 = vld [vmem:[%s6512 + $0x184] sm:$0xf]
    %v9979 = vld [vmem:[%s6512 + $0x18c] sm:$0xf]
    %v9980 = vld [vmem:[%s6512 + $0x190] sm:$0xf]
    %v10045 = vunpack.c.l.b16 %v9917
    %v10046 = vunpack.c.l.b16 %v9918
    %v10047 = vunpack.c.l.b16 %v9919
    %v10048 = vunpack.c.l.b16 %v9920
    %v10049 = vunpack.c.l.b16 %v9921
    %v10050 = vunpack.c.l.b16 %v9922
    %v10051 = vunpack.c.l.b16 %v9923
    %v10052 = vunpack.c.l.b16 %v9924
    %v10053 = vunpack.c.l.b16 %v9925
    %v10054 = vunpack.c.l.b16 %v9926
    %v10055 = vunpack.c.l.b16 %v9927
    %v10056 = vunpack.c.l.b16 %v9928
    %v10057 = vunpack.c.l.b16 %v9929
    %v10058 = vunpack.c.l.b16 %v9930
    %v10059 = vunpack.c.l.b16 %v9931
    %v10060 = vunpack.c.l.b16 %v9932
    %v10061 = vunpack.c.l.b16 %v9933
    %v10062 = vunpack.c.l.b16 %v9934
    %v10063 = vunpack.c.l.b16 %v9935
    %v10064 = vunpack.c.l.b16 %v9936
    %v10065 = vunpack.c.l.b16 %v9937
    %v10066 = vunpack.c.l.b16 %v9938
    %v10067 = vunpack.c.l.b16 %v9939
    %v10068 = vunpack.c.l.b16 %v9940
    %v10069 = vunpack.c.l.b16 %v9941
    %v10070 = vunpack.c.l.b16 %v9942
    %v10071 = vunpack.c.l.b16 %v9943
    %v10072 = vunpack.c.l.b16 %v9944
    %v10073 = vunpack.c.l.b16 %v9945
    %v10074 = vunpack.c.l.b16 %v9946
    %v10075 = vunpack.c.l.b16 %v9947
    %v10076 = vunpack.c.l.b16 %v9948
    %v10077 = vunpack.c.l.b16 %v9949
    %v10078 = vunpack.c.l.b16 %v9950
    %v10079 = vunpack.c.l.b16 %v9951
    %v10080 = vunpack.c.l.b16 %v9952
    %v10081 = vunpack.c.l.b16 %v9953
    %v10082 = vunpack.c.l.b16 %v9954
    %v10083 = vunpack.c.l.b16 %v9955
    %v10084 = vunpack.c.l.b16 %v9956
    %v10085 = vunpack.c.l.b16 %v9957
    %v10086 = vunpack.c.l.b16 %v9958
    %v10087 = vunpack.c.l.b16 %v9959
    %v10088 = vunpack.c.l.b16 %v9960
    %v10089 = vunpack.c.l.b16 %v9961
    %v10090 = vunpack.c.l.b16 %v9962
    %v10091 = vunpack.c.l.b16 %v9963
    %v10092 = vunpack.c.l.b16 %v9964
    %v10093 = vunpack.c.l.b16 %v9965
    %v10094 = vunpack.c.l.b16 %v9966
    %v10095 = vunpack.c.l.b16 %v9967
    %v10096 = vunpack.c.l.b16 %v9968
    %v10097 = vunpack.c.l.b16 %v9969
    %v10098 = vunpack.c.l.b16 %v9970
    %v10099 = vunpack.c.l.b16 %v9971
    %v10100 = vunpack.c.l.b16 %v9972
    %v10101 = vunpack.c.l.b16 %v9973
    %v10102 = vunpack.c.l.b16 %v9974
    %v10103 = vunpack.c.l.b16 %v9975
    %v10104 = vunpack.c.l.b16 %v9976
    %v10105 = vunpack.c.l.b16 %v9977
    %v10106 = vunpack.c.l.b16 %v9978
    %v10107 = vunpack.c.l.b16 %v9979
    %v10108 = vunpack.c.l.b16 %v9980
    %v10109 = vpack.c.b16 %v10046, %v10045
    %v10110 = vpack.c.b16 %v10048, %v10047
    %v10111 = vpack.c.b16 %v10050, %v10049
    %v10112 = vpack.c.b16 %v10052, %v10051
    %v10113 = vpack.c.b16 %v10054, %v10053
    %v10114 = vpack.c.b16 %v10056, %v10055
    %v10115 = vpack.c.b16 %v10058, %v10057
    %v10116 = vpack.c.b16 %v10060, %v10059
    %v10117 = vpack.c.b16 %v10062, %v10061
    %v10118 = vpack.c.b16 %v10064, %v10063
    %v10119 = vpack.c.b16 %v10066, %v10065
    %v10120 = vpack.c.b16 %v10068, %v10067
    %v10121 = vpack.c.b16 %v10070, %v10069
    %v10122 = vpack.c.b16 %v10072, %v10071
    %v10123 = vpack.c.b16 %v10074, %v10073
    %v10124 = vpack.c.b16 %v10076, %v10075
    %v10125 = vpack.c.b16 %v10078, %v10077
    %v10126 = vpack.c.b16 %v10080, %v10079
    %v10127 = vpack.c.b16 %v10082, %v10081
    %v10128 = vpack.c.b16 %v10084, %v10083
    %v10129 = vpack.c.b16 %v10086, %v10085
    %v10130 = vpack.c.b16 %v10088, %v10087
    %v10131 = vpack.c.b16 %v10090, %v10089
    %v10132 = vpack.c.b16 %v10092, %v10091
    %v10133 = vpack.c.b16 %v10094, %v10093
    %v10134 = vpack.c.b16 %v10096, %v10095
    %v10135 = vpack.c.b16 %v10098, %v10097
    %v10136 = vpack.c.b16 %v10100, %v10099
    %v10137 = vpack.c.b16 %v10102, %v10101
    %v10138 = vpack.c.b16 %v10104, %v10103
    %v10139 = vpack.c.b16 %v10106, %v10105
    %v10140 = vpack.c.b16 %v10108, %v10107
    %10141 = vrot.lane.b32.xlu0 %v10109, 24
    %v10142 = vpop.permute.xlu0 %10141
    %10143 = vrot.lane.b32.xlu0 %v10110, 24
    %v10144 = vpop.permute.xlu0 %10143
    %10145 = vrot.lane.b32.xlu0 %v10111, 24
    %v10146 = vpop.permute.xlu0 %10145
    %10147 = vrot.lane.b32.xlu0 %v10112, 24
    %v10148 = vpop.permute.xlu0 %10147
    %10149 = vrot.lane.b32.xlu0 %v10113, 24
    %v10150 = vpop.permute.xlu0 %10149
    %10151 = vrot.lane.b32.xlu0 %v10114, 24
    %v10152 = vpop.permute.xlu0 %10151
    %10153 = vrot.lane.b32.xlu0 %v10115, 24
    %v10154 = vpop.permute.xlu0 %10153
    %10155 = vrot.lane.b32.xlu0 %v10116, 24
    %v10156 = vpop.permute.xlu0 %10155
    %10157 = vrot.lane.b32.xlu0 %v10117, 24
    %v10158 = vpop.permute.xlu0 %10157
    %10159 = vrot.lane.b32.xlu0 %v10118, 24
    %v10160 = vpop.permute.xlu0 %10159
    %10161 = vrot.lane.b32.xlu0 %v10119, 24
    %v10162 = vpop.permute.xlu0 %10161
    %10163 = vrot.lane.b32.xlu0 %v10120, 24
    %v10164 = vpop.permute.xlu0 %10163
    %10165 = vrot.lane.b32.xlu0 %v10121, 24
    %v10166 = vpop.permute.xlu0 %10165
    %10167 = vrot.lane.b32.xlu0 %v10122, 24
    %v10168 = vpop.permute.xlu0 %10167
    %10169 = vrot.lane.b32.xlu0 %v10123, 24
    %v10170 = vpop.permute.xlu0 %10169
    %10171 = vrot.lane.b32.xlu0 %v10124, 24
    %v10172 = vpop.permute.xlu0 %10171
    %10173 = vrot.lane.b32.xlu0 %v10125, 24
    %v10174 = vpop.permute.xlu0 %10173
    %10175 = vrot.lane.b32.xlu0 %v10126, 24
    %v10176 = vpop.permute.xlu0 %10175
    %10177 = vrot.lane.b32.xlu0 %v10127, 24
    %v10178 = vpop.permute.xlu0 %10177
    %10179 = vrot.lane.b32.xlu0 %v10128, 24
    %v10180 = vpop.permute.xlu0 %10179
    %10181 = vrot.lane.b32.xlu0 %v10129, 24
    %v10182 = vpop.permute.xlu0 %10181
    %10183 = vrot.lane.b32.xlu0 %v10130, 24
    %v10184 = vpop.permute.xlu0 %10183
    %10185 = vrot.lane.b32.xlu0 %v10131, 24
    %v10186 = vpop.permute.xlu0 %10185
    %10187 = vrot.lane.b32.xlu0 %v10132, 24
    %v10188 = vpop.permute.xlu0 %10187
    %10189 = vrot.lane.b32.xlu0 %v10133, 24
    %v10190 = vpop.permute.xlu0 %10189
    %10191 = vrot.lane.b32.xlu0 %v10134, 24
    %v10192 = vpop.permute.xlu0 %10191
    %10193 = vrot.lane.b32.xlu0 %v10135, 24
    %v10194 = vpop.permute.xlu0 %10193
    %10195 = vrot.lane.b32.xlu0 %v10136, 24
    %v10196 = vpop.permute.xlu0 %10195
    %10197 = vrot.lane.b32.xlu0 %v10137, 24
    %v10198 = vpop.permute.xlu0 %10197
    %10199 = vrot.lane.b32.xlu0 %v10138, 24
    %v10200 = vpop.permute.xlu0 %10199
    %10201 = vrot.lane.b32.xlu0 %v10139, 24
    %v10202 = vpop.permute.xlu0 %10201
    %10203 = vrot.lane.b32.xlu0 %v10140, 24
    %v10204 = vpop.permute.xlu0 %10203
    %vm10237 = vcmask 261312
    %10238 = vst.msk [vmem:[#allocation4] sm:$0xff] %vm10237, %v10142
    %10239 = vst.msk [vmem:[#allocation4 + $0x8] sm:$0xff] %vm10237, %v10144
    %10240 = vst.msk [vmem:[#allocation4 + $0x10] sm:$0xff] %vm10237, %v10146
    %10241 = vst.msk [vmem:[#allocation4 + $0x18] sm:$0xff] %vm10237, %v10148
    %10242 = vst.msk [vmem:[#allocation4 + $0x20] sm:$0xff] %vm10237, %v10150
    %10243 = vst.msk [vmem:[#allocation4 + $0x28] sm:$0xff] %vm10237, %v10152
    %10244 = vst.msk [vmem:[#allocation4 + $0x30] sm:$0xff] %vm10237, %v10154
    %10245 = vst.msk [vmem:[#allocation4 + $0x38] sm:$0xff] %vm10237, %v10156
    %10246 = vst.msk [vmem:[#allocation4 + $0x40] sm:$0xff] %vm10237, %v10158
    %10247 = vst.msk [vmem:[#allocation4 + $0x48] sm:$0xff] %vm10237, %v10160
    %10248 = vst.msk [vmem:[#allocation4 + $0x50] sm:$0xff] %vm10237, %v10162
    %10249 = vst.msk [vmem:[#allocation4 + $0x58] sm:$0xff] %vm10237, %v10164
    %10250 = vst.msk [vmem:[#allocation4 + $0x60] sm:$0xff] %vm10237, %v10166
    %10251 = vst.msk [vmem:[#allocation4 + $0x68] sm:$0xff] %vm10237, %v10168
    %10252 = vst.msk [vmem:[#allocation4 + $0x70] sm:$0xff] %vm10237, %v10170
    %10253 = vst.msk [vmem:[#allocation4 + $0x78] sm:$0xff] %vm10237, %v10172
    %10254 = vst.msk [vmem:[#allocation4 + $0x80] sm:$0xff] %vm10237, %v10174
    %10255 = vst.msk [vmem:[#allocation4 + $0x88] sm:$0xff] %vm10237, %v10176
    %10256 = vst.msk [vmem:[#allocation4 + $0x90] sm:$0xff] %vm10237, %v10178
    %10257 = vst.msk [vmem:[#allocation4 + $0x98] sm:$0xff] %vm10237, %v10180
    %10258 = vst.msk [vmem:[#allocation4 + $0xa0] sm:$0xff] %vm10237, %v10182
    %10259 = vst.msk [vmem:[#allocation4 + $0xa8] sm:$0xff] %vm10237, %v10184
    %10260 = vst.msk [vmem:[#allocation4 + $0xb0] sm:$0xff] %vm10237, %v10186
    %10261 = vst.msk [vmem:[#allocation4 + $0xb8] sm:$0xff] %vm10237, %v10188
    %10262 = vst.msk [vmem:[#allocation4 + $0xc0] sm:$0xff] %vm10237, %v10190
    %10263 = vst.msk [vmem:[#allocation4 + $0xc8] sm:$0xff] %vm10237, %v10192
    %10264 = vst.msk [vmem:[#allocation4 + $0xd0] sm:$0xff] %vm10237, %v10194
    %10265 = vst.msk [vmem:[#allocation4 + $0xd8] sm:$0xff] %vm10237, %v10196
    %10266 = vst.msk [vmem:[#allocation4 + $0xe0] sm:$0xff] %vm10237, %v10198
    %10267 = vst.msk [vmem:[#allocation4 + $0xe8] sm:$0xff] %vm10237, %v10200
    %10268 = vst.msk [vmem:[#allocation4 + $0xf0] sm:$0xff] %vm10237, %v10202
    %10269 = vst.msk [vmem:[#allocation4 + $0xf8] sm:$0xff] %vm10237, %v10204
    %v10270 = vld [vmem:[%s6512] sm:$0xf]
    %v10271 = vld [vmem:[%s6512 + $0x4] sm:$0xf]
    %v10272 = vld [vmem:[%s6512 + $0x8] sm:$0x1]
    %v10273 = vld [vmem:[%s6512 + $0xc] sm:$0xf]
    %v10274 = vld [vmem:[%s6512 + $0x10] sm:$0xf]
    %v10275 = vld [vmem:[%s6512 + $0x14] sm:$0x1]
    %v10276 = vld [vmem:[%s6512 + $0x18] sm:$0xf]
    %v10277 = vld [vmem:[%s6512 + $0x1c] sm:$0xf]
    %v10278 = vld [vmem:[%s6512 + $0x20] sm:$0x1]
    %v10279 = vld [vmem:[%s6512 + $0x24] sm:$0xf]
    %v10280 = vld [vmem:[%s6512 + $0x28] sm:$0xf]
    %v10281 = vld [vmem:[%s6512 + $0x2c] sm:$0x1]
    %v10282 = vld [vmem:[%s6512 + $0x30] sm:$0xf]
    %v10283 = vld [vmem:[%s6512 + $0x34] sm:$0xf]
    %v10284 = vld [vmem:[%s6512 + $0x38] sm:$0x1]
    %v10285 = vld [vmem:[%s6512 + $0x3c] sm:$0xf]
    %v10286 = vld [vmem:[%s6512 + $0x40] sm:$0xf]
    %v10287 = vld [vmem:[%s6512 + $0x44] sm:$0x1]
    %v10288 = vld [vmem:[%s6512 + $0x48] sm:$0xf]
    %v10289 = vld [vmem:[%s6512 + $0x4c] sm:$0xf]
    %v10290 = vld [vmem:[%s6512 + $0x50] sm:$0x1]
    %v10291 = vld [vmem:[%s6512 + $0x54] sm:$0xf]
    %v10292 = vld [vmem:[%s6512 + $0x58] sm:$0xf]
    %v10293 = vld [vmem:[%s6512 + $0x5c] sm:$0x1]
    %v10294 = vld [vmem:[%s6512 + $0x60] sm:$0xf]
    %v10295 = vld [vmem:[%s6512 + $0x64] sm:$0xf]
    %v10296 = vld [vmem:[%s6512 + $0x68] sm:$0x1]
    %v10297 = vld [vmem:[%s6512 + $0x6c] sm:$0xf]
    %v10298 = vld [vmem:[%s6512 + $0x70] sm:$0xf]
    %v10299 = vld [vmem:[%s6512 + $0x74] sm:$0x1]
    %v10300 = vld [vmem:[%s6512 + $0x78] sm:$0xf]
    %v10301 = vld [vmem:[%s6512 + $0x7c] sm:$0xf]
    %v10302 = vld [vmem:[%s6512 + $0x80] sm:$0x1]
    %v10303 = vld [vmem:[%s6512 + $0x84] sm:$0xf]
    %v10304 = vld [vmem:[%s6512 + $0x88] sm:$0xf]
    %v10305 = vld [vmem:[%s6512 + $0x8c] sm:$0x1]
    %v10306 = vld [vmem:[%s6512 + $0x90] sm:$0xf]
    %v10307 = vld [vmem:[%s6512 + $0x94] sm:$0xf]
    %v10308 = vld [vmem:[%s6512 + $0x98] sm:$0x1]
    %v10309 = vld [vmem:[%s6512 + $0x9c] sm:$0xf]
    %v10310 = vld [vmem:[%s6512 + $0xa0] sm:$0xf]
    %v10311 = vld [vmem:[%s6512 + $0xa4] sm:$0x1]
    %v10312 = vld [vmem:[%s6512 + $0xa8] sm:$0xf]
    %v10313 = vld [vmem:[%s6512 + $0xac] sm:$0xf]
    %v10314 = vld [vmem:[%s6512 + $0xb0] sm:$0x1]
    %v10315 = vld [vmem:[%s6512 + $0xb4] sm:$0xf]
    %v10316 = vld [vmem:[%s6512 + $0xb8] sm:$0xf]
    %v10317 = vld [vmem:[%s6512 + $0xbc] sm:$0x1]
    %v10318 = vld [vmem:[%s6512 + $0xd8] sm:$0xf]
    %v10319 = vld [vmem:[%s6512 + $0xdc] sm:$0xf]
    %v10320 = vld [vmem:[%s6512 + $0xe0] sm:$0x1]
    %v10321 = vld [vmem:[%s6512 + $0xe4] sm:$0xf]
    %v10322 = vld [vmem:[%s6512 + $0xe8] sm:$0xf]
    %v10323 = vld [vmem:[%s6512 + $0xec] sm:$0x1]
    %v10324 = vld [vmem:[%s6512 + $0xf0] sm:$0xf]
    %v10325 = vld [vmem:[%s6512 + $0xf4] sm:$0xf]
    %v10326 = vld [vmem:[%s6512 + $0xf8] sm:$0x1]
    %v10327 = vld [vmem:[%s6512 + $0xfc] sm:$0xf]
    %v10328 = vld [vmem:[%s6512 + $0x100] sm:$0xf]
    %v10329 = vld [vmem:[%s6512 + $0x104] sm:$0x1]
    %v10330 = vld [vmem:[%s6512 + $0x108] sm:$0xf]
    %v10331 = vld [vmem:[%s6512 + $0x10c] sm:$0xf]
    %v10332 = vld [vmem:[%s6512 + $0x110] sm:$0x1]
    %v10333 = vld [vmem:[%s6512 + $0x114] sm:$0xf]
    %v10334 = vld [vmem:[%s6512 + $0x118] sm:$0xf]
    %v10335 = vld [vmem:[%s6512 + $0x11c] sm:$0x1]
    %v10336 = vld [vmem:[%s6512 + $0x120] sm:$0xf]
    %v10337 = vld [vmem:[%s6512 + $0x124] sm:$0xf]
    %v10338 = vld [vmem:[%s6512 + $0x128] sm:$0x1]
    %v10339 = vld [vmem:[%s6512 + $0x12c] sm:$0xf]
    %v10340 = vld [vmem:[%s6512 + $0x130] sm:$0xf]
    %v10341 = vld [vmem:[%s6512 + $0x134] sm:$0x1]
    %v10342 = vld [vmem:[%s6512 + $0x138] sm:$0xf]
    %v10343 = vld [vmem:[%s6512 + $0x13c] sm:$0xf]
    %v10344 = vld [vmem:[%s6512 + $0x140] sm:$0x1]
    %v10345 = vld [vmem:[%s6512 + $0x144] sm:$0xf]
    %v10346 = vld [vmem:[%s6512 + $0x148] sm:$0xf]
    %v10347 = vld [vmem:[%s6512 + $0x14c] sm:$0x1]
    %v10348 = vld [vmem:[%s6512 + $0x150] sm:$0xf]
    %v10349 = vld [vmem:[%s6512 + $0x154] sm:$0xf]
    %v10350 = vld [vmem:[%s6512 + $0x158] sm:$0x1]
    %v10351 = vld [vmem:[%s6512 + $0x15c] sm:$0xf]
    %v10352 = vld [vmem:[%s6512 + $0x160] sm:$0xf]
    %v10353 = vld [vmem:[%s6512 + $0x164] sm:$0x1]
    %v10354 = vld [vmem:[%s6512 + $0x168] sm:$0xf]
    %v10355 = vld [vmem:[%s6512 + $0x16c] sm:$0xf]
    %v10356 = vld [vmem:[%s6512 + $0x170] sm:$0x1]
    %v10357 = vld [vmem:[%s6512 + $0x174] sm:$0xf]
    %v10358 = vld [vmem:[%s6512 + $0x178] sm:$0xf]
    %v10359 = vld [vmem:[%s6512 + $0x17c] sm:$0x1]
    %v10360 = vld [vmem:[%s6512 + $0x180] sm:$0xf]
    %v10361 = vld [vmem:[%s6512 + $0x184] sm:$0xf]
    %v10362 = vld [vmem:[%s6512 + $0x188] sm:$0x1]
    %v10363 = vld [vmem:[%s6512 + $0x18c] sm:$0xf]
    %v10364 = vld [vmem:[%s6512 + $0x190] sm:$0xf]
    %v10365 = vld [vmem:[%s6512 + $0x194] sm:$0x1]
    %v10367 = vshrl.u32 %v10270, 16
    %v10369 = vrot.slane %v10367, 4
    %v10370 = vshll.u32 %v10270, 16
    %v10372 = vrot.slane %v10370, 5
    %v10373 = vor.u32 %v10369, %v10372
    %v10374 = vrot.slane %v10373, 4
    %v10376 = vshll.u32 %v10271, 16
    %v10378 = vrot.slane %v10376, 5
    %v10379 = vsel %vm421, %v10374, %v10378
    %v10380 = vshrl.u32 %v10271, 16
    %v10382 = vrot.slane %v10380, 4
    %v10383 = vor.u32 %v10382, %v10378
    %v10384 = vrot.slane %v10383, 4
    %v10386 = vshll.u32 %v10272, 16
    %v10388 = vrot.slane %v10386, 5
    %v10389 = vsel %vm421, %v10384, %v10388
    %v10391 = vshrl.u32 %v10273, 16
    %v10393 = vrot.slane %v10391, 4
    %v10394 = vshll.u32 %v10273, 16
    %v10396 = vrot.slane %v10394, 5
    %v10397 = vor.u32 %v10393, %v10396
    %v10398 = vrot.slane %v10397, 4
    %v10400 = vshll.u32 %v10274, 16
    %v10402 = vrot.slane %v10400, 5
    %v10403 = vsel %vm421, %v10398, %v10402
    %v10404 = vshrl.u32 %v10274, 16
    %v10406 = vrot.slane %v10404, 4
    %v10407 = vor.u32 %v10406, %v10402
    %v10408 = vrot.slane %v10407, 4
    %v10410 = vshll.u32 %v10275, 16
    %v10412 = vrot.slane %v10410, 5
    %v10413 = vsel %vm421, %v10408, %v10412
    %v10415 = vshrl.u32 %v10276, 16
    %v10417 = vrot.slane %v10415, 4
    %v10418 = vshll.u32 %v10276, 16
    %v10420 = vrot.slane %v10418, 5
    %v10421 = vor.u32 %v10417, %v10420
    %v10422 = vrot.slane %v10421, 4
    %v10424 = vshll.u32 %v10277, 16
    %v10426 = vrot.slane %v10424, 5
    %v10427 = vsel %vm421, %v10422, %v10426
    %v10428 = vshrl.u32 %v10277, 16
    %v10430 = vrot.slane %v10428, 4
    %v10431 = vor.u32 %v10430, %v10426
    %v10432 = vrot.slane %v10431, 4
    %v10434 = vshll.u32 %v10278, 16
    %v10436 = vrot.slane %v10434, 5
    %v10437 = vsel %vm421, %v10432, %v10436
    %v10439 = vshrl.u32 %v10279, 16
    %v10441 = vrot.slane %v10439, 4
    %v10442 = vshll.u32 %v10279, 16
    %v10444 = vrot.slane %v10442, 5
    %v10445 = vor.u32 %v10441, %v10444
    %v10446 = vrot.slane %v10445, 4
    %v10448 = vshll.u32 %v10280, 16
    %v10450 = vrot.slane %v10448, 5
    %v10451 = vsel %vm421, %v10446, %v10450
    %v10452 = vshrl.u32 %v10280, 16
    %v10454 = vrot.slane %v10452, 4
    %v10455 = vor.u32 %v10454, %v10450
    %v10456 = vrot.slane %v10455, 4
    %v10458 = vshll.u32 %v10281, 16
    %v10460 = vrot.slane %v10458, 5
    %v10461 = vsel %vm421, %v10456, %v10460
    %v10463 = vshrl.u32 %v10282, 16
    %v10465 = vrot.slane %v10463, 4
    %v10466 = vshll.u32 %v10282, 16
    %v10468 = vrot.slane %v10466, 5
    %v10469 = vor.u32 %v10465, %v10468
    %v10470 = vrot.slane %v10469, 4
    %v10472 = vshll.u32 %v10283, 16
    %v10474 = vrot.slane %v10472, 5
    %v10475 = vsel %vm421, %v10470, %v10474
    %v10476 = vshrl.u32 %v10283, 16
    %v10478 = vrot.slane %v10476, 4
    %v10479 = vor.u32 %v10478, %v10474
    %v10480 = vrot.slane %v10479, 4
    %v10482 = vshll.u32 %v10284, 16
    %v10484 = vrot.slane %v10482, 5
    %v10485 = vsel %vm421, %v10480, %v10484
    %v10487 = vshrl.u32 %v10285, 16
    %v10489 = vrot.slane %v10487, 4
    %v10490 = vshll.u32 %v10285, 16
    %v10492 = vrot.slane %v10490, 5
    %v10493 = vor.u32 %v10489, %v10492
    %v10494 = vrot.slane %v10493, 4
    %v10496 = vshll.u32 %v10286, 16
    %v10498 = vrot.slane %v10496, 5
    %v10499 = vsel %vm421, %v10494, %v10498
    %v10500 = vshrl.u32 %v10286, 16
    %v10502 = vrot.slane %v10500, 4
    %v10503 = vor.u32 %v10502, %v10498
    %v10504 = vrot.slane %v10503, 4
    %v10506 = vshll.u32 %v10287, 16
    %v10508 = vrot.slane %v10506, 5
    %v10509 = vsel %vm421, %v10504, %v10508
    %v10511 = vshrl.u32 %v10288, 16
    %v10513 = vrot.slane %v10511, 4
    %v10514 = vshll.u32 %v10288, 16
    %v10516 = vrot.slane %v10514, 5
    %v10517 = vor.u32 %v10513, %v10516
    %v10518 = vrot.slane %v10517, 4
    %v10520 = vshll.u32 %v10289, 16
    %v10522 = vrot.slane %v10520, 5
    %v10523 = vsel %vm421, %v10518, %v10522
    %v10524 = vshrl.u32 %v10289, 16
    %v10526 = vrot.slane %v10524, 4
    %v10527 = vor.u32 %v10526, %v10522
    %v10528 = vrot.slane %v10527, 4
    %v10530 = vshll.u32 %v10290, 16
    %v10532 = vrot.slane %v10530, 5
    %v10533 = vsel %vm421, %v10528, %v10532
    %v10535 = vshrl.u32 %v10291, 16
    %v10537 = vrot.slane %v10535, 4
    %v10538 = vshll.u32 %v10291, 16
    %v10540 = vrot.slane %v10538, 5
    %v10541 = vor.u32 %v10537, %v10540
    %v10542 = vrot.slane %v10541, 4
    %v10544 = vshll.u32 %v10292, 16
    %v10546 = vrot.slane %v10544, 5
    %v10547 = vsel %vm421, %v10542, %v10546
    %v10548 = vshrl.u32 %v10292, 16
    %v10550 = vrot.slane %v10548, 4
    %v10551 = vor.u32 %v10550, %v10546
    %v10552 = vrot.slane %v10551, 4
    %v10554 = vshll.u32 %v10293, 16
    %v10556 = vrot.slane %v10554, 5
    %v10557 = vsel %vm421, %v10552, %v10556
    %v10559 = vshrl.u32 %v10294, 16
    %v10561 = vrot.slane %v10559, 4
    %v10562 = vshll.u32 %v10294, 16
    %v10564 = vrot.slane %v10562, 5
    %v10565 = vor.u32 %v10561, %v10564
    %v10566 = vrot.slane %v10565, 4
    %v10568 = vshll.u32 %v10295, 16
    %v10570 = vrot.slane %v10568, 5
    %v10571 = vsel %vm421, %v10566, %v10570
    %v10572 = vshrl.u32 %v10295, 16
    %v10574 = vrot.slane %v10572, 4
    %v10575 = vor.u32 %v10574, %v10570
    %v10576 = vrot.slane %v10575, 4
    %v10578 = vshll.u32 %v10296, 16
    %v10580 = vrot.slane %v10578, 5
    %v10581 = vsel %vm421, %v10576, %v10580
    %v10583 = vshrl.u32 %v10297, 16
    %v10585 = vrot.slane %v10583, 4
    %v10586 = vshll.u32 %v10297, 16
    %v10588 = vrot.slane %v10586, 5
    %v10589 = vor.u32 %v10585, %v10588
    %v10590 = vrot.slane %v10589, 4
    %v10592 = vshll.u32 %v10298, 16
    %v10594 = vrot.slane %v10592, 5
    %v10595 = vsel %vm421, %v10590, %v10594
    %v10596 = vshrl.u32 %v10298, 16
    %v10598 = vrot.slane %v10596, 4
    %v10599 = vor.u32 %v10598, %v10594
    %v10600 = vrot.slane %v10599, 4
    %v10602 = vshll.u32 %v10299, 16
    %v10604 = vrot.slane %v10602, 5
    %v10605 = vsel %vm421, %v10600, %v10604
    %v10607 = vshrl.u32 %v10300, 16
    %v10609 = vrot.slane %v10607, 4
    %v10610 = vshll.u32 %v10300, 16
    %v10612 = vrot.slane %v10610, 5
    %v10613 = vor.u32 %v10609, %v10612
    %v10614 = vrot.slane %v10613, 4
    %v10616 = vshll.u32 %v10301, 16
    %v10618 = vrot.slane %v10616, 5
    %v10619 = vsel %vm421, %v10614, %v10618
    %v10620 = vshrl.u32 %v10301, 16
    %v10622 = vrot.slane %v10620, 4
    %v10623 = vor.u32 %v10622, %v10618
    %v10624 = vrot.slane %v10623, 4
    %v10626 = vshll.u32 %v10302, 16
    %v10628 = vrot.slane %v10626, 5
    %v10629 = vsel %vm421, %v10624, %v10628
    %v10631 = vshrl.u32 %v10303, 16
    %v10633 = vrot.slane %v10631, 4
    %v10634 = vshll.u32 %v10303, 16
    %v10636 = vrot.slane %v10634, 5
    %v10637 = vor.u32 %v10633, %v10636
    %v10638 = vrot.slane %v10637, 4
    %v10640 = vshll.u32 %v10304, 16
    %v10642 = vrot.slane %v10640, 5
    %v10643 = vsel %vm421, %v10638, %v10642
    %v10644 = vshrl.u32 %v10304, 16
    %v10646 = vrot.slane %v10644, 4
    %v10647 = vor.u32 %v10646, %v10642
    %v10648 = vrot.slane %v10647, 4
    %v10650 = vshll.u32 %v10305, 16
    %v10652 = vrot.slane %v10650, 5
    %v10653 = vsel %vm421, %v10648, %v10652
    %v10655 = vshrl.u32 %v10306, 16
    %v10657 = vrot.slane %v10655, 4
    %v10658 = vshll.u32 %v10306, 16
    %v10660 = vrot.slane %v10658, 5
    %v10661 = vor.u32 %v10657, %v10660
    %v10662 = vrot.slane %v10661, 4
    %v10664 = vshll.u32 %v10307, 16
    %v10666 = vrot.slane %v10664, 5
    %v10667 = vsel %vm421, %v10662, %v10666
    %v10668 = vshrl.u32 %v10307, 16
    %v10670 = vrot.slane %v10668, 4
    %v10671 = vor.u32 %v10670, %v10666
    %v10672 = vrot.slane %v10671, 4
    %v10674 = vshll.u32 %v10308, 16
    %v10676 = vrot.slane %v10674, 5
    %v10677 = vsel %vm421, %v10672, %v10676
    %v10679 = vshrl.u32 %v10309, 16
    %v10681 = vrot.slane %v10679, 4
    %v10682 = vshll.u32 %v10309, 16
    %v10684 = vrot.slane %v10682, 5
    %v10685 = vor.u32 %v10681, %v10684
    %v10686 = vrot.slane %v10685, 4
    %v10688 = vshll.u32 %v10310, 16
    %v10690 = vrot.slane %v10688, 5
    %v10691 = vsel %vm421, %v10686, %v10690
    %v10692 = vshrl.u32 %v10310, 16
    %v10694 = vrot.slane %v10692, 4
    %v10695 = vor.u32 %v10694, %v10690
    %v10696 = vrot.slane %v10695, 4
    %v10698 = vshll.u32 %v10311, 16
    %v10700 = vrot.slane %v10698, 5
    %v10701 = vsel %vm421, %v10696, %v10700
    %v10703 = vshrl.u32 %v10312, 16
    %v10705 = vrot.slane %v10703, 4
    %v10706 = vshll.u32 %v10312, 16
    %v10708 = vrot.slane %v10706, 5
    %v10709 = vor.u32 %v10705, %v10708
    %v10710 = vrot.slane %v10709, 4
    %v10712 = vshll.u32 %v10313, 16
    %v10714 = vrot.slane %v10712, 5
    %v10715 = vsel %vm421, %v10710, %v10714
    %v10716 = vshrl.u32 %v10313, 16
    %v10718 = vrot.slane %v10716, 4
    %v10719 = vor.u32 %v10718, %v10714
    %v10720 = vrot.slane %v10719, 4
    %v10722 = vshll.u32 %v10314, 16
    %v10724 = vrot.slane %v10722, 5
    %v10725 = vsel %vm421, %v10720, %v10724
    %v10727 = vshrl.u32 %v10315, 16
    %v10729 = vrot.slane %v10727, 4
    %v10730 = vshll.u32 %v10315, 16
    %v10732 = vrot.slane %v10730, 5
    %v10733 = vor.u32 %v10729, %v10732
    %v10734 = vrot.slane %v10733, 4
    %v10736 = vshll.u32 %v10316, 16
    %v10738 = vrot.slane %v10736, 5
    %v10739 = vsel %vm421, %v10734, %v10738
    %v10740 = vshrl.u32 %v10316, 16
    %v10742 = vrot.slane %v10740, 4
    %v10743 = vor.u32 %v10742, %v10738
    %v10744 = vrot.slane %v10743, 4
    %v10746 = vshll.u32 %v10317, 16
    %v10748 = vrot.slane %v10746, 5
    %v10749 = vsel %vm421, %v10744, %v10748
    %v10751 = vshrl.u32 %v10318, 16
    %v10753 = vrot.slane %v10751, 4
    %v10754 = vshll.u32 %v10318, 16
    %v10756 = vrot.slane %v10754, 5
    %v10757 = vor.u32 %v10753, %v10756
    %v10758 = vrot.slane %v10757, 4
    %v10760 = vshll.u32 %v10319, 16
    %v10762 = vrot.slane %v10760, 5
    %v10763 = vsel %vm421, %v10758, %v10762
    %v10764 = vshrl.u32 %v10319, 16
    %v10766 = vrot.slane %v10764, 4
    %v10767 = vor.u32 %v10766, %v10762
    %v10768 = vrot.slane %v10767, 4
    %v10770 = vshll.u32 %v10320, 16
    %v10772 = vrot.slane %v10770, 5
    %v10773 = vsel %vm421, %v10768, %v10772
    %v10775 = vshrl.u32 %v10321, 16
    %v10777 = vrot.slane %v10775, 4
    %v10778 = vshll.u32 %v10321, 16
    %v10780 = vrot.slane %v10778, 5
    %v10781 = vor.u32 %v10777, %v10780
    %v10782 = vrot.slane %v10781, 4
    %v10784 = vshll.u32 %v10322, 16
    %v10786 = vrot.slane %v10784, 5
    %v10787 = vsel %vm421, %v10782, %v10786
    %v10788 = vshrl.u32 %v10322, 16
    %v10790 = vrot.slane %v10788, 4
    %v10791 = vor.u32 %v10790, %v10786
    %v10792 = vrot.slane %v10791, 4
    %v10794 = vshll.u32 %v10323, 16
    %v10796 = vrot.slane %v10794, 5
    %v10797 = vsel %vm421, %v10792, %v10796
    %v10799 = vshrl.u32 %v10324, 16
    %v10801 = vrot.slane %v10799, 4
    %v10802 = vshll.u32 %v10324, 16
    %v10804 = vrot.slane %v10802, 5
    %v10805 = vor.u32 %v10801, %v10804
    %v10806 = vrot.slane %v10805, 4
    %v10808 = vshll.u32 %v10325, 16
    %v10810 = vrot.slane %v10808, 5
    %v10811 = vsel %vm421, %v10806, %v10810
    %v10812 = vshrl.u32 %v10325, 16
    %v10814 = vrot.slane %v10812, 4
    %v10815 = vor.u32 %v10814, %v10810
    %v10816 = vrot.slane %v10815, 4
    %v10818 = vshll.u32 %v10326, 16
    %v10820 = vrot.slane %v10818, 5
    %v10821 = vsel %vm421, %v10816, %v10820
    %v10823 = vshrl.u32 %v10327, 16
    %v10825 = vrot.slane %v10823, 4
    %v10826 = vshll.u32 %v10327, 16
    %v10828 = vrot.slane %v10826, 5
    %v10829 = vor.u32 %v10825, %v10828
    %v10830 = vrot.slane %v10829, 4
    %v10832 = vshll.u32 %v10328, 16
    %v10834 = vrot.slane %v10832, 5
    %v10835 = vsel %vm421, %v10830, %v10834
    %v10836 = vshrl.u32 %v10328, 16
    %v10838 = vrot.slane %v10836, 4
    %v10839 = vor.u32 %v10838, %v10834
    %v10840 = vrot.slane %v10839, 4
    %v10842 = vshll.u32 %v10329, 16
    %v10844 = vrot.slane %v10842, 5
    %v10845 = vsel %vm421, %v10840, %v10844
    %v10847 = vshrl.u32 %v10330, 16
    %v10849 = vrot.slane %v10847, 4
    %v10850 = vshll.u32 %v10330, 16
    %v10852 = vrot.slane %v10850, 5
    %v10853 = vor.u32 %v10849, %v10852
    %v10854 = vrot.slane %v10853, 4
    %v10856 = vshll.u32 %v10331, 16
    %v10858 = vrot.slane %v10856, 5
    %v10859 = vsel %vm421, %v10854, %v10858
    %v10860 = vshrl.u32 %v10331, 16
    %v10862 = vrot.slane %v10860, 4
    %v10863 = vor.u32 %v10862, %v10858
    %v10864 = vrot.slane %v10863, 4
    %v10866 = vshll.u32 %v10332, 16
    %v10868 = vrot.slane %v10866, 5
    %v10869 = vsel %vm421, %v10864, %v10868
    %v10871 = vshrl.u32 %v10333, 16
    %v10873 = vrot.slane %v10871, 4
    %v10874 = vshll.u32 %v10333, 16
    %v10876 = vrot.slane %v10874, 5
    %v10877 = vor.u32 %v10873, %v10876
    %v10878 = vrot.slane %v10877, 4
    %v10880 = vshll.u32 %v10334, 16
    %v10882 = vrot.slane %v10880, 5
    %v10883 = vsel %vm421, %v10878, %v10882
    %v10884 = vshrl.u32 %v10334, 16
    %v10886 = vrot.slane %v10884, 4
    %v10887 = vor.u32 %v10886, %v10882
    %v10888 = vrot.slane %v10887, 4
    %v10890 = vshll.u32 %v10335, 16
    %v10892 = vrot.slane %v10890, 5
    %v10893 = vsel %vm421, %v10888, %v10892
    %v10895 = vshrl.u32 %v10336, 16
    %v10897 = vrot.slane %v10895, 4
    %v10898 = vshll.u32 %v10336, 16
    %v10900 = vrot.slane %v10898, 5
    %v10901 = vor.u32 %v10897, %v10900
    %v10902 = vrot.slane %v10901, 4
    %v10904 = vshll.u32 %v10337, 16
    %v10906 = vrot.slane %v10904, 5
    %v10907 = vsel %vm421, %v10902, %v10906
    %v10908 = vshrl.u32 %v10337, 16
    %v10910 = vrot.slane %v10908, 4
    %v10911 = vor.u32 %v10910, %v10906
    %v10912 = vrot.slane %v10911, 4
    %v10914 = vshll.u32 %v10338, 16
    %v10916 = vrot.slane %v10914, 5
    %v10917 = vsel %vm421, %v10912, %v10916
    %v10919 = vshrl.u32 %v10339, 16
    %v10921 = vrot.slane %v10919, 4
    %v10922 = vshll.u32 %v10339, 16
    %v10924 = vrot.slane %v10922, 5
    %v10925 = vor.u32 %v10921, %v10924
    %v10926 = vrot.slane %v10925, 4
    %v10928 = vshll.u32 %v10340, 16
    %v10930 = vrot.slane %v10928, 5
    %v10931 = vsel %vm421, %v10926, %v10930
    %v10932 = vshrl.u32 %v10340, 16
    %v10934 = vrot.slane %v10932, 4
    %v10935 = vor.u32 %v10934, %v10930
    %v10936 = vrot.slane %v10935, 4
    %v10938 = vshll.u32 %v10341, 16
    %v10940 = vrot.slane %v10938, 5
    %v10941 = vsel %vm421, %v10936, %v10940
    %v10943 = vshrl.u32 %v10342, 16
    %v10945 = vrot.slane %v10943, 4
    %v10946 = vshll.u32 %v10342, 16
    %v10948 = vrot.slane %v10946, 5
    %v10949 = vor.u32 %v10945, %v10948
    %v10950 = vrot.slane %v10949, 4
    %v10952 = vshll.u32 %v10343, 16
    %v10954 = vrot.slane %v10952, 5
    %v10955 = vsel %vm421, %v10950, %v10954
    %v10956 = vshrl.u32 %v10343, 16
    %v10958 = vrot.slane %v10956, 4
    %v10959 = vor.u32 %v10958, %v10954
    %v10960 = vrot.slane %v10959, 4
    %v10962 = vshll.u32 %v10344, 16
    %v10964 = vrot.slane %v10962, 5
    %v10965 = vsel %vm421, %v10960, %v10964
    %v10967 = vshrl.u32 %v10345, 16
    %v10969 = vrot.slane %v10967, 4
    %v10970 = vshll.u32 %v10345, 16
    %v10972 = vrot.slane %v10970, 5
    %v10973 = vor.u32 %v10969, %v10972
    %v10974 = vrot.slane %v10973, 4
    %v10976 = vshll.u32 %v10346, 16
    %v10978 = vrot.slane %v10976, 5
    %v10979 = vsel %vm421, %v10974, %v10978
    %v10980 = vshrl.u32 %v10346, 16
    %v10982 = vrot.slane %v10980, 4
    %v10983 = vor.u32 %v10982, %v10978
    %v10984 = vrot.slane %v10983, 4
    %v10986 = vshll.u32 %v10347, 16
    %v10988 = vrot.slane %v10986, 5
    %v10989 = vsel %vm421, %v10984, %v10988
    %v10991 = vshrl.u32 %v10348, 16
    %v10993 = vrot.slane %v10991, 4
    %v10994 = vshll.u32 %v10348, 16
    %v10996 = vrot.slane %v10994, 5
    %v10997 = vor.u32 %v10993, %v10996
    %v10998 = vrot.slane %v10997, 4
    %v11000 = vshll.u32 %v10349, 16
    %v11002 = vrot.slane %v11000, 5
    %v11003 = vsel %vm421, %v10998, %v11002
    %v11004 = vshrl.u32 %v10349, 16
    %v11006 = vrot.slane %v11004, 4
    %v11007 = vor.u32 %v11006, %v11002
    %v11008 = vrot.slane %v11007, 4
    %v11010 = vshll.u32 %v10350, 16
    %v11012 = vrot.slane %v11010, 5
    %v11013 = vsel %vm421, %v11008, %v11012
    %v11015 = vshrl.u32 %v10351, 16
    %v11017 = vrot.slane %v11015, 4
    %v11018 = vshll.u32 %v10351, 16
    %v11020 = vrot.slane %v11018, 5
    %v11021 = vor.u32 %v11017, %v11020
    %v11022 = vrot.slane %v11021, 4
    %v11024 = vshll.u32 %v10352, 16
    %v11026 = vrot.slane %v11024, 5
    %v11027 = vsel %vm421, %v11022, %v11026
    %v11028 = vshrl.u32 %v10352, 16
    %v11030 = vrot.slane %v11028, 4
    %v11031 = vor.u32 %v11030, %v11026
    %v11032 = vrot.slane %v11031, 4
    %v11034 = vshll.u32 %v10353, 16
    %v11036 = vrot.slane %v11034, 5
    %v11037 = vsel %vm421, %v11032, %v11036
    %v11039 = vshrl.u32 %v10354, 16
    %v11041 = vrot.slane %v11039, 4
    %v11042 = vshll.u32 %v10354, 16
    %v11044 = vrot.slane %v11042, 5
    %v11045 = vor.u32 %v11041, %v11044
    %v11046 = vrot.slane %v11045, 4
    %v11048 = vshll.u32 %v10355, 16
    %v11050 = vrot.slane %v11048, 5
    %v11051 = vsel %vm421, %v11046, %v11050
    %v11052 = vshrl.u32 %v10355, 16
    %v11054 = vrot.slane %v11052, 4
    %v11055 = vor.u32 %v11054, %v11050
    %v11056 = vrot.slane %v11055, 4
    %v11058 = vshll.u32 %v10356, 16
    %v11060 = vrot.slane %v11058, 5
    %v11061 = vsel %vm421, %v11056, %v11060
    %v11063 = vshrl.u32 %v10357, 16
    %v11065 = vrot.slane %v11063, 4
    %v11066 = vshll.u32 %v10357, 16
    %v11068 = vrot.slane %v11066, 5
    %v11069 = vor.u32 %v11065, %v11068
    %v11070 = vrot.slane %v11069, 4
    %v11072 = vshll.u32 %v10358, 16
    %v11074 = vrot.slane %v11072, 5
    %v11075 = vsel %vm421, %v11070, %v11074
    %v11076 = vshrl.u32 %v10358, 16
    %v11078 = vrot.slane %v11076, 4
    %v11079 = vor.u32 %v11078, %v11074
    %v11080 = vrot.slane %v11079, 4
    %v11082 = vshll.u32 %v10359, 16
    %v11084 = vrot.slane %v11082, 5
    %v11085 = vsel %vm421, %v11080, %v11084
    %v11087 = vshrl.u32 %v10360, 16
    %v11089 = vrot.slane %v11087, 4
    %v11090 = vshll.u32 %v10360, 16
    %v11092 = vrot.slane %v11090, 5
    %v11093 = vor.u32 %v11089, %v11092
    %v11094 = vrot.slane %v11093, 4
    %v11096 = vshll.u32 %v10361, 16
    %v11098 = vrot.slane %v11096, 5
    %v11099 = vsel %vm421, %v11094, %v11098
    %v11100 = vshrl.u32 %v10361, 16
    %v11102 = vrot.slane %v11100, 4
    %v11103 = vor.u32 %v11102, %v11098
    %v11104 = vrot.slane %v11103, 4
    %v11106 = vshll.u32 %v10362, 16
    %v11108 = vrot.slane %v11106, 5
    %v11109 = vsel %vm421, %v11104, %v11108
    %v11111 = vshrl.u32 %v10363, 16
    %v11113 = vrot.slane %v11111, 4
    %v11114 = vshll.u32 %v10363, 16
    %v11116 = vrot.slane %v11114, 5
    %v11117 = vor.u32 %v11113, %v11116
    %v11118 = vrot.slane %v11117, 4
    %v11120 = vshll.u32 %v10364, 16
    %v11122 = vrot.slane %v11120, 5
    %v11123 = vsel %vm421, %v11118, %v11122
    %v11124 = vshrl.u32 %v10364, 16
    %v11126 = vrot.slane %v11124, 4
    %v11127 = vor.u32 %v11126, %v11122
    %v11128 = vrot.slane %v11127, 4
    %v11130 = vshll.u32 %v10365, 16
    %v11132 = vrot.slane %v11130, 5
    %v11133 = vsel %vm421, %v11128, %v11132
    %v11134 = vunpack.c.l.b16 %v10379
    %v11135 = vunpack.c.l.b16 %v10389
    %v11136 = vunpack.c.l.b16 %v10403
    %v11137 = vunpack.c.l.b16 %v10413
    %v11138 = vunpack.c.l.b16 %v10427
    %v11139 = vunpack.c.l.b16 %v10437
    %v11140 = vunpack.c.l.b16 %v10451
    %v11141 = vunpack.c.l.b16 %v10461
    %v11142 = vunpack.c.l.b16 %v10475
    %v11143 = vunpack.c.l.b16 %v10485
    %v11144 = vunpack.c.l.b16 %v10499
    %v11145 = vunpack.c.l.b16 %v10509
    %v11146 = vunpack.c.l.b16 %v10523
    %v11147 = vunpack.c.l.b16 %v10533
    %v11148 = vunpack.c.l.b16 %v10547
    %v11149 = vunpack.c.l.b16 %v10557
    %v11150 = vunpack.c.l.b16 %v10571
    %v11151 = vunpack.c.l.b16 %v10581
    %v11152 = vunpack.c.l.b16 %v10595
    %v11153 = vunpack.c.l.b16 %v10605
    %v11154 = vunpack.c.l.b16 %v10619
    %v11155 = vunpack.c.l.b16 %v10629
    %v11156 = vunpack.c.l.b16 %v10643
    %v11157 = vunpack.c.l.b16 %v10653
    %v11158 = vunpack.c.l.b16 %v10667
    %v11159 = vunpack.c.l.b16 %v10677
    %v11160 = vunpack.c.l.b16 %v10691
    %v11161 = vunpack.c.l.b16 %v10701
    %v11162 = vunpack.c.l.b16 %v10715
    %v11163 = vunpack.c.l.b16 %v10725
    %v11164 = vunpack.c.l.b16 %v10739
    %v11165 = vunpack.c.l.b16 %v10749
    %v11166 = vunpack.c.l.b16 %v10763
    %v11167 = vunpack.c.l.b16 %v10773
    %v11168 = vunpack.c.l.b16 %v10787
    %v11169 = vunpack.c.l.b16 %v10797
    %v11170 = vunpack.c.l.b16 %v10811
    %v11171 = vunpack.c.l.b16 %v10821
    %v11172 = vunpack.c.l.b16 %v10835
    %v11173 = vunpack.c.l.b16 %v10845
    %v11174 = vunpack.c.l.b16 %v10859
    %v11175 = vunpack.c.l.b16 %v10869
    %v11176 = vunpack.c.l.b16 %v10883
    %v11177 = vunpack.c.l.b16 %v10893
    %v11178 = vunpack.c.l.b16 %v10907
    %v11179 = vunpack.c.l.b16 %v10917
    %v11180 = vunpack.c.l.b16 %v10931
    %v11181 = vunpack.c.l.b16 %v10941
    %v11182 = vunpack.c.l.b16 %v10955
    %v11183 = vunpack.c.l.b16 %v10965
    %v11184 = vunpack.c.l.b16 %v10979
    %v11185 = vunpack.c.l.b16 %v10989
    %v11186 = vunpack.c.l.b16 %v11003
    %v11187 = vunpack.c.l.b16 %v11013
    %v11188 = vunpack.c.l.b16 %v11027
    %v11189 = vunpack.c.l.b16 %v11037
    %v11190 = vunpack.c.l.b16 %v11051
    %v11191 = vunpack.c.l.b16 %v11061
    %v11192 = vunpack.c.l.b16 %v11075
    %v11193 = vunpack.c.l.b16 %v11085
    %v11194 = vunpack.c.l.b16 %v11099
    %v11195 = vunpack.c.l.b16 %v11109
    %v11196 = vunpack.c.l.b16 %v11123
    %v11197 = vunpack.c.l.b16 %v11133
    %v11198 = vpack.c.b16 %v11135, %v11134
    %v11199 = vpack.c.b16 %v11137, %v11136
    %v11200 = vpack.c.b16 %v11139, %v11138
    %v11201 = vpack.c.b16 %v11141, %v11140
    %v11202 = vpack.c.b16 %v11143, %v11142
    %v11203 = vpack.c.b16 %v11145, %v11144
    %v11204 = vpack.c.b16 %v11147, %v11146
    %v11205 = vpack.c.b16 %v11149, %v11148
    %v11206 = vpack.c.b16 %v11151, %v11150
    %v11207 = vpack.c.b16 %v11153, %v11152
    %v11208 = vpack.c.b16 %v11155, %v11154
    %v11209 = vpack.c.b16 %v11157, %v11156
    %v11210 = vpack.c.b16 %v11159, %v11158
    %v11211 = vpack.c.b16 %v11161, %v11160
    %v11212 = vpack.c.b16 %v11163, %v11162
    %v11213 = vpack.c.b16 %v11165, %v11164
    %v11214 = vpack.c.b16 %v11167, %v11166
    %v11215 = vpack.c.b16 %v11169, %v11168
    %v11216 = vpack.c.b16 %v11171, %v11170
    %v11217 = vpack.c.b16 %v11173, %v11172
    %v11218 = vpack.c.b16 %v11175, %v11174
    %v11219 = vpack.c.b16 %v11177, %v11176
    %v11220 = vpack.c.b16 %v11179, %v11178
    %v11221 = vpack.c.b16 %v11181, %v11180
    %v11222 = vpack.c.b16 %v11183, %v11182
    %v11223 = vpack.c.b16 %v11185, %v11184
    %v11224 = vpack.c.b16 %v11187, %v11186
    %v11225 = vpack.c.b16 %v11189, %v11188
    %v11226 = vpack.c.b16 %v11191, %v11190
    %v11227 = vpack.c.b16 %v11193, %v11192
    %v11228 = vpack.c.b16 %v11195, %v11194
    %v11229 = vpack.c.b16 %v11197, %v11196
    %11230 = vrot.lane.b32.xlu0 %v11198, 32
    %v11231 = vpop.permute.xlu0 %11230
    %11232 = vrot.lane.b32.xlu0 %v11199, 32
    %v11233 = vpop.permute.xlu0 %11232
    %11234 = vrot.lane.b32.xlu0 %v11200, 32
    %v11235 = vpop.permute.xlu0 %11234
    %11236 = vrot.lane.b32.xlu0 %v11201, 32
    %v11237 = vpop.permute.xlu0 %11236
    %11238 = vrot.lane.b32.xlu0 %v11202, 32
    %v11239 = vpop.permute.xlu0 %11238
    %11240 = vrot.lane.b32.xlu0 %v11203, 32
    %v11241 = vpop.permute.xlu0 %11240
    %11242 = vrot.lane.b32.xlu0 %v11204, 32
    %v11243 = vpop.permute.xlu0 %11242
    %11244 = vrot.lane.b32.xlu0 %v11205, 32
    %v11245 = vpop.permute.xlu0 %11244
    %11246 = vrot.lane.b32.xlu0 %v11206, 32
    %v11247 = vpop.permute.xlu0 %11246
    %11248 = vrot.lane.b32.xlu0 %v11207, 32
    %v11249 = vpop.permute.xlu0 %11248
    %11250 = vrot.lane.b32.xlu0 %v11208, 32
    %v11251 = vpop.permute.xlu0 %11250
    %11252 = vrot.lane.b32.xlu0 %v11209, 32
    %v11253 = vpop.permute.xlu0 %11252
    %11254 = vrot.lane.b32.xlu0 %v11210, 32
    %v11255 = vpop.permute.xlu0 %11254
    %11256 = vrot.lane.b32.xlu0 %v11211, 32
    %v11257 = vpop.permute.xlu0 %11256
    %11258 = vrot.lane.b32.xlu0 %v11212, 32
    %v11259 = vpop.permute.xlu0 %11258
    %11260 = vrot.lane.b32.xlu0 %v11213, 32
    %v11261 = vpop.permute.xlu0 %11260
    %11262 = vrot.lane.b32.xlu0 %v11214, 32
    %v11263 = vpop.permute.xlu0 %11262
    %11264 = vrot.lane.b32.xlu0 %v11215, 32
    %v11265 = vpop.permute.xlu0 %11264
    %11266 = vrot.lane.b32.xlu0 %v11216, 32
    %v11267 = vpop.permute.xlu0 %11266
    %11268 = vrot.lane.b32.xlu0 %v11217, 32
    %v11269 = vpop.permute.xlu0 %11268
    %11270 = vrot.lane.b32.xlu0 %v11218, 32
    %v11271 = vpop.permute.xlu0 %11270
    %11272 = vrot.lane.b32.xlu0 %v11219, 32
    %v11273 = vpop.permute.xlu0 %11272
    %11274 = vrot.lane.b32.xlu0 %v11220, 32
    %v11275 = vpop.permute.xlu0 %11274
    %11276 = vrot.lane.b32.xlu0 %v11221, 32
    %v11277 = vpop.permute.xlu0 %11276
    %11278 = vrot.lane.b32.xlu0 %v11222, 32
    %v11279 = vpop.permute.xlu0 %11278
    %11280 = vrot.lane.b32.xlu0 %v11223, 32
    %v11281 = vpop.permute.xlu0 %11280
    %11282 = vrot.lane.b32.xlu0 %v11224, 32
    %v11283 = vpop.permute.xlu0 %11282
    %11284 = vrot.lane.b32.xlu0 %v11225, 32
    %v11285 = vpop.permute.xlu0 %11284
    %11286 = vrot.lane.b32.xlu0 %v11226, 32
    %v11287 = vpop.permute.xlu0 %11286
    %11288 = vrot.lane.b32.xlu0 %v11227, 32
    %v11289 = vpop.permute.xlu0 %11288
    %11290 = vrot.lane.b32.xlu0 %v11228, 32
    %v11291 = vpop.permute.xlu0 %11290
    %11292 = vrot.lane.b32.xlu0 %v11229, 32
    %v11293 = vpop.permute.xlu0 %11292
    %vm11326 = vcmask 326912
    %11327 = vst.msk [vmem:[#allocation4] sm:$0xff] %vm11326, %v11231
    %11328 = vst.msk [vmem:[#allocation4 + $0x8] sm:$0xff] %vm11326, %v11233
    %11329 = vst.msk [vmem:[#allocation4 + $0x10] sm:$0xff] %vm11326, %v11235
    %11330 = vst.msk [vmem:[#allocation4 + $0x18] sm:$0xff] %vm11326, %v11237
    %11331 = vst.msk [vmem:[#allocation4 + $0x20] sm:$0xff] %vm11326, %v11239
    %11332 = vst.msk [vmem:[#allocation4 + $0x28] sm:$0xff] %vm11326, %v11241
    %11333 = vst.msk [vmem:[#allocation4 + $0x30] sm:$0xff] %vm11326, %v11243
    %11334 = vst.msk [vmem:[#allocation4 + $0x38] sm:$0xff] %vm11326, %v11245
    %11335 = vst.msk [vmem:[#allocation4 + $0x40] sm:$0xff] %vm11326, %v11247
    %11336 = vst.msk [vmem:[#allocation4 + $0x48] sm:$0xff] %vm11326, %v11249
    %11337 = vst.msk [vmem:[#allocation4 + $0x50] sm:$0xff] %vm11326, %v11251
    %11338 = vst.msk [vmem:[#allocation4 + $0x58] sm:$0xff] %vm11326, %v11253
    %11339 = vst.msk [vmem:[#allocation4 + $0x60] sm:$0xff] %vm11326, %v11255
    %11340 = vst.msk [vmem:[#allocation4 + $0x68] sm:$0xff] %vm11326, %v11257
    %11341 = vst.msk [vmem:[#allocation4 + $0x70] sm:$0xff] %vm11326, %v11259
    %11342 = vst.msk [vmem:[#allocation4 + $0x78] sm:$0xff] %vm11326, %v11261
    %11343 = vst.msk [vmem:[#allocation4 + $0x80] sm:$0xff] %vm11326, %v11263
    %11344 = vst.msk [vmem:[#allocation4 + $0x88] sm:$0xff] %vm11326, %v11265
    %11345 = vst.msk [vmem:[#allocation4 + $0x90] sm:$0xff] %vm11326, %v11267
    %11346 = vst.msk [vmem:[#allocation4 + $0x98] sm:$0xff] %vm11326, %v11269
    %11347 = vst.msk [vmem:[#allocation4 + $0xa0] sm:$0xff] %vm11326, %v11271
    %11348 = vst.msk [vmem:[#allocation4 + $0xa8] sm:$0xff] %vm11326, %v11273
    %11349 = vst.msk [vmem:[#allocation4 + $0xb0] sm:$0xff] %vm11326, %v11275
    %11350 = vst.msk [vmem:[#allocation4 + $0xb8] sm:$0xff] %vm11326, %v11277
    %11351 = vst.msk [vmem:[#allocation4 + $0xc0] sm:$0xff] %vm11326, %v11279
    %11352 = vst.msk [vmem:[#allocation4 + $0xc8] sm:$0xff] %vm11326, %v11281
    %11353 = vst.msk [vmem:[#allocation4 + $0xd0] sm:$0xff] %vm11326, %v11283
    %11354 = vst.msk [vmem:[#allocation4 + $0xd8] sm:$0xff] %vm11326, %v11285
    %11355 = vst.msk [vmem:[#allocation4 + $0xe0] sm:$0xff] %vm11326, %v11287
    %11356 = vst.msk [vmem:[#allocation4 + $0xe8] sm:$0xff] %vm11326, %v11289
    %11357 = vst.msk [vmem:[#allocation4 + $0xf0] sm:$0xff] %vm11326, %v11291
    %11358 = vst.msk [vmem:[#allocation4 + $0xf8] sm:$0xff] %vm11326, %v11293
    %v11359 = vld [vmem:[%s6512] sm:$0xe]
    %v11360 = vld [vmem:[%s6512 + $0x4] sm:$0xf]
    %v11361 = vld [vmem:[%s6512 + $0x8] sm:$0x1]
    %v11362 = vld [vmem:[%s6512 + $0xc] sm:$0xe]
    %v11363 = vld [vmem:[%s6512 + $0x10] sm:$0xf]
    %v11364 = vld [vmem:[%s6512 + $0x14] sm:$0x1]
    %v11365 = vld [vmem:[%s6512 + $0x18] sm:$0xe]
    %v11366 = vld [vmem:[%s6512 + $0x1c] sm:$0xf]
    %v11367 = vld [vmem:[%s6512 + $0x20] sm:$0x1]
    %v11368 = vld [vmem:[%s6512 + $0x24] sm:$0xe]
    %v11369 = vld [vmem:[%s6512 + $0x28] sm:$0xf]
    %v11370 = vld [vmem:[%s6512 + $0x2c] sm:$0x1]
    %v11371 = vld [vmem:[%s6512 + $0x30] sm:$0xe]
    %v11372 = vld [vmem:[%s6512 + $0x34] sm:$0xf]
    %v11373 = vld [vmem:[%s6512 + $0x38] sm:$0x1]
    %v11374 = vld [vmem:[%s6512 + $0x3c] sm:$0xe]
    %v11375 = vld [vmem:[%s6512 + $0x40] sm:$0xf]
    %v11376 = vld [vmem:[%s6512 + $0x44] sm:$0x1]
    %v11377 = vld [vmem:[%s6512 + $0x48] sm:$0xe]
    %v11378 = vld [vmem:[%s6512 + $0x4c] sm:$0xf]
    %v11379 = vld [vmem:[%s6512 + $0x50] sm:$0x1]
    %v11380 = vld [vmem:[%s6512 + $0x54] sm:$0xe]
    %v11381 = vld [vmem:[%s6512 + $0x58] sm:$0xf]
    %v11382 = vld [vmem:[%s6512 + $0x5c] sm:$0x1]
    %v11383 = vld [vmem:[%s6512 + $0x60] sm:$0xe]
    %v11384 = vld [vmem:[%s6512 + $0x64] sm:$0xf]
    %v11385 = vld [vmem:[%s6512 + $0x68] sm:$0x1]
    %v11386 = vld [vmem:[%s6512 + $0x6c] sm:$0xe]
    %v11387 = vld [vmem:[%s6512 + $0x70] sm:$0xf]
    %v11388 = vld [vmem:[%s6512 + $0x74] sm:$0x1]
    %v11389 = vld [vmem:[%s6512 + $0x78] sm:$0xe]
    %v11390 = vld [vmem:[%s6512 + $0x7c] sm:$0xf]
    %v11391 = vld [vmem:[%s6512 + $0x80] sm:$0x1]
    %v11392 = vld [vmem:[%s6512 + $0x84] sm:$0xe]
    %v11393 = vld [vmem:[%s6512 + $0x88] sm:$0xf]
    %v11394 = vld [vmem:[%s6512 + $0x8c] sm:$0x1]
    %v11395 = vld [vmem:[%s6512 + $0x90] sm:$0xe]
    %v11396 = vld [vmem:[%s6512 + $0x94] sm:$0xf]
    %v11397 = vld [vmem:[%s6512 + $0x98] sm:$0x1]
    %v11398 = vld [vmem:[%s6512 + $0x9c] sm:$0xe]
    %v11399 = vld [vmem:[%s6512 + $0xa0] sm:$0xf]
    %v11400 = vld [vmem:[%s6512 + $0xa4] sm:$0x1]
    %v11401 = vld [vmem:[%s6512 + $0xa8] sm:$0xe]
    %v11402 = vld [vmem:[%s6512 + $0xac] sm:$0xf]
    %v11403 = vld [vmem:[%s6512 + $0xb0] sm:$0x1]
    %v11404 = vld [vmem:[%s6512 + $0xb4] sm:$0xe]
    %v11405 = vld [vmem:[%s6512 + $0xb8] sm:$0xf]
    %v11406 = vld [vmem:[%s6512 + $0xbc] sm:$0x1]
    %v11407 = vld [vmem:[%s6512 + $0xd8] sm:$0xe]
    %v11408 = vld [vmem:[%s6512 + $0xdc] sm:$0xf]
    %v11409 = vld [vmem:[%s6512 + $0xe0] sm:$0x1]
    %v11410 = vld [vmem:[%s6512 + $0xe4] sm:$0xe]
    %v11411 = vld [vmem:[%s6512 + $0xe8] sm:$0xf]
    %v11412 = vld [vmem:[%s6512 + $0xec] sm:$0x1]
    %v11413 = vld [vmem:[%s6512 + $0xf0] sm:$0xe]
    %v11414 = vld [vmem:[%s6512 + $0xf4] sm:$0xf]
    %v11415 = vld [vmem:[%s6512 + $0xf8] sm:$0x1]
    %v11416 = vld [vmem:[%s6512 + $0xfc] sm:$0xe]
    %v11417 = vld [vmem:[%s6512 + $0x100] sm:$0xf]
    %v11418 = vld [vmem:[%s6512 + $0x104] sm:$0x1]
    %v11419 = vld [vmem:[%s6512 + $0x108] sm:$0xe]
    %v11420 = vld [vmem:[%s6512 + $0x10c] sm:$0xf]
    %v11421 = vld [vmem:[%s6512 + $0x110] sm:$0x1]
    %v11422 = vld [vmem:[%s6512 + $0x114] sm:$0xe]
    %v11423 = vld [vmem:[%s6512 + $0x118] sm:$0xf]
    %v11424 = vld [vmem:[%s6512 + $0x11c] sm:$0x1]
    %v11425 = vld [vmem:[%s6512 + $0x120] sm:$0xe]
    %v11426 = vld [vmem:[%s6512 + $0x124] sm:$0xf]
    %v11427 = vld [vmem:[%s6512 + $0x128] sm:$0x1]
    %v11428 = vld [vmem:[%s6512 + $0x12c] sm:$0xe]
    %v11429 = vld [vmem:[%s6512 + $0x130] sm:$0xf]
    %v11430 = vld [vmem:[%s6512 + $0x134] sm:$0x1]
    %v11431 = vld [vmem:[%s6512 + $0x138] sm:$0xe]
    %v11432 = vld [vmem:[%s6512 + $0x13c] sm:$0xf]
    %v11433 = vld [vmem:[%s6512 + $0x140] sm:$0x1]
    %v11434 = vld [vmem:[%s6512 + $0x144] sm:$0xe]
    %v11435 = vld [vmem:[%s6512 + $0x148] sm:$0xf]
    %v11436 = vld [vmem:[%s6512 + $0x14c] sm:$0x1]
    %v11437 = vld [vmem:[%s6512 + $0x150] sm:$0xe]
    %v11438 = vld [vmem:[%s6512 + $0x154] sm:$0xf]
    %v11439 = vld [vmem:[%s6512 + $0x158] sm:$0x1]
    %v11440 = vld [vmem:[%s6512 + $0x15c] sm:$0xe]
    %v11441 = vld [vmem:[%s6512 + $0x160] sm:$0xf]
    %v11442 = vld [vmem:[%s6512 + $0x164] sm:$0x1]
    %v11443 = vld [vmem:[%s6512 + $0x168] sm:$0xe]
    %v11444 = vld [vmem:[%s6512 + $0x16c] sm:$0xf]
    %v11445 = vld [vmem:[%s6512 + $0x170] sm:$0x1]
    %v11446 = vld [vmem:[%s6512 + $0x174] sm:$0xe]
    %v11447 = vld [vmem:[%s6512 + $0x178] sm:$0xf]
    %v11448 = vld [vmem:[%s6512 + $0x17c] sm:$0x1]
    %v11449 = vld [vmem:[%s6512 + $0x180] sm:$0xe]
    %v11450 = vld [vmem:[%s6512 + $0x184] sm:$0xf]
    %v11451 = vld [vmem:[%s6512 + $0x188] sm:$0x1]
    %v11452 = vld [vmem:[%s6512 + $0x18c] sm:$0xe]
    %v11453 = vld [vmem:[%s6512 + $0x190] sm:$0xf]
    %v11454 = vld [vmem:[%s6512 + $0x194] sm:$0x1]
    %v11551 = vrot.slane %v11359, 5
    %v11552 = vrot.slane %v11551, 4
    %v11553 = vrot.slane %v11360, 5
    %v11554 = vsel %vm1609, %v11552, %v11553
    %v11555 = vrot.slane %v11553, 4
    %v11556 = vrot.slane %v11361, 5
    %v11557 = vsel %vm1609, %v11555, %v11556
    %v11558 = vrot.slane %v11362, 5
    %v11559 = vrot.slane %v11558, 4
    %v11560 = vrot.slane %v11363, 5
    %v11561 = vsel %vm1609, %v11559, %v11560
    %v11562 = vrot.slane %v11560, 4
    %v11563 = vrot.slane %v11364, 5
    %v11564 = vsel %vm1609, %v11562, %v11563
    %v11565 = vrot.slane %v11365, 5
    %v11566 = vrot.slane %v11565, 4
    %v11567 = vrot.slane %v11366, 5
    %v11568 = vsel %vm1609, %v11566, %v11567
    %v11569 = vrot.slane %v11567, 4
    %v11570 = vrot.slane %v11367, 5
    %v11571 = vsel %vm1609, %v11569, %v11570
    %v11572 = vrot.slane %v11368, 5
    %v11573 = vrot.slane %v11572, 4
    %v11574 = vrot.slane %v11369, 5
    %v11575 = vsel %vm1609, %v11573, %v11574
    %v11576 = vrot.slane %v11574, 4
    %v11577 = vrot.slane %v11370, 5
    %v11578 = vsel %vm1609, %v11576, %v11577
    %v11579 = vrot.slane %v11371, 5
    %v11580 = vrot.slane %v11579, 4
    %v11581 = vrot.slane %v11372, 5
    %v11582 = vsel %vm1609, %v11580, %v11581
    %v11583 = vrot.slane %v11581, 4
    %v11584 = vrot.slane %v11373, 5
    %v11585 = vsel %vm1609, %v11583, %v11584
    %v11586 = vrot.slane %v11374, 5
    %v11587 = vrot.slane %v11586, 4
    %v11588 = vrot.slane %v11375, 5
    %v11589 = vsel %vm1609, %v11587, %v11588
    %v11590 = vrot.slane %v11588, 4
    %v11591 = vrot.slane %v11376, 5
    %v11592 = vsel %vm1609, %v11590, %v11591
    %v11593 = vrot.slane %v11377, 5
    %v11594 = vrot.slane %v11593, 4
    %v11595 = vrot.slane %v11378, 5
    %v11596 = vsel %vm1609, %v11594, %v11595
    %v11597 = vrot.slane %v11595, 4
    %v11598 = vrot.slane %v11379, 5
    %v11599 = vsel %vm1609, %v11597, %v11598
    %v11600 = vrot.slane %v11380, 5
    %v11601 = vrot.slane %v11600, 4
    %v11602 = vrot.slane %v11381, 5
    %v11603 = vsel %vm1609, %v11601, %v11602
    %v11604 = vrot.slane %v11602, 4
    %v11605 = vrot.slane %v11382, 5
    %v11606 = vsel %vm1609, %v11604, %v11605
    %v11607 = vrot.slane %v11383, 5
    %v11608 = vrot.slane %v11607, 4
    %v11609 = vrot.slane %v11384, 5
    %v11610 = vsel %vm1609, %v11608, %v11609
    %v11611 = vrot.slane %v11609, 4
    %v11612 = vrot.slane %v11385, 5
    %v11613 = vsel %vm1609, %v11611, %v11612
    %v11614 = vrot.slane %v11386, 5
    %v11615 = vrot.slane %v11614, 4
    %v11616 = vrot.slane %v11387, 5
    %v11617 = vsel %vm1609, %v11615, %v11616
    %v11618 = vrot.slane %v11616, 4
    %v11619 = vrot.slane %v11388, 5
    %v11620 = vsel %vm1609, %v11618, %v11619
    %v11621 = vrot.slane %v11389, 5
    %v11622 = vrot.slane %v11621, 4
    %v11623 = vrot.slane %v11390, 5
    %v11624 = vsel %vm1609, %v11622, %v11623
    %v11625 = vrot.slane %v11623, 4
    %v11626 = vrot.slane %v11391, 5
    %v11627 = vsel %vm1609, %v11625, %v11626
    %v11628 = vrot.slane %v11392, 5
    %v11629 = vrot.slane %v11628, 4
    %v11630 = vrot.slane %v11393, 5
    %v11631 = vsel %vm1609, %v11629, %v11630
    %v11632 = vrot.slane %v11630, 4
    %v11633 = vrot.slane %v11394, 5
    %v11634 = vsel %vm1609, %v11632, %v11633
    %v11635 = vrot.slane %v11395, 5
    %v11636 = vrot.slane %v11635, 4
    %v11637 = vrot.slane %v11396, 5
    %v11638 = vsel %vm1609, %v11636, %v11637
    %v11639 = vrot.slane %v11637, 4
    %v11640 = vrot.slane %v11397, 5
    %v11641 = vsel %vm1609, %v11639, %v11640
    %v11642 = vrot.slane %v11398, 5
    %v11643 = vrot.slane %v11642, 4
    %v11644 = vrot.slane %v11399, 5
    %v11645 = vsel %vm1609, %v11643, %v11644
    %v11646 = vrot.slane %v11644, 4
    %v11647 = vrot.slane %v11400, 5
    %v11648 = vsel %vm1609, %v11646, %v11647
    %v11649 = vrot.slane %v11401, 5
    %v11650 = vrot.slane %v11649, 4
    %v11651 = vrot.slane %v11402, 5
    %v11652 = vsel %vm1609, %v11650, %v11651
    %v11653 = vrot.slane %v11651, 4
    %v11654 = vrot.slane %v11403, 5
    %v11655 = vsel %vm1609, %v11653, %v11654
    %v11656 = vrot.slane %v11404, 5
    %v11657 = vrot.slane %v11656, 4
    %v11658 = vrot.slane %v11405, 5
    %v11659 = vsel %vm1609, %v11657, %v11658
    %v11660 = vrot.slane %v11658, 4
    %v11661 = vrot.slane %v11406, 5
    %v11662 = vsel %vm1609, %v11660, %v11661
    %v11663 = vrot.slane %v11407, 5
    %v11664 = vrot.slane %v11663, 4
    %v11665 = vrot.slane %v11408, 5
    %v11666 = vsel %vm1609, %v11664, %v11665
    %v11667 = vrot.slane %v11665, 4
    %v11668 = vrot.slane %v11409, 5
    %v11669 = vsel %vm1609, %v11667, %v11668
    %v11670 = vrot.slane %v11410, 5
    %v11671 = vrot.slane %v11670, 4
    %v11672 = vrot.slane %v11411, 5
    %v11673 = vsel %vm1609, %v11671, %v11672
    %v11674 = vrot.slane %v11672, 4
    %v11675 = vrot.slane %v11412, 5
    %v11676 = vsel %vm1609, %v11674, %v11675
    %v11677 = vrot.slane %v11413, 5
    %v11678 = vrot.slane %v11677, 4
    %v11679 = vrot.slane %v11414, 5
    %v11680 = vsel %vm1609, %v11678, %v11679
    %v11681 = vrot.slane %v11679, 4
    %v11682 = vrot.slane %v11415, 5
    %v11683 = vsel %vm1609, %v11681, %v11682
    %v11684 = vrot.slane %v11416, 5
    %v11685 = vrot.slane %v11684, 4
    %v11686 = vrot.slane %v11417, 5
    %v11687 = vsel %vm1609, %v11685, %v11686
    %v11688 = vrot.slane %v11686, 4
    %v11689 = vrot.slane %v11418, 5
    %v11690 = vsel %vm1609, %v11688, %v11689
    %v11691 = vrot.slane %v11419, 5
    %v11692 = vrot.slane %v11691, 4
    %v11693 = vrot.slane %v11420, 5
    %v11694 = vsel %vm1609, %v11692, %v11693
    %v11695 = vrot.slane %v11693, 4
    %v11696 = vrot.slane %v11421, 5
    %v11697 = vsel %vm1609, %v11695, %v11696
    %v11698 = vrot.slane %v11422, 5
    %v11699 = vrot.slane %v11698, 4
    %v11700 = vrot.slane %v11423, 5
    %v11701 = vsel %vm1609, %v11699, %v11700
    %v11702 = vrot.slane %v11700, 4
    %v11703 = vrot.slane %v11424, 5
    %v11704 = vsel %vm1609, %v11702, %v11703
    %v11705 = vrot.slane %v11425, 5
    %v11706 = vrot.slane %v11705, 4
    %v11707 = vrot.slane %v11426, 5
    %v11708 = vsel %vm1609, %v11706, %v11707
    %v11709 = vrot.slane %v11707, 4
    %v11710 = vrot.slane %v11427, 5
    %v11711 = vsel %vm1609, %v11709, %v11710
    %v11712 = vrot.slane %v11428, 5
    %v11713 = vrot.slane %v11712, 4
    %v11714 = vrot.slane %v11429, 5
    %v11715 = vsel %vm1609, %v11713, %v11714
    %v11716 = vrot.slane %v11714, 4
    %v11717 = vrot.slane %v11430, 5
    %v11718 = vsel %vm1609, %v11716, %v11717
    %v11719 = vrot.slane %v11431, 5
    %v11720 = vrot.slane %v11719, 4
    %v11721 = vrot.slane %v11432, 5
    %v11722 = vsel %vm1609, %v11720, %v11721
    %v11723 = vrot.slane %v11721, 4
    %v11724 = vrot.slane %v11433, 5
    %v11725 = vsel %vm1609, %v11723, %v11724
    %v11726 = vrot.slane %v11434, 5
    %v11727 = vrot.slane %v11726, 4
    %v11728 = vrot.slane %v11435, 5
    %v11729 = vsel %vm1609, %v11727, %v11728
    %v11730 = vrot.slane %v11728, 4
    %v11731 = vrot.slane %v11436, 5
    %v11732 = vsel %vm1609, %v11730, %v11731
    %v11733 = vrot.slane %v11437, 5
    %v11734 = vrot.slane %v11733, 4
    %v11735 = vrot.slane %v11438, 5
    %v11736 = vsel %vm1609, %v11734, %v11735
    %v11737 = vrot.slane %v11735, 4
    %v11738 = vrot.slane %v11439, 5
    %v11739 = vsel %vm1609, %v11737, %v11738
    %v11740 = vrot.slane %v11440, 5
    %v11741 = vrot.slane %v11740, 4
    %v11742 = vrot.slane %v11441, 5
    %v11743 = vsel %vm1609, %v11741, %v11742
    %v11744 = vrot.slane %v11742, 4
    %v11745 = vrot.slane %v11442, 5
    %v11746 = vsel %vm1609, %v11744, %v11745
    %v11747 = vrot.slane %v11443, 5
    %v11748 = vrot.slane %v11747, 4
    %v11749 = vrot.slane %v11444, 5
    %v11750 = vsel %vm1609, %v11748, %v11749
    %v11751 = vrot.slane %v11749, 4
    %v11752 = vrot.slane %v11445, 5
    %v11753 = vsel %vm1609, %v11751, %v11752
    %v11754 = vrot.slane %v11446, 5
    %v11755 = vrot.slane %v11754, 4
    %v11756 = vrot.slane %v11447, 5
    %v11757 = vsel %vm1609, %v11755, %v11756
    %v11758 = vrot.slane %v11756, 4
    %v11759 = vrot.slane %v11448, 5
    %v11760 = vsel %vm1609, %v11758, %v11759
    %v11761 = vrot.slane %v11449, 5
    %v11762 = vrot.slane %v11761, 4
    %v11763 = vrot.slane %v11450, 5
    %v11764 = vsel %vm1609, %v11762, %v11763
    %v11765 = vrot.slane %v11763, 4
    %v11766 = vrot.slane %v11451, 5
    %v11767 = vsel %vm1609, %v11765, %v11766
    %v11768 = vrot.slane %v11452, 5
    %v11769 = vrot.slane %v11768, 4
    %v11770 = vrot.slane %v11453, 5
    %v11771 = vsel %vm1609, %v11769, %v11770
    %v11772 = vrot.slane %v11770, 4
    %v11773 = vrot.slane %v11454, 5
    %v11774 = vsel %vm1609, %v11772, %v11773
    %v11775 = vunpack.c.l.b16 %v11554
    %v11776 = vunpack.c.l.b16 %v11557
    %v11777 = vunpack.c.l.b16 %v11561
    %v11778 = vunpack.c.l.b16 %v11564
    %v11779 = vunpack.c.l.b16 %v11568
    %v11780 = vunpack.c.l.b16 %v11571
    %v11781 = vunpack.c.l.b16 %v11575
    %v11782 = vunpack.c.l.b16 %v11578
    %v11783 = vunpack.c.l.b16 %v11582
    %v11784 = vunpack.c.l.b16 %v11585
    %v11785 = vunpack.c.l.b16 %v11589
    %v11786 = vunpack.c.l.b16 %v11592
    %v11787 = vunpack.c.l.b16 %v11596
    %v11788 = vunpack.c.l.b16 %v11599
    %v11789 = vunpack.c.l.b16 %v11603
    %v11790 = vunpack.c.l.b16 %v11606
    %v11791 = vunpack.c.l.b16 %v11610
    %v11792 = vunpack.c.l.b16 %v11613
    %v11793 = vunpack.c.l.b16 %v11617
    %v11794 = vunpack.c.l.b16 %v11620
    %v11795 = vunpack.c.l.b16 %v11624
    %v11796 = vunpack.c.l.b16 %v11627
    %v11797 = vunpack.c.l.b16 %v11631
    %v11798 = vunpack.c.l.b16 %v11634
    %v11799 = vunpack.c.l.b16 %v11638
    %v11800 = vunpack.c.l.b16 %v11641
    %v11801 = vunpack.c.l.b16 %v11645
    %v11802 = vunpack.c.l.b16 %v11648
    %v11803 = vunpack.c.l.b16 %v11652
    %v11804 = vunpack.c.l.b16 %v11655
    %v11805 = vunpack.c.l.b16 %v11659
    %v11806 = vunpack.c.l.b16 %v11662
    %v11807 = vunpack.c.l.b16 %v11666
    %v11808 = vunpack.c.l.b16 %v11669
    %v11809 = vunpack.c.l.b16 %v11673
    %v11810 = vunpack.c.l.b16 %v11676
    %v11811 = vunpack.c.l.b16 %v11680
    %v11812 = vunpack.c.l.b16 %v11683
    %v11813 = vunpack.c.l.b16 %v11687
    %v11814 = vunpack.c.l.b16 %v11690
    %v11815 = vunpack.c.l.b16 %v11694
    %v11816 = vunpack.c.l.b16 %v11697
    %v11817 = vunpack.c.l.b16 %v11701
    %v11818 = vunpack.c.l.b16 %v11704
    %v11819 = vunpack.c.l.b16 %v11708
    %v11820 = vunpack.c.l.b16 %v11711
    %v11821 = vunpack.c.l.b16 %v11715
    %v11822 = vunpack.c.l.b16 %v11718
    %v11823 = vunpack.c.l.b16 %v11722
    %v11824 = vunpack.c.l.b16 %v11725
    %v11825 = vunpack.c.l.b16 %v11729
    %v11826 = vunpack.c.l.b16 %v11732
    %v11827 = vunpack.c.l.b16 %v11736
    %v11828 = vunpack.c.l.b16 %v11739
    %v11829 = vunpack.c.l.b16 %v11743
    %v11830 = vunpack.c.l.b16 %v11746
    %v11831 = vunpack.c.l.b16 %v11750
    %v11832 = vunpack.c.l.b16 %v11753
    %v11833 = vunpack.c.l.b16 %v11757
    %v11834 = vunpack.c.l.b16 %v11760
    %v11835 = vunpack.c.l.b16 %v11764
    %v11836 = vunpack.c.l.b16 %v11767
    %v11837 = vunpack.c.l.b16 %v11771
    %v11838 = vunpack.c.l.b16 %v11774
    %v11839 = vpack.c.b16 %v11776, %v11775
    %v11840 = vpack.c.b16 %v11778, %v11777
    %v11841 = vpack.c.b16 %v11780, %v11779
    %v11842 = vpack.c.b16 %v11782, %v11781
    %v11843 = vpack.c.b16 %v11784, %v11783
    %v11844 = vpack.c.b16 %v11786, %v11785
    %v11845 = vpack.c.b16 %v11788, %v11787
    %v11846 = vpack.c.b16 %v11790, %v11789
    %v11847 = vpack.c.b16 %v11792, %v11791
    %v11848 = vpack.c.b16 %v11794, %v11793
    %v11849 = vpack.c.b16 %v11796, %v11795
    %v11850 = vpack.c.b16 %v11798, %v11797
    %v11851 = vpack.c.b16 %v11800, %v11799
    %v11852 = vpack.c.b16 %v11802, %v11801
    %v11853 = vpack.c.b16 %v11804, %v11803
    %v11854 = vpack.c.b16 %v11806, %v11805
    %v11855 = vpack.c.b16 %v11808, %v11807
    %v11856 = vpack.c.b16 %v11810, %v11809
    %v11857 = vpack.c.b16 %v11812, %v11811
    %v11858 = vpack.c.b16 %v11814, %v11813
    %v11859 = vpack.c.b16 %v11816, %v11815
    %v11860 = vpack.c.b16 %v11818, %v11817
    %v11861 = vpack.c.b16 %v11820, %v11819
    %v11862 = vpack.c.b16 %v11822, %v11821
    %v11863 = vpack.c.b16 %v11824, %v11823
    %v11864 = vpack.c.b16 %v11826, %v11825
    %v11865 = vpack.c.b16 %v11828, %v11827
    %v11866 = vpack.c.b16 %v11830, %v11829
    %v11867 = vpack.c.b16 %v11832, %v11831
    %v11868 = vpack.c.b16 %v11834, %v11833
    %v11869 = vpack.c.b16 %v11836, %v11835
    %v11870 = vpack.c.b16 %v11838, %v11837
    %11871 = vrot.lane.b32.xlu0 %v11839, 40
    %v11872 = vpop.permute.xlu0 %11871
    %11873 = vrot.lane.b32.xlu0 %v11840, 40
    %v11874 = vpop.permute.xlu0 %11873
    %11875 = vrot.lane.b32.xlu0 %v11841, 40
    %v11876 = vpop.permute.xlu0 %11875
    %11877 = vrot.lane.b32.xlu0 %v11842, 40
    %v11878 = vpop.permute.xlu0 %11877
    %11879 = vrot.lane.b32.xlu0 %v11843, 40
    %v11880 = vpop.permute.xlu0 %11879
    %11881 = vrot.lane.b32.xlu0 %v11844, 40
    %v11882 = vpop.permute.xlu0 %11881
    %11883 = vrot.lane.b32.xlu0 %v11845, 40
    %v11884 = vpop.permute.xlu0 %11883
    %11885 = vrot.lane.b32.xlu0 %v11846, 40
    %v11886 = vpop.permute.xlu0 %11885
    %11887 = vrot.lane.b32.xlu0 %v11847, 40
    %v11888 = vpop.permute.xlu0 %11887
    %11889 = vrot.lane.b32.xlu0 %v11848, 40
    %v11890 = vpop.permute.xlu0 %11889
    %11891 = vrot.lane.b32.xlu0 %v11849, 40
    %v11892 = vpop.permute.xlu0 %11891
    %11893 = vrot.lane.b32.xlu0 %v11850, 40
    %v11894 = vpop.permute.xlu0 %11893
    %11895 = vrot.lane.b32.xlu0 %v11851, 40
    %v11896 = vpop.permute.xlu0 %11895
    %11897 = vrot.lane.b32.xlu0 %v11852, 40
    %v11898 = vpop.permute.xlu0 %11897
    %11899 = vrot.lane.b32.xlu0 %v11853, 40
    %v11900 = vpop.permute.xlu0 %11899
    %11901 = vrot.lane.b32.xlu0 %v11854, 40
    %v11902 = vpop.permute.xlu0 %11901
    %11903 = vrot.lane.b32.xlu0 %v11855, 40
    %v11904 = vpop.permute.xlu0 %11903
    %11905 = vrot.lane.b32.xlu0 %v11856, 40
    %v11906 = vpop.permute.xlu0 %11905
    %11907 = vrot.lane.b32.xlu0 %v11857, 40
    %v11908 = vpop.permute.xlu0 %11907
    %11909 = vrot.lane.b32.xlu0 %v11858, 40
    %v11910 = vpop.permute.xlu0 %11909
    %11911 = vrot.lane.b32.xlu0 %v11859, 40
    %v11912 = vpop.permute.xlu0 %11911
    %11913 = vrot.lane.b32.xlu0 %v11860, 40
    %v11914 = vpop.permute.xlu0 %11913
    %11915 = vrot.lane.b32.xlu0 %v11861, 40
    %v11916 = vpop.permute.xlu0 %11915
    %11917 = vrot.lane.b32.xlu0 %v11862, 40
    %v11918 = vpop.permute.xlu0 %11917
    %11919 = vrot.lane.b32.xlu0 %v11863, 40
    %v11920 = vpop.permute.xlu0 %11919
    %11921 = vrot.lane.b32.xlu0 %v11864, 40
    %v11922 = vpop.permute.xlu0 %11921
    %11923 = vrot.lane.b32.xlu0 %v11865, 40
    %v11924 = vpop.permute.xlu0 %11923
    %11925 = vrot.lane.b32.xlu0 %v11866, 40
    %v11926 = vpop.permute.xlu0 %11925
    %11927 = vrot.lane.b32.xlu0 %v11867, 40
    %v11928 = vpop.permute.xlu0 %11927
    %11929 = vrot.lane.b32.xlu0 %v11868, 40
    %v11930 = vpop.permute.xlu0 %11929
    %11931 = vrot.lane.b32.xlu0 %v11869, 40
    %v11932 = vpop.permute.xlu0 %11931
    %11933 = vrot.lane.b32.xlu0 %v11870, 40
    %v11934 = vpop.permute.xlu0 %11933
    %vm11967 = vcmask 392512
    %11968 = vst.msk [vmem:[#allocation4] sm:$0xff] %vm11967, %v11872
    %11969 = vst.msk [vmem:[#allocation4 + $0x8] sm:$0xff] %vm11967, %v11874
    %11970 = vst.msk [vmem:[#allocation4 + $0x10] sm:$0xff] %vm11967, %v11876
    %11971 = vst.msk [vmem:[#allocation4 + $0x18] sm:$0xff] %vm11967, %v11878
    %11972 = vst.msk [vmem:[#allocation4 + $0x20] sm:$0xff] %vm11967, %v11880
    %11973 = vst.msk [vmem:[#allocation4 + $0x28] sm:$0xff] %vm11967, %v11882
    %11974 = vst.msk [vmem:[#allocation4 + $0x30] sm:$0xff] %vm11967, %v11884
    %11975 = vst.msk [vmem:[#allocation4 + $0x38] sm:$0xff] %vm11967, %v11886
    %11976 = vst.msk [vmem:[#allocation4 + $0x40] sm:$0xff] %vm11967, %v11888
    %11977 = vst.msk [vmem:[#allocation4 + $0x48] sm:$0xff] %vm11967, %v11890
    %11978 = vst.msk [vmem:[#allocation4 + $0x50] sm:$0xff] %vm11967, %v11892
    %11979 = vst.msk [vmem:[#allocation4 + $0x58] sm:$0xff] %vm11967, %v11894
    %11980 = vst.msk [vmem:[#allocation4 + $0x60] sm:$0xff] %vm11967, %v11896
    %11981 = vst.msk [vmem:[#allocation4 + $0x68] sm:$0xff] %vm11967, %v11898
    %11982 = vst.msk [vmem:[#allocation4 + $0x70] sm:$0xff] %vm11967, %v11900
    %11983 = vst.msk [vmem:[#allocation4 + $0x78] sm:$0xff] %vm11967, %v11902
    %11984 = vst.msk [vmem:[#allocation4 + $0x80] sm:$0xff] %vm11967, %v11904
    %11985 = vst.msk [vmem:[#allocation4 + $0x88] sm:$0xff] %vm11967, %v11906
    %11986 = vst.msk [vmem:[#allocation4 + $0x90] sm:$0xff] %vm11967, %v11908
    %11987 = vst.msk [vmem:[#allocation4 + $0x98] sm:$0xff] %vm11967, %v11910
    %11988 = vst.msk [vmem:[#allocation4 + $0xa0] sm:$0xff] %vm11967, %v11912
    %11989 = vst.msk [vmem:[#allocation4 + $0xa8] sm:$0xff] %vm11967, %v11914
    %11990 = vst.msk [vmem:[#allocation4 + $0xb0] sm:$0xff] %vm11967, %v11916
    %11991 = vst.msk [vmem:[#allocation4 + $0xb8] sm:$0xff] %vm11967, %v11918
    %11992 = vst.msk [vmem:[#allocation4 + $0xc0] sm:$0xff] %vm11967, %v11920
    %11993 = vst.msk [vmem:[#allocation4 + $0xc8] sm:$0xff] %vm11967, %v11922
    %11994 = vst.msk [vmem:[#allocation4 + $0xd0] sm:$0xff] %vm11967, %v11924
    %11995 = vst.msk [vmem:[#allocation4 + $0xd8] sm:$0xff] %vm11967, %v11926
    %11996 = vst.msk [vmem:[#allocation4 + $0xe0] sm:$0xff] %vm11967, %v11928
    %11997 = vst.msk [vmem:[#allocation4 + $0xe8] sm:$0xff] %vm11967, %v11930
    %11998 = vst.msk [vmem:[#allocation4 + $0xf0] sm:$0xff] %vm11967, %v11932
    %11999 = vst.msk [vmem:[#allocation4 + $0xf8] sm:$0xff] %vm11967, %v11934
    %s12000 = scalar_lea.vmem [#allocation2], 24
    %v12001 = vld [vmem:[%s12000] sm:$0xf]
    %v12002 = vld [vmem:[%s12000 + $0x4] sm:$0xf]
    %v12003 = vld [vmem:[%s12000 + $0xc] sm:$0xf]
    %v12004 = vld [vmem:[%s12000 + $0x10] sm:$0xf]
    %v12005 = vld [vmem:[%s12000 + $0x18] sm:$0xf]
    %v12006 = vld [vmem:[%s12000 + $0x1c] sm:$0xf]
    %v12007 = vld [vmem:[%s12000 + $0x24] sm:$0xf]
    %v12008 = vld [vmem:[%s12000 + $0x28] sm:$0xf]
    %v12009 = vld [vmem:[%s12000 + $0x30] sm:$0xf]
    %v12010 = vld [vmem:[%s12000 + $0x34] sm:$0xf]
    %v12011 = vld [vmem:[%s12000 + $0x3c] sm:$0xf]
    %v12012 = vld [vmem:[%s12000 + $0x40] sm:$0xf]
    %v12013 = vld [vmem:[%s12000 + $0x48] sm:$0xf]
    %v12014 = vld [vmem:[%s12000 + $0x4c] sm:$0xf]
    %v12015 = vld [vmem:[%s12000 + $0x54] sm:$0xf]
    %v12016 = vld [vmem:[%s12000 + $0x58] sm:$0xf]
    %v12017 = vld [vmem:[%s12000 + $0x60] sm:$0xf]
    %v12018 = vld [vmem:[%s12000 + $0x64] sm:$0xf]
    %v12019 = vld [vmem:[%s12000 + $0x6c] sm:$0xf]
    %v12020 = vld [vmem:[%s12000 + $0x70] sm:$0xf]
    %v12021 = vld [vmem:[%s12000 + $0x78] sm:$0xf]
    %v12022 = vld [vmem:[%s12000 + $0x7c] sm:$0xf]
    %v12023 = vld [vmem:[%s12000 + $0x84] sm:$0xf]
    %v12024 = vld [vmem:[%s12000 + $0x88] sm:$0xf]
    %v12025 = vld [vmem:[%s12000 + $0x90] sm:$0xf]
    %v12026 = vld [vmem:[%s12000 + $0x94] sm:$0xf]
    %v12027 = vld [vmem:[%s12000 + $0x9c] sm:$0xf]
    %v12028 = vld [vmem:[%s12000 + $0xa0] sm:$0xf]
    %v12029 = vld [vmem:[%s12000 + $0xa8] sm:$0xf]
    %v12030 = vld [vmem:[%s12000 + $0xac] sm:$0xf]
    %v12031 = vld [vmem:[%s12000 + $0xb4] sm:$0xf]
    %v12032 = vld [vmem:[%s12000 + $0xb8] sm:$0xf]
    %v12033 = vld [vmem:[%s12000 + $0xd8] sm:$0xf]
    %v12034 = vld [vmem:[%s12000 + $0xdc] sm:$0xf]
    %v12035 = vld [vmem:[%s12000 + $0xe4] sm:$0xf]
    %v12036 = vld [vmem:[%s12000 + $0xe8] sm:$0xf]
    %v12037 = vld [vmem:[%s12000 + $0xf0] sm:$0xf]
    %v12038 = vld [vmem:[%s12000 + $0xf4] sm:$0xf]
    %v12039 = vld [vmem:[%s12000 + $0xfc] sm:$0xf]
    %v12040 = vld [vmem:[%s12000 + $0x100] sm:$0xf]
    %v12041 = vld [vmem:[%s12000 + $0x108] sm:$0xf]
    %v12042 = vld [vmem:[%s12000 + $0x10c] sm:$0xf]
    %v12043 = vld [vmem:[%s12000 + $0x114] sm:$0xf]
    %v12044 = vld [vmem:[%s12000 + $0x118] sm:$0xf]
    %v12045 = vld [vmem:[%s12000 + $0x120] sm:$0xf]
    %v12046 = vld [vmem:[%s12000 + $0x124] sm:$0xf]
    %v12047 = vld [vmem:[%s12000 + $0x12c] sm:$0xf]
    %v12048 = vld [vmem:[%s12000 + $0x130] sm:$0xf]
    %v12049 = vld [vmem:[%s12000 + $0x138] sm:$0xf]
    %v12050 = vld [vmem:[%s12000 + $0x13c] sm:$0xf]
    %v12051 = vld [vmem:[%s12000 + $0x144] sm:$0xf]
    %v12052 = vld [vmem:[%s12000 + $0x148] sm:$0xf]
    %v12053 = vld [vmem:[%s12000 + $0x150] sm:$0xf]
    %v12054 = vld [vmem:[%s12000 + $0x154] sm:$0xf]
    %v12055 = vld [vmem:[%s12000 + $0x15c] sm:$0xf]
    %v12056 = vld [vmem:[%s12000 + $0x160] sm:$0xf]
    %v12057 = vld [vmem:[%s12000 + $0x168] sm:$0xf]
    %v12058 = vld [vmem:[%s12000 + $0x16c] sm:$0xf]
    %v12059 = vld [vmem:[%s12000 + $0x174] sm:$0xf]
    %v12060 = vld [vmem:[%s12000 + $0x178] sm:$0xf]
    %v12061 = vld [vmem:[%s12000 + $0x180] sm:$0xf]
    %v12062 = vld [vmem:[%s12000 + $0x184] sm:$0xf]
    %v12063 = vld [vmem:[%s12000 + $0x18c] sm:$0xf]
    %v12064 = vld [vmem:[%s12000 + $0x190] sm:$0xf]
    %v12129 = vunpack.c.l.b16 %v12001
    %v12130 = vunpack.c.l.b16 %v12002
    %v12131 = vunpack.c.l.b16 %v12003
    %v12132 = vunpack.c.l.b16 %v12004
    %v12133 = vunpack.c.l.b16 %v12005
    %v12134 = vunpack.c.l.b16 %v12006
    %v12135 = vunpack.c.l.b16 %v12007
    %v12136 = vunpack.c.l.b16 %v12008
    %v12137 = vunpack.c.l.b16 %v12009
    %v12138 = vunpack.c.l.b16 %v12010
    %v12139 = vunpack.c.l.b16 %v12011
    %v12140 = vunpack.c.l.b16 %v12012
    %v12141 = vunpack.c.l.b16 %v12013
    %v12142 = vunpack.c.l.b16 %v12014
    %v12143 = vunpack.c.l.b16 %v12015
    %v12144 = vunpack.c.l.b16 %v12016
    %v12145 = vunpack.c.l.b16 %v12017
    %v12146 = vunpack.c.l.b16 %v12018
    %v12147 = vunpack.c.l.b16 %v12019
    %v12148 = vunpack.c.l.b16 %v12020
    %v12149 = vunpack.c.l.b16 %v12021
    %v12150 = vunpack.c.l.b16 %v12022
    %v12151 = vunpack.c.l.b16 %v12023
    %v12152 = vunpack.c.l.b16 %v12024
    %v12153 = vunpack.c.l.b16 %v12025
    %v12154 = vunpack.c.l.b16 %v12026
    %v12155 = vunpack.c.l.b16 %v12027
    %v12156 = vunpack.c.l.b16 %v12028
    %v12157 = vunpack.c.l.b16 %v12029
    %v12158 = vunpack.c.l.b16 %v12030
    %v12159 = vunpack.c.l.b16 %v12031
    %v12160 = vunpack.c.l.b16 %v12032
    %v12161 = vunpack.c.l.b16 %v12033
    %v12162 = vunpack.c.l.b16 %v12034
    %v12163 = vunpack.c.l.b16 %v12035
    %v12164 = vunpack.c.l.b16 %v12036
    %v12165 = vunpack.c.l.b16 %v12037
    %v12166 = vunpack.c.l.b16 %v12038
    %v12167 = vunpack.c.l.b16 %v12039
    %v12168 = vunpack.c.l.b16 %v12040
    %v12169 = vunpack.c.l.b16 %v12041
    %v12170 = vunpack.c.l.b16 %v12042
    %v12171 = vunpack.c.l.b16 %v12043
    %v12172 = vunpack.c.l.b16 %v12044
    %v12173 = vunpack.c.l.b16 %v12045
    %v12174 = vunpack.c.l.b16 %v12046
    %v12175 = vunpack.c.l.b16 %v12047
    %v12176 = vunpack.c.l.b16 %v12048
    %v12177 = vunpack.c.l.b16 %v12049
    %v12178 = vunpack.c.l.b16 %v12050
    %v12179 = vunpack.c.l.b16 %v12051
    %v12180 = vunpack.c.l.b16 %v12052
    %v12181 = vunpack.c.l.b16 %v12053
    %v12182 = vunpack.c.l.b16 %v12054
    %v12183 = vunpack.c.l.b16 %v12055
    %v12184 = vunpack.c.l.b16 %v12056
    %v12185 = vunpack.c.l.b16 %v12057
    %v12186 = vunpack.c.l.b16 %v12058
    %v12187 = vunpack.c.l.b16 %v12059
    %v12188 = vunpack.c.l.b16 %v12060
    %v12189 = vunpack.c.l.b16 %v12061
    %v12190 = vunpack.c.l.b16 %v12062
    %v12191 = vunpack.c.l.b16 %v12063
    %v12192 = vunpack.c.l.b16 %v12064
    %v12193 = vpack.c.b16 %v12130, %v12129
    %v12194 = vpack.c.b16 %v12132, %v12131
    %v12195 = vpack.c.b16 %v12134, %v12133
    %v12196 = vpack.c.b16 %v12136, %v12135
    %v12197 = vpack.c.b16 %v12138, %v12137
    %v12198 = vpack.c.b16 %v12140, %v12139
    %v12199 = vpack.c.b16 %v12142, %v12141
    %v12200 = vpack.c.b16 %v12144, %v12143
    %v12201 = vpack.c.b16 %v12146, %v12145
    %v12202 = vpack.c.b16 %v12148, %v12147
    %v12203 = vpack.c.b16 %v12150, %v12149
    %v12204 = vpack.c.b16 %v12152, %v12151
    %v12205 = vpack.c.b16 %v12154, %v12153
    %v12206 = vpack.c.b16 %v12156, %v12155
    %v12207 = vpack.c.b16 %v12158, %v12157
    %v12208 = vpack.c.b16 %v12160, %v12159
    %v12209 = vpack.c.b16 %v12162, %v12161
    %v12210 = vpack.c.b16 %v12164, %v12163
    %v12211 = vpack.c.b16 %v12166, %v12165
    %v12212 = vpack.c.b16 %v12168, %v12167
    %v12213 = vpack.c.b16 %v12170, %v12169
    %v12214 = vpack.c.b16 %v12172, %v12171
    %v12215 = vpack.c.b16 %v12174, %v12173
    %v12216 = vpack.c.b16 %v12176, %v12175
    %v12217 = vpack.c.b16 %v12178, %v12177
    %v12218 = vpack.c.b16 %v12180, %v12179
    %v12219 = vpack.c.b16 %v12182, %v12181
    %v12220 = vpack.c.b16 %v12184, %v12183
    %v12221 = vpack.c.b16 %v12186, %v12185
    %v12222 = vpack.c.b16 %v12188, %v12187
    %v12223 = vpack.c.b16 %v12190, %v12189
    %v12224 = vpack.c.b16 %v12192, %v12191
    %12225 = vrot.lane.b32.xlu0 %v12193, 48
    %v12226 = vpop.permute.xlu0 %12225
    %12227 = vrot.lane.b32.xlu0 %v12194, 48
    %v12228 = vpop.permute.xlu0 %12227
    %12229 = vrot.lane.b32.xlu0 %v12195, 48
    %v12230 = vpop.permute.xlu0 %12229
    %12231 = vrot.lane.b32.xlu0 %v12196, 48
    %v12232 = vpop.permute.xlu0 %12231
    %12233 = vrot.lane.b32.xlu0 %v12197, 48
    %v12234 = vpop.permute.xlu0 %12233
    %12235 = vrot.lane.b32.xlu0 %v12198, 48
    %v12236 = vpop.permute.xlu0 %12235
    %12237 = vrot.lane.b32.xlu0 %v12199, 48
    %v12238 = vpop.permute.xlu0 %12237
    %12239 = vrot.lane.b32.xlu0 %v12200, 48
    %v12240 = vpop.permute.xlu0 %12239
    %12241 = vrot.lane.b32.xlu0 %v12201, 48
    %v12242 = vpop.permute.xlu0 %12241
    %12243 = vrot.lane.b32.xlu0 %v12202, 48
    %v12244 = vpop.permute.xlu0 %12243
    %12245 = vrot.lane.b32.xlu0 %v12203, 48
    %v12246 = vpop.permute.xlu0 %12245
    %12247 = vrot.lane.b32.xlu0 %v12204, 48
    %v12248 = vpop.permute.xlu0 %12247
    %12249 = vrot.lane.b32.xlu0 %v12205, 48
    %v12250 = vpop.permute.xlu0 %12249
    %12251 = vrot.lane.b32.xlu0 %v12206, 48
    %v12252 = vpop.permute.xlu0 %12251
    %12253 = vrot.lane.b32.xlu0 %v12207, 48
    %v12254 = vpop.permute.xlu0 %12253
    %12255 = vrot.lane.b32.xlu0 %v12208, 48
    %v12256 = vpop.permute.xlu0 %12255
    %12257 = vrot.lane.b32.xlu0 %v12209, 48
    %v12258 = vpop.permute.xlu0 %12257
    %12259 = vrot.lane.b32.xlu0 %v12210, 48
    %v12260 = vpop.permute.xlu0 %12259
    %12261 = vrot.lane.b32.xlu0 %v12211, 48
    %v12262 = vpop.permute.xlu0 %12261
    %12263 = vrot.lane.b32.xlu0 %v12212, 48
    %v12264 = vpop.permute.xlu0 %12263
    %12265 = vrot.lane.b32.xlu0 %v12213, 48
    %v12266 = vpop.permute.xlu0 %12265
    %12267 = vrot.lane.b32.xlu0 %v12214, 48
    %v12268 = vpop.permute.xlu0 %12267
    %12269 = vrot.lane.b32.xlu0 %v12215, 48
    %v12270 = vpop.permute.xlu0 %12269
    %12271 = vrot.lane.b32.xlu0 %v12216, 48
    %v12272 = vpop.permute.xlu0 %12271
    %12273 = vrot.lane.b32.xlu0 %v12217, 48
    %v12274 = vpop.permute.xlu0 %12273
    %12275 = vrot.lane.b32.xlu0 %v12218, 48
    %v12276 = vpop.permute.xlu0 %12275
    %12277 = vrot.lane.b32.xlu0 %v12219, 48
    %v12278 = vpop.permute.xlu0 %12277
    %12279 = vrot.lane.b32.xlu0 %v12220, 48
    %v12280 = vpop.permute.xlu0 %12279
    %12281 = vrot.lane.b32.xlu0 %v12221, 48
    %v12282 = vpop.permute.xlu0 %12281
    %12283 = vrot.lane.b32.xlu0 %v12222, 48
    %v12284 = vpop.permute.xlu0 %12283
    %12285 = vrot.lane.b32.xlu0 %v12223, 48
    %v12286 = vpop.permute.xlu0 %12285
    %12287 = vrot.lane.b32.xlu0 %v12224, 48
    %v12288 = vpop.permute.xlu0 %12287
    %vm12321 = vcmask 458112
    %12322 = vst.msk [vmem:[#allocation4] sm:$0xff] %vm12321, %v12226
    %12323 = vst.msk [vmem:[#allocation4 + $0x8] sm:$0xff] %vm12321, %v12228
    %12324 = vst.msk [vmem:[#allocation4 + $0x10] sm:$0xff] %vm12321, %v12230
    %12325 = vst.msk [vmem:[#allocation4 + $0x18] sm:$0xff] %vm12321, %v12232
    %12326 = vst.msk [vmem:[#allocation4 + $0x20] sm:$0xff] %vm12321, %v12234
    %12327 = vst.msk [vmem:[#allocation4 + $0x28] sm:$0xff] %vm12321, %v12236
    %12328 = vst.msk [vmem:[#allocation4 + $0x30] sm:$0xff] %vm12321, %v12238
    %12329 = vst.msk [vmem:[#allocation4 + $0x38] sm:$0xff] %vm12321, %v12240
    %12330 = vst.msk [vmem:[#allocation4 + $0x40] sm:$0xff] %vm12321, %v12242
    %12331 = vst.msk [vmem:[#allocation4 + $0x48] sm:$0xff] %vm12321, %v12244
    %12332 = vst.msk [vmem:[#allocation4 + $0x50] sm:$0xff] %vm12321, %v12246
    %12333 = vst.msk [vmem:[#allocation4 + $0x58] sm:$0xff] %vm12321, %v12248
    %12334 = vst.msk [vmem:[#allocation4 + $0x60] sm:$0xff] %vm12321, %v12250
    %12335 = vst.msk [vmem:[#allocation4 + $0x68] sm:$0xff] %vm12321, %v12252
    %12336 = vst.msk [vmem:[#allocation4 + $0x70] sm:$0xff] %vm12321, %v12254
    %12337 = vst.msk [vmem:[#allocation4 + $0x78] sm:$0xff] %vm12321, %v12256
    %12338 = vst.msk [vmem:[#allocation4 + $0x80] sm:$0xff] %vm12321, %v12258
    %12339 = vst.msk [vmem:[#allocation4 + $0x88] sm:$0xff] %vm12321, %v12260
    %12340 = vst.msk [vmem:[#allocation4 + $0x90] sm:$0xff] %vm12321, %v12262
    %12341 = vst.msk [vmem:[#allocation4 + $0x98] sm:$0xff] %vm12321, %v12264
    %12342 = vst.msk [vmem:[#allocation4 + $0xa0] sm:$0xff] %vm12321, %v12266
    %12343 = vst.msk [vmem:[#allocation4 + $0xa8] sm:$0xff] %vm12321, %v12268
    %12344 = vst.msk [vmem:[#allocation4 + $0xb0] sm:$0xff] %vm12321, %v12270
    %12345 = vst.msk [vmem:[#allocation4 + $0xb8] sm:$0xff] %vm12321, %v12272
    %12346 = vst.msk [vmem:[#allocation4 + $0xc0] sm:$0xff] %vm12321, %v12274
    %12347 = vst.msk [vmem:[#allocation4 + $0xc8] sm:$0xff] %vm12321, %v12276
    %12348 = vst.msk [vmem:[#allocation4 + $0xd0] sm:$0xff] %vm12321, %v12278
    %12349 = vst.msk [vmem:[#allocation4 + $0xd8] sm:$0xff] %vm12321, %v12280
    %12350 = vst.msk [vmem:[#allocation4 + $0xe0] sm:$0xff] %vm12321, %v12282
    %12351 = vst.msk [vmem:[#allocation4 + $0xe8] sm:$0xff] %vm12321, %v12284
    %12352 = vst.msk [vmem:[#allocation4 + $0xf0] sm:$0xff] %vm12321, %v12286
    %12353 = vst.msk [vmem:[#allocation4 + $0xf8] sm:$0xff] %vm12321, %v12288
    %v12354 = vld [vmem:[%s12000] sm:$0xf]
    %v12355 = vld [vmem:[%s12000 + $0x4] sm:$0xf]
    %v12356 = vld [vmem:[%s12000 + $0x8] sm:$0x1]
    %v12357 = vld [vmem:[%s12000 + $0xc] sm:$0xf]
    %v12358 = vld [vmem:[%s12000 + $0x10] sm:$0xf]
    %v12359 = vld [vmem:[%s12000 + $0x14] sm:$0x1]
    %v12360 = vld [vmem:[%s12000 + $0x18] sm:$0xf]
    %v12361 = vld [vmem:[%s12000 + $0x1c] sm:$0xf]
    %v12362 = vld [vmem:[%s12000 + $0x20] sm:$0x1]
    %v12363 = vld [vmem:[%s12000 + $0x24] sm:$0xf]
    %v12364 = vld [vmem:[%s12000 + $0x28] sm:$0xf]
    %v12365 = vld [vmem:[%s12000 + $0x2c] sm:$0x1]
    %v12366 = vld [vmem:[%s12000 + $0x30] sm:$0xf]
    %v12367 = vld [vmem:[%s12000 + $0x34] sm:$0xf]
    %v12368 = vld [vmem:[%s12000 + $0x38] sm:$0x1]
    %v12369 = vld [vmem:[%s12000 + $0x3c] sm:$0xf]
    %v12370 = vld [vmem:[%s12000 + $0x40] sm:$0xf]
    %v12371 = vld [vmem:[%s12000 + $0x44] sm:$0x1]
    %v12372 = vld [vmem:[%s12000 + $0x48] sm:$0xf]
    %v12373 = vld [vmem:[%s12000 + $0x4c] sm:$0xf]
    %v12374 = vld [vmem:[%s12000 + $0x50] sm:$0x1]
    %v12375 = vld [vmem:[%s12000 + $0x54] sm:$0xf]
    %v12376 = vld [vmem:[%s12000 + $0x58] sm:$0xf]
    %v12377 = vld [vmem:[%s12000 + $0x5c] sm:$0x1]
    %v12378 = vld [vmem:[%s12000 + $0x60] sm:$0xf]
    %v12379 = vld [vmem:[%s12000 + $0x64] sm:$0xf]
    %v12380 = vld [vmem:[%s12000 + $0x68] sm:$0x1]
    %v12381 = vld [vmem:[%s12000 + $0x6c] sm:$0xf]
    %v12382 = vld [vmem:[%s12000 + $0x70] sm:$0xf]
    %v12383 = vld [vmem:[%s12000 + $0x74] sm:$0x1]
    %v12384 = vld [vmem:[%s12000 + $0x78] sm:$0xf]
    %v12385 = vld [vmem:[%s12000 + $0x7c] sm:$0xf]
    %v12386 = vld [vmem:[%s12000 + $0x80] sm:$0x1]
    %v12387 = vld [vmem:[%s12000 + $0x84] sm:$0xf]
    %v12388 = vld [vmem:[%s12000 + $0x88] sm:$0xf]
    %v12389 = vld [vmem:[%s12000 + $0x8c] sm:$0x1]
    %v12390 = vld [vmem:[%s12000 + $0x90] sm:$0xf]
    %v12391 = vld [vmem:[%s12000 + $0x94] sm:$0xf]
    %v12392 = vld [vmem:[%s12000 + $0x98] sm:$0x1]
    %v12393 = vld [vmem:[%s12000 + $0x9c] sm:$0xf]
    %v12394 = vld [vmem:[%s12000 + $0xa0] sm:$0xf]
    %v12395 = vld [vmem:[%s12000 + $0xa4] sm:$0x1]
    %v12396 = vld [vmem:[%s12000 + $0xa8] sm:$0xf]
    %v12397 = vld [vmem:[%s12000 + $0xac] sm:$0xf]
    %v12398 = vld [vmem:[%s12000 + $0xb0] sm:$0x1]
    %v12399 = vld [vmem:[%s12000 + $0xb4] sm:$0xf]
    %v12400 = vld [vmem:[%s12000 + $0xb8] sm:$0xf]
    %v12401 = vld [vmem:[%s12000 + $0xbc] sm:$0x1]
    %v12402 = vld [vmem:[%s12000 + $0xd8] sm:$0xf]
    %v12403 = vld [vmem:[%s12000 + $0xdc] sm:$0xf]
    %v12404 = vld [vmem:[%s12000 + $0xe0] sm:$0x1]
    %v12405 = vld [vmem:[%s12000 + $0xe4] sm:$0xf]
    %v12406 = vld [vmem:[%s12000 + $0xe8] sm:$0xf]
    %v12407 = vld [vmem:[%s12000 + $0xec] sm:$0x1]
    %v12408 = vld [vmem:[%s12000 + $0xf0] sm:$0xf]
    %v12409 = vld [vmem:[%s12000 + $0xf4] sm:$0xf]
    %v12410 = vld [vmem:[%s12000 + $0xf8] sm:$0x1]
    %v12411 = vld [vmem:[%s12000 + $0xfc] sm:$0xf]
    %v12412 = vld [vmem:[%s12000 + $0x100] sm:$0xf]
    %v12413 = vld [vmem:[%s12000 + $0x104] sm:$0x1]
    %v12414 = vld [vmem:[%s12000 + $0x108] sm:$0xf]
    %v12415 = vld [vmem:[%s12000 + $0x10c] sm:$0xf]
    %v12416 = vld [vmem:[%s12000 + $0x110] sm:$0x1]
    %v12417 = vld [vmem:[%s12000 + $0x114] sm:$0xf]
    %v12418 = vld [vmem:[%s12000 + $0x118] sm:$0xf]
    %v12419 = vld [vmem:[%s12000 + $0x11c] sm:$0x1]
    %v12420 = vld [vmem:[%s12000 + $0x120] sm:$0xf]
    %v12421 = vld [vmem:[%s12000 + $0x124] sm:$0xf]
    %v12422 = vld [vmem:[%s12000 + $0x128] sm:$0x1]
    %v12423 = vld [vmem:[%s12000 + $0x12c] sm:$0xf]
    %v12424 = vld [vmem:[%s12000 + $0x130] sm:$0xf]
    %v12425 = vld [vmem:[%s12000 + $0x134] sm:$0x1]
    %v12426 = vld [vmem:[%s12000 + $0x138] sm:$0xf]
    %v12427 = vld [vmem:[%s12000 + $0x13c] sm:$0xf]
    %v12428 = vld [vmem:[%s12000 + $0x140] sm:$0x1]
    %v12429 = vld [vmem:[%s12000 + $0x144] sm:$0xf]
    %v12430 = vld [vmem:[%s12000 + $0x148] sm:$0xf]
    %v12431 = vld [vmem:[%s12000 + $0x14c] sm:$0x1]
    %v12432 = vld [vmem:[%s12000 + $0x150] sm:$0xf]
    %v12433 = vld [vmem:[%s12000 + $0x154] sm:$0xf]
    %v12434 = vld [vmem:[%s12000 + $0x158] sm:$0x1]
    %v12435 = vld [vmem:[%s12000 + $0x15c] sm:$0xf]
    %v12436 = vld [vmem:[%s12000 + $0x160] sm:$0xf]
    %v12437 = vld [vmem:[%s12000 + $0x164] sm:$0x1]
    %v12438 = vld [vmem:[%s12000 + $0x168] sm:$0xf]
    %v12439 = vld [vmem:[%s12000 + $0x16c] sm:$0xf]
    %v12440 = vld [vmem:[%s12000 + $0x170] sm:$0x1]
    %v12441 = vld [vmem:[%s12000 + $0x174] sm:$0xf]
    %v12442 = vld [vmem:[%s12000 + $0x178] sm:$0xf]
    %v12443 = vld [vmem:[%s12000 + $0x17c] sm:$0x1]
    %v12444 = vld [vmem:[%s12000 + $0x180] sm:$0xf]
    %v12445 = vld [vmem:[%s12000 + $0x184] sm:$0xf]
    %v12446 = vld [vmem:[%s12000 + $0x188] sm:$0x1]
    %v12447 = vld [vmem:[%s12000 + $0x18c] sm:$0xf]
    %v12448 = vld [vmem:[%s12000 + $0x190] sm:$0xf]
    %v12449 = vld [vmem:[%s12000 + $0x194] sm:$0x1]
    %v12451 = vshrl.u32 %v12354, 16
    %v12453 = vrot.slane %v12451, 4
    %v12454 = vshll.u32 %v12354, 16
    %v12456 = vrot.slane %v12454, 5
    %v12457 = vor.u32 %v12453, %v12456
    %v12458 = vrot.slane %v12457, 4
    %v12460 = vshll.u32 %v12355, 16
    %v12462 = vrot.slane %v12460, 5
    %v12463 = vsel %vm421, %v12458, %v12462
    %v12464 = vshrl.u32 %v12355, 16
    %v12466 = vrot.slane %v12464, 4
    %v12467 = vor.u32 %v12466, %v12462
    %v12468 = vrot.slane %v12467, 4
    %v12470 = vshll.u32 %v12356, 16
    %v12472 = vrot.slane %v12470, 5
    %v12473 = vsel %vm421, %v12468, %v12472
    %v12475 = vshrl.u32 %v12357, 16
    %v12477 = vrot.slane %v12475, 4
    %v12478 = vshll.u32 %v12357, 16
    %v12480 = vrot.slane %v12478, 5
    %v12481 = vor.u32 %v12477, %v12480
    %v12482 = vrot.slane %v12481, 4
    %v12484 = vshll.u32 %v12358, 16
    %v12486 = vrot.slane %v12484, 5
    %v12487 = vsel %vm421, %v12482, %v12486
    %v12488 = vshrl.u32 %v12358, 16
    %v12490 = vrot.slane %v12488, 4
    %v12491 = vor.u32 %v12490, %v12486
    %v12492 = vrot.slane %v12491, 4
    %v12494 = vshll.u32 %v12359, 16
    %v12496 = vrot.slane %v12494, 5
    %v12497 = vsel %vm421, %v12492, %v12496
    %v12499 = vshrl.u32 %v12360, 16
    %v12501 = vrot.slane %v12499, 4
    %v12502 = vshll.u32 %v12360, 16
    %v12504 = vrot.slane %v12502, 5
    %v12505 = vor.u32 %v12501, %v12504
    %v12506 = vrot.slane %v12505, 4
    %v12508 = vshll.u32 %v12361, 16
    %v12510 = vrot.slane %v12508, 5
    %v12511 = vsel %vm421, %v12506, %v12510
    %v12512 = vshrl.u32 %v12361, 16
    %v12514 = vrot.slane %v12512, 4
    %v12515 = vor.u32 %v12514, %v12510
    %v12516 = vrot.slane %v12515, 4
    %v12518 = vshll.u32 %v12362, 16
    %v12520 = vrot.slane %v12518, 5
    %v12521 = vsel %vm421, %v12516, %v12520
    %v12523 = vshrl.u32 %v12363, 16
    %v12525 = vrot.slane %v12523, 4
    %v12526 = vshll.u32 %v12363, 16
    %v12528 = vrot.slane %v12526, 5
    %v12529 = vor.u32 %v12525, %v12528
    %v12530 = vrot.slane %v12529, 4
    %v12532 = vshll.u32 %v12364, 16
    %v12534 = vrot.slane %v12532, 5
    %v12535 = vsel %vm421, %v12530, %v12534
    %v12536 = vshrl.u32 %v12364, 16
    %v12538 = vrot.slane %v12536, 4
    %v12539 = vor.u32 %v12538, %v12534
    %v12540 = vrot.slane %v12539, 4
    %v12542 = vshll.u32 %v12365, 16
    %v12544 = vrot.slane %v12542, 5
    %v12545 = vsel %vm421, %v12540, %v12544
    %v12547 = vshrl.u32 %v12366, 16
    %v12549 = vrot.slane %v12547, 4
    %v12550 = vshll.u32 %v12366, 16
    %v12552 = vrot.slane %v12550, 5
    %v12553 = vor.u32 %v12549, %v12552
    %v12554 = vrot.slane %v12553, 4
    %v12556 = vshll.u32 %v12367, 16
    %v12558 = vrot.slane %v12556, 5
    %v12559 = vsel %vm421, %v12554, %v12558
    %v12560 = vshrl.u32 %v12367, 16
    %v12562 = vrot.slane %v12560, 4
    %v12563 = vor.u32 %v12562, %v12558
    %v12564 = vrot.slane %v12563, 4
    %v12566 = vshll.u32 %v12368, 16
    %v12568 = vrot.slane %v12566, 5
    %v12569 = vsel %vm421, %v12564, %v12568
    %v12571 = vshrl.u32 %v12369, 16
    %v12573 = vrot.slane %v12571, 4
    %v12574 = vshll.u32 %v12369, 16
    %v12576 = vrot.slane %v12574, 5
    %v12577 = vor.u32 %v12573, %v12576
    %v12578 = vrot.slane %v12577, 4
    %v12580 = vshll.u32 %v12370, 16
    %v12582 = vrot.slane %v12580, 5
    %v12583 = vsel %vm421, %v12578, %v12582
    %v12584 = vshrl.u32 %v12370, 16
    %v12586 = vrot.slane %v12584, 4
    %v12587 = vor.u32 %v12586, %v12582
    %v12588 = vrot.slane %v12587, 4
    %v12590 = vshll.u32 %v12371, 16
    %v12592 = vrot.slane %v12590, 5
    %v12593 = vsel %vm421, %v12588, %v12592
    %v12595 = vshrl.u32 %v12372, 16
    %v12597 = vrot.slane %v12595, 4
    %v12598 = vshll.u32 %v12372, 16
    %v12600 = vrot.slane %v12598, 5
    %v12601 = vor.u32 %v12597, %v12600
    %v12602 = vrot.slane %v12601, 4
    %v12604 = vshll.u32 %v12373, 16
    %v12606 = vrot.slane %v12604, 5
    %v12607 = vsel %vm421, %v12602, %v12606
    %v12608 = vshrl.u32 %v12373, 16
    %v12610 = vrot.slane %v12608, 4
    %v12611 = vor.u32 %v12610, %v12606
    %v12612 = vrot.slane %v12611, 4
    %v12614 = vshll.u32 %v12374, 16
    %v12616 = vrot.slane %v12614, 5
    %v12617 = vsel %vm421, %v12612, %v12616
    %v12619 = vshrl.u32 %v12375, 16
    %v12621 = vrot.slane %v12619, 4
    %v12622 = vshll.u32 %v12375, 16
    %v12624 = vrot.slane %v12622, 5
    %v12625 = vor.u32 %v12621, %v12624
    %v12626 = vrot.slane %v12625, 4
    %v12628 = vshll.u32 %v12376, 16
    %v12630 = vrot.slane %v12628, 5
    %v12631 = vsel %vm421, %v12626, %v12630
    %v12632 = vshrl.u32 %v12376, 16
    %v12634 = vrot.slane %v12632, 4
    %v12635 = vor.u32 %v12634, %v12630
    %v12636 = vrot.slane %v12635, 4
    %v12638 = vshll.u32 %v12377, 16
    %v12640 = vrot.slane %v12638, 5
    %v12641 = vsel %vm421, %v12636, %v12640
    %v12643 = vshrl.u32 %v12378, 16
    %v12645 = vrot.slane %v12643, 4
    %v12646 = vshll.u32 %v12378, 16
    %v12648 = vrot.slane %v12646, 5
    %v12649 = vor.u32 %v12645, %v12648
    %v12650 = vrot.slane %v12649, 4
    %v12652 = vshll.u32 %v12379, 16
    %v12654 = vrot.slane %v12652, 5
    %v12655 = vsel %vm421, %v12650, %v12654
    %v12656 = vshrl.u32 %v12379, 16
    %v12658 = vrot.slane %v12656, 4
    %v12659 = vor.u32 %v12658, %v12654
    %v12660 = vrot.slane %v12659, 4
    %v12662 = vshll.u32 %v12380, 16
    %v12664 = vrot.slane %v12662, 5
    %v12665 = vsel %vm421, %v12660, %v12664
    %v12667 = vshrl.u32 %v12381, 16
    %v12669 = vrot.slane %v12667, 4
    %v12670 = vshll.u32 %v12381, 16
    %v12672 = vrot.slane %v12670, 5
    %v12673 = vor.u32 %v12669, %v12672
    %v12674 = vrot.slane %v12673, 4
    %v12676 = vshll.u32 %v12382, 16
    %v12678 = vrot.slane %v12676, 5
    %v12679 = vsel %vm421, %v12674, %v12678
    %v12680 = vshrl.u32 %v12382, 16
    %v12682 = vrot.slane %v12680, 4
    %v12683 = vor.u32 %v12682, %v12678
    %v12684 = vrot.slane %v12683, 4
    %v12686 = vshll.u32 %v12383, 16
    %v12688 = vrot.slane %v12686, 5
    %v12689 = vsel %vm421, %v12684, %v12688
    %v12691 = vshrl.u32 %v12384, 16
    %v12693 = vrot.slane %v12691, 4
    %v12694 = vshll.u32 %v12384, 16
    %v12696 = vrot.slane %v12694, 5
    %v12697 = vor.u32 %v12693, %v12696
    %v12698 = vrot.slane %v12697, 4
    %v12700 = vshll.u32 %v12385, 16
    %v12702 = vrot.slane %v12700, 5
    %v12703 = vsel %vm421, %v12698, %v12702
    %v12704 = vshrl.u32 %v12385, 16
    %v12706 = vrot.slane %v12704, 4
    %v12707 = vor.u32 %v12706, %v12702
    %v12708 = vrot.slane %v12707, 4
    %v12710 = vshll.u32 %v12386, 16
    %v12712 = vrot.slane %v12710, 5
    %v12713 = vsel %vm421, %v12708, %v12712
    %v12715 = vshrl.u32 %v12387, 16
    %v12717 = vrot.slane %v12715, 4
    %v12718 = vshll.u32 %v12387, 16
    %v12720 = vrot.slane %v12718, 5
    %v12721 = vor.u32 %v12717, %v12720
    %v12722 = vrot.slane %v12721, 4
    %v12724 = vshll.u32 %v12388, 16
    %v12726 = vrot.slane %v12724, 5
    %v12727 = vsel %vm421, %v12722, %v12726
    %v12728 = vshrl.u32 %v12388, 16
    %v12730 = vrot.slane %v12728, 4
    %v12731 = vor.u32 %v12730, %v12726
    %v12732 = vrot.slane %v12731, 4
    %v12734 = vshll.u32 %v12389, 16
    %v12736 = vrot.slane %v12734, 5
    %v12737 = vsel %vm421, %v12732, %v12736
    %v12739 = vshrl.u32 %v12390, 16
    %v12741 = vrot.slane %v12739, 4
    %v12742 = vshll.u32 %v12390, 16
    %v12744 = vrot.slane %v12742, 5
    %v12745 = vor.u32 %v12741, %v12744
    %v12746 = vrot.slane %v12745, 4
    %v12748 = vshll.u32 %v12391, 16
    %v12750 = vrot.slane %v12748, 5
    %v12751 = vsel %vm421, %v12746, %v12750
    %v12752 = vshrl.u32 %v12391, 16
    %v12754 = vrot.slane %v12752, 4
    %v12755 = vor.u32 %v12754, %v12750
    %v12756 = vrot.slane %v12755, 4
    %v12758 = vshll.u32 %v12392, 16
    %v12760 = vrot.slane %v12758, 5
    %v12761 = vsel %vm421, %v12756, %v12760
    %v12763 = vshrl.u32 %v12393, 16
    %v12765 = vrot.slane %v12763, 4
    %v12766 = vshll.u32 %v12393, 16
    %v12768 = vrot.slane %v12766, 5
    %v12769 = vor.u32 %v12765, %v12768
    %v12770 = vrot.slane %v12769, 4
    %v12772 = vshll.u32 %v12394, 16
    %v12774 = vrot.slane %v12772, 5
    %v12775 = vsel %vm421, %v12770, %v12774
    %v12776 = vshrl.u32 %v12394, 16
    %v12778 = vrot.slane %v12776, 4
    %v12779 = vor.u32 %v12778, %v12774
    %v12780 = vrot.slane %v12779, 4
    %v12782 = vshll.u32 %v12395, 16
    %v12784 = vrot.slane %v12782, 5
    %v12785 = vsel %vm421, %v12780, %v12784
    %v12787 = vshrl.u32 %v12396, 16
    %v12789 = vrot.slane %v12787, 4
    %v12790 = vshll.u32 %v12396, 16
    %v12792 = vrot.slane %v12790, 5
    %v12793 = vor.u32 %v12789, %v12792
    %v12794 = vrot.slane %v12793, 4
    %v12796 = vshll.u32 %v12397, 16
    %v12798 = vrot.slane %v12796, 5
    %v12799 = vsel %vm421, %v12794, %v12798
    %v12800 = vshrl.u32 %v12397, 16
    %v12802 = vrot.slane %v12800, 4
    %v12803 = vor.u32 %v12802, %v12798
    %v12804 = vrot.slane %v12803, 4
    %v12806 = vshll.u32 %v12398, 16
    %v12808 = vrot.slane %v12806, 5
    %v12809 = vsel %vm421, %v12804, %v12808
    %v12811 = vshrl.u32 %v12399, 16
    %v12813 = vrot.slane %v12811, 4
    %v12814 = vshll.u32 %v12399, 16
    %v12816 = vrot.slane %v12814, 5
    %v12817 = vor.u32 %v12813, %v12816
    %v12818 = vrot.slane %v12817, 4
    %v12820 = vshll.u32 %v12400, 16
    %v12822 = vrot.slane %v12820, 5
    %v12823 = vsel %vm421, %v12818, %v12822
    %v12824 = vshrl.u32 %v12400, 16
    %v12826 = vrot.slane %v12824, 4
    %v12827 = vor.u32 %v12826, %v12822
    %v12828 = vrot.slane %v12827, 4
    %v12830 = vshll.u32 %v12401, 16
    %v12832 = vrot.slane %v12830, 5
    %v12833 = vsel %vm421, %v12828, %v12832
    %v12835 = vshrl.u32 %v12402, 16
    %v12837 = vrot.slane %v12835, 4
    %v12838 = vshll.u32 %v12402, 16
    %v12840 = vrot.slane %v12838, 5
    %v12841 = vor.u32 %v12837, %v12840
    %v12842 = vrot.slane %v12841, 4
    %v12844 = vshll.u32 %v12403, 16
    %v12846 = vrot.slane %v12844, 5
    %v12847 = vsel %vm421, %v12842, %v12846
    %v12848 = vshrl.u32 %v12403, 16
    %v12850 = vrot.slane %v12848, 4
    %v12851 = vor.u32 %v12850, %v12846
    %v12852 = vrot.slane %v12851, 4
    %v12854 = vshll.u32 %v12404, 16
    %v12856 = vrot.slane %v12854, 5
    %v12857 = vsel %vm421, %v12852, %v12856
    %v12859 = vshrl.u32 %v12405, 16
    %v12861 = vrot.slane %v12859, 4
    %v12862 = vshll.u32 %v12405, 16
    %v12864 = vrot.slane %v12862, 5
    %v12865 = vor.u32 %v12861, %v12864
    %v12866 = vrot.slane %v12865, 4
    %v12868 = vshll.u32 %v12406, 16
    %v12870 = vrot.slane %v12868, 5
    %v12871 = vsel %vm421, %v12866, %v12870
    %v12872 = vshrl.u32 %v12406, 16
    %v12874 = vrot.slane %v12872, 4
    %v12875 = vor.u32 %v12874, %v12870
    %v12876 = vrot.slane %v12875, 4
    %v12878 = vshll.u32 %v12407, 16
    %v12880 = vrot.slane %v12878, 5
    %v12881 = vsel %vm421, %v12876, %v12880
    %v12883 = vshrl.u32 %v12408, 16
    %v12885 = vrot.slane %v12883, 4
    %v12886 = vshll.u32 %v12408, 16
    %v12888 = vrot.slane %v12886, 5
    %v12889 = vor.u32 %v12885, %v12888
    %v12890 = vrot.slane %v12889, 4
    %v12892 = vshll.u32 %v12409, 16
    %v12894 = vrot.slane %v12892, 5
    %v12895 = vsel %vm421, %v12890, %v12894
    %v12896 = vshrl.u32 %v12409, 16
    %v12898 = vrot.slane %v12896, 4
    %v12899 = vor.u32 %v12898, %v12894
    %v12900 = vrot.slane %v12899, 4
    %v12902 = vshll.u32 %v12410, 16
    %v12904 = vrot.slane %v12902, 5
    %v12905 = vsel %vm421, %v12900, %v12904
    %v12907 = vshrl.u32 %v12411, 16
    %v12909 = vrot.slane %v12907, 4
    %v12910 = vshll.u32 %v12411, 16
    %v12912 = vrot.slane %v12910, 5
    %v12913 = vor.u32 %v12909, %v12912
    %v12914 = vrot.slane %v12913, 4
    %v12916 = vshll.u32 %v12412, 16
    %v12918 = vrot.slane %v12916, 5
    %v12919 = vsel %vm421, %v12914, %v12918
    %v12920 = vshrl.u32 %v12412, 16
    %v12922 = vrot.slane %v12920, 4
    %v12923 = vor.u32 %v12922, %v12918
    %v12924 = vrot.slane %v12923, 4
    %v12926 = vshll.u32 %v12413, 16
    %v12928 = vrot.slane %v12926, 5
    %v12929 = vsel %vm421, %v12924, %v12928
    %v12931 = vshrl.u32 %v12414, 16
    %v12933 = vrot.slane %v12931, 4
    %v12934 = vshll.u32 %v12414, 16
    %v12936 = vrot.slane %v12934, 5
    %v12937 = vor.u32 %v12933, %v12936
    %v12938 = vrot.slane %v12937, 4
    %v12940 = vshll.u32 %v12415, 16
    %v12942 = vrot.slane %v12940, 5
    %v12943 = vsel %vm421, %v12938, %v12942
    %v12944 = vshrl.u32 %v12415, 16
    %v12946 = vrot.slane %v12944, 4
    %v12947 = vor.u32 %v12946, %v12942
    %v12948 = vrot.slane %v12947, 4
    %v12950 = vshll.u32 %v12416, 16
    %v12952 = vrot.slane %v12950, 5
    %v12953 = vsel %vm421, %v12948, %v12952
    %v12955 = vshrl.u32 %v12417, 16
    %v12957 = vrot.slane %v12955, 4
    %v12958 = vshll.u32 %v12417, 16
    %v12960 = vrot.slane %v12958, 5
    %v12961 = vor.u32 %v12957, %v12960
    %v12962 = vrot.slane %v12961, 4
    %v12964 = vshll.u32 %v12418, 16
    %v12966 = vrot.slane %v12964, 5
    %v12967 = vsel %vm421, %v12962, %v12966
    %v12968 = vshrl.u32 %v12418, 16
    %v12970 = vrot.slane %v12968, 4
    %v12971 = vor.u32 %v12970, %v12966
    %v12972 = vrot.slane %v12971, 4
    %v12974 = vshll.u32 %v12419, 16
    %v12976 = vrot.slane %v12974, 5
    %v12977 = vsel %vm421, %v12972, %v12976
    %v12979 = vshrl.u32 %v12420, 16
    %v12981 = vrot.slane %v12979, 4
    %v12982 = vshll.u32 %v12420, 16
    %v12984 = vrot.slane %v12982, 5
    %v12985 = vor.u32 %v12981, %v12984
    %v12986 = vrot.slane %v12985, 4
    %v12988 = vshll.u32 %v12421, 16
    %v12990 = vrot.slane %v12988, 5
    %v12991 = vsel %vm421, %v12986, %v12990
    %v12992 = vshrl.u32 %v12421, 16
    %v12994 = vrot.slane %v12992, 4
    %v12995 = vor.u32 %v12994, %v12990
    %v12996 = vrot.slane %v12995, 4
    %v12998 = vshll.u32 %v12422, 16
    %v13000 = vrot.slane %v12998, 5
    %v13001 = vsel %vm421, %v12996, %v13000
    %v13003 = vshrl.u32 %v12423, 16
    %v13005 = vrot.slane %v13003, 4
    %v13006 = vshll.u32 %v12423, 16
    %v13008 = vrot.slane %v13006, 5
    %v13009 = vor.u32 %v13005, %v13008
    %v13010 = vrot.slane %v13009, 4
    %v13012 = vshll.u32 %v12424, 16
    %v13014 = vrot.slane %v13012, 5
    %v13015 = vsel %vm421, %v13010, %v13014
    %v13016 = vshrl.u32 %v12424, 16
    %v13018 = vrot.slane %v13016, 4
    %v13019 = vor.u32 %v13018, %v13014
    %v13020 = vrot.slane %v13019, 4
    %v13022 = vshll.u32 %v12425, 16
    %v13024 = vrot.slane %v13022, 5
    %v13025 = vsel %vm421, %v13020, %v13024
    %v13027 = vshrl.u32 %v12426, 16
    %v13029 = vrot.slane %v13027, 4
    %v13030 = vshll.u32 %v12426, 16
    %v13032 = vrot.slane %v13030, 5
    %v13033 = vor.u32 %v13029, %v13032
    %v13034 = vrot.slane %v13033, 4
    %v13036 = vshll.u32 %v12427, 16
    %v13038 = vrot.slane %v13036, 5
    %v13039 = vsel %vm421, %v13034, %v13038
    %v13040 = vshrl.u32 %v12427, 16
    %v13042 = vrot.slane %v13040, 4
    %v13043 = vor.u32 %v13042, %v13038
    %v13044 = vrot.slane %v13043, 4
    %v13046 = vshll.u32 %v12428, 16
    %v13048 = vrot.slane %v13046, 5
    %v13049 = vsel %vm421, %v13044, %v13048
    %v13051 = vshrl.u32 %v12429, 16
    %v13053 = vrot.slane %v13051, 4
    %v13054 = vshll.u32 %v12429, 16
    %v13056 = vrot.slane %v13054, 5
    %v13057 = vor.u32 %v13053, %v13056
    %v13058 = vrot.slane %v13057, 4
    %v13060 = vshll.u32 %v12430, 16
    %v13062 = vrot.slane %v13060, 5
    %v13063 = vsel %vm421, %v13058, %v13062
    %v13064 = vshrl.u32 %v12430, 16
    %v13066 = vrot.slane %v13064, 4
    %v13067 = vor.u32 %v13066, %v13062
    %v13068 = vrot.slane %v13067, 4
    %v13070 = vshll.u32 %v12431, 16
    %v13072 = vrot.slane %v13070, 5
    %v13073 = vsel %vm421, %v13068, %v13072
    %v13075 = vshrl.u32 %v12432, 16
    %v13077 = vrot.slane %v13075, 4
    %v13078 = vshll.u32 %v12432, 16
    %v13080 = vrot.slane %v13078, 5
    %v13081 = vor.u32 %v13077, %v13080
    %v13082 = vrot.slane %v13081, 4
    %v13084 = vshll.u32 %v12433, 16
    %v13086 = vrot.slane %v13084, 5
    %v13087 = vsel %vm421, %v13082, %v13086
    %v13088 = vshrl.u32 %v12433, 16
    %v13090 = vrot.slane %v13088, 4
    %v13091 = vor.u32 %v13090, %v13086
    %v13092 = vrot.slane %v13091, 4
    %v13094 = vshll.u32 %v12434, 16
    %v13096 = vrot.slane %v13094, 5
    %v13097 = vsel %vm421, %v13092, %v13096
    %v13099 = vshrl.u32 %v12435, 16
    %v13101 = vrot.slane %v13099, 4
    %v13102 = vshll.u32 %v12435, 16
    %v13104 = vrot.slane %v13102, 5
    %v13105 = vor.u32 %v13101, %v13104
    %v13106 = vrot.slane %v13105, 4
    %v13108 = vshll.u32 %v12436, 16
    %v13110 = vrot.slane %v13108, 5
    %v13111 = vsel %vm421, %v13106, %v13110
    %v13112 = vshrl.u32 %v12436, 16
    %v13114 = vrot.slane %v13112, 4
    %v13115 = vor.u32 %v13114, %v13110
    %v13116 = vrot.slane %v13115, 4
    %v13118 = vshll.u32 %v12437, 16
    %v13120 = vrot.slane %v13118, 5
    %v13121 = vsel %vm421, %v13116, %v13120
    %v13123 = vshrl.u32 %v12438, 16
    %v13125 = vrot.slane %v13123, 4
    %v13126 = vshll.u32 %v12438, 16
    %v13128 = vrot.slane %v13126, 5
    %v13129 = vor.u32 %v13125, %v13128
    %v13130 = vrot.slane %v13129, 4
    %v13132 = vshll.u32 %v12439, 16
    %v13134 = vrot.slane %v13132, 5
    %v13135 = vsel %vm421, %v13130, %v13134
    %v13136 = vshrl.u32 %v12439, 16
    %v13138 = vrot.slane %v13136, 4
    %v13139 = vor.u32 %v13138, %v13134
    %v13140 = vrot.slane %v13139, 4
    %v13142 = vshll.u32 %v12440, 16
    %v13144 = vrot.slane %v13142, 5
    %v13145 = vsel %vm421, %v13140, %v13144
    %v13147 = vshrl.u32 %v12441, 16
    %v13149 = vrot.slane %v13147, 4
    %v13150 = vshll.u32 %v12441, 16
    %v13152 = vrot.slane %v13150, 5
    %v13153 = vor.u32 %v13149, %v13152
    %v13154 = vrot.slane %v13153, 4
    %v13156 = vshll.u32 %v12442, 16
    %v13158 = vrot.slane %v13156, 5
    %v13159 = vsel %vm421, %v13154, %v13158
    %v13160 = vshrl.u32 %v12442, 16
    %v13162 = vrot.slane %v13160, 4
    %v13163 = vor.u32 %v13162, %v13158
    %v13164 = vrot.slane %v13163, 4
    %v13166 = vshll.u32 %v12443, 16
    %v13168 = vrot.slane %v13166, 5
    %v13169 = vsel %vm421, %v13164, %v13168
    %v13171 = vshrl.u32 %v12444, 16
    %v13173 = vrot.slane %v13171, 4
    %v13174 = vshll.u32 %v12444, 16
    %v13176 = vrot.slane %v13174, 5
    %v13177 = vor.u32 %v13173, %v13176
    %v13178 = vrot.slane %v13177, 4
    %v13180 = vshll.u32 %v12445, 16
    %v13182 = vrot.slane %v13180, 5
    %v13183 = vsel %vm421, %v13178, %v13182
    %v13184 = vshrl.u32 %v12445, 16
    %v13186 = vrot.slane %v13184, 4
    %v13187 = vor.u32 %v13186, %v13182
    %v13188 = vrot.slane %v13187, 4
    %v13190 = vshll.u32 %v12446, 16
    %v13192 = vrot.slane %v13190, 5
    %v13193 = vsel %vm421, %v13188, %v13192
    %v13195 = vshrl.u32 %v12447, 16
    %v13197 = vrot.slane %v13195, 4
    %v13198 = vshll.u32 %v12447, 16
    %v13200 = vrot.slane %v13198, 5
    %v13201 = vor.u32 %v13197, %v13200
    %v13202 = vrot.slane %v13201, 4
    %v13204 = vshll.u32 %v12448, 16
    %v13206 = vrot.slane %v13204, 5
    %v13207 = vsel %vm421, %v13202, %v13206
    %v13208 = vshrl.u32 %v12448, 16
    %v13210 = vrot.slane %v13208, 4
    %v13211 = vor.u32 %v13210, %v13206
    %v13212 = vrot.slane %v13211, 4
    %v13214 = vshll.u32 %v12449, 16
    %v13216 = vrot.slane %v13214, 5
    %v13217 = vsel %vm421, %v13212, %v13216
    %v13218 = vunpack.c.l.b16 %v12463
    %v13219 = vunpack.c.l.b16 %v12473
    %v13220 = vunpack.c.l.b16 %v12487
    %v13221 = vunpack.c.l.b16 %v12497
    %v13222 = vunpack.c.l.b16 %v12511
    %v13223 = vunpack.c.l.b16 %v12521
    %v13224 = vunpack.c.l.b16 %v12535
    %v13225 = vunpack.c.l.b16 %v12545
    %v13226 = vunpack.c.l.b16 %v12559
    %v13227 = vunpack.c.l.b16 %v12569
    %v13228 = vunpack.c.l.b16 %v12583
    %v13229 = vunpack.c.l.b16 %v12593
    %v13230 = vunpack.c.l.b16 %v12607
    %v13231 = vunpack.c.l.b16 %v12617
    %v13232 = vunpack.c.l.b16 %v12631
    %v13233 = vunpack.c.l.b16 %v12641
    %v13234 = vunpack.c.l.b16 %v12655
    %v13235 = vunpack.c.l.b16 %v12665
    %v13236 = vunpack.c.l.b16 %v12679
    %v13237 = vunpack.c.l.b16 %v12689
    %v13238 = vunpack.c.l.b16 %v12703
    %v13239 = vunpack.c.l.b16 %v12713
    %v13240 = vunpack.c.l.b16 %v12727
    %v13241 = vunpack.c.l.b16 %v12737
    %v13242 = vunpack.c.l.b16 %v12751
    %v13243 = vunpack.c.l.b16 %v12761
    %v13244 = vunpack.c.l.b16 %v12775
    %v13245 = vunpack.c.l.b16 %v12785
    %v13246 = vunpack.c.l.b16 %v12799
    %v13247 = vunpack.c.l.b16 %v12809
    %v13248 = vunpack.c.l.b16 %v12823
    %v13249 = vunpack.c.l.b16 %v12833
    %v13250 = vunpack.c.l.b16 %v12847
    %v13251 = vunpack.c.l.b16 %v12857
    %v13252 = vunpack.c.l.b16 %v12871
    %v13253 = vunpack.c.l.b16 %v12881
    %v13254 = vunpack.c.l.b16 %v12895
    %v13255 = vunpack.c.l.b16 %v12905
    %v13256 = vunpack.c.l.b16 %v12919
    %v13257 = vunpack.c.l.b16 %v12929
    %v13258 = vunpack.c.l.b16 %v12943
    %v13259 = vunpack.c.l.b16 %v12953
    %v13260 = vunpack.c.l.b16 %v12967
    %v13261 = vunpack.c.l.b16 %v12977
    %v13262 = vunpack.c.l.b16 %v12991
    %v13263 = vunpack.c.l.b16 %v13001
    %v13264 = vunpack.c.l.b16 %v13015
    %v13265 = vunpack.c.l.b16 %v13025
    %v13266 = vunpack.c.l.b16 %v13039
    %v13267 = vunpack.c.l.b16 %v13049
    %v13268 = vunpack.c.l.b16 %v13063
    %v13269 = vunpack.c.l.b16 %v13073
    %v13270 = vunpack.c.l.b16 %v13087
    %v13271 = vunpack.c.l.b16 %v13097
    %v13272 = vunpack.c.l.b16 %v13111
    %v13273 = vunpack.c.l.b16 %v13121
    %v13274 = vunpack.c.l.b16 %v13135
    %v13275 = vunpack.c.l.b16 %v13145
    %v13276 = vunpack.c.l.b16 %v13159
    %v13277 = vunpack.c.l.b16 %v13169
    %v13278 = vunpack.c.l.b16 %v13183
    %v13279 = vunpack.c.l.b16 %v13193
    %v13280 = vunpack.c.l.b16 %v13207
    %v13281 = vunpack.c.l.b16 %v13217
    %v13282 = vpack.c.b16 %v13219, %v13218
    %v13283 = vpack.c.b16 %v13221, %v13220
    %v13284 = vpack.c.b16 %v13223, %v13222
    %v13285 = vpack.c.b16 %v13225, %v13224
    %v13286 = vpack.c.b16 %v13227, %v13226
    %v13287 = vpack.c.b16 %v13229, %v13228
    %v13288 = vpack.c.b16 %v13231, %v13230
    %v13289 = vpack.c.b16 %v13233, %v13232
    %v13290 = vpack.c.b16 %v13235, %v13234
    %v13291 = vpack.c.b16 %v13237, %v13236
    %v13292 = vpack.c.b16 %v13239, %v13238
    %v13293 = vpack.c.b16 %v13241, %v13240
    %v13294 = vpack.c.b16 %v13243, %v13242
    %v13295 = vpack.c.b16 %v13245, %v13244
    %v13296 = vpack.c.b16 %v13247, %v13246
    %v13297 = vpack.c.b16 %v13249, %v13248
    %v13298 = vpack.c.b16 %v13251, %v13250
    %v13299 = vpack.c.b16 %v13253, %v13252
    %v13300 = vpack.c.b16 %v13255, %v13254
    %v13301 = vpack.c.b16 %v13257, %v13256
    %v13302 = vpack.c.b16 %v13259, %v13258
    %v13303 = vpack.c.b16 %v13261, %v13260
    %v13304 = vpack.c.b16 %v13263, %v13262
    %v13305 = vpack.c.b16 %v13265, %v13264
    %v13306 = vpack.c.b16 %v13267, %v13266
    %v13307 = vpack.c.b16 %v13269, %v13268
    %v13308 = vpack.c.b16 %v13271, %v13270
    %v13309 = vpack.c.b16 %v13273, %v13272
    %v13310 = vpack.c.b16 %v13275, %v13274
    %v13311 = vpack.c.b16 %v13277, %v13276
    %v13312 = vpack.c.b16 %v13279, %v13278
    %v13313 = vpack.c.b16 %v13281, %v13280
    %13314 = vrot.lane.b32.xlu0 %v13282, 56
    %v13315 = vpop.permute.xlu0 %13314
    %13316 = vrot.lane.b32.xlu0 %v13283, 56
    %v13317 = vpop.permute.xlu0 %13316
    %13318 = vrot.lane.b32.xlu0 %v13284, 56
    %v13319 = vpop.permute.xlu0 %13318
    %13320 = vrot.lane.b32.xlu0 %v13285, 56
    %v13321 = vpop.permute.xlu0 %13320
    %13322 = vrot.lane.b32.xlu0 %v13286, 56
    %v13323 = vpop.permute.xlu0 %13322
    %13324 = vrot.lane.b32.xlu0 %v13287, 56
    %v13325 = vpop.permute.xlu0 %13324
    %13326 = vrot.lane.b32.xlu0 %v13288, 56
    %v13327 = vpop.permute.xlu0 %13326
    %13328 = vrot.lane.b32.xlu0 %v13289, 56
    %v13329 = vpop.permute.xlu0 %13328
    %13330 = vrot.lane.b32.xlu0 %v13290, 56
    %v13331 = vpop.permute.xlu0 %13330
    %13332 = vrot.lane.b32.xlu0 %v13291, 56
    %v13333 = vpop.permute.xlu0 %13332
    %13334 = vrot.lane.b32.xlu0 %v13292, 56
    %v13335 = vpop.permute.xlu0 %13334
    %13336 = vrot.lane.b32.xlu0 %v13293, 56
    %v13337 = vpop.permute.xlu0 %13336
    %13338 = vrot.lane.b32.xlu0 %v13294, 56
    %v13339 = vpop.permute.xlu0 %13338
    %13340 = vrot.lane.b32.xlu0 %v13295, 56
    %v13341 = vpop.permute.xlu0 %13340
    %13342 = vrot.lane.b32.xlu0 %v13296, 56
    %v13343 = vpop.permute.xlu0 %13342
    %13344 = vrot.lane.b32.xlu0 %v13297, 56
    %v13345 = vpop.permute.xlu0 %13344
    %13346 = vrot.lane.b32.xlu0 %v13298, 56
    %v13347 = vpop.permute.xlu0 %13346
    %13348 = vrot.lane.b32.xlu0 %v13299, 56
    %v13349 = vpop.permute.xlu0 %13348
    %13350 = vrot.lane.b32.xlu0 %v13300, 56
    %v13351 = vpop.permute.xlu0 %13350
    %13352 = vrot.lane.b32.xlu0 %v13301, 56
    %v13353 = vpop.permute.xlu0 %13352
    %13354 = vrot.lane.b32.xlu0 %v13302, 56
    %v13355 = vpop.permute.xlu0 %13354
    %13356 = vrot.lane.b32.xlu0 %v13303, 56
    %v13357 = vpop.permute.xlu0 %13356
    %13358 = vrot.lane.b32.xlu0 %v13304, 56
    %v13359 = vpop.permute.xlu0 %13358
    %13360 = vrot.lane.b32.xlu0 %v13305, 56
    %v13361 = vpop.permute.xlu0 %13360
    %13362 = vrot.lane.b32.xlu0 %v13306, 56
    %v13363 = vpop.permute.xlu0 %13362
    %13364 = vrot.lane.b32.xlu0 %v13307, 56
    %v13365 = vpop.permute.xlu0 %13364
    %13366 = vrot.lane.b32.xlu0 %v13308, 56
    %v13367 = vpop.permute.xlu0 %13366
    %13368 = vrot.lane.b32.xlu0 %v13309, 56
    %v13369 = vpop.permute.xlu0 %13368
    %13370 = vrot.lane.b32.xlu0 %v13310, 56
    %v13371 = vpop.permute.xlu0 %13370
    %13372 = vrot.lane.b32.xlu0 %v13311, 56
    %v13373 = vpop.permute.xlu0 %13372
    %13374 = vrot.lane.b32.xlu0 %v13312, 56
    %v13375 = vpop.permute.xlu0 %13374
    %13376 = vrot.lane.b32.xlu0 %v13313, 56
    %v13377 = vpop.permute.xlu0 %13376
    %vm13410 = vcmask 523712
    %13411 = vst.msk [vmem:[#allocation4] sm:$0xff] %vm13410, %v13315
    %13412 = vst.msk [vmem:[#allocation4 + $0x8] sm:$0xff] %vm13410, %v13317
    %13413 = vst.msk [vmem:[#allocation4 + $0x10] sm:$0xff] %vm13410, %v13319
    %13414 = vst.msk [vmem:[#allocation4 + $0x18] sm:$0xff] %vm13410, %v13321
    %13415 = vst.msk [vmem:[#allocation4 + $0x20] sm:$0xff] %vm13410, %v13323
    %13416 = vst.msk [vmem:[#allocation4 + $0x28] sm:$0xff] %vm13410, %v13325
    %13417 = vst.msk [vmem:[#allocation4 + $0x30] sm:$0xff] %vm13410, %v13327
    %13418 = vst.msk [vmem:[#allocation4 + $0x38] sm:$0xff] %vm13410, %v13329
    %13419 = vst.msk [vmem:[#allocation4 + $0x40] sm:$0xff] %vm13410, %v13331
    %13420 = vst.msk [vmem:[#allocation4 + $0x48] sm:$0xff] %vm13410, %v13333
    %13421 = vst.msk [vmem:[#allocation4 + $0x50] sm:$0xff] %vm13410, %v13335
    %13422 = vst.msk [vmem:[#allocation4 + $0x58] sm:$0xff] %vm13410, %v13337
    %13423 = vst.msk [vmem:[#allocation4 + $0x60] sm:$0xff] %vm13410, %v13339
    %13424 = vst.msk [vmem:[#allocation4 + $0x68] sm:$0xff] %vm13410, %v13341
    %13425 = vst.msk [vmem:[#allocation4 + $0x70] sm:$0xff] %vm13410, %v13343
    %13426 = vst.msk [vmem:[#allocation4 + $0x78] sm:$0xff] %vm13410, %v13345
    %13427 = vst.msk [vmem:[#allocation4 + $0x80] sm:$0xff] %vm13410, %v13347
    %13428 = vst.msk [vmem:[#allocation4 + $0x88] sm:$0xff] %vm13410, %v13349
    %13429 = vst.msk [vmem:[#allocation4 + $0x90] sm:$0xff] %vm13410, %v13351
    %13430 = vst.msk [vmem:[#allocation4 + $0x98] sm:$0xff] %vm13410, %v13353
    %13431 = vst.msk [vmem:[#allocation4 + $0xa0] sm:$0xff] %vm13410, %v13355
    %13432 = vst.msk [vmem:[#allocation4 + $0xa8] sm:$0xff] %vm13410, %v13357
    %13433 = vst.msk [vmem:[#allocation4 + $0xb0] sm:$0xff] %vm13410, %v13359
    %13434 = vst.msk [vmem:[#allocation4 + $0xb8] sm:$0xff] %vm13410, %v13361
    %13435 = vst.msk [vmem:[#allocation4 + $0xc0] sm:$0xff] %vm13410, %v13363
    %13436 = vst.msk [vmem:[#allocation4 + $0xc8] sm:$0xff] %vm13410, %v13365
    %13437 = vst.msk [vmem:[#allocation4 + $0xd0] sm:$0xff] %vm13410, %v13367
    %13438 = vst.msk [vmem:[#allocation4 + $0xd8] sm:$0xff] %vm13410, %v13369
    %13439 = vst.msk [vmem:[#allocation4 + $0xe0] sm:$0xff] %vm13410, %v13371
    %13440 = vst.msk [vmem:[#allocation4 + $0xe8] sm:$0xff] %vm13410, %v13373
    %13441 = vst.msk [vmem:[#allocation4 + $0xf0] sm:$0xff] %vm13410, %v13375
    %13442 = vst.msk [vmem:[#allocation4 + $0xf8] sm:$0xff] %vm13410, %v13377
    %v13443 = vld [vmem:[%s12000] sm:$0xe]
    %v13444 = vld [vmem:[%s12000 + $0x4] sm:$0xf]
    %v13445 = vld [vmem:[%s12000 + $0x8] sm:$0x1]
    %v13446 = vld [vmem:[%s12000 + $0xc] sm:$0xe]
    %v13447 = vld [vmem:[%s12000 + $0x10] sm:$0xf]
    %v13448 = vld [vmem:[%s12000 + $0x14] sm:$0x1]
    %v13449 = vld [vmem:[%s12000 + $0x18] sm:$0xe]
    %v13450 = vld [vmem:[%s12000 + $0x1c] sm:$0xf]
    %v13451 = vld [vmem:[%s12000 + $0x20] sm:$0x1]
    %v13452 = vld [vmem:[%s12000 + $0x24] sm:$0xe]
    %v13453 = vld [vmem:[%s12000 + $0x28] sm:$0xf]
    %v13454 = vld [vmem:[%s12000 + $0x2c] sm:$0x1]
    %v13455 = vld [vmem:[%s12000 + $0x30] sm:$0xe]
    %v13456 = vld [vmem:[%s12000 + $0x34] sm:$0xf]
    %v13457 = vld [vmem:[%s12000 + $0x38] sm:$0x1]
    %v13458 = vld [vmem:[%s12000 + $0x3c] sm:$0xe]
    %v13459 = vld [vmem:[%s12000 + $0x40] sm:$0xf]
    %v13460 = vld [vmem:[%s12000 + $0x44] sm:$0x1]
    %v13461 = vld [vmem:[%s12000 + $0x48] sm:$0xe]
    %v13462 = vld [vmem:[%s12000 + $0x4c] sm:$0xf]
    %v13463 = vld [vmem:[%s12000 + $0x50] sm:$0x1]
    %v13464 = vld [vmem:[%s12000 + $0x54] sm:$0xe]
    %v13465 = vld [vmem:[%s12000 + $0x58] sm:$0xf]
    %v13466 = vld [vmem:[%s12000 + $0x5c] sm:$0x1]
    %v13467 = vld [vmem:[%s12000 + $0x60] sm:$0xe]
    %v13468 = vld [vmem:[%s12000 + $0x64] sm:$0xf]
    %v13469 = vld [vmem:[%s12000 + $0x68] sm:$0x1]
    %v13470 = vld [vmem:[%s12000 + $0x6c] sm:$0xe]
    %v13471 = vld [vmem:[%s12000 + $0x70] sm:$0xf]
    %v13472 = vld [vmem:[%s12000 + $0x74] sm:$0x1]
    %v13473 = vld [vmem:[%s12000 + $0x78] sm:$0xe]
    %v13474 = vld [vmem:[%s12000 + $0x7c] sm:$0xf]
    %v13475 = vld [vmem:[%s12000 + $0x80] sm:$0x1]
    %v13476 = vld [vmem:[%s12000 + $0x84] sm:$0xe]
    %v13477 = vld [vmem:[%s12000 + $0x88] sm:$0xf]
    %v13478 = vld [vmem:[%s12000 + $0x8c] sm:$0x1]
    %v13479 = vld [vmem:[%s12000 + $0x90] sm:$0xe]
    %v13480 = vld [vmem:[%s12000 + $0x94] sm:$0xf]
    %v13481 = vld [vmem:[%s12000 + $0x98] sm:$0x1]
    %v13482 = vld [vmem:[%s12000 + $0x9c] sm:$0xe]
    %v13483 = vld [vmem:[%s12000 + $0xa0] sm:$0xf]
    %v13484 = vld [vmem:[%s12000 + $0xa4] sm:$0x1]
    %v13485 = vld [vmem:[%s12000 + $0xa8] sm:$0xe]
    %v13486 = vld [vmem:[%s12000 + $0xac] sm:$0xf]
    %v13487 = vld [vmem:[%s12000 + $0xb0] sm:$0x1]
    %v13488 = vld [vmem:[%s12000 + $0xb4] sm:$0xe]
    %v13489 = vld [vmem:[%s12000 + $0xb8] sm:$0xf]
    %v13490 = vld [vmem:[%s12000 + $0xbc] sm:$0x1]
    %v13491 = vld [vmem:[%s12000 + $0xd8] sm:$0xe]
    %v13492 = vld [vmem:[%s12000 + $0xdc] sm:$0xf]
    %v13493 = vld [vmem:[%s12000 + $0xe0] sm:$0x1]
    %v13494 = vld [vmem:[%s12000 + $0xe4] sm:$0xe]
    %v13495 = vld [vmem:[%s12000 + $0xe8] sm:$0xf]
    %v13496 = vld [vmem:[%s12000 + $0xec] sm:$0x1]
    %v13497 = vld [vmem:[%s12000 + $0xf0] sm:$0xe]
    %v13498 = vld [vmem:[%s12000 + $0xf4] sm:$0xf]
    %v13499 = vld [vmem:[%s12000 + $0xf8] sm:$0x1]
    %v13500 = vld [vmem:[%s12000 + $0xfc] sm:$0xe]
    %v13501 = vld [vmem:[%s12000 + $0x100] sm:$0xf]
    %v13502 = vld [vmem:[%s12000 + $0x104] sm:$0x1]
    %v13503 = vld [vmem:[%s12000 + $0x108] sm:$0xe]
    %v13504 = vld [vmem:[%s12000 + $0x10c] sm:$0xf]
    %v13505 = vld [vmem:[%s12000 + $0x110] sm:$0x1]
    %v13506 = vld [vmem:[%s12000 + $0x114] sm:$0xe]
    %v13507 = vld [vmem:[%s12000 + $0x118] sm:$0xf]
    %v13508 = vld [vmem:[%s12000 + $0x11c] sm:$0x1]
    %v13509 = vld [vmem:[%s12000 + $0x120] sm:$0xe]
    %v13510 = vld [vmem:[%s12000 + $0x124] sm:$0xf]
    %v13511 = vld [vmem:[%s12000 + $0x128] sm:$0x1]
    %v13512 = vld [vmem:[%s12000 + $0x12c] sm:$0xe]
    %v13513 = vld [vmem:[%s12000 + $0x130] sm:$0xf]
    %v13514 = vld [vmem:[%s12000 + $0x134] sm:$0x1]
    %v13515 = vld [vmem:[%s12000 + $0x138] sm:$0xe]
    %v13516 = vld [vmem:[%s12000 + $0x13c] sm:$0xf]
    %v13517 = vld [vmem:[%s12000 + $0x140] sm:$0x1]
    %v13518 = vld [vmem:[%s12000 + $0x144] sm:$0xe]
    %v13519 = vld [vmem:[%s12000 + $0x148] sm:$0xf]
    %v13520 = vld [vmem:[%s12000 + $0x14c] sm:$0x1]
    %v13521 = vld [vmem:[%s12000 + $0x150] sm:$0xe]
    %v13522 = vld [vmem:[%s12000 + $0x154] sm:$0xf]
    %v13523 = vld [vmem:[%s12000 + $0x158] sm:$0x1]
    %v13524 = vld [vmem:[%s12000 + $0x15c] sm:$0xe]
    %v13525 = vld [vmem:[%s12000 + $0x160] sm:$0xf]
    %v13526 = vld [vmem:[%s12000 + $0x164] sm:$0x1]
    %v13527 = vld [vmem:[%s12000 + $0x168] sm:$0xe]
    %v13528 = vld [vmem:[%s12000 + $0x16c] sm:$0xf]
    %v13529 = vld [vmem:[%s12000 + $0x170] sm:$0x1]
    %v13530 = vld [vmem:[%s12000 + $0x174] sm:$0xe]
    %v13531 = vld [vmem:[%s12000 + $0x178] sm:$0xf]
    %v13532 = vld [vmem:[%s12000 + $0x17c] sm:$0x1]
    %v13533 = vld [vmem:[%s12000 + $0x180] sm:$0xe]
    %v13534 = vld [vmem:[%s12000 + $0x184] sm:$0xf]
    %v13535 = vld [vmem:[%s12000 + $0x188] sm:$0x1]
    %v13536 = vld [vmem:[%s12000 + $0x18c] sm:$0xe]
    %v13537 = vld [vmem:[%s12000 + $0x190] sm:$0xf]
    %v13538 = vld [vmem:[%s12000 + $0x194] sm:$0x1]
    %v13635 = vrot.slane %v13443, 5
    %v13636 = vrot.slane %v13635, 4
    %v13637 = vrot.slane %v13444, 5
    %v13638 = vsel %vm1609, %v13636, %v13637
    %v13639 = vrot.slane %v13637, 4
    %v13640 = vrot.slane %v13445, 5
    %v13641 = vsel %vm1609, %v13639, %v13640
    %v13642 = vrot.slane %v13446, 5
    %v13643 = vrot.slane %v13642, 4
    %v13644 = vrot.slane %v13447, 5
    %v13645 = vsel %vm1609, %v13643, %v13644
    %v13646 = vrot.slane %v13644, 4
    %v13647 = vrot.slane %v13448, 5
    %v13648 = vsel %vm1609, %v13646, %v13647
    %v13649 = vrot.slane %v13449, 5
    %v13650 = vrot.slane %v13649, 4
    %v13651 = vrot.slane %v13450, 5
    %v13652 = vsel %vm1609, %v13650, %v13651
    %v13653 = vrot.slane %v13651, 4
    %v13654 = vrot.slane %v13451, 5
    %v13655 = vsel %vm1609, %v13653, %v13654
    %v13656 = vrot.slane %v13452, 5
    %v13657 = vrot.slane %v13656, 4
    %v13658 = vrot.slane %v13453, 5
    %v13659 = vsel %vm1609, %v13657, %v13658
    %v13660 = vrot.slane %v13658, 4
    %v13661 = vrot.slane %v13454, 5
    %v13662 = vsel %vm1609, %v13660, %v13661
    %v13663 = vrot.slane %v13455, 5
    %v13664 = vrot.slane %v13663, 4
    %v13665 = vrot.slane %v13456, 5
    %v13666 = vsel %vm1609, %v13664, %v13665
    %v13667 = vrot.slane %v13665, 4
    %v13668 = vrot.slane %v13457, 5
    %v13669 = vsel %vm1609, %v13667, %v13668
    %v13670 = vrot.slane %v13458, 5
    %v13671 = vrot.slane %v13670, 4
    %v13672 = vrot.slane %v13459, 5
    %v13673 = vsel %vm1609, %v13671, %v13672
    %v13674 = vrot.slane %v13672, 4
    %v13675 = vrot.slane %v13460, 5
    %v13676 = vsel %vm1609, %v13674, %v13675
    %v13677 = vrot.slane %v13461, 5
    %v13678 = vrot.slane %v13677, 4
    %v13679 = vrot.slane %v13462, 5
    %v13680 = vsel %vm1609, %v13678, %v13679
    %v13681 = vrot.slane %v13679, 4
    %v13682 = vrot.slane %v13463, 5
    %v13683 = vsel %vm1609, %v13681, %v13682
    %v13684 = vrot.slane %v13464, 5
    %v13685 = vrot.slane %v13684, 4
    %v13686 = vrot.slane %v13465, 5
    %v13687 = vsel %vm1609, %v13685, %v13686
    %v13688 = vrot.slane %v13686, 4
    %v13689 = vrot.slane %v13466, 5
    %v13690 = vsel %vm1609, %v13688, %v13689
    %v13691 = vrot.slane %v13467, 5
    %v13692 = vrot.slane %v13691, 4
    %v13693 = vrot.slane %v13468, 5
    %v13694 = vsel %vm1609, %v13692, %v13693
    %v13695 = vrot.slane %v13693, 4
    %v13696 = vrot.slane %v13469, 5
    %v13697 = vsel %vm1609, %v13695, %v13696
    %v13698 = vrot.slane %v13470, 5
    %v13699 = vrot.slane %v13698, 4
    %v13700 = vrot.slane %v13471, 5
    %v13701 = vsel %vm1609, %v13699, %v13700
    %v13702 = vrot.slane %v13700, 4
    %v13703 = vrot.slane %v13472, 5
    %v13704 = vsel %vm1609, %v13702, %v13703
    %v13705 = vrot.slane %v13473, 5
    %v13706 = vrot.slane %v13705, 4
    %v13707 = vrot.slane %v13474, 5
    %v13708 = vsel %vm1609, %v13706, %v13707
    %v13709 = vrot.slane %v13707, 4
    %v13710 = vrot.slane %v13475, 5
    %v13711 = vsel %vm1609, %v13709, %v13710
    %v13712 = vrot.slane %v13476, 5
    %v13713 = vrot.slane %v13712, 4
    %v13714 = vrot.slane %v13477, 5
    %v13715 = vsel %vm1609, %v13713, %v13714
    %v13716 = vrot.slane %v13714, 4
    %v13717 = vrot.slane %v13478, 5
    %v13718 = vsel %vm1609, %v13716, %v13717
    %v13719 = vrot.slane %v13479, 5
    %v13720 = vrot.slane %v13719, 4
    %v13721 = vrot.slane %v13480, 5
    %v13722 = vsel %vm1609, %v13720, %v13721
    %v13723 = vrot.slane %v13721, 4
    %v13724 = vrot.slane %v13481, 5
    %v13725 = vsel %vm1609, %v13723, %v13724
    %v13726 = vrot.slane %v13482, 5
    %v13727 = vrot.slane %v13726, 4
    %v13728 = vrot.slane %v13483, 5
    %v13729 = vsel %vm1609, %v13727, %v13728
    %v13730 = vrot.slane %v13728, 4
    %v13731 = vrot.slane %v13484, 5
    %v13732 = vsel %vm1609, %v13730, %v13731
    %v13733 = vrot.slane %v13485, 5
    %v13734 = vrot.slane %v13733, 4
    %v13735 = vrot.slane %v13486, 5
    %v13736 = vsel %vm1609, %v13734, %v13735
    %v13737 = vrot.slane %v13735, 4
    %v13738 = vrot.slane %v13487, 5
    %v13739 = vsel %vm1609, %v13737, %v13738
    %v13740 = vrot.slane %v13488, 5
    %v13741 = vrot.slane %v13740, 4
    %v13742 = vrot.slane %v13489, 5
    %v13743 = vsel %vm1609, %v13741, %v13742
    %v13744 = vrot.slane %v13742, 4
    %v13745 = vrot.slane %v13490, 5
    %v13746 = vsel %vm1609, %v13744, %v13745
    %v13747 = vrot.slane %v13491, 5
    %v13748 = vrot.slane %v13747, 4
    %v13749 = vrot.slane %v13492, 5
    %v13750 = vsel %vm1609, %v13748, %v13749
    %v13751 = vrot.slane %v13749, 4
    %v13752 = vrot.slane %v13493, 5
    %v13753 = vsel %vm1609, %v13751, %v13752
    %v13754 = vrot.slane %v13494, 5
    %v13755 = vrot.slane %v13754, 4
    %v13756 = vrot.slane %v13495, 5
    %v13757 = vsel %vm1609, %v13755, %v13756
    %v13758 = vrot.slane %v13756, 4
    %v13759 = vrot.slane %v13496, 5
    %v13760 = vsel %vm1609, %v13758, %v13759
    %v13761 = vrot.slane %v13497, 5
    %v13762 = vrot.slane %v13761, 4
    %v13763 = vrot.slane %v13498, 5
    %v13764 = vsel %vm1609, %v13762, %v13763
    %v13765 = vrot.slane %v13763, 4
    %v13766 = vrot.slane %v13499, 5
    %v13767 = vsel %vm1609, %v13765, %v13766
    %v13768 = vrot.slane %v13500, 5
    %v13769 = vrot.slane %v13768, 4
    %v13770 = vrot.slane %v13501, 5
    %v13771 = vsel %vm1609, %v13769, %v13770
    %v13772 = vrot.slane %v13770, 4
    %v13773 = vrot.slane %v13502, 5
    %v13774 = vsel %vm1609, %v13772, %v13773
    %v13775 = vrot.slane %v13503, 5
    %v13776 = vrot.slane %v13775, 4
    %v13777 = vrot.slane %v13504, 5
    %v13778 = vsel %vm1609, %v13776, %v13777
    %v13779 = vrot.slane %v13777, 4
    %v13780 = vrot.slane %v13505, 5
    %v13781 = vsel %vm1609, %v13779, %v13780
    %v13782 = vrot.slane %v13506, 5
    %v13783 = vrot.slane %v13782, 4
    %v13784 = vrot.slane %v13507, 5
    %v13785 = vsel %vm1609, %v13783, %v13784
    %v13786 = vrot.slane %v13784, 4
    %v13787 = vrot.slane %v13508, 5
    %v13788 = vsel %vm1609, %v13786, %v13787
    %v13789 = vrot.slane %v13509, 5
    %v13790 = vrot.slane %v13789, 4
    %v13791 = vrot.slane %v13510, 5
    %v13792 = vsel %vm1609, %v13790, %v13791
    %v13793 = vrot.slane %v13791, 4
    %v13794 = vrot.slane %v13511, 5
    %v13795 = vsel %vm1609, %v13793, %v13794
    %v13796 = vrot.slane %v13512, 5
    %v13797 = vrot.slane %v13796, 4
    %v13798 = vrot.slane %v13513, 5
    %v13799 = vsel %vm1609, %v13797, %v13798
    %v13800 = vrot.slane %v13798, 4
    %v13801 = vrot.slane %v13514, 5
    %v13802 = vsel %vm1609, %v13800, %v13801
    %v13803 = vrot.slane %v13515, 5
    %v13804 = vrot.slane %v13803, 4
    %v13805 = vrot.slane %v13516, 5
    %v13806 = vsel %vm1609, %v13804, %v13805
    %v13807 = vrot.slane %v13805, 4
    %v13808 = vrot.slane %v13517, 5
    %v13809 = vsel %vm1609, %v13807, %v13808
    %v13810 = vrot.slane %v13518, 5
    %v13811 = vrot.slane %v13810, 4
    %v13812 = vrot.slane %v13519, 5
    %v13813 = vsel %vm1609, %v13811, %v13812
    %v13814 = vrot.slane %v13812, 4
    %v13815 = vrot.slane %v13520, 5
    %v13816 = vsel %vm1609, %v13814, %v13815
    %v13817 = vrot.slane %v13521, 5
    %v13818 = vrot.slane %v13817, 4
    %v13819 = vrot.slane %v13522, 5
    %v13820 = vsel %vm1609, %v13818, %v13819
    %v13821 = vrot.slane %v13819, 4
    %v13822 = vrot.slane %v13523, 5
    %v13823 = vsel %vm1609, %v13821, %v13822
    %v13824 = vrot.slane %v13524, 5
    %v13825 = vrot.slane %v13824, 4
    %v13826 = vrot.slane %v13525, 5
    %v13827 = vsel %vm1609, %v13825, %v13826
    %v13828 = vrot.slane %v13826, 4
    %v13829 = vrot.slane %v13526, 5
    %v13830 = vsel %vm1609, %v13828, %v13829
    %v13831 = vrot.slane %v13527, 5
    %v13832 = vrot.slane %v13831, 4
    %v13833 = vrot.slane %v13528, 5
    %v13834 = vsel %vm1609, %v13832, %v13833
    %v13835 = vrot.slane %v13833, 4
    %v13836 = vrot.slane %v13529, 5
    %v13837 = vsel %vm1609, %v13835, %v13836
    %v13838 = vrot.slane %v13530, 5
    %v13839 = vrot.slane %v13838, 4
    %v13840 = vrot.slane %v13531, 5
    %v13841 = vsel %vm1609, %v13839, %v13840
    %v13842 = vrot.slane %v13840, 4
    %v13843 = vrot.slane %v13532, 5
    %v13844 = vsel %vm1609, %v13842, %v13843
    %v13845 = vrot.slane %v13533, 5
    %v13846 = vrot.slane %v13845, 4
    %v13847 = vrot.slane %v13534, 5
    %v13848 = vsel %vm1609, %v13846, %v13847
    %v13849 = vrot.slane %v13847, 4
    %v13850 = vrot.slane %v13535, 5
    %v13851 = vsel %vm1609, %v13849, %v13850
    %v13852 = vrot.slane %v13536, 5
    %v13853 = vrot.slane %v13852, 4
    %v13854 = vrot.slane %v13537, 5
    %v13855 = vsel %vm1609, %v13853, %v13854
    %v13856 = vrot.slane %v13854, 4
    %v13857 = vrot.slane %v13538, 5
    %v13858 = vsel %vm1609, %v13856, %v13857
    %v13859 = vunpack.c.l.b16 %v13638
    %v13860 = vunpack.c.l.b16 %v13641
    %v13861 = vunpack.c.l.b16 %v13645
    %v13862 = vunpack.c.l.b16 %v13648
    %v13863 = vunpack.c.l.b16 %v13652
    %v13864 = vunpack.c.l.b16 %v13655
    %v13865 = vunpack.c.l.b16 %v13659
    %v13866 = vunpack.c.l.b16 %v13662
    %v13867 = vunpack.c.l.b16 %v13666
    %v13868 = vunpack.c.l.b16 %v13669
    %v13869 = vunpack.c.l.b16 %v13673
    %v13870 = vunpack.c.l.b16 %v13676
    %v13871 = vunpack.c.l.b16 %v13680
    %v13872 = vunpack.c.l.b16 %v13683
    %v13873 = vunpack.c.l.b16 %v13687
    %v13874 = vunpack.c.l.b16 %v13690
    %v13875 = vunpack.c.l.b16 %v13694
    %v13876 = vunpack.c.l.b16 %v13697
    %v13877 = vunpack.c.l.b16 %v13701
    %v13878 = vunpack.c.l.b16 %v13704
    %v13879 = vunpack.c.l.b16 %v13708
    %v13880 = vunpack.c.l.b16 %v13711
    %v13881 = vunpack.c.l.b16 %v13715
    %v13882 = vunpack.c.l.b16 %v13718
    %v13883 = vunpack.c.l.b16 %v13722
    %v13884 = vunpack.c.l.b16 %v13725
    %v13885 = vunpack.c.l.b16 %v13729
    %v13886 = vunpack.c.l.b16 %v13732
    %v13887 = vunpack.c.l.b16 %v13736
    %v13888 = vunpack.c.l.b16 %v13739
    %v13889 = vunpack.c.l.b16 %v13743
    %v13890 = vunpack.c.l.b16 %v13746
    %v13891 = vunpack.c.l.b16 %v13750
    %v13892 = vunpack.c.l.b16 %v13753
    %v13893 = vunpack.c.l.b16 %v13757
    %v13894 = vunpack.c.l.b16 %v13760
    %v13895 = vunpack.c.l.b16 %v13764
    %v13896 = vunpack.c.l.b16 %v13767
    %v13897 = vunpack.c.l.b16 %v13771
    %v13898 = vunpack.c.l.b16 %v13774
    %v13899 = vunpack.c.l.b16 %v13778
    %v13900 = vunpack.c.l.b16 %v13781
    %v13901 = vunpack.c.l.b16 %v13785
    %v13902 = vunpack.c.l.b16 %v13788
    %v13903 = vunpack.c.l.b16 %v13792
    %v13904 = vunpack.c.l.b16 %v13795
    %v13905 = vunpack.c.l.b16 %v13799
    %v13906 = vunpack.c.l.b16 %v13802
    %v13907 = vunpack.c.l.b16 %v13806
    %v13908 = vunpack.c.l.b16 %v13809
    %v13909 = vunpack.c.l.b16 %v13813
    %v13910 = vunpack.c.l.b16 %v13816
    %v13911 = vunpack.c.l.b16 %v13820
    %v13912 = vunpack.c.l.b16 %v13823
    %v13913 = vunpack.c.l.b16 %v13827
    %v13914 = vunpack.c.l.b16 %v13830
    %v13915 = vunpack.c.l.b16 %v13834
    %v13916 = vunpack.c.l.b16 %v13837
    %v13917 = vunpack.c.l.b16 %v13841
    %v13918 = vunpack.c.l.b16 %v13844
    %v13919 = vunpack.c.l.b16 %v13848
    %v13920 = vunpack.c.l.b16 %v13851
    %v13921 = vunpack.c.l.b16 %v13855
    %v13922 = vunpack.c.l.b16 %v13858
    %v13923 = vpack.c.b16 %v13860, %v13859
    %v13924 = vpack.c.b16 %v13862, %v13861
    %v13925 = vpack.c.b16 %v13864, %v13863
    %v13926 = vpack.c.b16 %v13866, %v13865
    %v13927 = vpack.c.b16 %v13868, %v13867
    %v13928 = vpack.c.b16 %v13870, %v13869
    %v13929 = vpack.c.b16 %v13872, %v13871
    %v13930 = vpack.c.b16 %v13874, %v13873
    %v13931 = vpack.c.b16 %v13876, %v13875
    %v13932 = vpack.c.b16 %v13878, %v13877
    %v13933 = vpack.c.b16 %v13880, %v13879
    %v13934 = vpack.c.b16 %v13882, %v13881
    %v13935 = vpack.c.b16 %v13884, %v13883
    %v13936 = vpack.c.b16 %v13886, %v13885
    %v13937 = vpack.c.b16 %v13888, %v13887
    %v13938 = vpack.c.b16 %v13890, %v13889
    %v13939 = vpack.c.b16 %v13892, %v13891
    %v13940 = vpack.c.b16 %v13894, %v13893
    %v13941 = vpack.c.b16 %v13896, %v13895
    %v13942 = vpack.c.b16 %v13898, %v13897
    %v13943 = vpack.c.b16 %v13900, %v13899
    %v13944 = vpack.c.b16 %v13902, %v13901
    %v13945 = vpack.c.b16 %v13904, %v13903
    %v13946 = vpack.c.b16 %v13906, %v13905
    %v13947 = vpack.c.b16 %v13908, %v13907
    %v13948 = vpack.c.b16 %v13910, %v13909
    %v13949 = vpack.c.b16 %v13912, %v13911
    %v13950 = vpack.c.b16 %v13914, %v13913
    %v13951 = vpack.c.b16 %v13916, %v13915
    %v13952 = vpack.c.b16 %v13918, %v13917
    %v13953 = vpack.c.b16 %v13920, %v13919
    %v13954 = vpack.c.b16 %v13922, %v13921
    %13955 = vrot.lane.b32.xlu0 %v13923, 64
    %v13956 = vpop.permute.xlu0 %13955
    %13957 = vrot.lane.b32.xlu0 %v13924, 64
    %v13958 = vpop.permute.xlu0 %13957
    %13959 = vrot.lane.b32.xlu0 %v13925, 64
    %v13960 = vpop.permute.xlu0 %13959
    %13961 = vrot.lane.b32.xlu0 %v13926, 64
    %v13962 = vpop.permute.xlu0 %13961
    %13963 = vrot.lane.b32.xlu0 %v13927, 64
    %v13964 = vpop.permute.xlu0 %13963
    %13965 = vrot.lane.b32.xlu0 %v13928, 64
    %v13966 = vpop.permute.xlu0 %13965
    %13967 = vrot.lane.b32.xlu0 %v13929, 64
    %v13968 = vpop.permute.xlu0 %13967
    %13969 = vrot.lane.b32.xlu0 %v13930, 64
    %v13970 = vpop.permute.xlu0 %13969
    %13971 = vrot.lane.b32.xlu0 %v13931, 64
    %v13972 = vpop.permute.xlu0 %13971
    %13973 = vrot.lane.b32.xlu0 %v13932, 64
    %v13974 = vpop.permute.xlu0 %13973
    %13975 = vrot.lane.b32.xlu0 %v13933, 64
    %v13976 = vpop.permute.xlu0 %13975
    %13977 = vrot.lane.b32.xlu0 %v13934, 64
    %v13978 = vpop.permute.xlu0 %13977
    %13979 = vrot.lane.b32.xlu0 %v13935, 64
    %v13980 = vpop.permute.xlu0 %13979
    %13981 = vrot.lane.b32.xlu0 %v13936, 64
    %v13982 = vpop.permute.xlu0 %13981
    %13983 = vrot.lane.b32.xlu0 %v13937, 64
    %v13984 = vpop.permute.xlu0 %13983
    %13985 = vrot.lane.b32.xlu0 %v13938, 64
    %v13986 = vpop.permute.xlu0 %13985
    %13987 = vrot.lane.b32.xlu0 %v13939, 64
    %v13988 = vpop.permute.xlu0 %13987
    %13989 = vrot.lane.b32.xlu0 %v13940, 64
    %v13990 = vpop.permute.xlu0 %13989
    %13991 = vrot.lane.b32.xlu0 %v13941, 64
    %v13992 = vpop.permute.xlu0 %13991
    %13993 = vrot.lane.b32.xlu0 %v13942, 64
    %v13994 = vpop.permute.xlu0 %13993
    %13995 = vrot.lane.b32.xlu0 %v13943, 64
    %v13996 = vpop.permute.xlu0 %13995
    %13997 = vrot.lane.b32.xlu0 %v13944, 64
    %v13998 = vpop.permute.xlu0 %13997
    %13999 = vrot.lane.b32.xlu0 %v13945, 64
    %v14000 = vpop.permute.xlu0 %13999
    %14001 = vrot.lane.b32.xlu0 %v13946, 64
    %v14002 = vpop.permute.xlu0 %14001
    %14003 = vrot.lane.b32.xlu0 %v13947, 64
    %v14004 = vpop.permute.xlu0 %14003
    %14005 = vrot.lane.b32.xlu0 %v13948, 64
    %v14006 = vpop.permute.xlu0 %14005
    %14007 = vrot.lane.b32.xlu0 %v13949, 64
    %v14008 = vpop.permute.xlu0 %14007
    %14009 = vrot.lane.b32.xlu0 %v13950, 64
    %v14010 = vpop.permute.xlu0 %14009
    %14011 = vrot.lane.b32.xlu0 %v13951, 64
    %v14012 = vpop.permute.xlu0 %14011
    %14013 = vrot.lane.b32.xlu0 %v13952, 64
    %v14014 = vpop.permute.xlu0 %14013
    %14015 = vrot.lane.b32.xlu0 %v13953, 64
    %v14016 = vpop.permute.xlu0 %14015
    %14017 = vrot.lane.b32.xlu0 %v13954, 64
    %v14018 = vpop.permute.xlu0 %14017
    %vm14051 = vcmask 589312
    %14052 = vst.msk [vmem:[#allocation4] sm:$0xff] %vm14051, %v13956
    %14053 = vst.msk [vmem:[#allocation4 + $0x8] sm:$0xff] %vm14051, %v13958
    %14054 = vst.msk [vmem:[#allocation4 + $0x10] sm:$0xff] %vm14051, %v13960
    %14055 = vst.msk [vmem:[#allocation4 + $0x18] sm:$0xff] %vm14051, %v13962
    %14056 = vst.msk [vmem:[#allocation4 + $0x20] sm:$0xff] %vm14051, %v13964
    %14057 = vst.msk [vmem:[#allocation4 + $0x28] sm:$0xff] %vm14051, %v13966
    %14058 = vst.msk [vmem:[#allocation4 + $0x30] sm:$0xff] %vm14051, %v13968
    %14059 = vst.msk [vmem:[#allocation4 + $0x38] sm:$0xff] %vm14051, %v13970
    %14060 = vst.msk [vmem:[#allocation4 + $0x40] sm:$0xff] %vm14051, %v13972
    %14061 = vst.msk [vmem:[#allocation4 + $0x48] sm:$0xff] %vm14051, %v13974
    %14062 = vst.msk [vmem:[#allocation4 + $0x50] sm:$0xff] %vm14051, %v13976
    %14063 = vst.msk [vmem:[#allocation4 + $0x58] sm:$0xff] %vm14051, %v13978
    %14064 = vst.msk [vmem:[#allocation4 + $0x60] sm:$0xff] %vm14051, %v13980
    %14065 = vst.msk [vmem:[#allocation4 + $0x68] sm:$0xff] %vm14051, %v13982
    %14066 = vst.msk [vmem:[#allocation4 + $0x70] sm:$0xff] %vm14051, %v13984
    %14067 = vst.msk [vmem:[#allocation4 + $0x78] sm:$0xff] %vm14051, %v13986
    %14068 = vst.msk [vmem:[#allocation4 + $0x80] sm:$0xff] %vm14051, %v13988
    %14069 = vst.msk [vmem:[#allocation4 + $0x88] sm:$0xff] %vm14051, %v13990
    %14070 = vst.msk [vmem:[#allocation4 + $0x90] sm:$0xff] %vm14051, %v13992
    %14071 = vst.msk [vmem:[#allocation4 + $0x98] sm:$0xff] %vm14051, %v13994
    %14072 = vst.msk [vmem:[#allocation4 + $0xa0] sm:$0xff] %vm14051, %v13996
    %14073 = vst.msk [vmem:[#allocation4 + $0xa8] sm:$0xff] %vm14051, %v13998
    %14074 = vst.msk [vmem:[#allocation4 + $0xb0] sm:$0xff] %vm14051, %v14000
    %14075 = vst.msk [vmem:[#allocation4 + $0xb8] sm:$0xff] %vm14051, %v14002
    %14076 = vst.msk [vmem:[#allocation4 + $0xc0] sm:$0xff] %vm14051, %v14004
    %14077 = vst.msk [vmem:[#allocation4 + $0xc8] sm:$0xff] %vm14051, %v14006
    %14078 = vst.msk [vmem:[#allocation4 + $0xd0] sm:$0xff] %vm14051, %v14008
    %14079 = vst.msk [vmem:[#allocation4 + $0xd8] sm:$0xff] %vm14051, %v14010
    %14080 = vst.msk [vmem:[#allocation4 + $0xe0] sm:$0xff] %vm14051, %v14012
    %14081 = vst.msk [vmem:[#allocation4 + $0xe8] sm:$0xff] %vm14051, %v14014
    %14082 = vst.msk [vmem:[#allocation4 + $0xf0] sm:$0xff] %vm14051, %v14016
    %14083 = vst.msk [vmem:[#allocation4 + $0xf8] sm:$0xff] %vm14051, %v14018
    %v14084 = vld [vmem:[%s6] sm:$0xff]
    %v14085 = vld [vmem:[%s7] sm:$0xff]
    %v14086 = vld [vmem:[%s8] sm:$0xff]
    %v14087 = vld [vmem:[%s5] sm:$0xf]
    %v14088 = vld [vmem:[#allocation4] sm:$0xff]
    %v14089 = vld [vmem:[#allocation4 + $0x8] sm:$0xff]
    %v14090 = vld [vmem:[#allocation4 + $0x10] sm:$0xff]
    %v14091 = vld [vmem:[#allocation4 + $0x18] sm:$0xff]
    %v14092 = vld [vmem:[#allocation4 + $0x20] sm:$0xff]
    %v14093 = vld [vmem:[#allocation4 + $0x28] sm:$0xff]
    %v14094 = vld [vmem:[#allocation4 + $0x30] sm:$0xff]
    %v14095 = vld [vmem:[#allocation4 + $0x38] sm:$0xff]
    %v14096 = vld [vmem:[#allocation4 + $0x40] sm:$0xff]
    %v14097 = vld [vmem:[#allocation4 + $0x48] sm:$0xff]
    %v14098 = vld [vmem:[#allocation4 + $0x50] sm:$0xff]
    %v14099 = vld [vmem:[#allocation4 + $0x58] sm:$0xff]
    %v14100 = vld [vmem:[#allocation4 + $0x60] sm:$0xff]
    %v14101 = vld [vmem:[#allocation4 + $0x68] sm:$0xff]
    %v14102 = vld [vmem:[#allocation4 + $0x70] sm:$0xff]
    %v14103 = vld [vmem:[#allocation4 + $0x78] sm:$0xff]
    %v14104 = vld [vmem:[#allocation4 + $0x80] sm:$0xff]
    %v14105 = vld [vmem:[#allocation4 + $0x88] sm:$0xff]
    %v14106 = vld [vmem:[#allocation4 + $0x90] sm:$0xff]
    %v14107 = vld [vmem:[#allocation4 + $0x98] sm:$0xff]
    %v14108 = vld [vmem:[#allocation4 + $0xa0] sm:$0xff]
    %v14109 = vld [vmem:[#allocation4 + $0xa8] sm:$0xff]
    %v14110 = vld [vmem:[#allocation4 + $0xb0] sm:$0xff]
    %v14111 = vld [vmem:[#allocation4 + $0xb8] sm:$0xff]
    %v14112 = vld [vmem:[#allocation4 + $0xc0] sm:$0xff]
    %v14113 = vld [vmem:[#allocation4 + $0xc8] sm:$0xff]
    %v14114 = vld [vmem:[#allocation4 + $0xd0] sm:$0xff]
    %v14115 = vld [vmem:[#allocation4 + $0xd8] sm:$0xff]
    %v14116 = vld [vmem:[#allocation4 + $0xe0] sm:$0xff]
    %v14117 = vld [vmem:[#allocation4 + $0xe8] sm:$0xff]
    %v14118 = vld [vmem:[#allocation4 + $0xf0] sm:$0xff]
    %v14119 = vld [vmem:[#allocation4 + $0xf8] sm:$0xff]
    %14121 = vset.pattern.permute.xlu0 0
    %14122 = vperm.xlu0 %14121, %v14084
    %v14123 = vpop.permute.xlu0 %14122
    %vm14125 = vcmask 588800
    %v14127 = vsel %vm14125, %v14087, 0
    %v14130 = vsel %vm14125, %v14088, 0
    %v14133 = vsel %vm14125, %v14089, 0
    %v14136 = vsel %vm14125, %v14090, 0
    %v14139 = vsel %vm14125, %v14091, 0
    %v14142 = vsel %vm14125, %v14092, 0
    %v14145 = vsel %vm14125, %v14093, 0
    %v14148 = vsel %vm14125, %v14094, 0
    %v14151 = vsel %vm14125, %v14095, 0
    %v14154 = vsel %vm14125, %v14096, 0
    %v14157 = vsel %vm14125, %v14097, 0
    %v14160 = vsel %vm14125, %v14098, 0
    %v14163 = vsel %vm14125, %v14099, 0
    %v14166 = vsel %vm14125, %v14100, 0
    %v14169 = vsel %vm14125, %v14101, 0
    %v14172 = vsel %vm14125, %v14102, 0
    %v14175 = vsel %vm14125, %v14103, 0
    %v14178 = vsel %vm14125, %v14104, 0
    %v14181 = vsel %vm14125, %v14105, 0
    %v14184 = vsel %vm14125, %v14106, 0
    %v14187 = vsel %vm14125, %v14107, 0
    %v14190 = vsel %vm14125, %v14108, 0
    %v14193 = vsel %vm14125, %v14109, 0
    %v14196 = vsel %vm14125, %v14110, 0
    %v14199 = vsel %vm14125, %v14111, 0
    %v14202 = vsel %vm14125, %v14112, 0
    %v14205 = vsel %vm14125, %v14113, 0
    %v14208 = vsel %vm14125, %v14114, 0
    %v14211 = vsel %vm14125, %v14115, 0
    %v14214 = vsel %vm14125, %v14116, 0
    %v14217 = vsel %vm14125, %v14117, 0
    %v14220 = vsel %vm14125, %v14118, 0
    %v14223 = vsel %vm14125, %v14119, 0
    %14225 = vmatprep.subr.bf16.mxu0 0
    %14226 = vmatpush1.bf16.xpose.msra.mxu0 %v14130
    %14227 = vmatprep.subr.bf16.mxu0 0
    %14228 = vmatpush1.bf16.xpose.msra.mxu0 %v14133
    %14229 = vmatprep.subr.bf16.mxu0 0
    %14230 = vmatpush1.bf16.xpose.msra.mxu0 %v14136
    %14231 = vmatprep.subr.bf16.mxu0 0
    %14232 = vmatpush1.bf16.xpose.msra.mxu0 %v14139
    %14233 = vmatprep.subr.bf16.mxu0 0
    %14234 = vmatpush1.bf16.xpose.msra.mxu0 %v14142
    %14235 = vmatprep.subr.bf16.mxu0 0
    %14236 = vmatpush1.bf16.xpose.msra.mxu0 %v14145
    %14237 = vmatprep.subr.bf16.mxu0 0
    %14238 = vmatpush1.bf16.xpose.msra.mxu0 %v14148
    %14239 = vmatprep.subr.bf16.mxu0 0
    %14240 = vmatpush1.bf16.xpose.msra.mxu0 %v14151
    %14241 = vmatprep.subr.bf16.mxu0 0
    %14242 = vmatpush1.bf16.xpose.msra.mxu0 %v14154
    %14243 = vmatprep.subr.bf16.mxu0 0
    %14244 = vmatpush1.bf16.xpose.msra.mxu0 %v14157
    %14245 = vmatprep.subr.bf16.mxu0 0
    %14246 = vmatpush1.bf16.xpose.msra.mxu0 %v14160
    %14247 = vmatprep.subr.bf16.mxu0 0
    %14248 = vmatpush1.bf16.xpose.msra.mxu0 %v14163
    %14249 = vmatprep.subr.bf16.mxu0 0
    %14250 = vmatpush1.bf16.xpose.msra.mxu0 %v14166
    %14251 = vmatprep.subr.bf16.mxu0 0
    %14252 = vmatpush1.bf16.xpose.msra.mxu0 %v14169
    %14253 = vmatprep.subr.bf16.mxu0 0
    %14254 = vmatpush1.bf16.xpose.msra.mxu0 %v14172
    %14255 = vmatprep.subr.bf16.mxu0 0
    %14256 = vmatpush1.bf16.xpose.msra.mxu0 %v14175
    %14257 = vmatprep.mubr.bf16.mxu0 0
    %14258 = vmatmul.mubr.bf16.gmra.mrb[0].mxu0 %v14127
    %v14259 = vpop.f32.mrb[0].mxu0
    %v14260 = vadd.f32 %v14123, %v14259
    %v14261 = vpop.f32.mrb[0].mxu0
    %v14262 = vadd.f32 %v14123, %v14261
    %v14263 = vpop.f32.mrb[0].mxu0
    %v14264 = vpop.f32.mrb[0].mxu0
    %14265 = vdwg.mxu0
    %14266 = vmatprep.subr.bf16.mxu0 0
    %14267 = vmatpush1.bf16.xpose.msra.mxu0 %v14178
    %14268 = vmatprep.subr.bf16.mxu0 0
    %14269 = vmatpush1.bf16.xpose.msra.mxu0 %v14181
    %14270 = vmatprep.subr.bf16.mxu0 0
    %14271 = vmatpush1.bf16.xpose.msra.mxu0 %v14184
    %14272 = vmatprep.subr.bf16.mxu0 0
    %14273 = vmatpush1.bf16.xpose.msra.mxu0 %v14187
    %14274 = vmatprep.subr.bf16.mxu0 0
    %14275 = vmatpush1.bf16.xpose.msra.mxu0 %v14190
    %14276 = vmatprep.subr.bf16.mxu0 0
    %14277 = vmatpush1.bf16.xpose.msra.mxu0 %v14193
    %14278 = vmatprep.subr.bf16.mxu0 0
    %14279 = vmatpush1.bf16.xpose.msra.mxu0 %v14196
    %14280 = vmatprep.subr.bf16.mxu0 0
    %14281 = vmatpush1.bf16.xpose.msra.mxu0 %v14199
    %14282 = vmatprep.subr.bf16.mxu0 0
    %14283 = vmatpush1.bf16.xpose.msra.mxu0 %v14202
    %14284 = vmatprep.subr.bf16.mxu0 0
    %14285 = vmatpush1.bf16.xpose.msra.mxu0 %v14205
    %14286 = vmatprep.subr.bf16.mxu0 0
    %14287 = vmatpush1.bf16.xpose.msra.mxu0 %v14208
    %14288 = vmatprep.subr.bf16.mxu0 0
    %14289 = vmatpush1.bf16.xpose.msra.mxu0 %v14211
    %14290 = vmatprep.subr.bf16.mxu0 0
    %14291 = vmatpush1.bf16.xpose.msra.mxu0 %v14214
    %14292 = vmatprep.subr.bf16.mxu0 0
    %14293 = vmatpush1.bf16.xpose.msra.mxu0 %v14217
    %14294 = vmatprep.subr.bf16.mxu0 0
    %14295 = vmatpush1.bf16.xpose.msra.mxu0 %v14220
    %14296 = vmatprep.subr.bf16.mxu0 0
    %14297 = vmatpush1.bf16.xpose.msra.mxu0 %v14223
    %14298 = vmatprep.mubr.bf16.mxu0 0
    %14299 = vmatmul.mubr.bf16.gmra.mrb[0].mxu0 %v14127
    %v14300 = vpop.f32.mrb[0].mxu0
    %v14301 = vadd.f32 %v14123, %v14300
    %v14302 = vpop.f32.mrb[0].mxu0
    %v14303 = vadd.f32 %v14123, %v14302
    %v14304 = vpop.f32.mrb[0].mxu0
    %v14305 = vpop.f32.mrb[0].mxu0
    %14306 = vdwg.mxu0
    %v14307 = vadd.f32 %v14260, %v14262
    %v14308 = vadd.f32 %v14307, %v14301
    %v14309 = vadd.f32 %v14308, %v14303
    %14310 = vadd.xlane.f32.xlu0 %v14309
    %v14311 = vpop.xlane.xlu0 %14310
    %v14312 = vmul.f32 %v14311, 0.001953125
    %v14313 = vsub.f32 %v14260, %v14312
    %v14314 = vsub.f32 %v14262, %v14312
    %v14315 = vsub.f32 %v14301, %v14312
    %v14316 = vsub.f32 %v14303, %v14312
    %v14317 = vmul.f32 %v14313, %v14313
    %v14318 = vmul.f32 %v14314, %v14314
    %v14319 = vmul.f32 %v14315, %v14315
    %v14320 = vmul.f32 %v14316, %v14316
    %v14321 = vadd.f32 %v14317, %v14318
    %v14322 = vadd.f32 %v14321, %v14319
    %v14323 = vadd.f32 %v14322, %v14320
    %14324 = vadd.xlane.f32.xlu0 %v14323
    %v14325 = vpop.xlane.xlu0 %14324
    %v14326 = vmul.f32 %v14325, 0.001953125
    %v14327 = vadd.f32 %v14326, 1e-05
    %v14328 = vrsqrt.pop %v14327
    %v14329 = vmul.f32 %v14085, %v14328
    %v14330 = vmul.f32 %v14312, %v14329
    %v14331 = vsub.f32 %v14086, %v14330
    %14333 = vset.pattern.permute.xlu0 0
    %14334 = vperm.xlu0 %14333, %v14329
    %v14335 = vpop.permute.xlu0 %14334
    %v14337 = vmul.f32 %v14260, %v14335
    %v14338 = vmul.f32 %v14262, %v14335
    %v14339 = vmul.f32 %v14301, %v14335
    %v14340 = vmul.f32 %v14303, %v14335
    %14342 = vset.pattern.permute.xlu0 0
    %14343 = vperm.xlu0 %14342, %v14331
    %v14344 = vpop.permute.xlu0 %14343
    %v14346 = vadd.f32 %v14337, %v14344
    %v14347 = vadd.f32 %v14338, %v14344
    %v14348 = vadd.f32 %v14339, %v14344
    %v14349 = vadd.f32 %v14340, %v14344
    %v14350 = vmax.f32 %v14346, 0.0
    %v14351 = vmax.f32 %v14347, 0.0
    %v14352 = vmax.f32 %v14348, 0.0
    %v14353 = vmax.f32 %v14349, 0.0
    %14354 = vst [vmem:[#allocation5] sm:$0xff] %v14350
    %14355 = vst [vmem:[#allocation5 + $0x8] sm:$0xff] %v14351
    %14356 = vst [vmem:[#allocation5 + $0x10] sm:$0xff] %v14352
    %14357 = vst [vmem:[#allocation5 + $0x18] sm:$0xff] %v14353
    // Predicated region
    $region38: #{tpu_custom_call.1} parent=1 // pred_check
      _
    $region39: #{tpu_custom_call.1} parent=1 // pred_check_branch
      %14359 = sbr.rel (0) target = $region41
    $region40: #{tpu_custom_call.1} parent=1 // pred_region
      %s14361 = ssub.s32 512, 512
      %14362 = vsyncadd [#allocation6], %s14361
      %s14364 = sshll.u32 [#allocation5], 4
      %s14365 = int_to_ptr.vmem [resolvable:$true] %s14364
      %14367 = dma.vmem_to_hbm [thread:$0]  %s14365, 512, %s9, [#allocation6]
    $region41: #{tpu_custom_call.1} parent=1 // pred_fallthru
      _
    // Predicated region
    $region42: #{tpu_custom_call.1} parent=1 // pred_check
      _
    $region43: #{tpu_custom_call.1} parent=1 // pred_check_branch
      %14369 = sbr.rel (0) target = $region45
    $region44: #{tpu_custom_call.1} parent=1 // pred_region
      %14370 = dma.done [#allocation6], 512
    $region45: #{tpu_custom_call.1} parent=1 // pred_fallthru
      _
    %14371 = vsyncpa [#allocation6], 1

</llo_original>
